<compile_context>
chip_gen: v5e
topology: v5e:2x2
jax: 0.10.0
libtpu: 0.0.40
codegen_flags: <defaults>
</compile_context>

<pallas_src>
import functools

import jax
import jax.numpy as jnp
from jax.experimental import pallas as pl
from jax.experimental.pallas import tpu as pltpu


def _layernorm(x, g, b, eps=1e-5):
    mu = jnp.mean(x, axis=-1, keepdims=True)
    var = jnp.mean((x - mu) ** 2, axis=-1, keepdims=True)
    return (x - mu) * jax.lax.rsqrt(var + eps) * g + b


def rotation_head_kernel(
    x_ref,
    w1_ref, b1_ref, w2_ref, b2_ref,
    wqkv_ref, bqkv_ref, wo_ref, bo_ref,
    ln1g_ref, ln1b_ref,
    wff1_ref, bff1_ref, wff2_ref, bff2_ref,
    ln2g_ref, ln2b_ref,
    whead_ref, bhead_ref,
    feat_ref, head_ref,
    *, num_layers, num_heads, d_model,
):
    bf = jnp.bfloat16
    Bt, S, Din = x_ref.shape
    R = Bt * S
    D = d_model
    hd = D // num_heads
    scale = 1.0 / float(hd) ** 0.5

    def mm(a, w):  # bf16 operands, f32 accumulation on the MXU
        return jnp.dot(a.astype(bf), w, preferred_element_type=jnp.float32)

    # All sequences in this batch tile flattened to one row-block for the MXU.
    x = x_ref[...].reshape(R, Din)

    # ---- rotation_processor: Linear -> ReLU -> (Dropout) -> Linear -> ReLU -> (Dropout)
    h = jnp.maximum(mm(x, w1_ref[...]) + b1_ref[...], 0.0)
    h = jnp.maximum(mm(h, w2_ref[...]) + b2_ref[...], 0.0)          # (R, D) f32

    # ---- angular_transformer: post-norm TransformerEncoderLayer x num_layers
    for l in range(num_layers):
        wqkv_l = wqkv_ref[l]                                        # (D, 3D) bf16
        wo_l = wo_ref[l]                                            # (D, D)  bf16
        qkv = mm(h, wqkv_l) + bqkv_ref[l]                           # (R, 3D) f32

        attn = jnp.zeros((R, D), jnp.float32)
        for hh in range(num_heads):
            lo = hh * hd
            qh = qkv[:, lo:lo + hd].reshape(Bt, S, hd).astype(bf)
            kh = qkv[:, D + lo:D + lo + hd].reshape(Bt, S, hd).astype(bf)
            vh = qkv[:, 2 * D + lo:2 * D + lo + hd].reshape(Bt, S, hd).astype(bf)

            s = jnp.einsum('bqd,bkd->bqk', qh, kh,
                           preferred_element_type=jnp.float32) * scale
            s = s - jnp.max(s, axis=-1, keepdims=True)
            p = jnp.exp(s)
            p = p * pl.reciprocal(jnp.sum(p, axis=-1, keepdims=True), approx=True)
            ctx = jnp.einsum('bqk,bkd->bqd', p.astype(bf), vh,
                             preferred_element_type=jnp.float32)    # (Bt, S, hd)

            # Accumulate this head's slice of the output projection (no concat).
            attn = attn + jnp.dot(ctx.reshape(R, hd).astype(bf),
                                  wo_l[lo:lo + hd, :],
                                  preferred_element_type=jnp.float32)
        attn = attn + bo_ref[l]
        h = _layernorm(h + attn, ln1g_ref[l], ln1b_ref[l])

        ff = jnp.maximum(mm(h, wff1_ref[l]) + bff1_ref[l], 0.0)
        ff = mm(ff, wff2_ref[l]) + bff2_ref[l]
        h = _layernorm(h + ff, ln2g_ref[l], ln2b_ref[l])

    # rotation_features output (f32 to match the PyTorch module; could be bf16 if allowed)
    feat_ref[...] = h.reshape(Bt, S, D).astype(feat_ref.dtype)

    # ---- fused, lane-dense (128-wide) output heads: cols 0:4 = rotation, 4:7 = ang.vel.
    ho = mm(h, whead_ref[...]) + bhead_ref[...]                     # (R, 128) f32
    head_ref[...] = ho.reshape(Bt, S, -1).astype(head_ref.dtype)


_HEAD_PAD = 128  # lane-dense width for the fused rotation / angular-velocity heads


def rotation_specialized_head(features, params, *, num_heads=4):
    B, S, Din = features.shape
    D = params['w1'].shape[1]
    L = params['wqkv'].shape[0]

    # Batch tile: aim for >= 128 rows per grid step (MXU M-dim), Bt must divide B.
    bt_cap = max(1, 128 // S)
    Bt = 1
    for d in range(1, B + 1):
        if B % d == 0 and d <= bt_cap:
            Bt = d
    grid = (B // Bt,)

    bf = jnp.bfloat16
    # bf16 matmul weights (halves DMA bytes + native MXU rate); biases / LN params stay f32.
    w1 = params['w1'].astype(bf)
    w2 = params['w2'].astype(bf)
    wqkv = params['wqkv'].astype(bf)
    wo = params['wo'].astype(bf)
    wff1 = params['wff1'].astype(bf)
    wff2 = params['wff2'].astype(bf)

    # Fuse + lane-pad the two small output heads into one (D, 128) weight.
    whead = jnp.zeros((D, _HEAD_PAD), jnp.float32)
    whead = whead.at[:, 0:4].set(params['wr'])
    whead = whead.at[:, 4:7].set(params['wv'])
    whead = whead.astype(bf)
    bhead = jnp.zeros((1, _HEAD_PAD), jnp.float32)
    bhead = bhead.at[:, 0:4].set(params['br'].reshape(1, 4))
    bhead = bhead.at[:, 4:7].set(params['bv'].reshape(1, 3))

    param_list = [
        w1, params['b1'], w2, params['b2'],
        wqkv, params['bqkv'], wo, params['bo'],
        params['ln1g'], params['ln1b'],
        wff1, params['bff1'], wff2, params['bff2'],
        params['ln2g'], params['ln2b'],
        whead, bhead,
    ]

    def full_spec(a):
        nd = a.ndim
        return pl.BlockSpec(a.shape, lambda b, _nd=nd: (0,) * _nd)

    in_specs = ([pl.BlockSpec((Bt, S, Din), lambda b: (b, 0, 0))]
                + [full_spec(a) for a in param_list])
    out_specs = [pl.BlockSpec((Bt, S, D), lambda b: (b, 0, 0)),
                 pl.BlockSpec((Bt, S, _HEAD_PAD), lambda b: (b, 0, 0))]
    out_shape = [jax.ShapeDtypeStruct((B, S, D), jnp.float32),
                 jax.ShapeDtypeStruct((B, S, _HEAD_PAD), jnp.float32)]

    kernel = functools.partial(rotation_head_kernel,
                               num_layers=L, num_heads=num_heads, d_model=D)

    feat, head = pl.pallas_call(
        kernel,
        out_shape=out_shape,
        grid_spec=pltpu.PrefetchScalarGridSpec(
            num_scalar_prefetch=0,
            grid=grid,
            in_specs=in_specs,
            out_specs=out_specs),
        compiler_params=pltpu.CompilerParams(
            dimension_semantics=("parallel",),          # independent batch tiles (v7x 2 TCs)
            vmem_limit_bytes=32 * 1024 * 1024),
    )(features, *param_list)

    # Tiny epilogue in the wrapper keeps the kernel's output stores lane-dense.
    rot = head[..., 0:4]
    av = head[..., 4:7]
    rot = rot / (jnp.sqrt(jnp.sum(rot * rot, axis=-1, keepdims=True)) + 1e-8)
    rot_xyzw = jnp.concatenate([rot[..., 1:4], rot[..., 0:1]], axis=-1)   # wxyz -> xyzw
    return {'rotation': rot_xyzw, 'angular_velocity': av, 'rotation_features': feat}


# -------- pure-JAX reference (same math, same bf16 casts) for correctness check --------
def reference_forward(features, params, *, num_heads=4):
    bf = jnp.bfloat16

    def mm(a, w):
        return jnp.dot(a.astype(bf), w.astype(bf), preferred_element_type=jnp.float32)

    h = jnp.maximum(mm(features.astype(jnp.float32), params['w1']) + params['b1'], 0.0)
    h = jnp.maximum(mm(h, params['w2']) + params['b2'], 0.0)
    L = params['wqkv'].shape[0]
    D = params['w1'].shape[1]
    hd = D // num_heads
    for l in range(L):
        qkv = mm(h, params['wqkv'][l]) + params['bqkv'][l]
        q, k, v = qkv[..., :D], qkv[..., D:2 * D], qkv[..., 2 * D:]
        heads = []
        for hh in range(num_heads):
            qh = q[..., hh * hd:(hh + 1) * hd].astype(bf)
            kh = k[..., hh * hd:(hh + 1) * hd].astype(bf)
            vh = v[..., hh * hd:(hh + 1) * hd].astype(bf)
            s = jnp.einsum('bqd,bkd->bqk', qh, kh,
                           preferred_element_type=jnp.float32) / jnp.sqrt(float(hd))
            p = jax.nn.softmax(s, axis=-1)
            heads.append(jnp.einsum('bqk,bkd->bqd', p.astype(bf), vh,
                                    preferred_element_type=jnp.float32))
        attn = mm(jnp.concatenate(heads, axis=-1), params['wo'][l]) + params['bo'][l]
        h = _layernorm(h + attn, params['ln1g'][l], params['ln1b'][l])
        ff = jnp.maximum(mm(h, params['wff1'][l]) + params['bff1'][l], 0.0)
        ff = mm(ff, params['wff2'][l]) + params['bff2'][l]
        h = _layernorm(h + ff, params['ln2g'][l], params['ln2b'][l])
    rot = mm(h, params['wr']) + params['br']
    av = mm(h, params['wv']) + params['bv']
    rot = rot / (jnp.linalg.norm(rot, axis=-1, keepdims=True) + 1e-8)
    rot = jnp.concatenate([rot[..., 1:4], rot[..., 0:1]], axis=-1)
    return {'rotation': rot, 'angular_velocity': av, 'rotation_features': h}


def make_params(key, input_dim, hidden_dim, num_layers):
    D, Dff = hidden_dim, 2 * hidden_dim
    ks = jax.random.split(key, 16)

    def u(k, shape, fan_in, fan_out):
        lim = (6.0 / (fan_in + fan_out)) ** 0.5
        return jax.random.uniform(k, shape, jnp.float32, -lim, lim)

    params = {
        'w1': u(ks[0], (input_dim, D), input_dim, D), 'b1': jnp.zeros((1, D), jnp.float32),
        'w2': u(ks[1], (D, D), D, D),                 'b2': jnp.zeros((1, D), jnp.float32),
        'wqkv': u(ks[2], (num_layers, D, 3 * D), D, 3 * D),
        'bqkv': jnp.zeros((num_layers, 3 * D), jnp.float32),
        'wo': u(ks[3], (num_layers, D, D), D, D),
        'bo': jnp.zeros((num_layers, D), jnp.float32),
        'ln1g': jnp.ones((num_layers, D), jnp.float32),
        'ln1b': jnp.zeros((num_layers, D), jnp.float32),
        'wff1': u(ks[4], (num_layers, D, Dff), D, Dff),
        'bff1': jnp.zeros((num_layers, Dff), jnp.float32),
        'wff2': u(ks[5], (num_layers, Dff, D), Dff, D),
        'bff2': jnp.zeros((num_layers, D), jnp.float32),
        'ln2g': jnp.ones((num_layers, D), jnp.float32),
        'ln2b': jnp.zeros((num_layers, D), jnp.float32),
        # rotation_output: zero weight, bias = [1, 0, 0, 0]  (as in the PyTorch __init__)
        'wr': jnp.zeros((D, 4), jnp.float32),
        'br': jnp.array([[1.0, 0.0, 0.0, 0.0]], jnp.float32),
        # angular_velocity_output: xavier-uniform weight, zero bias
        'wv': u(ks[6], (D, 3), D, 3),
        'bv': jnp.zeros((1, 3), jnp.float32),
    }
    return params


if __name__ == "__main__":
    B, S, Din, D, L, NH = 16, 16, 32, 128, 2, 4
    key = jax.random.PRNGKey(0)
    kx, kp = jax.random.split(key)
    features = jax.random.normal(kx, (B, S, Din), jnp.float32)
    params = make_params(kp, Din, D, L)

    out = rotation_specialized_head(features, params, num_heads=NH)
    out = jax.block_until_ready(out)

    assert out['rotation'].shape == (B, S, 4)
    assert out['angular_velocity'].shape == (B, S, 3)
    assert out['rotation_features'].shape == (B, S, D)

    ref = reference_forward(features, params, num_heads=NH)
    for name in ('rotation', 'angular_velocity', 'rotation_features'):
        assert jnp.allclose(out[name], ref[name], atol=2e-2, rtol=2e-2), name

    # rotation_output has zero weight and bias [1,0,0,0] -> normalized quat, reordered to xyzw
    assert jnp.allclose(out['rotation'], jnp.broadcast_to(
        jnp.array([0.0, 0.0, 0.0, 1.0]), (B, S, 4)), atol=1e-5)

    print("KERNEL_OK")
</pallas_src>

<mosaic_0001>
module attributes {stable_mosaic.version = 11 : i64} {
  func.func @rotation_head_kernel(%arg0: i32, %arg1: memref<8x16x32xf32, #tpu.memory_space<vmem>>, %arg2: memref<32x128xbf16, #tpu.memory_space<vmem>>, %arg3: memref<1x128xf32, #tpu.memory_space<vmem>>, %arg4: memref<128x128xbf16, #tpu.memory_space<vmem>>, %arg5: memref<1x128xf32, #tpu.memory_space<vmem>>, %arg6: memref<2x128x384xbf16, #tpu.memory_space<vmem>>, %arg7: memref<2x384xf32, #tpu.memory_space<vmem>>, %arg8: memref<2x128x128xbf16, #tpu.memory_space<vmem>>, %arg9: memref<2x128xf32, #tpu.memory_space<vmem>>, %arg10: memref<2x128xf32, #tpu.memory_space<vmem>>, %arg11: memref<2x128xf32, #tpu.memory_space<vmem>>, %arg12: memref<2x128x256xbf16, #tpu.memory_space<vmem>>, %arg13: memref<2x256xf32, #tpu.memory_space<vmem>>, %arg14: memref<2x256x128xbf16, #tpu.memory_space<vmem>>, %arg15: memref<2x128xf32, #tpu.memory_space<vmem>>, %arg16: memref<2x128xf32, #tpu.memory_space<vmem>>, %arg17: memref<2x128xf32, #tpu.memory_space<vmem>>, %arg18: memref<128x128xbf16, #tpu.memory_space<vmem>>, %arg19: memref<1x128xf32, #tpu.memory_space<vmem>>, %arg20: memref<8x16x128xf32, #tpu.memory_space<vmem>>, %arg21: memref<8x16x128xf32, #tpu.memory_space<vmem>>) attributes {dimension_semantics = [#tpu.dimension_semantics<parallel>], iteration_bounds = array<i64: 2>, scalar_prefetch = 0 : i64, scratch_operands = 0 : i64, tpu.core_type = #tpu.core_type<tc>, window_params = [{transform_indices = @transform_0, window_bounds = array<i64: 8, 16, 32>}, {pipeline_mode = #tpu.pipeline_mode<synchronous>, transform_indices = @transform_1, window_bounds = array<i64: 32, 128>}, {pipeline_mode = #tpu.pipeline_mode<synchronous>, transform_indices = @transform_2, window_bounds = array<i64: 1, 128>}, {pipeline_mode = #tpu.pipeline_mode<synchronous>, transform_indices = @transform_3, window_bounds = array<i64: 128, 128>}, {pipeline_mode = #tpu.pipeline_mode<synchronous>, transform_indices = @transform_4, window_bounds = array<i64: 1, 128>}, {pipeline_mode = #tpu.pipeline_mode<synchronous>, transform_indices = @transform_5, window_bounds = array<i64: 2, 128, 384>}, {pipeline_mode = #tpu.pipeline_mode<synchronous>, transform_indices = @transform_6, window_bounds = array<i64: 2, 384>}, {pipeline_mode = #tpu.pipeline_mode<synchronous>, transform_indices = @transform_7, window_bounds = array<i64: 2, 128, 128>}, {pipeline_mode = #tpu.pipeline_mode<synchronous>, transform_indices = @transform_8, window_bounds = array<i64: 2, 128>}, {pipeline_mode = #tpu.pipeline_mode<synchronous>, transform_indices = @transform_9, window_bounds = array<i64: 2, 128>}, {pipeline_mode = #tpu.pipeline_mode<synchronous>, transform_indices = @transform_10, window_bounds = array<i64: 2, 128>}, {pipeline_mode = #tpu.pipeline_mode<synchronous>, transform_indices = @transform_11, window_bounds = array<i64: 2, 128, 256>}, {pipeline_mode = #tpu.pipeline_mode<synchronous>, transform_indices = @transform_12, window_bounds = array<i64: 2, 256>}, {pipeline_mode = #tpu.pipeline_mode<synchronous>, transform_indices = @transform_13, window_bounds = array<i64: 2, 256, 128>}, {pipeline_mode = #tpu.pipeline_mode<synchronous>, transform_indices = @transform_14, window_bounds = array<i64: 2, 128>}, {pipeline_mode = #tpu.pipeline_mode<synchronous>, transform_indices = @transform_15, window_bounds = array<i64: 2, 128>}, {pipeline_mode = #tpu.pipeline_mode<synchronous>, transform_indices = @transform_16, window_bounds = array<i64: 2, 128>}, {pipeline_mode = #tpu.pipeline_mode<synchronous>, transform_indices = @transform_17, window_bounds = array<i64: 128, 128>}, {pipeline_mode = #tpu.pipeline_mode<synchronous>, transform_indices = @transform_18, window_bounds = array<i64: 1, 128>}, {transform_indices = @transform_19, window_bounds = array<i64: 8, 16, 128>}, {transform_indices = @transform_20, window_bounds = array<i64: 8, 16, 128>}]} {
    %c0 = arith.constant 0 : index
    %c0_0 = arith.constant 0 : index
    %c0_1 = arith.constant 0 : index
    %0 = vector.load %arg1[%c0, %c0_0, %c0_1] : memref<8x16x32xf32, #tpu.memory_space<vmem>>, vector<8x16x32xf32>
    %1 = vector.shape_cast %0 : vector<8x16x32xf32> to vector<128x32xf32>
    %c0_2 = arith.constant 0 : index
    %c0_3 = arith.constant 0 : index
    %2 = vector.load %arg2[%c0_2, %c0_3] : memref<32x128xbf16, #tpu.memory_space<vmem>>, vector<32x128xbf16>
    %3 = arith.truncf %1 : vector<128x32xf32> to vector<128x32xbf16>
    %cst = arith.constant dense<0.000000e+00> : vector<128x128xf32>
    %4 = tpu.matmul %3, %2, %cst {dimension_numbers = #tpu.dot_dimension_numbers<[1], [0], [0], [1], [0, 0, 1, 1], [], []>} : vector<128x32xbf16>, vector<32x128xbf16>, vector<128x128xf32> -> vector<128x128xf32>
    %c0_4 = arith.constant 0 : index
    %c0_5 = arith.constant 0 : index
    %5 = vector.load %arg3[%c0_4, %c0_5] : memref<1x128xf32, #tpu.memory_space<vmem>>, vector<1x128xf32>
    %6 = vector.broadcast %5 : vector<1x128xf32> to vector<128x128xf32>
    %7 = arith.addf %4, %6 : vector<128x128xf32>
    %cst_6 = arith.constant 0.000000e+00 : f32
    %8 = vector.broadcast %cst_6 : f32 to vector<128x128xf32>
    %9 = arith.maximumf %7, %8 : vector<128x128xf32>
    %c0_7 = arith.constant 0 : index
    %c0_8 = arith.constant 0 : index
    %10 = vector.load %arg4[%c0_7, %c0_8] : memref<128x128xbf16, #tpu.memory_space<vmem>>, vector<128x128xbf16>
    %11 = arith.truncf %9 : vector<128x128xf32> to vector<128x128xbf16>
    %cst_9 = arith.constant dense<0.000000e+00> : vector<128x128xf32>
    %12 = tpu.matmul %11, %10, %cst_9 {dimension_numbers = #tpu.dot_dimension_numbers<[1], [0], [0], [1], [0, 0, 1, 1], [], []>} : vector<128x128xbf16>, vector<128x128xbf16>, vector<128x128xf32> -> vector<128x128xf32>
    %c0_10 = arith.constant 0 : index
    %c0_11 = arith.constant 0 : index
    %13 = vector.load %arg5[%c0_10, %c0_11] : memref<1x128xf32, #tpu.memory_space<vmem>>, vector<1x128xf32>
    %14 = vector.broadcast %13 : vector<1x128xf32> to vector<128x128xf32>
    %15 = arith.addf %12, %14 : vector<128x128xf32>
    %cst_12 = arith.constant 0.000000e+00 : f32
    %16 = vector.broadcast %cst_12 : f32 to vector<128x128xf32>
    %17 = arith.maximumf %15, %16 : vector<128x128xf32>
    %c0_13 = arith.constant 0 : index
    %c0_14 = arith.constant 0 : index
    %c0_15 = arith.constant 0 : index
    %18 = vector.load %arg6[%c0_13, %c0_14, %c0_15] : memref<2x128x384xbf16, #tpu.memory_space<vmem>>, vector<1x128x384xbf16>
    %19 = vector.shape_cast %18 : vector<1x128x384xbf16> to vector<128x384xbf16>
    %c0_16 = arith.constant 0 : index
    %c0_17 = arith.constant 0 : index
    %c0_18 = arith.constant 0 : index
    %20 = vector.load %arg8[%c0_16, %c0_17, %c0_18] : memref<2x128x128xbf16, #tpu.memory_space<vmem>>, vector<1x128x128xbf16>
    %21 = vector.shape_cast %20 : vector<1x128x128xbf16> to vector<128x128xbf16>
    %22 = arith.truncf %17 : vector<128x128xf32> to vector<128x128xbf16>
    %cst_19 = arith.constant dense<0.000000e+00> : vector<128x384xf32>
    %23 = tpu.matmul %22, %19, %cst_19 {dimension_numbers = #tpu.dot_dimension_numbers<[1], [0], [0], [1], [0, 0, 1, 1], [], []>} : vector<128x128xbf16>, vector<128x384xbf16>, vector<128x384xf32> -> vector<128x384xf32>
    %c0_20 = arith.constant 0 : index
    %c0_21 = arith.constant 0 : index
    %24 = vector.load %arg7[%c0_20, %c0_21] : memref<2x384xf32, #tpu.memory_space<vmem>>, vector<1x384xf32>
    %25 = vector.shape_cast %24 : vector<1x384xf32> to vector<384xf32>
    %26 = vector.shape_cast %25 : vector<384xf32> to vector<1x384xf32>
    %27 = vector.broadcast %26 : vector<1x384xf32> to vector<128x384xf32>
    %28 = arith.addf %23, %27 : vector<128x384xf32>
    %cst_22 = arith.constant 0.000000e+00 : f32
    %29 = vector.broadcast %cst_22 : f32 to vector<128x128xf32>
    %30 = vector.extract_strided_slice %28 {offsets = [0, 0], sizes = [128, 32], strides = [1, 1]} : vector<128x384xf32> to vector<128x32xf32>
    %31 = vector.shape_cast %30 : vector<128x32xf32> to vector<8x16x32xf32>
    %32 = arith.truncf %31 : vector<8x16x32xf32> to vector<8x16x32xbf16>
    %33 = vector.extract_strided_slice %28 {offsets = [0, 128], sizes = [128, 32], strides = [1, 1]} : vector<128x384xf32> to vector<128x32xf32>
    %34 = vector.shape_cast %33 : vector<128x32xf32> to vector<8x16x32xf32>
    %35 = arith.truncf %34 : vector<8x16x32xf32> to vector<8x16x32xbf16>
    %36 = vector.extract_strided_slice %28 {offsets = [0, 256], sizes = [128, 32], strides = [1, 1]} : vector<128x384xf32> to vector<128x32xf32>
    %37 = vector.shape_cast %36 : vector<128x32xf32> to vector<8x16x32xf32>
    %38 = arith.truncf %37 : vector<8x16x32xf32> to vector<8x16x32xbf16>
    "tpu.trace_start"() <{level = 10 : i32, message = "bqd,bkd->bqk"}> : () -> ()
    %cst_23 = arith.constant dense<0.000000e+00> : vector<8x16x16xf32>
    %39 = tpu.matmul %32, %35, %cst_23 {dimension_numbers = #tpu.dot_dimension_numbers<[2], [2], [1], [1], [0, 0, 0, 1, 1, 1], [0], [0]>} : vector<8x16x32xbf16>, vector<8x16x32xbf16>, vector<8x16x16xf32> -> vector<8x16x16xf32>
    "tpu.trace_stop"() : () -> ()
    %cst_24 = arith.constant 0.176776692 : f32
    %40 = vector.broadcast %cst_24 : f32 to vector<8x16x16xf32>
    %41 = arith.mulf %39, %40 : vector<8x16x16xf32>
    %cst_25 = arith.constant dense<0xFF800000> : vector<8x16xf32>
    %42 = vector.multi_reduction <maximumf>, %41, %cst_25 [2] : vector<8x16x16xf32> to vector<8x16xf32>
    %43 = vector.shape_cast %42 : vector<8x16xf32> to vector<8x16x1xf32>
    %44 = vector.broadcast %43 : vector<8x16x1xf32> to vector<8x16x16xf32>
    %45 = arith.subf %41, %44 : vector<8x16x16xf32>
    %46 = math.exp %45 : vector<8x16x16xf32>
    %cst_26 = arith.constant dense<0.000000e+00> : vector<8x16xf32>
    %47 = vector.multi_reduction <add>, %46, %cst_26 [2] : vector<8x16x16xf32> to vector<8x16xf32>
    %48 = vector.shape_cast %47 : vector<8x16xf32> to vector<8x16x1xf32>
    %49 = tpu.reciprocal %48 {approx = true} : vector<8x16x1xf32> -> vector<8x16x1xf32>
    %50 = vector.broadcast %49 : vector<8x16x1xf32> to vector<8x16x16xf32>
    %51 = arith.mulf %46, %50 : vector<8x16x16xf32>
    %52 = arith.truncf %51 : vector<8x16x16xf32> to vector<8x16x16xbf16>
    "tpu.trace_start"() <{level = 10 : i32, message = "bqk,bkd->bqd"}> : () -> ()
    %cst_27 = arith.constant dense<0.000000e+00> : vector<8x16x32xf32>
    %53 = tpu.matmul %52, %38, %cst_27 {dimension_numbers = #tpu.dot_dimension_numbers<[2], [1], [1], [2], [0, 0, 0, 1, 1, 2], [0], [0]>} : vector<8x16x16xbf16>, vector<8x16x32xbf16>, vector<8x16x32xf32> -> vector<8x16x32xf32>
    "tpu.trace_stop"() : () -> ()
    %54 = vector.shape_cast %53 : vector<8x16x32xf32> to vector<128x32xf32>
    %55 = arith.truncf %54 : vector<128x32xf32> to vector<128x32xbf16>
    %56 = vector.extract_strided_slice %21 {offsets = [0, 0], sizes = [32, 128], strides = [1, 1]} : vector<128x128xbf16> to vector<32x128xbf16>
    %cst_28 = arith.constant dense<0.000000e+00> : vector<128x128xf32>
    %57 = tpu.matmul %55, %56, %cst_28 {dimension_numbers = #tpu.dot_dimension_numbers<[1], [0], [0], [1], [0, 0, 1, 1], [], []>} : vector<128x32xbf16>, vector<32x128xbf16>, vector<128x128xf32> -> vector<128x128xf32>
    %58 = arith.addf %29, %57 : vector<128x128xf32>
    %59 = vector.extract_strided_slice %28 {offsets = [0, 32], sizes = [128, 32], strides = [1, 1]} : vector<128x384xf32> to vector<128x32xf32>
    %60 = vector.shape_cast %59 : vector<128x32xf32> to vector<8x16x32xf32>
    %61 = arith.truncf %60 : vector<8x16x32xf32> to vector<8x16x32xbf16>
    %62 = vector.extract_strided_slice %28 {offsets = [0, 160], sizes = [128, 32], strides = [1, 1]} : vector<128x384xf32> to vector<128x32xf32>
    %63 = vector.shape_cast %62 : vector<128x32xf32> to vector<8x16x32xf32>
    %64 = arith.truncf %63 : vector<8x16x32xf32> to vector<8x16x32xbf16>
    %65 = vector.extract_strided_slice %28 {offsets = [0, 288], sizes = [128, 32], strides = [1, 1]} : vector<128x384xf32> to vector<128x32xf32>
    %66 = vector.shape_cast %65 : vector<128x32xf32> to vector<8x16x32xf32>
    %67 = arith.truncf %66 : vector<8x16x32xf32> to vector<8x16x32xbf16>
    "tpu.trace_start"() <{level = 10 : i32, message = "bqd,bkd->bqk"}> : () -> ()
    %cst_29 = arith.constant dense<0.000000e+00> : vector<8x16x16xf32>
    %68 = tpu.matmul %61, %64, %cst_29 {dimension_numbers = #tpu.dot_dimension_numbers<[2], [2], [1], [1], [0, 0, 0, 1, 1, 1], [0], [0]>} : vector<8x16x32xbf16>, vector<8x16x32xbf16>, vector<8x16x16xf32> -> vector<8x16x16xf32>
    "tpu.trace_stop"() : () -> ()
    %cst_30 = arith.constant 0.176776692 : f32
    %69 = vector.broadcast %cst_30 : f32 to vector<8x16x16xf32>
    %70 = arith.mulf %68, %69 : vector<8x16x16xf32>
    %cst_31 = arith.constant dense<0xFF800000> : vector<8x16xf32>
    %71 = vector.multi_reduction <maximumf>, %70, %cst_31 [2] : vector<8x16x16xf32> to vector<8x16xf32>
    %72 = vector.shape_cast %71 : vector<8x16xf32> to vector<8x16x1xf32>
    %73 = vector.broadcast %72 : vector<8x16x1xf32> to vector<8x16x16xf32>
    %74 = arith.subf %70, %73 : vector<8x16x16xf32>
    %75 = math.exp %74 : vector<8x16x16xf32>
    %cst_32 = arith.constant dense<0.000000e+00> : vector<8x16xf32>
    %76 = vector.multi_reduction <add>, %75, %cst_32 [2] : vector<8x16x16xf32> to vector<8x16xf32>
    %77 = vector.shape_cast %76 : vector<8x16xf32> to vector<8x16x1xf32>
    %78 = tpu.reciprocal %77 {approx = true} : vector<8x16x1xf32> -> vector<8x16x1xf32>
    %79 = vector.broadcast %78 : vector<8x16x1xf32> to vector<8x16x16xf32>
    %80 = arith.mulf %75, %79 : vector<8x16x16xf32>
    %81 = arith.truncf %80 : vector<8x16x16xf32> to vector<8x16x16xbf16>
    "tpu.trace_start"() <{level = 10 : i32, message = "bqk,bkd->bqd"}> : () -> ()
    %cst_33 = arith.constant dense<0.000000e+00> : vector<8x16x32xf32>
    %82 = tpu.matmul %81, %67, %cst_33 {dimension_numbers = #tpu.dot_dimension_numbers<[2], [1], [1], [2], [0, 0, 0, 1, 1, 2], [0], [0]>} : vector<8x16x16xbf16>, vector<8x16x32xbf16>, vector<8x16x32xf32> -> vector<8x16x32xf32>
    "tpu.trace_stop"() : () -> ()
    %83 = vector.shape_cast %82 : vector<8x16x32xf32> to vector<128x32xf32>
    %84 = arith.truncf %83 : vector<128x32xf32> to vector<128x32xbf16>
    %85 = vector.extract_strided_slice %21 {offsets = [32, 0], sizes = [32, 128], strides = [1, 1]} : vector<128x128xbf16> to vector<32x128xbf16>
    %cst_34 = arith.constant dense<0.000000e+00> : vector<128x128xf32>
    %86 = tpu.matmul %84, %85, %cst_34 {dimension_numbers = #tpu.dot_dimension_numbers<[1], [0], [0], [1], [0, 0, 1, 1], [], []>} : vector<128x32xbf16>, vector<32x128xbf16>, vector<128x128xf32> -> vector<128x128xf32>
    %87 = arith.addf %58, %86 : vector<128x128xf32>
    %88 = vector.extract_strided_slice %28 {offsets = [0, 64], sizes = [128, 32], strides = [1, 1]} : vector<128x384xf32> to vector<128x32xf32>
    %89 = vector.shape_cast %88 : vector<128x32xf32> to vector<8x16x32xf32>
    %90 = arith.truncf %89 : vector<8x16x32xf32> to vector<8x16x32xbf16>
    %91 = vector.extract_strided_slice %28 {offsets = [0, 192], sizes = [128, 32], strides = [1, 1]} : vector<128x384xf32> to vector<128x32xf32>
    %92 = vector.shape_cast %91 : vector<128x32xf32> to vector<8x16x32xf32>
    %93 = arith.truncf %92 : vector<8x16x32xf32> to vector<8x16x32xbf16>
    %94 = vector.extract_strided_slice %28 {offsets = [0, 320], sizes = [128, 32], strides = [1, 1]} : vector<128x384xf32> to vector<128x32xf32>
    %95 = vector.shape_cast %94 : vector<128x32xf32> to vector<8x16x32xf32>
    %96 = arith.truncf %95 : vector<8x16x32xf32> to vector<8x16x32xbf16>
    "tpu.trace_start"() <{level = 10 : i32, message = "bqd,bkd->bqk"}> : () -> ()
    %cst_35 = arith.constant dense<0.000000e+00> : vector<8x16x16xf32>
    %97 = tpu.matmul %90, %93, %cst_35 {dimension_numbers = #tpu.dot_dimension_numbers<[2], [2], [1], [1], [0, 0, 0, 1, 1, 1], [0], [0]>} : vector<8x16x32xbf16>, vector<8x16x32xbf16>, vector<8x16x16xf32> -> vector<8x16x16xf32>
    "tpu.trace_stop"() : () -> ()
    %cst_36 = arith.constant 0.176776692 : f32
    %98 = vector.broadcast %cst_36 : f32 to vector<8x16x16xf32>
    %99 = arith.mulf %97, %98 : vector<8x16x16xf32>
    %cst_37 = arith.constant dense<0xFF800000> : vector<8x16xf32>
    %100 = vector.multi_reduction <maximumf>, %99, %cst_37 [2] : vector<8x16x16xf32> to vector<8x16xf32>
    %101 = vector.shape_cast %100 : vector<8x16xf32> to vector<8x16x1xf32>
    %102 = vector.broadcast %101 : vector<8x16x1xf32> to vector<8x16x16xf32>
    %103 = arith.subf %99, %102 : vector<8x16x16xf32>
    %104 = math.exp %103 : vector<8x16x16xf32>
    %cst_38 = arith.constant dense<0.000000e+00> : vector<8x16xf32>
    %105 = vector.multi_reduction <add>, %104, %cst_38 [2] : vector<8x16x16xf32> to vector<8x16xf32>
    %106 = vector.shape_cast %105 : vector<8x16xf32> to vector<8x16x1xf32>
    %107 = tpu.reciprocal %106 {approx = true} : vector<8x16x1xf32> -> vector<8x16x1xf32>
    %108 = vector.broadcast %107 : vector<8x16x1xf32> to vector<8x16x16xf32>
    %109 = arith.mulf %104, %108 : vector<8x16x16xf32>
    %110 = arith.truncf %109 : vector<8x16x16xf32> to vector<8x16x16xbf16>
    "tpu.trace_start"() <{level = 10 : i32, message = "bqk,bkd->bqd"}> : () -> ()
    %cst_39 = arith.constant dense<0.000000e+00> : vector<8x16x32xf32>
    %111 = tpu.matmul %110, %96, %cst_39 {dimension_numbers = #tpu.dot_dimension_numbers<[2], [1], [1], [2], [0, 0, 0, 1, 1, 2], [0], [0]>} : vector<8x16x16xbf16>, vector<8x16x32xbf16>, vector<8x16x32xf32> -> vector<8x16x32xf32>
    "tpu.trace_stop"() : () -> ()
    %112 = vector.shape_cast %111 : vector<8x16x32xf32> to vector<128x32xf32>
    %113 = arith.truncf %112 : vector<128x32xf32> to vector<128x32xbf16>
    %114 = vector.extract_strided_slice %21 {offsets = [64, 0], sizes = [32, 128], strides = [1, 1]} : vector<128x128xbf16> to vector<32x128xbf16>
    %cst_40 = arith.constant dense<0.000000e+00> : vector<128x128xf32>
    %115 = tpu.matmul %113, %114, %cst_40 {dimension_numbers = #tpu.dot_dimension_numbers<[1], [0], [0], [1], [0, 0, 1, 1], [], []>} : vector<128x32xbf16>, vector<32x128xbf16>, vector<128x128xf32> -> vector<128x128xf32>
    %116 = arith.addf %87, %115 : vector<128x128xf32>
    %117 = vector.extract_strided_slice %28 {offsets = [0, 96], sizes = [128, 32], strides = [1, 1]} : vector<128x384xf32> to vector<128x32xf32>
    %118 = vector.shape_cast %117 : vector<128x32xf32> to vector<8x16x32xf32>
    %119 = arith.truncf %118 : vector<8x16x32xf32> to vector<8x16x32xbf16>
    %120 = vector.extract_strided_slice %28 {offsets = [0, 224], sizes = [128, 32], strides = [1, 1]} : vector<128x384xf32> to vector<128x32xf32>
    %121 = vector.shape_cast %120 : vector<128x32xf32> to vector<8x16x32xf32>
    %122 = arith.truncf %121 : vector<8x16x32xf32> to vector<8x16x32xbf16>
    %123 = vector.extract_strided_slice %28 {offsets = [0, 352], sizes = [128, 32], strides = [1, 1]} : vector<128x384xf32> to vector<128x32xf32>
    %124 = vector.shape_cast %123 : vector<128x32xf32> to vector<8x16x32xf32>
    %125 = arith.truncf %124 : vector<8x16x32xf32> to vector<8x16x32xbf16>
    "tpu.trace_start"() <{level = 10 : i32, message = "bqd,bkd->bqk"}> : () -> ()
    %cst_41 = arith.constant dense<0.000000e+00> : vector<8x16x16xf32>
    %126 = tpu.matmul %119, %122, %cst_41 {dimension_numbers = #tpu.dot_dimension_numbers<[2], [2], [1], [1], [0, 0, 0, 1, 1, 1], [0], [0]>} : vector<8x16x32xbf16>, vector<8x16x32xbf16>, vector<8x16x16xf32> -> vector<8x16x16xf32>
    "tpu.trace_stop"() : () -> ()
    %cst_42 = arith.constant 0.176776692 : f32
    %127 = vector.broadcast %cst_42 : f32 to vector<8x16x16xf32>
    %128 = arith.mulf %126, %127 : vector<8x16x16xf32>
    %cst_43 = arith.constant dense<0xFF800000> : vector<8x16xf32>
    %129 = vector.multi_reduction <maximumf>, %128, %cst_43 [2] : vector<8x16x16xf32> to vector<8x16xf32>
    %130 = vector.shape_cast %129 : vector<8x16xf32> to vector<8x16x1xf32>
    %131 = vector.broadcast %130 : vector<8x16x1xf32> to vector<8x16x16xf32>
    %132 = arith.subf %128, %131 : vector<8x16x16xf32>
    %133 = math.exp %132 : vector<8x16x16xf32>
    %cst_44 = arith.constant dense<0.000000e+00> : vector<8x16xf32>
    %134 = vector.multi_reduction <add>, %133, %cst_44 [2] : vector<8x16x16xf32> to vector<8x16xf32>
    %135 = vector.shape_cast %134 : vector<8x16xf32> to vector<8x16x1xf32>
    %136 = tpu.reciprocal %135 {approx = true} : vector<8x16x1xf32> -> vector<8x16x1xf32>
    %137 = vector.broadcast %136 : vector<8x16x1xf32> to vector<8x16x16xf32>
    %138 = arith.mulf %133, %137 : vector<8x16x16xf32>
    %139 = arith.truncf %138 : vector<8x16x16xf32> to vector<8x16x16xbf16>
    "tpu.trace_start"() <{level = 10 : i32, message = "bqk,bkd->bqd"}> : () -> ()
    %cst_45 = arith.constant dense<0.000000e+00> : vector<8x16x32xf32>
    %140 = tpu.matmul %139, %125, %cst_45 {dimension_numbers = #tpu.dot_dimension_numbers<[2], [1], [1], [2], [0, 0, 0, 1, 1, 2], [0], [0]>} : vector<8x16x16xbf16>, vector<8x16x32xbf16>, vector<8x16x32xf32> -> vector<8x16x32xf32>
    "tpu.trace_stop"() : () -> ()
    %141 = vector.shape_cast %140 : vector<8x16x32xf32> to vector<128x32xf32>
    %142 = arith.truncf %141 : vector<128x32xf32> to vector<128x32xbf16>
    %143 = vector.extract_strided_slice %21 {offsets = [96, 0], sizes = [32, 128], strides = [1, 1]} : vector<128x128xbf16> to vector<32x128xbf16>
    %cst_46 = arith.constant dense<0.000000e+00> : vector<128x128xf32>
    %144 = tpu.matmul %142, %143, %cst_46 {dimension_numbers = #tpu.dot_dimension_numbers<[1], [0], [0], [1], [0, 0, 1, 1], [], []>} : vector<128x32xbf16>, vector<32x128xbf16>, vector<128x128xf32> -> vector<128x128xf32>
    %145 = arith.addf %116, %144 : vector<128x128xf32>
    %c0_47 = arith.constant 0 : index
    %c0_48 = arith.constant 0 : index
    %146 = vector.load %arg9[%c0_47, %c0_48] : memref<2x128xf32, #tpu.memory_space<vmem>>, vector<1x128xf32>
    %147 = vector.shape_cast %146 : vector<1x128xf32> to vector<128xf32>
    %148 = vector.shape_cast %147 : vector<128xf32> to vector<1x128xf32>
    %149 = vector.broadcast %148 : vector<1x128xf32> to vector<128x128xf32>
    %150 = arith.addf %145, %149 : vector<128x128xf32>
    %151 = arith.addf %17, %150 : vector<128x128xf32>
    %c0_49 = arith.constant 0 : index
    %c0_50 = arith.constant 0 : index
    %152 = vector.load %arg10[%c0_49, %c0_50] : memref<2x128xf32, #tpu.memory_space<vmem>>, vector<1x128xf32>
    %153 = vector.shape_cast %152 : vector<1x128xf32> to vector<128xf32>
    %c0_51 = arith.constant 0 : index
    %c0_52 = arith.constant 0 : index
    %154 = vector.load %arg11[%c0_51, %c0_52] : memref<2x128xf32, #tpu.memory_space<vmem>>, vector<1x128xf32>
    %155 = vector.shape_cast %154 : vector<1x128xf32> to vector<128xf32>
    %cst_53 = arith.constant dense<0.000000e+00> : vector<128xf32>
    %156 = vector.multi_reduction <add>, %151, %cst_53 [1] : vector<128x128xf32> to vector<128xf32>
    %157 = vector.shape_cast %156 : vector<128xf32> to vector<128x1xf32>
    %cst_54 = arith.constant 1.280000e+02 : f32
    %158 = vector.broadcast %cst_54 : f32 to vector<128x1xf32>
    %159 = arith.divf %157, %158 : vector<128x1xf32>
    %160 = vector.broadcast %159 : vector<128x1xf32> to vector<128x128xf32>
    %161 = arith.subf %151, %160 : vector<128x128xf32>
    %162 = arith.mulf %161, %161 : vector<128x128xf32>
    %cst_55 = arith.constant dense<0.000000e+00> : vector<128xf32>
    %163 = vector.multi_reduction <add>, %162, %cst_55 [1] : vector<128x128xf32> to vector<128xf32>
    %164 = vector.shape_cast %163 : vector<128xf32> to vector<128x1xf32>
    %cst_56 = arith.constant 1.280000e+02 : f32
    %165 = vector.broadcast %cst_56 : f32 to vector<128x1xf32>
    %166 = arith.divf %164, %165 : vector<128x1xf32>
    %167 = vector.broadcast %159 : vector<128x1xf32> to vector<128x128xf32>
    %168 = arith.subf %151, %167 : vector<128x128xf32>
    %cst_57 = arith.constant 9.99999974E-6 : f32
    %169 = vector.broadcast %cst_57 : f32 to vector<128x1xf32>
    %170 = arith.addf %166, %169 : vector<128x1xf32>
    %171 = math.rsqrt %170 : vector<128x1xf32>
    %172 = vector.broadcast %171 : vector<128x1xf32> to vector<128x128xf32>
    %173 = arith.mulf %168, %172 : vector<128x128xf32>
    %174 = vector.shape_cast %153 : vector<128xf32> to vector<1x128xf32>
    %175 = vector.broadcast %174 : vector<1x128xf32> to vector<128x128xf32>
    %176 = arith.mulf %173, %175 : vector<128x128xf32>
    %177 = vector.shape_cast %155 : vector<128xf32> to vector<1x128xf32>
    %178 = vector.broadcast %177 : vector<1x128xf32> to vector<128x128xf32>
    %179 = arith.addf %176, %178 : vector<128x128xf32>
    %c0_58 = arith.constant 0 : index
    %c0_59 = arith.constant 0 : index
    %c0_60 = arith.constant 0 : index
    %180 = vector.load %arg12[%c0_58, %c0_59, %c0_60] : memref<2x128x256xbf16, #tpu.memory_space<vmem>>, vector<1x128x256xbf16>
    %181 = vector.shape_cast %180 : vector<1x128x256xbf16> to vector<128x256xbf16>
    %182 = arith.truncf %179 : vector<128x128xf32> to vector<128x128xbf16>
    %cst_61 = arith.constant dense<0.000000e+00> : vector<128x256xf32>
    %183 = tpu.matmul %182, %181, %cst_61 {dimension_numbers = #tpu.dot_dimension_numbers<[1], [0], [0], [1], [0, 0, 1, 1], [], []>} : vector<128x128xbf16>, vector<128x256xbf16>, vector<128x256xf32> -> vector<128x256xf32>
    %c0_62 = arith.constant 0 : index
    %c0_63 = arith.constant 0 : index
    %184 = vector.load %arg13[%c0_62, %c0_63] : memref<2x256xf32, #tpu.memory_space<vmem>>, vector<1x256xf32>
    %185 = vector.shape_cast %184 : vector<1x256xf32> to vector<256xf32>
    %186 = vector.shape_cast %185 : vector<256xf32> to vector<1x256xf32>
    %187 = vector.broadcast %186 : vector<1x256xf32> to vector<128x256xf32>
    %188 = arith.addf %183, %187 : vector<128x256xf32>
    %cst_64 = arith.constant 0.000000e+00 : f32
    %189 = vector.broadcast %cst_64 : f32 to vector<128x256xf32>
    %190 = arith.maximumf %188, %189 : vector<128x256xf32>
    %c0_65 = arith.constant 0 : index
    %c0_66 = arith.constant 0 : index
    %c0_67 = arith.constant 0 : index
    %191 = vector.load %arg14[%c0_65, %c0_66, %c0_67] : memref<2x256x128xbf16, #tpu.memory_space<vmem>>, vector<1x256x128xbf16>
    %192 = vector.shape_cast %191 : vector<1x256x128xbf16> to vector<256x128xbf16>
    %193 = arith.truncf %190 : vector<128x256xf32> to vector<128x256xbf16>
    %cst_68 = arith.constant dense<0.000000e+00> : vector<128x128xf32>
    %194 = tpu.matmul %193, %192, %cst_68 {dimension_numbers = #tpu.dot_dimension_numbers<[1], [0], [0], [1], [0, 0, 1, 1], [], []>} : vector<128x256xbf16>, vector<256x128xbf16>, vector<128x128xf32> -> vector<128x128xf32>
    %c0_69 = arith.constant 0 : index
    %c0_70 = arith.constant 0 : index
    %195 = vector.load %arg15[%c0_69, %c0_70] : memref<2x128xf32, #tpu.memory_space<vmem>>, vector<1x128xf32>
    %196 = vector.shape_cast %195 : vector<1x128xf32> to vector<128xf32>
    %197 = vector.shape_cast %196 : vector<128xf32> to vector<1x128xf32>
    %198 = vector.broadcast %197 : vector<1x128xf32> to vector<128x128xf32>
    %199 = arith.addf %194, %198 : vector<128x128xf32>
    %200 = arith.addf %179, %199 : vector<128x128xf32>
    %c0_71 = arith.constant 0 : index
    %c0_72 = arith.constant 0 : index
    %201 = vector.load %arg16[%c0_71, %c0_72] : memref<2x128xf32, #tpu.memory_space<vmem>>, vector<1x128xf32>
    %202 = vector.shape_cast %201 : vector<1x128xf32> to vector<128xf32>
    %c0_73 = arith.constant 0 : index
    %c0_74 = arith.constant 0 : index
    %203 = vector.load %arg17[%c0_73, %c0_74] : memref<2x128xf32, #tpu.memory_space<vmem>>, vector<1x128xf32>
    %204 = vector.shape_cast %203 : vector<1x128xf32> to vector<128xf32>
    %cst_75 = arith.constant dense<0.000000e+00> : vector<128xf32>
    %205 = vector.multi_reduction <add>, %200, %cst_75 [1] : vector<128x128xf32> to vector<128xf32>
    %206 = vector.shape_cast %205 : vector<128xf32> to vector<128x1xf32>
    %cst_76 = arith.constant 1.280000e+02 : f32
    %207 = vector.broadcast %cst_76 : f32 to vector<128x1xf32>
    %208 = arith.divf %206, %207 : vector<128x1xf32>
    %209 = vector.broadcast %208 : vector<128x1xf32> to vector<128x128xf32>
    %210 = arith.subf %200, %209 : vector<128x128xf32>
    %211 = arith.mulf %210, %210 : vector<128x128xf32>
    %cst_77 = arith.constant dense<0.000000e+00> : vector<128xf32>
    %212 = vector.multi_reduction <add>, %211, %cst_77 [1] : vector<128x128xf32> to vector<128xf32>
    %213 = vector.shape_cast %212 : vector<128xf32> to vector<128x1xf32>
    %cst_78 = arith.constant 1.280000e+02 : f32
    %214 = vector.broadcast %cst_78 : f32 to vector<128x1xf32>
    %215 = arith.divf %213, %214 : vector<128x1xf32>
    %216 = vector.broadcast %208 : vector<128x1xf32> to vector<128x128xf32>
    %217 = arith.subf %200, %216 : vector<128x128xf32>
    %cst_79 = arith.constant 9.99999974E-6 : f32
    %218 = vector.broadcast %cst_79 : f32 to vector<128x1xf32>
    %219 = arith.addf %215, %218 : vector<128x1xf32>
    %220 = math.rsqrt %219 : vector<128x1xf32>
    %221 = vector.broadcast %220 : vector<128x1xf32> to vector<128x128xf32>
    %222 = arith.mulf %217, %221 : vector<128x128xf32>
    %223 = vector.shape_cast %202 : vector<128xf32> to vector<1x128xf32>
    %224 = vector.broadcast %223 : vector<1x128xf32> to vector<128x128xf32>
    %225 = arith.mulf %222, %224 : vector<128x128xf32>
    %226 = vector.shape_cast %204 : vector<128xf32> to vector<1x128xf32>
    %227 = vector.broadcast %226 : vector<1x128xf32> to vector<128x128xf32>
    %228 = arith.addf %225, %227 : vector<128x128xf32>
    %c1 = arith.constant 1 : index
    %c0_80 = arith.constant 0 : index
    %c0_81 = arith.constant 0 : index
    %229 = vector.load %arg6[%c1, %c0_80, %c0_81] : memref<2x128x384xbf16, #tpu.memory_space<vmem>>, vector<1x128x384xbf16>
    %230 = vector.shape_cast %229 : vector<1x128x384xbf16> to vector<128x384xbf16>
    %c1_82 = arith.constant 1 : index
    %c0_83 = arith.constant 0 : index
    %c0_84 = arith.constant 0 : index
    %231 = vector.load %arg8[%c1_82, %c0_83, %c0_84] : memref<2x128x128xbf16, #tpu.memory_space<vmem>>, vector<1x128x128xbf16>
    %232 = vector.shape_cast %231 : vector<1x128x128xbf16> to vector<128x128xbf16>
    %233 = arith.truncf %228 : vector<128x128xf32> to vector<128x128xbf16>
    %cst_85 = arith.constant dense<0.000000e+00> : vector<128x384xf32>
    %234 = tpu.matmul %233, %230, %cst_85 {dimension_numbers = #tpu.dot_dimension_numbers<[1], [0], [0], [1], [0, 0, 1, 1], [], []>} : vector<128x128xbf16>, vector<128x384xbf16>, vector<128x384xf32> -> vector<128x384xf32>
    %c1_86 = arith.constant 1 : index
    %c0_87 = arith.constant 0 : index
    %235 = vector.load %arg7[%c1_86, %c0_87] : memref<2x384xf32, #tpu.memory_space<vmem>>, vector<1x384xf32>
    %236 = vector.shape_cast %235 : vector<1x384xf32> to vector<384xf32>
    %237 = vector.shape_cast %236 : vector<384xf32> to vector<1x384xf32>
    %238 = vector.broadcast %237 : vector<1x384xf32> to vector<128x384xf32>
    %239 = arith.addf %234, %238 : vector<128x384xf32>
    %cst_88 = arith.constant 0.000000e+00 : f32
    %240 = vector.broadcast %cst_88 : f32 to vector<128x128xf32>
    %241 = vector.extract_strided_slice %239 {offsets = [0, 0], sizes = [128, 32], strides = [1, 1]} : vector<128x384xf32> to vector<128x32xf32>
    %242 = vector.shape_cast %241 : vector<128x32xf32> to vector<8x16x32xf32>
    %243 = arith.truncf %242 : vector<8x16x32xf32> to vector<8x16x32xbf16>
    %244 = vector.extract_strided_slice %239 {offsets = [0, 128], sizes = [128, 32], strides = [1, 1]} : vector<128x384xf32> to vector<128x32xf32>
    %245 = vector.shape_cast %244 : vector<128x32xf32> to vector<8x16x32xf32>
    %246 = arith.truncf %245 : vector<8x16x32xf32> to vector<8x16x32xbf16>
    %247 = vector.extract_strided_slice %239 {offsets = [0, 256], sizes = [128, 32], strides = [1, 1]} : vector<128x384xf32> to vector<128x32xf32>
    %248 = vector.shape_cast %247 : vector<128x32xf32> to vector<8x16x32xf32>
    %249 = arith.truncf %248 : vector<8x16x32xf32> to vector<8x16x32xbf16>
    "tpu.trace_start"() <{level = 10 : i32, message = "bqd,bkd->bqk"}> : () -> ()
    %cst_89 = arith.constant dense<0.000000e+00> : vector<8x16x16xf32>
    %250 = tpu.matmul %243, %246, %cst_89 {dimension_numbers = #tpu.dot_dimension_numbers<[2], [2], [1], [1], [0, 0, 0, 1, 1, 1], [0], [0]>} : vector<8x16x32xbf16>, vector<8x16x32xbf16>, vector<8x16x16xf32> -> vector<8x16x16xf32>
    "tpu.trace_stop"() : () -> ()
    %cst_90 = arith.constant 0.176776692 : f32
    %251 = vector.broadcast %cst_90 : f32 to vector<8x16x16xf32>
    %252 = arith.mulf %250, %251 : vector<8x16x16xf32>
    %cst_91 = arith.constant dense<0xFF800000> : vector<8x16xf32>
    %253 = vector.multi_reduction <maximumf>, %252, %cst_91 [2] : vector<8x16x16xf32> to vector<8x16xf32>
    %254 = vector.shape_cast %253 : vector<8x16xf32> to vector<8x16x1xf32>
    %255 = vector.broadcast %254 : vector<8x16x1xf32> to vector<8x16x16xf32>
    %256 = arith.subf %252, %255 : vector<8x16x16xf32>
    %257 = math.exp %256 : vector<8x16x16xf32>
    %cst_92 = arith.constant dense<0.000000e+00> : vector<8x16xf32>
    %258 = vector.multi_reduction <add>, %257, %cst_92 [2] : vector<8x16x16xf32> to vector<8x16xf32>
    %259 = vector.shape_cast %258 : vector<8x16xf32> to vector<8x16x1xf32>
    %260 = tpu.reciprocal %259 {approx = true} : vector<8x16x1xf32> -> vector<8x16x1xf32>
    %261 = vector.broadcast %260 : vector<8x16x1xf32> to vector<8x16x16xf32>
    %262 = arith.mulf %257, %261 : vector<8x16x16xf32>
    %263 = arith.truncf %262 : vector<8x16x16xf32> to vector<8x16x16xbf16>
    "tpu.trace_start"() <{level = 10 : i32, message = "bqk,bkd->bqd"}> : () -> ()
    %cst_93 = arith.constant dense<0.000000e+00> : vector<8x16x32xf32>
    %264 = tpu.matmul %263, %249, %cst_93 {dimension_numbers = #tpu.dot_dimension_numbers<[2], [1], [1], [2], [0, 0, 0, 1, 1, 2], [0], [0]>} : vector<8x16x16xbf16>, vector<8x16x32xbf16>, vector<8x16x32xf32> -> vector<8x16x32xf32>
    "tpu.trace_stop"() : () -> ()
    %265 = vector.shape_cast %264 : vector<8x16x32xf32> to vector<128x32xf32>
    %266 = arith.truncf %265 : vector<128x32xf32> to vector<128x32xbf16>
    %267 = vector.extract_strided_slice %232 {offsets = [0, 0], sizes = [32, 128], strides = [1, 1]} : vector<128x128xbf16> to vector<32x128xbf16>
    %cst_94 = arith.constant dense<0.000000e+00> : vector<128x128xf32>
    %268 = tpu.matmul %266, %267, %cst_94 {dimension_numbers = #tpu.dot_dimension_numbers<[1], [0], [0], [1], [0, 0, 1, 1], [], []>} : vector<128x32xbf16>, vector<32x128xbf16>, vector<128x128xf32> -> vector<128x128xf32>
    %269 = arith.addf %240, %268 : vector<128x128xf32>
    %270 = vector.extract_strided_slice %239 {offsets = [0, 32], sizes = [128, 32], strides = [1, 1]} : vector<128x384xf32> to vector<128x32xf32>
    %271 = vector.shape_cast %270 : vector<128x32xf32> to vector<8x16x32xf32>
    %272 = arith.truncf %271 : vector<8x16x32xf32> to vector<8x16x32xbf16>
    %273 = vector.extract_strided_slice %239 {offsets = [0, 160], sizes = [128, 32], strides = [1, 1]} : vector<128x384xf32> to vector<128x32xf32>
    %274 = vector.shape_cast %273 : vector<128x32xf32> to vector<8x16x32xf32>
    %275 = arith.truncf %274 : vector<8x16x32xf32> to vector<8x16x32xbf16>
    %276 = vector.extract_strided_slice %239 {offsets = [0, 288], sizes = [128, 32], strides = [1, 1]} : vector<128x384xf32> to vector<128x32xf32>
    %277 = vector.shape_cast %276 : vector<128x32xf32> to vector<8x16x32xf32>
    %278 = arith.truncf %277 : vector<8x16x32xf32> to vector<8x16x32xbf16>
    "tpu.trace_start"() <{level = 10 : i32, message = "bqd,bkd->bqk"}> : () -> ()
    %cst_95 = arith.constant dense<0.000000e+00> : vector<8x16x16xf32>
    %279 = tpu.matmul %272, %275, %cst_95 {dimension_numbers = #tpu.dot_dimension_numbers<[2], [2], [1], [1], [0, 0, 0, 1, 1, 1], [0], [0]>} : vector<8x16x32xbf16>, vector<8x16x32xbf16>, vector<8x16x16xf32> -> vector<8x16x16xf32>
    "tpu.trace_stop"() : () -> ()
    %cst_96 = arith.constant 0.176776692 : f32
    %280 = vector.broadcast %cst_96 : f32 to vector<8x16x16xf32>
    %281 = arith.mulf %279, %280 : vector<8x16x16xf32>
    %cst_97 = arith.constant dense<0xFF800000> : vector<8x16xf32>
    %282 = vector.multi_reduction <maximumf>, %281, %cst_97 [2] : vector<8x16x16xf32> to vector<8x16xf32>
    %283 = vector.shape_cast %282 : vector<8x16xf32> to vector<8x16x1xf32>
    %284 = vector.broadcast %283 : vector<8x16x1xf32> to vector<8x16x16xf32>
    %285 = arith.subf %281, %284 : vector<8x16x16xf32>
    %286 = math.exp %285 : vector<8x16x16xf32>
    %cst_98 = arith.constant dense<0.000000e+00> : vector<8x16xf32>
    %287 = vector.multi_reduction <add>, %286, %cst_98 [2] : vector<8x16x16xf32> to vector<8x16xf32>
    %288 = vector.shape_cast %287 : vector<8x16xf32> to vector<8x16x1xf32>
    %289 = tpu.reciprocal %288 {approx = true} : vector<8x16x1xf32> -> vector<8x16x1xf32>
    %290 = vector.broadcast %289 : vector<8x16x1xf32> to vector<8x16x16xf32>
    %291 = arith.mulf %286, %290 : vector<8x16x16xf32>
    %292 = arith.truncf %291 : vector<8x16x16xf32> to vector<8x16x16xbf16>
    "tpu.trace_start"() <{level = 10 : i32, message = "bqk,bkd->bqd"}> : () -> ()
    %cst_99 = arith.constant dense<0.000000e+00> : vector<8x16x32xf32>
    %293 = tpu.matmul %292, %278, %cst_99 {dimension_numbers = #tpu.dot_dimension_numbers<[2], [1], [1], [2], [0, 0, 0, 1, 1, 2], [0], [0]>} : vector<8x16x16xbf16>, vector<8x16x32xbf16>, vector<8x16x32xf32> -> vector<8x16x32xf32>
    "tpu.trace_stop"() : () -> ()
    %294 = vector.shape_cast %293 : vector<8x16x32xf32> to vector<128x32xf32>
    %295 = arith.truncf %294 : vector<128x32xf32> to vector<128x32xbf16>
    %296 = vector.extract_strided_slice %232 {offsets = [32, 0], sizes = [32, 128], strides = [1, 1]} : vector<128x128xbf16> to vector<32x128xbf16>
    %cst_100 = arith.constant dense<0.000000e+00> : vector<128x128xf32>
    %297 = tpu.matmul %295, %296, %cst_100 {dimension_numbers = #tpu.dot_dimension_numbers<[1], [0], [0], [1], [0, 0, 1, 1], [], []>} : vector<128x32xbf16>, vector<32x128xbf16>, vector<128x128xf32> -> vector<128x128xf32>
    %298 = arith.addf %269, %297 : vector<128x128xf32>
    %299 = vector.extract_strided_slice %239 {offsets = [0, 64], sizes = [128, 32], strides = [1, 1]} : vector<128x384xf32> to vector<128x32xf32>
    %300 = vector.shape_cast %299 : vector<128x32xf32> to vector<8x16x32xf32>
    %301 = arith.truncf %300 : vector<8x16x32xf32> to vector<8x16x32xbf16>
    %302 = vector.extract_strided_slice %239 {offsets = [0, 192], sizes = [128, 32], strides = [1, 1]} : vector<128x384xf32> to vector<128x32xf32>
    %303 = vector.shape_cast %302 : vector<128x32xf32> to vector<8x16x32xf32>
    %304 = arith.truncf %303 : vector<8x16x32xf32> to vector<8x16x32xbf16>
    %305 = vector.extract_strided_slice %239 {offsets = [0, 320], sizes = [128, 32], strides = [1, 1]} : vector<128x384xf32> to vector<128x32xf32>
    %306 = vector.shape_cast %305 : vector<128x32xf32> to vector<8x16x32xf32>
    %307 = arith.truncf %306 : vector<8x16x32xf32> to vector<8x16x32xbf16>
    "tpu.trace_start"() <{level = 10 : i32, message = "bqd,bkd->bqk"}> : () -> ()
    %cst_101 = arith.constant dense<0.000000e+00> : vector<8x16x16xf32>
    %308 = tpu.matmul %301, %304, %cst_101 {dimension_numbers = #tpu.dot_dimension_numbers<[2], [2], [1], [1], [0, 0, 0, 1, 1, 1], [0], [0]>} : vector<8x16x32xbf16>, vector<8x16x32xbf16>, vector<8x16x16xf32> -> vector<8x16x16xf32>
    "tpu.trace_stop"() : () -> ()
    %cst_102 = arith.constant 0.176776692 : f32
    %309 = vector.broadcast %cst_102 : f32 to vector<8x16x16xf32>
    %310 = arith.mulf %308, %309 : vector<8x16x16xf32>
    %cst_103 = arith.constant dense<0xFF800000> : vector<8x16xf32>
    %311 = vector.multi_reduction <maximumf>, %310, %cst_103 [2] : vector<8x16x16xf32> to vector<8x16xf32>
    %312 = vector.shape_cast %311 : vector<8x16xf32> to vector<8x16x1xf32>
    %313 = vector.broadcast %312 : vector<8x16x1xf32> to vector<8x16x16xf32>
    %314 = arith.subf %310, %313 : vector<8x16x16xf32>
    %315 = math.exp %314 : vector<8x16x16xf32>
    %cst_104 = arith.constant dense<0.000000e+00> : vector<8x16xf32>
    %316 = vector.multi_reduction <add>, %315, %cst_104 [2] : vector<8x16x16xf32> to vector<8x16xf32>
    %317 = vector.shape_cast %316 : vector<8x16xf32> to vector<8x16x1xf32>
    %318 = tpu.reciprocal %317 {approx = true} : vector<8x16x1xf32> -> vector<8x16x1xf32>
    %319 = vector.broadcast %318 : vector<8x16x1xf32> to vector<8x16x16xf32>
    %320 = arith.mulf %315, %319 : vector<8x16x16xf32>
    %321 = arith.truncf %320 : vector<8x16x16xf32> to vector<8x16x16xbf16>
    "tpu.trace_start"() <{level = 10 : i32, message = "bqk,bkd->bqd"}> : () -> ()
    %cst_105 = arith.constant dense<0.000000e+00> : vector<8x16x32xf32>
    %322 = tpu.matmul %321, %307, %cst_105 {dimension_numbers = #tpu.dot_dimension_numbers<[2], [1], [1], [2], [0, 0, 0, 1, 1, 2], [0], [0]>} : vector<8x16x16xbf16>, vector<8x16x32xbf16>, vector<8x16x32xf32> -> vector<8x16x32xf32>
    "tpu.trace_stop"() : () -> ()
    %323 = vector.shape_cast %322 : vector<8x16x32xf32> to vector<128x32xf32>
    %324 = arith.truncf %323 : vector<128x32xf32> to vector<128x32xbf16>
    %325 = vector.extract_strided_slice %232 {offsets = [64, 0], sizes = [32, 128], strides = [1, 1]} : vector<128x128xbf16> to vector<32x128xbf16>
    %cst_106 = arith.constant dense<0.000000e+00> : vector<128x128xf32>
    %326 = tpu.matmul %324, %325, %cst_106 {dimension_numbers = #tpu.dot_dimension_numbers<[1], [0], [0], [1], [0, 0, 1, 1], [], []>} : vector<128x32xbf16>, vector<32x128xbf16>, vector<128x128xf32> -> vector<128x128xf32>
    %327 = arith.addf %298, %326 : vector<128x128xf32>
    %328 = vector.extract_strided_slice %239 {offsets = [0, 96], sizes = [128, 32], strides = [1, 1]} : vector<128x384xf32> to vector<128x32xf32>
    %329 = vector.shape_cast %328 : vector<128x32xf32> to vector<8x16x32xf32>
    %330 = arith.truncf %329 : vector<8x16x32xf32> to vector<8x16x32xbf16>
    %331 = vector.extract_strided_slice %239 {offsets = [0, 224], sizes = [128, 32], strides = [1, 1]} : vector<128x384xf32> to vector<128x32xf32>
    %332 = vector.shape_cast %331 : vector<128x32xf32> to vector<8x16x32xf32>
    %333 = arith.truncf %332 : vector<8x16x32xf32> to vector<8x16x32xbf16>
    %334 = vector.extract_strided_slice %239 {offsets = [0, 352], sizes = [128, 32], strides = [1, 1]} : vector<128x384xf32> to vector<128x32xf32>
    %335 = vector.shape_cast %334 : vector<128x32xf32> to vector<8x16x32xf32>
    %336 = arith.truncf %335 : vector<8x16x32xf32> to vector<8x16x32xbf16>
    "tpu.trace_start"() <{level = 10 : i32, message = "bqd,bkd->bqk"}> : () -> ()
    %cst_107 = arith.constant dense<0.000000e+00> : vector<8x16x16xf32>
    %337 = tpu.matmul %330, %333, %cst_107 {dimension_numbers = #tpu.dot_dimension_numbers<[2], [2], [1], [1], [0, 0, 0, 1, 1, 1], [0], [0]>} : vector<8x16x32xbf16>, vector<8x16x32xbf16>, vector<8x16x16xf32> -> vector<8x16x16xf32>
    "tpu.trace_stop"() : () -> ()
    %cst_108 = arith.constant 0.176776692 : f32
    %338 = vector.broadcast %cst_108 : f32 to vector<8x16x16xf32>
    %339 = arith.mulf %337, %338 : vector<8x16x16xf32>
    %cst_109 = arith.constant dense<0xFF800000> : vector<8x16xf32>
    %340 = vector.multi_reduction <maximumf>, %339, %cst_109 [2] : vector<8x16x16xf32> to vector<8x16xf32>
    %341 = vector.shape_cast %340 : vector<8x16xf32> to vector<8x16x1xf32>
    %342 = vector.broadcast %341 : vector<8x16x1xf32> to vector<8x16x16xf32>
    %343 = arith.subf %339, %342 : vector<8x16x16xf32>
    %344 = math.exp %343 : vector<8x16x16xf32>
    %cst_110 = arith.constant dense<0.000000e+00> : vector<8x16xf32>
    %345 = vector.multi_reduction <add>, %344, %cst_110 [2] : vector<8x16x16xf32> to vector<8x16xf32>
    %346 = vector.shape_cast %345 : vector<8x16xf32> to vector<8x16x1xf32>
    %347 = tpu.reciprocal %346 {approx = true} : vector<8x16x1xf32> -> vector<8x16x1xf32>
    %348 = vector.broadcast %347 : vector<8x16x1xf32> to vector<8x16x16xf32>
    %349 = arith.mulf %344, %348 : vector<8x16x16xf32>
    %350 = arith.truncf %349 : vector<8x16x16xf32> to vector<8x16x16xbf16>
    "tpu.trace_start"() <{level = 10 : i32, message = "bqk,bkd->bqd"}> : () -> ()
    %cst_111 = arith.constant dense<0.000000e+00> : vector<8x16x32xf32>
    %351 = tpu.matmul %350, %336, %cst_111 {dimension_numbers = #tpu.dot_dimension_numbers<[2], [1], [1], [2], [0, 0, 0, 1, 1, 2], [0], [0]>} : vector<8x16x16xbf16>, vector<8x16x32xbf16>, vector<8x16x32xf32> -> vector<8x16x32xf32>
    "tpu.trace_stop"() : () -> ()
    %352 = vector.shape_cast %351 : vector<8x16x32xf32> to vector<128x32xf32>
    %353 = arith.truncf %352 : vector<128x32xf32> to vector<128x32xbf16>
    %354 = vector.extract_strided_slice %232 {offsets = [96, 0], sizes = [32, 128], strides = [1, 1]} : vector<128x128xbf16> to vector<32x128xbf16>
    %cst_112 = arith.constant dense<0.000000e+00> : vector<128x128xf32>
    %355 = tpu.matmul %353, %354, %cst_112 {dimension_numbers = #tpu.dot_dimension_numbers<[1], [0], [0], [1], [0, 0, 1, 1], [], []>} : vector<128x32xbf16>, vector<32x128xbf16>, vector<128x128xf32> -> vector<128x128xf32>
    %356 = arith.addf %327, %355 : vector<128x128xf32>
    %c1_113 = arith.constant 1 : index
    %c0_114 = arith.constant 0 : index
    %357 = vector.load %arg9[%c1_113, %c0_114] : memref<2x128xf32, #tpu.memory_space<vmem>>, vector<1x128xf32>
    %358 = vector.shape_cast %357 : vector<1x128xf32> to vector<128xf32>
    %359 = vector.shape_cast %358 : vector<128xf32> to vector<1x128xf32>
    %360 = vector.broadcast %359 : vector<1x128xf32> to vector<128x128xf32>
    %361 = arith.addf %356, %360 : vector<128x128xf32>
    %362 = arith.addf %228, %361 : vector<128x128xf32>
    %c1_115 = arith.constant 1 : index
    %c0_116 = arith.constant 0 : index
    %363 = vector.load %arg10[%c1_115, %c0_116] : memref<2x128xf32, #tpu.memory_space<vmem>>, vector<1x128xf32>
    %364 = vector.shape_cast %363 : vector<1x128xf32> to vector<128xf32>
    %c1_117 = arith.constant 1 : index
    %c0_118 = arith.constant 0 : index
    %365 = vector.load %arg11[%c1_117, %c0_118] : memref<2x128xf32, #tpu.memory_space<vmem>>, vector<1x128xf32>
    %366 = vector.shape_cast %365 : vector<1x128xf32> to vector<128xf32>
    %cst_119 = arith.constant dense<0.000000e+00> : vector<128xf32>
    %367 = vector.multi_reduction <add>, %362, %cst_119 [1] : vector<128x128xf32> to vector<128xf32>
    %368 = vector.shape_cast %367 : vector<128xf32> to vector<128x1xf32>
    %cst_120 = arith.constant 1.280000e+02 : f32
    %369 = vector.broadcast %cst_120 : f32 to vector<128x1xf32>
    %370 = arith.divf %368, %369 : vector<128x1xf32>
    %371 = vector.broadcast %370 : vector<128x1xf32> to vector<128x128xf32>
    %372 = arith.subf %362, %371 : vector<128x128xf32>
    %373 = arith.mulf %372, %372 : vector<128x128xf32>
    %cst_121 = arith.constant dense<0.000000e+00> : vector<128xf32>
    %374 = vector.multi_reduction <add>, %373, %cst_121 [1] : vector<128x128xf32> to vector<128xf32>
    %375 = vector.shape_cast %374 : vector<128xf32> to vector<128x1xf32>
    %cst_122 = arith.constant 1.280000e+02 : f32
    %376 = vector.broadcast %cst_122 : f32 to vector<128x1xf32>
    %377 = arith.divf %375, %376 : vector<128x1xf32>
    %378 = vector.broadcast %370 : vector<128x1xf32> to vector<128x128xf32>
    %379 = arith.subf %362, %378 : vector<128x128xf32>
    %cst_123 = arith.constant 9.99999974E-6 : f32
    %380 = vector.broadcast %cst_123 : f32 to vector<128x1xf32>
    %381 = arith.addf %377, %380 : vector<128x1xf32>
    %382 = math.rsqrt %381 : vector<128x1xf32>
    %383 = vector.broadcast %382 : vector<128x1xf32> to vector<128x128xf32>
    %384 = arith.mulf %379, %383 : vector<128x128xf32>
    %385 = vector.shape_cast %364 : vector<128xf32> to vector<1x128xf32>
    %386 = vector.broadcast %385 : vector<1x128xf32> to vector<128x128xf32>
    %387 = arith.mulf %384, %386 : vector<128x128xf32>
    %388 = vector.shape_cast %366 : vector<128xf32> to vector<1x128xf32>
    %389 = vector.broadcast %388 : vector<1x128xf32> to vector<128x128xf32>
    %390 = arith.addf %387, %389 : vector<128x128xf32>
    %c1_124 = arith.constant 1 : index
    %c0_125 = arith.constant 0 : index
    %c0_126 = arith.constant 0 : index
    %391 = vector.load %arg12[%c1_124, %c0_125, %c0_126] : memref<2x128x256xbf16, #tpu.memory_space<vmem>>, vector<1x128x256xbf16>
    %392 = vector.shape_cast %391 : vector<1x128x256xbf16> to vector<128x256xbf16>
    %393 = arith.truncf %390 : vector<128x128xf32> to vector<128x128xbf16>
    %cst_127 = arith.constant dense<0.000000e+00> : vector<128x256xf32>
    %394 = tpu.matmul %393, %392, %cst_127 {dimension_numbers = #tpu.dot_dimension_numbers<[1], [0], [0], [1], [0, 0, 1, 1], [], []>} : vector<128x128xbf16>, vector<128x256xbf16>, vector<128x256xf32> -> vector<128x256xf32>
    %c1_128 = arith.constant 1 : index
    %c0_129 = arith.constant 0 : index
    %395 = vector.load %arg13[%c1_128, %c0_129] : memref<2x256xf32, #tpu.memory_space<vmem>>, vector<1x256xf32>
    %396 = vector.shape_cast %395 : vector<1x256xf32> to vector<256xf32>
    %397 = vector.shape_cast %396 : vector<256xf32> to vector<1x256xf32>
    %398 = vector.broadcast %397 : vector<1x256xf32> to vector<128x256xf32>
    %399 = arith.addf %394, %398 : vector<128x256xf32>
    %cst_130 = arith.constant 0.000000e+00 : f32
    %400 = vector.broadcast %cst_130 : f32 to vector<128x256xf32>
    %401 = arith.maximumf %399, %400 : vector<128x256xf32>
    %c1_131 = arith.constant 1 : index
    %c0_132 = arith.constant 0 : index
    %c0_133 = arith.constant 0 : index
    %402 = vector.load %arg14[%c1_131, %c0_132, %c0_133] : memref<2x256x128xbf16, #tpu.memory_space<vmem>>, vector<1x256x128xbf16>
    %403 = vector.shape_cast %402 : vector<1x256x128xbf16> to vector<256x128xbf16>
    %404 = arith.truncf %401 : vector<128x256xf32> to vector<128x256xbf16>
    %cst_134 = arith.constant dense<0.000000e+00> : vector<128x128xf32>
    %405 = tpu.matmul %404, %403, %cst_134 {dimension_numbers = #tpu.dot_dimension_numbers<[1], [0], [0], [1], [0, 0, 1, 1], [], []>} : vector<128x256xbf16>, vector<256x128xbf16>, vector<128x128xf32> -> vector<128x128xf32>
    %c1_135 = arith.constant 1 : index
    %c0_136 = arith.constant 0 : index
    %406 = vector.load %arg15[%c1_135, %c0_136] : memref<2x128xf32, #tpu.memory_space<vmem>>, vector<1x128xf32>
    %407 = vector.shape_cast %406 : vector<1x128xf32> to vector<128xf32>
    %408 = vector.shape_cast %407 : vector<128xf32> to vector<1x128xf32>
    %409 = vector.broadcast %408 : vector<1x128xf32> to vector<128x128xf32>
    %410 = arith.addf %405, %409 : vector<128x128xf32>
    %411 = arith.addf %390, %410 : vector<128x128xf32>
    %c1_137 = arith.constant 1 : index
    %c0_138 = arith.constant 0 : index
    %412 = vector.load %arg16[%c1_137, %c0_138] : memref<2x128xf32, #tpu.memory_space<vmem>>, vector<1x128xf32>
    %413 = vector.shape_cast %412 : vector<1x128xf32> to vector<128xf32>
    %c1_139 = arith.constant 1 : index
    %c0_140 = arith.constant 0 : index
    %414 = vector.load %arg17[%c1_139, %c0_140] : memref<2x128xf32, #tpu.memory_space<vmem>>, vector<1x128xf32>
    %415 = vector.shape_cast %414 : vector<1x128xf32> to vector<128xf32>
    %cst_141 = arith.constant dense<0.000000e+00> : vector<128xf32>
    %416 = vector.multi_reduction <add>, %411, %cst_141 [1] : vector<128x128xf32> to vector<128xf32>
    %417 = vector.shape_cast %416 : vector<128xf32> to vector<128x1xf32>
    %cst_142 = arith.constant 1.280000e+02 : f32
    %418 = vector.broadcast %cst_142 : f32 to vector<128x1xf32>
    %419 = arith.divf %417, %418 : vector<128x1xf32>
    %420 = vector.broadcast %419 : vector<128x1xf32> to vector<128x128xf32>
    %421 = arith.subf %411, %420 : vector<128x128xf32>
    %422 = arith.mulf %421, %421 : vector<128x128xf32>
    %cst_143 = arith.constant dense<0.000000e+00> : vector<128xf32>
    %423 = vector.multi_reduction <add>, %422, %cst_143 [1] : vector<128x128xf32> to vector<128xf32>
    %424 = vector.shape_cast %423 : vector<128xf32> to vector<128x1xf32>
    %cst_144 = arith.constant 1.280000e+02 : f32
    %425 = vector.broadcast %cst_144 : f32 to vector<128x1xf32>
    %426 = arith.divf %424, %425 : vector<128x1xf32>
    %427 = vector.broadcast %419 : vector<128x1xf32> to vector<128x128xf32>
    %428 = arith.subf %411, %427 : vector<128x128xf32>
    %cst_145 = arith.constant 9.99999974E-6 : f32
    %429 = vector.broadcast %cst_145 : f32 to vector<128x1xf32>
    %430 = arith.addf %426, %429 : vector<128x1xf32>
    %431 = math.rsqrt %430 : vector<128x1xf32>
    %432 = vector.broadcast %431 : vector<128x1xf32> to vector<128x128xf32>
    %433 = arith.mulf %428, %432 : vector<128x128xf32>
    %434 = vector.shape_cast %413 : vector<128xf32> to vector<1x128xf32>
    %435 = vector.broadcast %434 : vector<1x128xf32> to vector<128x128xf32>
    %436 = arith.mulf %433, %435 : vector<128x128xf32>
    %437 = vector.shape_cast %415 : vector<128xf32> to vector<1x128xf32>
    %438 = vector.broadcast %437 : vector<1x128xf32> to vector<128x128xf32>
    %439 = arith.addf %436, %438 : vector<128x128xf32>
    %440 = vector.shape_cast %439 : vector<128x128xf32> to vector<8x16x128xf32>
    %c0_146 = arith.constant 0 : index
    %c0_147 = arith.constant 0 : index
    %c0_148 = arith.constant 0 : index
    %441 = vector.load %arg20[%c0_146, %c0_147, %c0_148] : memref<8x16x128xf32, #tpu.memory_space<vmem>>, vector<8x16x128xf32>
    tpu.vector_store %arg20[%c0_146, %c0_147, %c0_148], %440 {strides = array<i32>} : memref<8x16x128xf32, #tpu.memory_space<vmem>>, vector<8x16x128xf32>,
    %c0_149 = arith.constant 0 : index
    %c0_150 = arith.constant 0 : index
    %442 = vector.load %arg18[%c0_149, %c0_150] : memref<128x128xbf16, #tpu.memory_space<vmem>>, vector<128x128xbf16>
    %443 = arith.truncf %439 : vector<128x128xf32> to vector<128x128xbf16>
    %cst_151 = arith.constant dense<0.000000e+00> : vector<128x128xf32>
    %444 = tpu.matmul %443, %442, %cst_151 {dimension_numbers = #tpu.dot_dimension_numbers<[1], [0], [0], [1], [0, 0, 1, 1], [], []>} : vector<128x128xbf16>, vector<128x128xbf16>, vector<128x128xf32> -> vector<128x128xf32>
    %c0_152 = arith.constant 0 : index
    %c0_153 = arith.constant 0 : index
    %445 = vector.load %arg19[%c0_152, %c0_153] : memref<1x128xf32, #tpu.memory_space<vmem>>, vector<1x128xf32>
    %446 = vector.broadcast %445 : vector<1x128xf32> to vector<128x128xf32>
    %447 = arith.addf %444, %446 : vector<128x128xf32>
    %448 = vector.shape_cast %447 : vector<128x128xf32> to vector<8x16x128xf32>
    %c0_154 = arith.constant 0 : index
    %c0_155 = arith.constant 0 : index
    %c0_156 = arith.constant 0 : index
    %449 = vector.load %arg21[%c0_154, %c0_155, %c0_156] : memref<8x16x128xf32, #tpu.memory_space<vmem>>, vector<8x16x128xf32>
    tpu.vector_store %arg21[%c0_154, %c0_155, %c0_156], %448 {strides = array<i32>} : memref<8x16x128xf32, #tpu.memory_space<vmem>>, vector<8x16x128xf32>,
    return
  }
  func.func @transform_0(%arg0: i32) -> (i32, i32, i32) {
    %c0_i32 = arith.constant 0 : i32
    %c0_i32_0 = arith.constant 0 : i32
    %c0_i32_1 = arith.constant 0 : i32
    return %arg0, %c0_i32, %c0_i32_0 : i32, i32, i32
  }
  func.func @transform_1(%arg0: i32) -> (i32, i32) {
    %c0_i32 = arith.constant 0 : i32
    %c0_i32_0 = arith.constant 0 : i32
    %c0_i32_1 = arith.constant 0 : i32
    return %c0_i32, %c0_i32_0 : i32, i32
  }
  func.func @transform_2(%arg0: i32) -> (i32, i32) {
    %c0_i32 = arith.constant 0 : i32
    %c0_i32_0 = arith.constant 0 : i32
    %c0_i32_1 = arith.constant 0 : i32
    return %c0_i32, %c0_i32_0 : i32, i32
  }
  func.func @transform_3(%arg0: i32) -> (i32, i32) {
    %c0_i32 = arith.constant 0 : i32
    %c0_i32_0 = arith.constant 0 : i32
    %c0_i32_1 = arith.constant 0 : i32
    return %c0_i32, %c0_i32_0 : i32, i32
  }
  func.func @transform_4(%arg0: i32) -> (i32, i32) {
    %c0_i32 = arith.constant 0 : i32
    %c0_i32_0 = arith.constant 0 : i32
    %c0_i32_1 = arith.constant 0 : i32
    return %c0_i32, %c0_i32_0 : i32, i32
  }
  func.func @transform_5(%arg0: i32) -> (i32, i32, i32) {
    %c0_i32 = arith.constant 0 : i32
    %c0_i32_0 = arith.constant 0 : i32
    %c0_i32_1 = arith.constant 0 : i32
    %c0_i32_2 = arith.constant 0 : i32
    return %c0_i32, %c0_i32_0, %c0_i32_1 : i32, i32, i32
  }
  func.func @transform_6(%arg0: i32) -> (i32, i32) {
    %c0_i32 = arith.constant 0 : i32
    %c0_i32_0 = arith.constant 0 : i32
    %c0_i32_1 = arith.constant 0 : i32
    return %c0_i32, %c0_i32_0 : i32, i32
  }
  func.func @transform_7(%arg0: i32) -> (i32, i32, i32) {
    %c0_i32 = arith.constant 0 : i32
    %c0_i32_0 = arith.constant 0 : i32
    %c0_i32_1 = arith.constant 0 : i32
    %c0_i32_2 = arith.constant 0 : i32
    return %c0_i32, %c0_i32_0, %c0_i32_1 : i32, i32, i32
  }
  func.func @transform_8(%arg0: i32) -> (i32, i32) {
    %c0_i32 = arith.constant 0 : i32
    %c0_i32_0 = arith.constant 0 : i32
    %c0_i32_1 = arith.constant 0 : i32
    return %c0_i32, %c0_i32_0 : i32, i32
  }
  func.func @transform_9(%arg0: i32) -> (i32, i32) {
    %c0_i32 = arith.constant 0 : i32
    %c0_i32_0 = arith.constant 0 : i32
    %c0_i32_1 = arith.constant 0 : i32
    return %c0_i32, %c0_i32_0 : i32, i32
  }
  func.func @transform_10(%arg0: i32) -> (i32, i32) {
    %c0_i32 = arith.constant 0 : i32
    %c0_i32_0 = arith.constant 0 : i32
    %c0_i32_1 = arith.constant 0 : i32
    return %c0_i32, %c0_i32_0 : i32, i32
  }
  func.func @transform_11(%arg0: i32) -> (i32, i32, i32) {
    %c0_i32 = arith.constant 0 : i32
    %c0_i32_0 = arith.constant 0 : i32
    %c0_i32_1 = arith.constant 0 : i32
    %c0_i32_2 = arith.constant 0 : i32
    return %c0_i32, %c0_i32_0, %c0_i32_1 : i32, i32, i32
  }
  func.func @transform_12(%arg0: i32) -> (i32, i32) {
    %c0_i32 = arith.constant 0 : i32
    %c0_i32_0 = arith.constant 0 : i32
    %c0_i32_1 = arith.constant 0 : i32
    return %c0_i32, %c0_i32_0 : i32, i32
  }
  func.func @transform_13(%arg0: i32) -> (i32, i32, i32) {
    %c0_i32 = arith.constant 0 : i32
    %c0_i32_0 = arith.constant 0 : i32
    %c0_i32_1 = arith.constant 0 : i32
    %c0_i32_2 = arith.constant 0 : i32
    return %c0_i32, %c0_i32_0, %c0_i32_1 : i32, i32, i32
  }
  func.func @transform_14(%arg0: i32) -> (i32, i32) {
    %c0_i32 = arith.constant 0 : i32
    %c0_i32_0 = arith.constant 0 : i32
    %c0_i32_1 = arith.constant 0 : i32
    return %c0_i32, %c0_i32_0 : i32, i32
  }
  func.func @transform_15(%arg0: i32) -> (i32, i32) {
    %c0_i32 = arith.constant 0 : i32
    %c0_i32_0 = arith.constant 0 : i32
    %c0_i32_1 = arith.constant 0 : i32
    return %c0_i32, %c0_i32_0 : i32, i32
  }
  func.func @transform_16(%arg0: i32) -> (i32, i32) {
    %c0_i32 = arith.constant 0 : i32
    %c0_i32_0 = arith.constant 0 : i32
    %c0_i32_1 = arith.constant 0 : i32
    return %c0_i32, %c0_i32_0 : i32, i32
  }
  func.func @transform_17(%arg0: i32) -> (i32, i32) {
    %c0_i32 = arith.constant 0 : i32
    %c0_i32_0 = arith.constant 0 : i32
    %c0_i32_1 = arith.constant 0 : i32
    return %c0_i32, %c0_i32_0 : i32, i32
  }
  func.func @transform_18(%arg0: i32) -> (i32, i32) {
    %c0_i32 = arith.constant 0 : i32
    %c0_i32_0 = arith.constant 0 : i32
    %c0_i32_1 = arith.constant 0 : i32
    return %c0_i32, %c0_i32_0 : i32, i32
  }
  func.func @transform_19(%arg0: i32) -> (i32, i32, i32) {
    %c0_i32 = arith.constant 0 : i32
    %c0_i32_0 = arith.constant 0 : i32
    %c0_i32_1 = arith.constant 0 : i32
    return %arg0, %c0_i32, %c0_i32_0 : i32, i32, i32
  }
  func.func @transform_20(%arg0: i32) -> (i32, i32, i32) {
    %c0_i32 = arith.constant 0 : i32
    %c0_i32_0 = arith.constant 0 : i32
    %c0_i32_1 = arith.constant 0 : i32
    return %arg0, %c0_i32, %c0_i32_0 : i32, i32, i32
  }
}

</mosaic_0001>

<llo_original>
// kernel: tpu_custom_call.1
$region0: #{tpu_custom_call.1}
  #allocation0 [shape = 'u32[]', space=smem, size = 0x4, offset = 0x4, fixed_abs, tag = 'smem constant byte address 0x4 - core index']
  #allocation1 [shape = 'u32[72,128]{1,0:T(1,128)}', space=vmem, size = 0x9000, scoped, tag = 'internal scratch']
  %s0 = inlined_call_operand.hbm [shape: f32[16,16,32], index: 0, kind: input, shape index: {}]
  %s1 = inlined_call_operand.hbm [shape: bf16[32,128], index: 1, kind: input, shape index: {}]
  %s2 = inlined_call_operand.hbm [shape: f32[1,128], index: 2, kind: input, shape index: {}]
  %s3 = inlined_call_operand.hbm [shape: bf16[128,128], index: 3, kind: input, shape index: {}]
  %s4 = inlined_call_operand.hbm [shape: f32[1,128], index: 4, kind: input, shape index: {}]
  %s5 = inlined_call_operand.hbm [shape: bf16[2,128,384], index: 5, kind: input, shape index: {}]
  %s6 = inlined_call_operand.hbm [shape: f32[2,384], index: 6, kind: input, shape index: {}]
  %s7 = inlined_call_operand.hbm [shape: bf16[2,128,128], index: 7, kind: input, shape index: {}]
  %s8 = inlined_call_operand.vmem [shape: f32[2,128], index: 8, kind: input, shape index: {}]
  %s9 = inlined_call_operand.vmem [shape: f32[2,128], index: 9, kind: input, shape index: {}]
  %s10 = inlined_call_operand.hbm [shape: f32[2,128], index: 10, kind: input, shape index: {}]
  %s11 = inlined_call_operand.hbm [shape: bf16[2,128,256], index: 11, kind: input, shape index: {}]
  %s12 = inlined_call_operand.vmem [shape: f32[2,256], index: 12, kind: input, shape index: {}]
  %s13 = inlined_call_operand.hbm [shape: bf16[2,256,128], index: 13, kind: input, shape index: {}]
  %s14 = inlined_call_operand.vmem [shape: f32[2,128], index: 14, kind: input, shape index: {}]
  %s15 = inlined_call_operand.vmem [shape: f32[2,128], index: 15, kind: input, shape index: {}]
  %s16 = inlined_call_operand.vmem [shape: f32[2,128], index: 16, kind: input, shape index: {}]
  %s17 = inlined_call_operand.hbm [shape: bf16[128,128], index: 17, kind: input, shape index: {}]
  %s18 = inlined_call_operand.vmem [shape: f32[1,128], index: 18, kind: input, shape index: {}]
  %s19 = inlined_call_operand.hbm [shape: f32[16,16,128], index: 19, kind: output, shape index: {0}]
  %s20 = inlined_call_operand.hbm [shape: f32[16,16,128], index: 20, kind: output, shape index: {1}]
  %21 = xla_tuple %s19, %s20
  %s22 = sld [smem:[#allocation0]]
  $region165: #{tpu_custom_call.1} parent=0
    _
  %s24 = ssub.s32 1, %s22
  %s25 = scalar_select 0, %s24, %s22
  $region1: #{tpu_custom_call.1} parent=0
    #allocation2 [shape = 'u8[131072]{0}', space=vmem, size = 0x20000, scoped, tag = 'input window, operand 0']
    #allocation3 [shape = 's32[2]{0}', space=sflag, size = 0x8, scoped, tag = 'scoped memory for tpu_custom_call.1']
    #allocation4 [shape = 's32[2]{0}', space=sflag, size = 0x8, scoped, tag = 'scoped memory for tpu_custom_call.1']
    #allocation5 [shape = 'u8[8192]{0}', space=vmem, size = 0x2000, scoped, tag = 'input window, operand 1, single buffered']
    #allocation6 [shape = 's32[1]{0}', space=sflag, size = 0x4, scoped, tag = 'scoped memory for tpu_custom_call.1']
    #allocation7 [shape = 'u8[512]{0}', space=vmem, size = 0x400, scoped, tag = 'input window, operand 2, single buffered']
    #allocation8 [shape = 'u8[32768]{0}', space=vmem, size = 0x8000, scoped, tag = 'input window, operand 3, single buffered']
    #allocation9 [shape = 's32[1]{0}', space=sflag, size = 0x4, scoped, tag = 'scoped memory for tpu_custom_call.1']
    #allocation10 [shape = 'u8[512]{0}', space=vmem, size = 0x400, scoped, tag = 'input window, operand 4, single buffered']
    #allocation11 [shape = 'u8[196608]{0}', space=vmem, size = 0x30000, scoped, tag = 'input window, operand 5, single buffered']
    #allocation12 [shape = 's32[1]{0}', space=sflag, size = 0x4, scoped, tag = 'scoped memory for tpu_custom_call.1']
    #allocation13 [shape = 'u8[3072]{0}', space=vmem, size = 0xc00, scoped, tag = 'input window, operand 6, single buffered']
    #allocation14 [shape = 'u8[65536]{0}', space=vmem, size = 0x10000, scoped, tag = 'input window, operand 7, single buffered']
    #allocation15 [shape = 's32[1]{0}', space=sflag, size = 0x4, scoped, tag = 'scoped memory for tpu_custom_call.1']
    #allocation16 [shape = 'u8[1024]{0}', space=vmem, size = 0x400, scoped, tag = 'input window, operand 10, single buffered']
    #allocation17 [shape = 'u8[131072]{0}', space=vmem, size = 0x20000, scoped, tag = 'input window, operand 11, single buffered']
    #allocation18 [shape = 's32[1]{0}', space=sflag, size = 0x4, scoped, tag = 'scoped memory for tpu_custom_call.1']
    #allocation19 [shape = 'u8[131072]{0}', space=vmem, size = 0x20000, scoped, tag = 'input window, operand 13, single buffered']
    #allocation20 [shape = 'u8[32768]{0}', space=vmem, size = 0x8000, scoped, tag = 'input window, operand 17, single buffered']
    #allocation21 [shape = 's32[1]{0}', space=sflag, size = 0x4, scoped, tag = 'scoped memory for tpu_custom_call.1']
    #allocation22 [shape = 'u8[131072]{0}', space=vmem, size = 0x20000, scoped, tag = 'output window, operand 0']
    #allocation23 [shape = 'u8[131072]{0}', space=vmem, size = 0x20000, scoped, tag = 'output window, operand 1']
    #allocation24 [shape = 's32[2]{0}', space=sflag, size = 0x8, scoped, tag = 'scoped memory for tpu_custom_call.1']
    %26 = vsyncpa [#allocation3], 0
    %s27 = scalar_lea.sflag [#allocation3], 1
    %28 = vsyncpa %s27, 0
    %29 = vsyncpa [#allocation6], 0
    %30 = vsyncpa [#allocation9], 0
    %31 = vsyncpa [#allocation12], 0
    %32 = vsyncpa [#allocation15], 0
    %33 = vsyncpa [#allocation18], 0
    %34 = vsyncpa [#allocation21], 0
    %35 = vsyncpa [#allocation4], 0
    %s36 = scalar_lea.sflag [#allocation4], 1
    %37 = vsyncpa %s36, 0
    %38 = vsyncpa [#allocation24], 0
    %s39 = scalar_lea.sflag [#allocation24], 1
    %40 = vsyncpa %s39, 0
    loop: start=0, step=1, limit=4
    $region2: #{tpu_custom_call.1} parent=1 // loop_pre_header
      _
    $region3: #{tpu_custom_call.1} parent=1 // loop_header
      %s42 = sphi 0, %s46
      %p43 = scmp.ge.s32.totalorder %s42, 4
      %s52 = sphi 0, %s54
      %s55 = sphi 0, %s52
      %s56 = sphi 0, %s55
      %s72 = sphi 0, %s56
      %s76 = sphi 0, %s76
      %s78 = sphi 0, %s76
      %s79 = sphi 0, %s78
      %s93 = sphi 0, %s79
      %s97 = sphi 0, %s97
      %s99 = sphi 0, %s97
      %s100 = sphi 0, %s99
      %s114 = sphi 0, %s100
      %s118 = sphi 0, %s118
      %s120 = sphi 0, %s118
      %s121 = sphi 0, %s120
      %s135 = sphi 0, %s121
      %s139 = sphi 0, %s139
      %s141 = sphi 0, %s139
      %s142 = sphi 0, %s141
      %s156 = sphi 0, %s142
      %s160 = sphi 0, %s160
      %s162 = sphi 0, %s160
      %s163 = sphi 0, %s162
      %s177 = sphi 0, %s163
      %s181 = sphi 0, %s181
      %s183 = sphi 0, %s181
      %s184 = sphi 0, %s183
      %s198 = sphi 0, %s184
      %s202 = sphi 0, %s202
      %s204 = sphi 0, %s202
      %s205 = sphi 0, %s204
      %s219 = sphi 0, %s205
      %s223 = sphi 0, %s223
      %s225 = sphi 0, %s223
      %s226 = sphi 0, %s225
      %s240 = sphi 0, %s226
      %s244 = sphi 0, %s244
      %s246 = sphi 0, %s244
      %s247 = sphi 0, %s246
      %s261 = sphi 0, %s247
      %s265 = sphi 0, %s265
      %s267 = sphi 0, %s265
      %s268 = sphi 0, %s267
      %s282 = sphi 0, %s268
      %s286 = sphi 0, %s286
      %s288 = sphi 0, %s286
      %s289 = sphi 0, %s288
      %s303 = sphi 0, %s289
      %s307 = sphi 0, %s307
      %s309 = sphi 0, %s307
      %s310 = sphi 0, %s309
      %s324 = sphi 0, %s310
      %s328 = sphi 0, %s328
      %s330 = sphi 0, %s328
      %s331 = sphi 0, %s330
      %s345 = sphi 0, %s331
      %s349 = sphi 0, %s349
      %s351 = sphi 0, %s349
      %s352 = sphi 0, %s351
      %s366 = sphi 0, %s352
      %s370 = sphi 0, %s370
      %s372 = sphi 0, %s370
      %s373 = sphi 0, %s372
      %s387 = sphi 0, %s373
      %s391 = sphi 0, %s391
      %s393 = sphi 0, %s391
      %s394 = sphi 0, %s393
      %s408 = sphi 0, %s394
      %s412 = sphi 0, %s412
      %s414 = sphi 0, %s412
      %s415 = sphi 0, %s414
      %s429 = sphi 0, %s415
      %s433 = sphi 0, %s433
      %s435 = sphi 0, %s433
      %s436 = sphi 0, %s435
      %s450 = sphi 0, %s436
      %s456 = sphi 0, %s458
      %s459 = sphi 0, %s456
      %s460 = sphi 0, %s459
      %s476 = sphi 0, %s460
      %s482 = sphi 0, %s484
      %s485 = sphi 0, %s482
      %s486 = sphi 0, %s485
      %s502 = sphi 0, %s486
    $region4: #{tpu_custom_call.1} parent=1 // loop_header_branch
      %45 = sbr.rel (%p43) target = $region8
    $region5: #{tpu_custom_call.1} parent=1 // loop_body
      %s47 = ssub.s32 %s42, 1
      %s48 = ssub.s32 %s42, 2
      %s49 = sadd.s32 %s42, 1
      %s50 = ssub.s32 %s42, %s49
      %p51 = scmp.eq.s32.totalorder %s50, 0
      %s53 = sadd.s32 %s52, 1
      %s54 = scalar_select %p51, %s52, %s53
      %p57 = pneg %p51
      %p58 = scmp.eq.s32.totalorder %s42, 1
      %p59 = por %p57, %p58
      %p60 = scmp.ne.s32.totalorder %s52, %s55
      %p61 = scmp.eq.s32.totalorder %s42, 0
      %p62 = por %p60, %p61
      %p63 = scmp.ne.s32.totalorder %s52, %s55
      %p64 = scmp.eq.s32.totalorder %s47, 1
      %p65 = por %p63, %p64
      %p66 = scmp.ne.s32.totalorder %s55, %s56
      %p67 = scmp.eq.s32.totalorder %s47, 0
      %p68 = por %p66, %p67
      %p69 = scmp.ne.s32.totalorder %s55, %s56
      %p70 = scmp.eq.s32.totalorder %s48, 1
      %p71 = por %p69, %p70
      %p73 = scmp.ne.s32.totalorder %s56, %s72
      %p74 = scmp.eq.s32.totalorder %s48, 0
      %p75 = por %p73, %p74
      %s77 = sadd.s32 %s76, 1
      %p80 = scmp.eq.s32.totalorder %s42, 1
      %p81 = scmp.ne.s32.totalorder %s76, %s78
      %p82 = scmp.eq.s32.totalorder %s42, 0
      %p83 = por %p81, %p82
      %p84 = scmp.ne.s32.totalorder %s76, %s78
      %p85 = scmp.eq.s32.totalorder %s47, 1
      %p86 = por %p84, %p85
      %p87 = scmp.ne.s32.totalorder %s78, %s79
      %p88 = scmp.eq.s32.totalorder %s47, 0
      %p89 = por %p87, %p88
      %p90 = scmp.ne.s32.totalorder %s78, %s79
      %p91 = scmp.eq.s32.totalorder %s48, 1
      %p92 = por %p90, %p91
      %p94 = scmp.ne.s32.totalorder %s79, %s93
      %p95 = scmp.eq.s32.totalorder %s48, 0
      %p96 = por %p94, %p95
      %s98 = sadd.s32 %s97, 1
      %p101 = scmp.eq.s32.totalorder %s42, 1
      %p102 = scmp.ne.s32.totalorder %s97, %s99
      %p103 = scmp.eq.s32.totalorder %s42, 0
      %p104 = por %p102, %p103
      %p105 = scmp.ne.s32.totalorder %s97, %s99
      %p106 = scmp.eq.s32.totalorder %s47, 1
      %p107 = por %p105, %p106
      %p108 = scmp.ne.s32.totalorder %s99, %s100
      %p109 = scmp.eq.s32.totalorder %s47, 0
      %p110 = por %p108, %p109
      %p111 = scmp.ne.s32.totalorder %s99, %s100
      %p112 = scmp.eq.s32.totalorder %s48, 1
      %p113 = por %p111, %p112
      %p115 = scmp.ne.s32.totalorder %s100, %s114
      %p116 = scmp.eq.s32.totalorder %s48, 0
      %p117 = por %p115, %p116
      %s119 = sadd.s32 %s118, 1
      %p122 = scmp.eq.s32.totalorder %s42, 1
      %p123 = scmp.ne.s32.totalorder %s118, %s120
      %p124 = scmp.eq.s32.totalorder %s42, 0
      %p125 = por %p123, %p124
      %p126 = scmp.ne.s32.totalorder %s118, %s120
      %p127 = scmp.eq.s32.totalorder %s47, 1
      %p128 = por %p126, %p127
      %p129 = scmp.ne.s32.totalorder %s120, %s121
      %p130 = scmp.eq.s32.totalorder %s47, 0
      %p131 = por %p129, %p130
      %p132 = scmp.ne.s32.totalorder %s120, %s121
      %p133 = scmp.eq.s32.totalorder %s48, 1
      %p134 = por %p132, %p133
      %p136 = scmp.ne.s32.totalorder %s121, %s135
      %p137 = scmp.eq.s32.totalorder %s48, 0
      %p138 = por %p136, %p137
      %s140 = sadd.s32 %s139, 1
      %p143 = scmp.eq.s32.totalorder %s42, 1
      %p144 = scmp.ne.s32.totalorder %s139, %s141
      %p145 = scmp.eq.s32.totalorder %s42, 0
      %p146 = por %p144, %p145
      %p147 = scmp.ne.s32.totalorder %s139, %s141
      %p148 = scmp.eq.s32.totalorder %s47, 1
      %p149 = por %p147, %p148
      %p150 = scmp.ne.s32.totalorder %s141, %s142
      %p151 = scmp.eq.s32.totalorder %s47, 0
      %p152 = por %p150, %p151
      %p153 = scmp.ne.s32.totalorder %s141, %s142
      %p154 = scmp.eq.s32.totalorder %s48, 1
      %p155 = por %p153, %p154
      %p157 = scmp.ne.s32.totalorder %s142, %s156
      %p158 = scmp.eq.s32.totalorder %s48, 0
      %p159 = por %p157, %p158
      %s161 = sadd.s32 %s160, 1
      %p164 = scmp.eq.s32.totalorder %s42, 1
      %p165 = scmp.ne.s32.totalorder %s160, %s162
      %p166 = scmp.eq.s32.totalorder %s42, 0
      %p167 = por %p165, %p166
      %p168 = scmp.ne.s32.totalorder %s160, %s162
      %p169 = scmp.eq.s32.totalorder %s47, 1
      %p170 = por %p168, %p169
      %p171 = scmp.ne.s32.totalorder %s162, %s163
      %p172 = scmp.eq.s32.totalorder %s47, 0
      %p173 = por %p171, %p172
      %p174 = scmp.ne.s32.totalorder %s162, %s163
      %p175 = scmp.eq.s32.totalorder %s48, 1
      %p176 = por %p174, %p175
      %p178 = scmp.ne.s32.totalorder %s163, %s177
      %p179 = scmp.eq.s32.totalorder %s48, 0
      %p180 = por %p178, %p179
      %s182 = sadd.s32 %s181, 1
      %p185 = scmp.eq.s32.totalorder %s42, 1
      %p186 = scmp.ne.s32.totalorder %s181, %s183
      %p187 = scmp.eq.s32.totalorder %s42, 0
      %p188 = por %p186, %p187
      %p189 = scmp.ne.s32.totalorder %s181, %s183
      %p190 = scmp.eq.s32.totalorder %s47, 1
      %p191 = por %p189, %p190
      %p192 = scmp.ne.s32.totalorder %s183, %s184
      %p193 = scmp.eq.s32.totalorder %s47, 0
      %p194 = por %p192, %p193
      %p195 = scmp.ne.s32.totalorder %s183, %s184
      %p196 = scmp.eq.s32.totalorder %s48, 1
      %p197 = por %p195, %p196
      %p199 = scmp.ne.s32.totalorder %s184, %s198
      %p200 = scmp.eq.s32.totalorder %s48, 0
      %p201 = por %p199, %p200
      %s203 = sadd.s32 %s202, 1
      %p206 = scmp.eq.s32.totalorder %s42, 1
      %p207 = scmp.ne.s32.totalorder %s202, %s204
      %p208 = scmp.eq.s32.totalorder %s42, 0
      %p209 = por %p207, %p208
      %p210 = scmp.ne.s32.totalorder %s202, %s204
      %p211 = scmp.eq.s32.totalorder %s47, 1
      %p212 = por %p210, %p211
      %p213 = scmp.ne.s32.totalorder %s204, %s205
      %p214 = scmp.eq.s32.totalorder %s47, 0
      %p215 = por %p213, %p214
      %p216 = scmp.ne.s32.totalorder %s204, %s205
      %p217 = scmp.eq.s32.totalorder %s48, 1
      %p218 = por %p216, %p217
      %p220 = scmp.ne.s32.totalorder %s205, %s219
      %p221 = scmp.eq.s32.totalorder %s48, 0
      %p222 = por %p220, %p221
      %s224 = sadd.s32 %s223, 1
      %p227 = scmp.eq.s32.totalorder %s42, 1
      %p228 = scmp.ne.s32.totalorder %s223, %s225
      %p229 = scmp.eq.s32.totalorder %s42, 0
      %p230 = por %p228, %p229
      %p231 = scmp.ne.s32.totalorder %s223, %s225
      %p232 = scmp.eq.s32.totalorder %s47, 1
      %p233 = por %p231, %p232
      %p234 = scmp.ne.s32.totalorder %s225, %s226
      %p235 = scmp.eq.s32.totalorder %s47, 0
      %p236 = por %p234, %p235
      %p237 = scmp.ne.s32.totalorder %s225, %s226
      %p238 = scmp.eq.s32.totalorder %s48, 1
      %p239 = por %p237, %p238
      %p241 = scmp.ne.s32.totalorder %s226, %s240
      %p242 = scmp.eq.s32.totalorder %s48, 0
      %p243 = por %p241, %p242
      %s245 = sadd.s32 %s244, 1
      %p248 = scmp.eq.s32.totalorder %s42, 1
      %p249 = scmp.ne.s32.totalorder %s244, %s246
      %p250 = scmp.eq.s32.totalorder %s42, 0
      %p251 = por %p249, %p250
      %p252 = scmp.ne.s32.totalorder %s244, %s246
      %p253 = scmp.eq.s32.totalorder %s47, 1
      %p254 = por %p252, %p253
      %p255 = scmp.ne.s32.totalorder %s246, %s247
      %p256 = scmp.eq.s32.totalorder %s47, 0
      %p257 = por %p255, %p256
      %p258 = scmp.ne.s32.totalorder %s246, %s247
      %p259 = scmp.eq.s32.totalorder %s48, 1
      %p260 = por %p258, %p259
      %p262 = scmp.ne.s32.totalorder %s247, %s261
      %p263 = scmp.eq.s32.totalorder %s48, 0
      %p264 = por %p262, %p263
      %s266 = sadd.s32 %s265, 1
      %p269 = scmp.eq.s32.totalorder %s42, 1
      %p270 = scmp.ne.s32.totalorder %s265, %s267
      %p271 = scmp.eq.s32.totalorder %s42, 0
      %p272 = por %p270, %p271
      %p273 = scmp.ne.s32.totalorder %s265, %s267
      %p274 = scmp.eq.s32.totalorder %s47, 1
      %p275 = por %p273, %p274
      %p276 = scmp.ne.s32.totalorder %s267, %s268
      %p277 = scmp.eq.s32.totalorder %s47, 0
      %p278 = por %p276, %p277
      %p279 = scmp.ne.s32.totalorder %s267, %s268
      %p280 = scmp.eq.s32.totalorder %s48, 1
      %p281 = por %p279, %p280
      %p283 = scmp.ne.s32.totalorder %s268, %s282
      %p284 = scmp.eq.s32.totalorder %s48, 0
      %p285 = por %p283, %p284
      %s287 = sadd.s32 %s286, 1
      %p290 = scmp.eq.s32.totalorder %s42, 1
      %p291 = scmp.ne.s32.totalorder %s286, %s288
      %p292 = scmp.eq.s32.totalorder %s42, 0
      %p293 = por %p291, %p292
      %p294 = scmp.ne.s32.totalorder %s286, %s288
      %p295 = scmp.eq.s32.totalorder %s47, 1
      %p296 = por %p294, %p295
      %p297 = scmp.ne.s32.totalorder %s288, %s289
      %p298 = scmp.eq.s32.totalorder %s47, 0
      %p299 = por %p297, %p298
      %p300 = scmp.ne.s32.totalorder %s288, %s289
      %p301 = scmp.eq.s32.totalorder %s48, 1
      %p302 = por %p300, %p301
      %p304 = scmp.ne.s32.totalorder %s289, %s303
      %p305 = scmp.eq.s32.totalorder %s48, 0
      %p306 = por %p304, %p305
      %s308 = sadd.s32 %s307, 1
      %p311 = scmp.eq.s32.totalorder %s42, 1
      %p312 = scmp.ne.s32.totalorder %s307, %s309
      %p313 = scmp.eq.s32.totalorder %s42, 0
      %p314 = por %p312, %p313
      %p315 = scmp.ne.s32.totalorder %s307, %s309
      %p316 = scmp.eq.s32.totalorder %s47, 1
      %p317 = por %p315, %p316
      %p318 = scmp.ne.s32.totalorder %s309, %s310
      %p319 = scmp.eq.s32.totalorder %s47, 0
      %p320 = por %p318, %p319
      %p321 = scmp.ne.s32.totalorder %s309, %s310
      %p322 = scmp.eq.s32.totalorder %s48, 1
      %p323 = por %p321, %p322
      %p325 = scmp.ne.s32.totalorder %s310, %s324
      %p326 = scmp.eq.s32.totalorder %s48, 0
      %p327 = por %p325, %p326
      %s329 = sadd.s32 %s328, 1
      %p332 = scmp.eq.s32.totalorder %s42, 1
      %p333 = scmp.ne.s32.totalorder %s328, %s330
      %p334 = scmp.eq.s32.totalorder %s42, 0
      %p335 = por %p333, %p334
      %p336 = scmp.ne.s32.totalorder %s328, %s330
      %p337 = scmp.eq.s32.totalorder %s47, 1
      %p338 = por %p336, %p337
      %p339 = scmp.ne.s32.totalorder %s330, %s331
      %p340 = scmp.eq.s32.totalorder %s47, 0
      %p341 = por %p339, %p340
      %p342 = scmp.ne.s32.totalorder %s330, %s331
      %p343 = scmp.eq.s32.totalorder %s48, 1
      %p344 = por %p342, %p343
      %p346 = scmp.ne.s32.totalorder %s331, %s345
      %p347 = scmp.eq.s32.totalorder %s48, 0
      %p348 = por %p346, %p347
      %s350 = sadd.s32 %s349, 1
      %p353 = scmp.eq.s32.totalorder %s42, 1
      %p354 = scmp.ne.s32.totalorder %s349, %s351
      %p355 = scmp.eq.s32.totalorder %s42, 0
      %p356 = por %p354, %p355
      %p357 = scmp.ne.s32.totalorder %s349, %s351
      %p358 = scmp.eq.s32.totalorder %s47, 1
      %p359 = por %p357, %p358
      %p360 = scmp.ne.s32.totalorder %s351, %s352
      %p361 = scmp.eq.s32.totalorder %s47, 0
      %p362 = por %p360, %p361
      %p363 = scmp.ne.s32.totalorder %s351, %s352
      %p364 = scmp.eq.s32.totalorder %s48, 1
      %p365 = por %p363, %p364
      %p367 = scmp.ne.s32.totalorder %s352, %s366
      %p368 = scmp.eq.s32.totalorder %s48, 0
      %p369 = por %p367, %p368
      %s371 = sadd.s32 %s370, 1
      %p374 = scmp.eq.s32.totalorder %s42, 1
      %p375 = scmp.ne.s32.totalorder %s370, %s372
      %p376 = scmp.eq.s32.totalorder %s42, 0
      %p377 = por %p375, %p376
      %p378 = scmp.ne.s32.totalorder %s370, %s372
      %p379 = scmp.eq.s32.totalorder %s47, 1
      %p380 = por %p378, %p379
      %p381 = scmp.ne.s32.totalorder %s372, %s373
      %p382 = scmp.eq.s32.totalorder %s47, 0
      %p383 = por %p381, %p382
      %p384 = scmp.ne.s32.totalorder %s372, %s373
      %p385 = scmp.eq.s32.totalorder %s48, 1
      %p386 = por %p384, %p385
      %p388 = scmp.ne.s32.totalorder %s373, %s387
      %p389 = scmp.eq.s32.totalorder %s48, 0
      %p390 = por %p388, %p389
      %s392 = sadd.s32 %s391, 1
      %p395 = scmp.eq.s32.totalorder %s42, 1
      %p396 = scmp.ne.s32.totalorder %s391, %s393
      %p397 = scmp.eq.s32.totalorder %s42, 0
      %p398 = por %p396, %p397
      %p399 = scmp.ne.s32.totalorder %s391, %s393
      %p400 = scmp.eq.s32.totalorder %s47, 1
      %p401 = por %p399, %p400
      %p402 = scmp.ne.s32.totalorder %s393, %s394
      %p403 = scmp.eq.s32.totalorder %s47, 0
      %p404 = por %p402, %p403
      %p405 = scmp.ne.s32.totalorder %s393, %s394
      %p406 = scmp.eq.s32.totalorder %s48, 1
      %p407 = por %p405, %p406
      %p409 = scmp.ne.s32.totalorder %s394, %s408
      %p410 = scmp.eq.s32.totalorder %s48, 0
      %p411 = por %p409, %p410
      %s413 = sadd.s32 %s412, 1
      %p416 = scmp.eq.s32.totalorder %s42, 1
      %p417 = scmp.ne.s32.totalorder %s412, %s414
      %p418 = scmp.eq.s32.totalorder %s42, 0
      %p419 = por %p417, %p418
      %p420 = scmp.ne.s32.totalorder %s412, %s414
      %p421 = scmp.eq.s32.totalorder %s47, 1
      %p422 = por %p420, %p421
      %p423 = scmp.ne.s32.totalorder %s414, %s415
      %p424 = scmp.eq.s32.totalorder %s47, 0
      %p425 = por %p423, %p424
      %p426 = scmp.ne.s32.totalorder %s414, %s415
      %p427 = scmp.eq.s32.totalorder %s48, 1
      %p428 = por %p426, %p427
      %p430 = scmp.ne.s32.totalorder %s415, %s429
      %p431 = scmp.eq.s32.totalorder %s48, 0
      %p432 = por %p430, %p431
      %s434 = sadd.s32 %s433, 1
      %p437 = scmp.eq.s32.totalorder %s42, 1
      %p438 = scmp.ne.s32.totalorder %s433, %s435
      %p439 = scmp.eq.s32.totalorder %s42, 0
      %p440 = por %p438, %p439
      %p441 = scmp.ne.s32.totalorder %s433, %s435
      %p442 = scmp.eq.s32.totalorder %s47, 1
      %p443 = por %p441, %p442
      %p444 = scmp.ne.s32.totalorder %s435, %s436
      %p445 = scmp.eq.s32.totalorder %s47, 0
      %p446 = por %p444, %p445
      %p447 = scmp.ne.s32.totalorder %s435, %s436
      %p448 = scmp.eq.s32.totalorder %s48, 1
      %p449 = por %p447, %p448
      %p451 = scmp.ne.s32.totalorder %s436, %s450
      %p452 = scmp.eq.s32.totalorder %s48, 0
      %p453 = por %p451, %p452
      %s454 = ssub.s32 %s42, %s49
      %p455 = scmp.eq.s32.totalorder %s454, 0
      %s457 = sadd.s32 %s456, 1
      %s458 = scalar_select %p455, %s456, %s457
      %p461 = pneg %p455
      %p462 = scmp.eq.s32.totalorder %s42, 1
      %p463 = por %p461, %p462
      %p464 = scmp.ne.s32.totalorder %s456, %s459
      %p465 = scmp.eq.s32.totalorder %s42, 0
      %p466 = por %p464, %p465
      %p467 = scmp.ne.s32.totalorder %s456, %s459
      %p468 = scmp.eq.s32.totalorder %s47, 1
      %p469 = por %p467, %p468
      %p470 = scmp.ne.s32.totalorder %s459, %s460
      %p471 = scmp.eq.s32.totalorder %s47, 0
      %p472 = por %p470, %p471
      %p473 = scmp.ne.s32.totalorder %s459, %s460
      %p474 = scmp.eq.s32.totalorder %s48, 1
      %p475 = por %p473, %p474
      %p477 = scmp.ne.s32.totalorder %s460, %s476
      %p478 = scmp.eq.s32.totalorder %s48, 0
      %p479 = por %p477, %p478
      %s480 = ssub.s32 %s42, %s49
      %p481 = scmp.eq.s32.totalorder %s480, 0
      %s483 = sadd.s32 %s482, 1
      %s484 = scalar_select %p481, %s482, %s483
      %p487 = pneg %p481
      %p488 = scmp.eq.s32.totalorder %s42, 1
      %p489 = por %p487, %p488
      %p490 = scmp.ne.s32.totalorder %s482, %s485
      %p491 = scmp.eq.s32.totalorder %s42, 0
      %p492 = por %p490, %p491
      %p493 = scmp.ne.s32.totalorder %s482, %s485
      %p494 = scmp.eq.s32.totalorder %s47, 1
      %p495 = por %p493, %p494
      %p496 = scmp.ne.s32.totalorder %s485, %s486
      %p497 = scmp.eq.s32.totalorder %s47, 0
      %p498 = por %p496, %p497
      %p499 = scmp.ne.s32.totalorder %s485, %s486
      %p500 = scmp.eq.s32.totalorder %s48, 1
      %p501 = por %p499, %p500
      %p503 = scmp.ne.s32.totalorder %s486, %s502
      %p504 = scmp.eq.s32.totalorder %s48, 0
      %p505 = por %p503, %p504
      %p506 = scmp.le.s32.totalorder 1, %s42
      %p507 = scmp.lt.s32.totalorder %s42, 3
      %p508 = pnand %p506, %p507
      %p509 = pneg %p508
      // Predicated region
      $region9: #{tpu_custom_call.1} parent=5 // pred_check
        _
      $region10: #{tpu_custom_call.1} parent=5 // pred_check_branch
        %511 = sbr.rel (%p508) target = $region12
      $region11: #{tpu_custom_call.1} parent=5 // pred_region
        %s512 = ssub.s32 %s42, 1
        // Predicated region
        $region13: #{tpu_custom_call.1} parent=11 // pred_check
          %p513 = pneg %p89
        $region14: #{tpu_custom_call.1} parent=11 // pred_check_branch
          %515 = sbr.rel (%p513) target = $region16
        $region15: #{tpu_custom_call.1} parent=11 // pred_region
          %517 = vsyncadd [#allocation6], 0
          %s518 = sshll.u32 %s1, 4
          %s519 = int_to_ptr.hbm [resolvable:$true] %s518
          %s520 = sshll.u32 [#allocation5], 4
          %s521 = int_to_ptr.vmem [resolvable:$true] %s520
          %526 = dma.hbm_to_vmem [thread:$0]  %s519, 256, %s521, [#allocation6], 64, 64, 4
        $region16: #{tpu_custom_call.1} parent=11 // pred_fallthru
          _
        // Predicated region
        $region17: #{tpu_custom_call.1} parent=11 // pred_check
          %p527 = pneg %p110
        $region18: #{tpu_custom_call.1} parent=11 // pred_check_branch
          %529 = sbr.rel (%p527) target = $region20
        $region19: #{tpu_custom_call.1} parent=11 // pred_region
          %531 = vsyncadd [#allocation6], 0
          %s533 = sshll.u32 %s2, 4
          %s534 = int_to_ptr.hbm [resolvable:$true] %s533
          %s535 = sshll.u32 [#allocation7], 4
          %s536 = int_to_ptr.vmem [resolvable:$true] %s535
          %538 = dma.hbm_to_vmem [thread:$0]  %s534, 16, %s536, [#allocation6]
        $region20: #{tpu_custom_call.1} parent=11 // pred_fallthru
          _
        // Predicated region
        $region21: #{tpu_custom_call.1} parent=11 // pred_check
          %p539 = pneg %p131
        $region22: #{tpu_custom_call.1} parent=11 // pred_check_branch
          %541 = sbr.rel (%p539) target = $region24
        $region23: #{tpu_custom_call.1} parent=11 // pred_region
          %543 = vsyncadd [#allocation9], 0
          %s544 = sshll.u32 %s3, 4
          %s545 = int_to_ptr.hbm [resolvable:$true] %s544
          %s546 = sshll.u32 [#allocation8], 4
          %s547 = int_to_ptr.vmem [resolvable:$true] %s546
          %552 = dma.hbm_to_vmem [thread:$0]  %s545, 1024, %s547, [#allocation9], 64, 64, 4
        $region24: #{tpu_custom_call.1} parent=11 // pred_fallthru
          _
        // Predicated region
        $region25: #{tpu_custom_call.1} parent=11 // pred_check
          %p553 = pneg %p152
        $region26: #{tpu_custom_call.1} parent=11 // pred_check_branch
          %555 = sbr.rel (%p553) target = $region28
        $region27: #{tpu_custom_call.1} parent=11 // pred_region
          %557 = vsyncadd [#allocation9], 0
          %s559 = sshll.u32 %s4, 4
          %s560 = int_to_ptr.hbm [resolvable:$true] %s559
          %s561 = sshll.u32 [#allocation10], 4
          %s562 = int_to_ptr.vmem [resolvable:$true] %s561
          %564 = dma.hbm_to_vmem [thread:$0]  %s560, 16, %s562, [#allocation9]
        $region28: #{tpu_custom_call.1} parent=11 // pred_fallthru
          _
        // Predicated region
        $region29: #{tpu_custom_call.1} parent=11 // pred_check
          %p565 = pneg %p173
        $region30: #{tpu_custom_call.1} parent=11 // pred_check_branch
          %567 = sbr.rel (%p565) target = $region32
        $region31: #{tpu_custom_call.1} parent=11 // pred_region
          %569 = vsyncadd [#allocation12], 0
          %s570 = sshll.u32 %s5, 4
          %s571 = int_to_ptr.hbm [resolvable:$true] %s570
          %s572 = sshll.u32 [#allocation11], 4
          %s573 = int_to_ptr.vmem [resolvable:$true] %s572
          %578 = dma.hbm_to_vmem [thread:$0]  %s571, 6144, %s573, [#allocation12], 192, 192, 12
        $region32: #{tpu_custom_call.1} parent=11 // pred_fallthru
          _
        // Predicated region
        $region33: #{tpu_custom_call.1} parent=11 // pred_check
          %p579 = pneg %p194
        $region34: #{tpu_custom_call.1} parent=11 // pred_check_branch
          %581 = sbr.rel (%p579) target = $region36
        $region35: #{tpu_custom_call.1} parent=11 // pred_region
          %583 = vsyncadd [#allocation12], 0
          %s585 = sshll.u32 %s6, 4
          %s586 = int_to_ptr.hbm [resolvable:$true] %s585
          %s587 = sshll.u32 [#allocation13], 4
          %s588 = int_to_ptr.vmem [resolvable:$true] %s587
          %590 = dma.hbm_to_vmem [thread:$0]  %s586, 96, %s588, [#allocation12]
        $region36: #{tpu_custom_call.1} parent=11 // pred_fallthru
          _
        // Predicated region
        $region37: #{tpu_custom_call.1} parent=11 // pred_check
          %p591 = pneg %p215
        $region38: #{tpu_custom_call.1} parent=11 // pred_check_branch
          %593 = sbr.rel (%p591) target = $region40
        $region39: #{tpu_custom_call.1} parent=11 // pred_region
          %595 = vsyncadd [#allocation15], 0
          %s596 = sshll.u32 %s7, 4
          %s597 = int_to_ptr.hbm [resolvable:$true] %s596
          %s598 = sshll.u32 [#allocation14], 4
          %s599 = int_to_ptr.vmem [resolvable:$true] %s598
          %604 = dma.hbm_to_vmem [thread:$0]  %s597, 2048, %s599, [#allocation15], 64, 64, 4
        $region40: #{tpu_custom_call.1} parent=11 // pred_fallthru
          _
        // Predicated region
        $region41: #{tpu_custom_call.1} parent=11 // pred_check
          %p605 = pneg %p236
        $region42: #{tpu_custom_call.1} parent=11 // pred_check_branch
          %607 = sbr.rel (%p605) target = $region44
        $region43: #{tpu_custom_call.1} parent=11 // pred_region
          _
        $region44: #{tpu_custom_call.1} parent=11 // pred_fallthru
          _
        // Predicated region
        $region45: #{tpu_custom_call.1} parent=11 // pred_check
          %p608 = pneg %p257
        $region46: #{tpu_custom_call.1} parent=11 // pred_check_branch
          %610 = sbr.rel (%p608) target = $region48
        $region47: #{tpu_custom_call.1} parent=11 // pred_region
          _
        $region48: #{tpu_custom_call.1} parent=11 // pred_fallthru
          _
        // Predicated region
        $region49: #{tpu_custom_call.1} parent=11 // pred_check
          %p611 = pneg %p278
        $region50: #{tpu_custom_call.1} parent=11 // pred_check_branch
          %613 = sbr.rel (%p611) target = $region52
        $region51: #{tpu_custom_call.1} parent=11 // pred_region
          %615 = vsyncadd [#allocation15], 0
          %s617 = sshll.u32 %s10, 4
          %s618 = int_to_ptr.hbm [resolvable:$true] %s617
          %s619 = sshll.u32 [#allocation16], 4
          %s620 = int_to_ptr.vmem [resolvable:$true] %s619
          %622 = dma.hbm_to_vmem [thread:$0]  %s618, 32, %s620, [#allocation15]
        $region52: #{tpu_custom_call.1} parent=11 // pred_fallthru
          _
        // Predicated region
        $region53: #{tpu_custom_call.1} parent=11 // pred_check
          %p623 = pneg %p299
        $region54: #{tpu_custom_call.1} parent=11 // pred_check_branch
          %625 = sbr.rel (%p623) target = $region56
        $region55: #{tpu_custom_call.1} parent=11 // pred_region
          %627 = vsyncadd [#allocation18], 0
          %s628 = sshll.u32 %s11, 4
          %s629 = int_to_ptr.hbm [resolvable:$true] %s628
          %s630 = sshll.u32 [#allocation17], 4
          %s631 = int_to_ptr.vmem [resolvable:$true] %s630
          %636 = dma.hbm_to_vmem [thread:$0]  %s629, 4096, %s631, [#allocation18], 128, 128, 8
        $region56: #{tpu_custom_call.1} parent=11 // pred_fallthru
          _
        // Predicated region
        $region57: #{tpu_custom_call.1} parent=11 // pred_check
          %p637 = pneg %p320
        $region58: #{tpu_custom_call.1} parent=11 // pred_check_branch
          %639 = sbr.rel (%p637) target = $region60
        $region59: #{tpu_custom_call.1} parent=11 // pred_region
          _
        $region60: #{tpu_custom_call.1} parent=11 // pred_fallthru
          _
        // Predicated region
        $region61: #{tpu_custom_call.1} parent=11 // pred_check
          %p640 = pneg %p341
        $region62: #{tpu_custom_call.1} parent=11 // pred_check_branch
          %642 = sbr.rel (%p640) target = $region64
        $region63: #{tpu_custom_call.1} parent=11 // pred_region
          %644 = vsyncadd [#allocation18], 0
          %s645 = sshll.u32 %s13, 4
          %s646 = int_to_ptr.hbm [resolvable:$true] %s645
          %s647 = sshll.u32 [#allocation19], 4
          %s648 = int_to_ptr.vmem [resolvable:$true] %s647
          %653 = dma.hbm_to_vmem [thread:$0]  %s646, 4096, %s648, [#allocation18], 64, 64, 4
        $region64: #{tpu_custom_call.1} parent=11 // pred_fallthru
          _
        // Predicated region
        $region65: #{tpu_custom_call.1} parent=11 // pred_check
          %p654 = pneg %p362
        $region66: #{tpu_custom_call.1} parent=11 // pred_check_branch
          %656 = sbr.rel (%p654) target = $region68
        $region67: #{tpu_custom_call.1} parent=11 // pred_region
          _
        $region68: #{tpu_custom_call.1} parent=11 // pred_fallthru
          _
        // Predicated region
        $region69: #{tpu_custom_call.1} parent=11 // pred_check
          %p657 = pneg %p383
        $region70: #{tpu_custom_call.1} parent=11 // pred_check_branch
          %659 = sbr.rel (%p657) target = $region72
        $region71: #{tpu_custom_call.1} parent=11 // pred_region
          _
        $region72: #{tpu_custom_call.1} parent=11 // pred_fallthru
          _
        // Predicated region
        $region73: #{tpu_custom_call.1} parent=11 // pred_check
          %p660 = pneg %p404
        $region74: #{tpu_custom_call.1} parent=11 // pred_check_branch
          %662 = sbr.rel (%p660) target = $region76
        $region75: #{tpu_custom_call.1} parent=11 // pred_region
          _
        $region76: #{tpu_custom_call.1} parent=11 // pred_fallthru
          _
        // Predicated region
        $region77: #{tpu_custom_call.1} parent=11 // pred_check
          %p663 = pneg %p425
        $region78: #{tpu_custom_call.1} parent=11 // pred_check_branch
          %665 = sbr.rel (%p663) target = $region80
        $region79: #{tpu_custom_call.1} parent=11 // pred_region
          %667 = vsyncadd [#allocation21], 0
          %s668 = sshll.u32 %s17, 4
          %s669 = int_to_ptr.hbm [resolvable:$true] %s668
          %s670 = sshll.u32 [#allocation20], 4
          %s671 = int_to_ptr.vmem [resolvable:$true] %s670
          %676 = dma.hbm_to_vmem [thread:$0]  %s669, 1024, %s671, [#allocation21], 64, 64, 4
        $region80: #{tpu_custom_call.1} parent=11 // pred_fallthru
          _
        // Predicated region
        $region81: #{tpu_custom_call.1} parent=11 // pred_check
          %p677 = pneg %p446
        $region82: #{tpu_custom_call.1} parent=11 // pred_check_branch
          %679 = sbr.rel (%p677) target = $region84
        $region83: #{tpu_custom_call.1} parent=11 // pred_region
          _
        $region84: #{tpu_custom_call.1} parent=11 // pred_fallthru
          _
      $region12: #{tpu_custom_call.1} parent=5 // pred_fallthru
        _
      %p680 = scmp.lt.s32.totalorder %s42, 2
      // Predicated region
      $region85: #{tpu_custom_call.1} parent=5 // pred_check
        %p681 = pneg %p680
      $region86: #{tpu_custom_call.1} parent=5 // pred_check_branch
        %683 = sbr.rel (%p681) target = $region88
      $region87: #{tpu_custom_call.1} parent=5 // pred_region
        // Predicated region
        $region89: #{tpu_custom_call.1} parent=87 // pred_check
          %p684 = pneg %p62
        $region90: #{tpu_custom_call.1} parent=87 // pred_check_branch
          %686 = sbr.rel (%p684) target = $region92
        $region91: #{tpu_custom_call.1} parent=87 // pred_region
          %s687 = sand.u32 %s52, 1
          %s688 = scalar_lea.sflag [#allocation3], %s687
          %s689 = sand.u32 %s52, 1
          %s690 = smul.addr %s689, 128
          %s691 = scalar_lea.vmem [#allocation2], %s690
          %s692 = smul.u32 8, %s42
          %694 = vsyncadd %s688, 0
          %s695 = smul.addr %s692, 2
          %s696 = smul.addr %s695, 8
          %s697 = scalar_lea.hbm %s0, %s696
          %s698 = sshll.u32 %s697, 4
          %s699 = int_to_ptr.hbm [resolvable:$true] %s698
          %s700 = sshll.u32 %s691, 4
          %s701 = int_to_ptr.vmem [resolvable:$true] %s700
          %706 = dma.hbm_to_vmem [thread:$0]  %s699, 2048, %s701, %s688, 128, 128, 8
        $region92: #{tpu_custom_call.1} parent=87 // pred_fallthru
          _
      $region88: #{tpu_custom_call.1} parent=5 // pred_fallthru
        _
      %p707 = scmp.le.s32.totalorder 1, %s42
      %p708 = scmp.lt.s32.totalorder %s42, 3
      %p709 = pnand %p707, %p708
      %p710 = pneg %p709
      // Predicated region
      $region93: #{tpu_custom_call.1} parent=5 // pred_check
        _
      $region94: #{tpu_custom_call.1} parent=5 // pred_check_branch
        %712 = sbr.rel (%p709) target = $region96
      $region95: #{tpu_custom_call.1} parent=5 // pred_region
        %s713 = ssub.s32 %s42, 1
        %s714 = sand.u32 %s55, 1
        %s715 = scalar_lea.sflag [#allocation3], %s714
        %s716 = sand.u32 %s55, 1
        %s717 = smul.addr %s716, 128
        %s718 = scalar_lea.vmem [#allocation2], %s717
        // Predicated region
        $region97: #{tpu_custom_call.1} parent=95 // pred_check
          %p719 = pneg %p68
        $region98: #{tpu_custom_call.1} parent=95 // pred_check_branch
          %721 = sbr.rel (%p719) target = $region100
        $region99: #{tpu_custom_call.1} parent=95 // pred_region
          %723 = dma.done %s715, 2048
        $region100: #{tpu_custom_call.1} parent=95 // pred_fallthru
          _
        // Predicated region
        $region101: #{tpu_custom_call.1} parent=95 // pred_check
          %p724 = pneg %p89
        $region102: #{tpu_custom_call.1} parent=95 // pred_check_branch
          %726 = sbr.rel (%p724) target = $region104
        $region103: #{tpu_custom_call.1} parent=95 // pred_region
          %728 = dma.done [#allocation6], 256
        $region104: #{tpu_custom_call.1} parent=95 // pred_fallthru
          _
        // Predicated region
        $region105: #{tpu_custom_call.1} parent=95 // pred_check
          %p729 = pneg %p110
        $region106: #{tpu_custom_call.1} parent=95 // pred_check_branch
          %731 = sbr.rel (%p729) target = $region108
        $region107: #{tpu_custom_call.1} parent=95 // pred_region
          %733 = dma.done [#allocation6], 16
        $region108: #{tpu_custom_call.1} parent=95 // pred_fallthru
          _
        // Predicated region
        $region109: #{tpu_custom_call.1} parent=95 // pred_check
          %p734 = pneg %p131
        $region110: #{tpu_custom_call.1} parent=95 // pred_check_branch
          %736 = sbr.rel (%p734) target = $region112
        $region111: #{tpu_custom_call.1} parent=95 // pred_region
          %738 = dma.done [#allocation9], 1024
        $region112: #{tpu_custom_call.1} parent=95 // pred_fallthru
          _
        // Predicated region
        $region113: #{tpu_custom_call.1} parent=95 // pred_check
          %p739 = pneg %p152
        $region114: #{tpu_custom_call.1} parent=95 // pred_check_branch
          %741 = sbr.rel (%p739) target = $region116
        $region115: #{tpu_custom_call.1} parent=95 // pred_region
          %743 = dma.done [#allocation9], 16
        $region116: #{tpu_custom_call.1} parent=95 // pred_fallthru
          _
        // Predicated region
        $region117: #{tpu_custom_call.1} parent=95 // pred_check
          %p744 = pneg %p173
        $region118: #{tpu_custom_call.1} parent=95 // pred_check_branch
          %746 = sbr.rel (%p744) target = $region120
        $region119: #{tpu_custom_call.1} parent=95 // pred_region
          %748 = dma.done [#allocation12], 6144
        $region120: #{tpu_custom_call.1} parent=95 // pred_fallthru
          _
        // Predicated region
        $region121: #{tpu_custom_call.1} parent=95 // pred_check
          %p749 = pneg %p194
        $region122: #{tpu_custom_call.1} parent=95 // pred_check_branch
          %751 = sbr.rel (%p749) target = $region124
        $region123: #{tpu_custom_call.1} parent=95 // pred_region
          %753 = dma.done [#allocation12], 96
        $region124: #{tpu_custom_call.1} parent=95 // pred_fallthru
          _
        // Predicated region
        $region125: #{tpu_custom_call.1} parent=95 // pred_check
          %p754 = pneg %p215
        $region126: #{tpu_custom_call.1} parent=95 // pred_check_branch
          %756 = sbr.rel (%p754) target = $region128
        $region127: #{tpu_custom_call.1} parent=95 // pred_region
          %758 = dma.done [#allocation15], 2048
        $region128: #{tpu_custom_call.1} parent=95 // pred_fallthru
          _
        // Predicated region
        $region129: #{tpu_custom_call.1} parent=95 // pred_check
          %p759 = pneg %p278
        $region130: #{tpu_custom_call.1} parent=95 // pred_check_branch
          %761 = sbr.rel (%p759) target = $region132
        $region131: #{tpu_custom_call.1} parent=95 // pred_region
          %763 = dma.done [#allocation15], 32
        $region132: #{tpu_custom_call.1} parent=95 // pred_fallthru
          _
        // Predicated region
        $region133: #{tpu_custom_call.1} parent=95 // pred_check
          %p764 = pneg %p299
        $region134: #{tpu_custom_call.1} parent=95 // pred_check_branch
          %766 = sbr.rel (%p764) target = $region136
        $region135: #{tpu_custom_call.1} parent=95 // pred_region
          %768 = dma.done [#allocation18], 4096
        $region136: #{tpu_custom_call.1} parent=95 // pred_fallthru
          _
        // Predicated region
        $region137: #{tpu_custom_call.1} parent=95 // pred_check
          %p769 = pneg %p341
        $region138: #{tpu_custom_call.1} parent=95 // pred_check_branch
          %771 = sbr.rel (%p769) target = $region140
        $region139: #{tpu_custom_call.1} parent=95 // pred_region
          %773 = dma.done [#allocation18], 4096
        $region140: #{tpu_custom_call.1} parent=95 // pred_fallthru
          _
        // Predicated region
        $region141: #{tpu_custom_call.1} parent=95 // pred_check
          %p774 = pneg %p425
        $region142: #{tpu_custom_call.1} parent=95 // pred_check_branch
          %776 = sbr.rel (%p774) target = $region144
        $region143: #{tpu_custom_call.1} parent=95 // pred_region
          %778 = dma.done [#allocation21], 1024
        $region144: #{tpu_custom_call.1} parent=95 // pred_fallthru
          _
        %s779 = sand.u32 %s55, 1
        %s780 = scalar_lea.sflag [#allocation3], %s779
        %s781 = sand.u32 %s55, 1
        %s782 = smul.addr %s781, 128
        %s783 = scalar_lea.vmem [#allocation2], %s782
        %p784 = pneg %p68
        %p785 = pneg %p65
        %p786 = pneg %p89
        %p787 = pneg %p86
        %p788 = pneg %p110
        %p789 = pneg %p107
        %p790 = pneg %p131
        %p791 = pneg %p128
        %p792 = pneg %p152
        %p793 = pneg %p149
        %p794 = pneg %p173
        %p795 = pneg %p170
        %p796 = pneg %p194
        %p797 = pneg %p191
        %p798 = pneg %p215
        %p799 = pneg %p212
        %p800 = pneg %p236
        %p801 = pneg %p233
        %p802 = pneg %p257
        %p803 = pneg %p254
        %p804 = pneg %p278
        %p805 = pneg %p275
        %p806 = pneg %p299
        %p807 = pneg %p296
        %p808 = pneg %p320
        %p809 = pneg %p317
        %p810 = pneg %p341
        %p811 = pneg %p338
        %p812 = pneg %p362
        %p813 = pneg %p359
        %p814 = pneg %p383
        %p815 = pneg %p380
        %p816 = pneg %p404
        %p817 = pneg %p401
        %p818 = pneg %p425
        %p819 = pneg %p422
        %p820 = pneg %p446
        %p821 = pneg %p443
        %p822 = pneg %p472
        %p823 = pneg %p469
        %s824 = sand.u32 %s459, 1
        %s825 = scalar_lea.sflag [#allocation4], %s824
        %s826 = sand.u32 %s459, 1
        %s827 = smul.addr %s826, 128
        %s828 = scalar_lea.vmem [#allocation22], %s827
        %p829 = pneg %p498
        %p830 = pneg %p495
        %s831 = sand.u32 %s485, 1
        %s832 = scalar_lea.sflag [#allocation24], %s831
        %s833 = sand.u32 %s485, 1
        %s834 = smul.addr %s833, 128
        %s835 = scalar_lea.vmem [#allocation23], %s834
        %s836 = smul.u32 8, %s47
        %s837 = smul.u32 8, %s47
        %s838 = smul.u32 8, %s47
        %v840 = vld [vmem:[%s718] sm:$0xff]
        %v841 = vld [vmem:[%s718 + $0x8] sm:$0xff]
        %v842 = vld [vmem:[%s718 + $0x10] sm:$0xff]
        %v843 = vld [vmem:[%s718 + $0x18] sm:$0xff]
        %v844 = vld [vmem:[%s718 + $0x20] sm:$0xff]
        %v845 = vld [vmem:[%s718 + $0x28] sm:$0xff]
        %v846 = vld [vmem:[%s718 + $0x30] sm:$0xff]
        %v847 = vld [vmem:[%s718 + $0x38] sm:$0xff]
        %v848 = vld [vmem:[%s718 + $0x40] sm:$0xff]
        %v849 = vld [vmem:[%s718 + $0x48] sm:$0xff]
        %v850 = vld [vmem:[%s718 + $0x50] sm:$0xff]
        %v851 = vld [vmem:[%s718 + $0x58] sm:$0xff]
        %v852 = vld [vmem:[%s718 + $0x60] sm:$0xff]
        %v853 = vld [vmem:[%s718 + $0x68] sm:$0xff]
        %v854 = vld [vmem:[%s718 + $0x70] sm:$0xff]
        %v855 = vld [vmem:[%s718 + $0x78] sm:$0xff]
        %v856 = vld [vmem:[#allocation5] sm:$0xf]
        %v857 = vld [vmem:[#allocation5 + $0x4] sm:$0xf]
        %v858 = vld [vmem:[#allocation5 + $0x8] sm:$0xf]
        %v859 = vld [vmem:[#allocation5 + $0xc] sm:$0xf]
        %v860 = vpack.c.bf16 %v841, %v840
        %v861 = vpack.c.bf16 %v843, %v842
        %v862 = vpack.c.bf16 %v845, %v844
        %v863 = vpack.c.bf16 %v847, %v846
        %v864 = vpack.c.bf16 %v849, %v848
        %v865 = vpack.c.bf16 %v851, %v850
        %v866 = vpack.c.bf16 %v853, %v852
        %v867 = vpack.c.bf16 %v855, %v854
        %v868 = vld [vmem:[#allocation7] sm:$0x1]
        %v870 = vperm.slane %v868, 0
        %v876 = vunpack.c.l.b16 %v856
        %v877 = vunpack.c.l.b16 %v857
        %v878 = vunpack.c.l.b16 %v858
        %v879 = vunpack.c.l.b16 %v859
        %v880 = vpack.c.b16 %v877, %v876
        %v881 = vpack.c.b16 %v879, %v878
        %vm884 = vcmask 261120
        %v886 = vsel %vm884, %v860, 0
        %v889 = vsel %vm884, %v861, 0
        %v892 = vsel %vm884, %v862, 0
        %v895 = vsel %vm884, %v863, 0
        %v898 = vsel %vm884, %v864, 0
        %v901 = vsel %vm884, %v865, 0
        %v904 = vsel %vm884, %v866, 0
        %v907 = vsel %vm884, %v867, 0
        %909 = vmatpush.bf16.msra.mxu0 0
        %910 = vmatpush.bf16.msra.mxu0 0
        %911 = vmatpush.bf16.msra.mxu0 0
        %912 = vmatpush.bf16.msra.mxu0 0
        %913 = vmatpush.bf16.msra.mxu0 0
        %914 = vmatpush.bf16.msra.mxu0 0
        %915 = vmatpush.bf16.msra.mxu0 %v881
        %916 = vmatpush.bf16.msra.mxu0 %v880
        %917 = vmatmul.bf16.gmra.mxu0 %v886
        %v918 = vpop.f32.mrf.mxu0
        %v919 = vadd.f32 %v870, %v918
        %v920 = vpop.f32.mrf.mxu0
        %v921 = vadd.f32 %v870, %v920
        %922 = vmatmul.bf16.gmra.mxu0 %v889
        %v923 = vpop.f32.mrf.mxu0
        %v924 = vadd.f32 %v870, %v923
        %v925 = vpop.f32.mrf.mxu0
        %v926 = vadd.f32 %v870, %v925
        %927 = vmatmul.bf16.gmra.mxu0 %v892
        %v928 = vpop.f32.mrf.mxu0
        %v929 = vadd.f32 %v870, %v928
        %v930 = vpop.f32.mrf.mxu0
        %v931 = vadd.f32 %v870, %v930
        %932 = vmatmul.bf16.gmra.mxu0 %v895
        %v933 = vpop.f32.mrf.mxu0
        %v934 = vadd.f32 %v870, %v933
        %v935 = vpop.f32.mrf.mxu0
        %v936 = vadd.f32 %v870, %v935
        %937 = vmatmul.bf16.gmra.mxu0 %v898
        %v938 = vpop.f32.mrf.mxu0
        %v939 = vadd.f32 %v870, %v938
        %v940 = vpop.f32.mrf.mxu0
        %v941 = vadd.f32 %v870, %v940
        %942 = vmatmul.bf16.gmra.mxu0 %v901
        %v943 = vpop.f32.mrf.mxu0
        %v944 = vadd.f32 %v870, %v943
        %v945 = vpop.f32.mrf.mxu0
        %v946 = vadd.f32 %v870, %v945
        %947 = vmatmul.bf16.gmra.mxu0 %v904
        %v948 = vpop.f32.mrf.mxu0
        %v949 = vadd.f32 %v870, %v948
        %v950 = vpop.f32.mrf.mxu0
        %v951 = vadd.f32 %v870, %v950
        %952 = vmatmul.bf16.gmra.mxu0 %v907
        %v953 = vpop.f32.mrf.mxu0
        %v954 = vadd.f32 %v870, %v953
        %v955 = vpop.f32.mrf.mxu0
        %v956 = vadd.f32 %v870, %v955
        %957 = vdwg.mxu0
        %v958 = vmax.f32 %v919, 0.0
        %v959 = vmax.f32 %v921, 0.0
        %v960 = vmax.f32 %v924, 0.0
        %v961 = vmax.f32 %v926, 0.0
        %v962 = vmax.f32 %v929, 0.0
        %v963 = vmax.f32 %v931, 0.0
        %v964 = vmax.f32 %v934, 0.0
        %v965 = vmax.f32 %v936, 0.0
        %v966 = vmax.f32 %v939, 0.0
        %v967 = vmax.f32 %v941, 0.0
        %v968 = vmax.f32 %v944, 0.0
        %v969 = vmax.f32 %v946, 0.0
        %v970 = vmax.f32 %v949, 0.0
        %v971 = vmax.f32 %v951, 0.0
        %v972 = vmax.f32 %v954, 0.0
        %v973 = vmax.f32 %v956, 0.0
        %v974 = vld [vmem:[#allocation8] sm:$0xf]
        %v975 = vld [vmem:[#allocation8 + $0x4] sm:$0xf]
        %v976 = vld [vmem:[#allocation8 + $0x8] sm:$0xf]
        %v977 = vld [vmem:[#allocation8 + $0xc] sm:$0xf]
        %v978 = vld [vmem:[#allocation8 + $0x10] sm:$0xf]
        %v979 = vld [vmem:[#allocation8 + $0x14] sm:$0xf]
        %v980 = vld [vmem:[#allocation8 + $0x18] sm:$0xf]
        %v981 = vld [vmem:[#allocation8 + $0x1c] sm:$0xf]
        %v982 = vld [vmem:[#allocation8 + $0x20] sm:$0xf]
        %v983 = vld [vmem:[#allocation8 + $0x24] sm:$0xf]
        %v984 = vld [vmem:[#allocation8 + $0x28] sm:$0xf]
        %v985 = vld [vmem:[#allocation8 + $0x2c] sm:$0xf]
        %v986 = vld [vmem:[#allocation8 + $0x30] sm:$0xf]
        %v987 = vld [vmem:[#allocation8 + $0x34] sm:$0xf]
        %v988 = vld [vmem:[#allocation8 + $0x38] sm:$0xf]
        %v989 = vld [vmem:[#allocation8 + $0x3c] sm:$0xf]
        %v990 = vpack.c.bf16 %v959, %v958
        %v991 = vpack.c.bf16 %v961, %v960
        %v992 = vpack.c.bf16 %v963, %v962
        %v993 = vpack.c.bf16 %v965, %v964
        %v994 = vpack.c.bf16 %v967, %v966
        %v995 = vpack.c.bf16 %v969, %v968
        %v996 = vpack.c.bf16 %v971, %v970
        %v997 = vpack.c.bf16 %v973, %v972
        %v998 = vld [vmem:[#allocation10] sm:$0x1]
        %v1000 = vperm.slane %v998, 0
        %v1018 = vunpack.c.l.b16 %v974
        %v1019 = vunpack.c.l.b16 %v975
        %v1020 = vunpack.c.l.b16 %v976
        %v1021 = vunpack.c.l.b16 %v977
        %v1022 = vunpack.c.l.b16 %v978
        %v1023 = vunpack.c.l.b16 %v979
        %v1024 = vunpack.c.l.b16 %v980
        %v1025 = vunpack.c.l.b16 %v981
        %v1026 = vunpack.c.l.b16 %v982
        %v1027 = vunpack.c.l.b16 %v983
        %v1028 = vunpack.c.l.b16 %v984
        %v1029 = vunpack.c.l.b16 %v985
        %v1030 = vunpack.c.l.b16 %v986
        %v1031 = vunpack.c.l.b16 %v987
        %v1032 = vunpack.c.l.b16 %v988
        %v1033 = vunpack.c.l.b16 %v989
        %v1034 = vpack.c.b16 %v1019, %v1018
        %v1035 = vpack.c.b16 %v1021, %v1020
        %v1036 = vpack.c.b16 %v1023, %v1022
        %v1037 = vpack.c.b16 %v1025, %v1024
        %v1038 = vpack.c.b16 %v1027, %v1026
        %v1039 = vpack.c.b16 %v1029, %v1028
        %v1040 = vpack.c.b16 %v1031, %v1030
        %v1041 = vpack.c.b16 %v1033, %v1032
        %1050 = vmatpush.bf16.msra.mxu0 %v1041
        %1051 = vmatpush.bf16.msra.mxu0 %v1040
        %1052 = vmatpush.bf16.msra.mxu0 %v1039
        %1053 = vmatpush.bf16.msra.mxu0 %v1038
        %1054 = vmatpush.bf16.msra.mxu0 %v1037
        %1055 = vmatpush.bf16.msra.mxu0 %v1036
        %1056 = vmatpush.bf16.msra.mxu0 %v1035
        %1057 = vmatpush.bf16.msra.mxu0 %v1034
        %1058 = vmatmul.bf16.gmra.mxu0 %v990
        %v1059 = vpop.f32.mrf.mxu0
        %v1060 = vadd.f32 %v1000, %v1059
        %v1061 = vpop.f32.mrf.mxu0
        %v1062 = vadd.f32 %v1000, %v1061
        %1063 = vmatmul.bf16.gmra.mxu0 %v991
        %v1064 = vpop.f32.mrf.mxu0
        %v1065 = vadd.f32 %v1000, %v1064
        %v1066 = vpop.f32.mrf.mxu0
        %v1067 = vadd.f32 %v1000, %v1066
        %1068 = vmatmul.bf16.gmra.mxu0 %v992
        %v1069 = vpop.f32.mrf.mxu0
        %v1070 = vadd.f32 %v1000, %v1069
        %v1071 = vpop.f32.mrf.mxu0
        %v1072 = vadd.f32 %v1000, %v1071
        %1073 = vmatmul.bf16.gmra.mxu0 %v993
        %v1074 = vpop.f32.mrf.mxu0
        %v1075 = vadd.f32 %v1000, %v1074
        %v1076 = vpop.f32.mrf.mxu0
        %v1077 = vadd.f32 %v1000, %v1076
        %1078 = vmatmul.bf16.gmra.mxu0 %v994
        %v1079 = vpop.f32.mrf.mxu0
        %v1080 = vadd.f32 %v1000, %v1079
        %v1081 = vpop.f32.mrf.mxu0
        %v1082 = vadd.f32 %v1000, %v1081
        %1083 = vmatmul.bf16.gmra.mxu0 %v995
        %v1084 = vpop.f32.mrf.mxu0
        %v1085 = vadd.f32 %v1000, %v1084
        %v1086 = vpop.f32.mrf.mxu0
        %v1087 = vadd.f32 %v1000, %v1086
        %1088 = vmatmul.bf16.gmra.mxu0 %v996
        %v1089 = vpop.f32.mrf.mxu0
        %v1090 = vadd.f32 %v1000, %v1089
        %v1091 = vpop.f32.mrf.mxu0
        %v1092 = vadd.f32 %v1000, %v1091
        %1093 = vmatmul.bf16.gmra.mxu0 %v997
        %v1094 = vpop.f32.mrf.mxu0
        %v1095 = vadd.f32 %v1000, %v1094
        %v1096 = vpop.f32.mrf.mxu0
        %v1097 = vadd.f32 %v1000, %v1096
        %1098 = vdwg.mxu0
        %v1099 = vmax.f32 %v1060, 0.0
        %v1100 = vmax.f32 %v1062, 0.0
        %v1101 = vmax.f32 %v1065, 0.0
        %v1102 = vmax.f32 %v1067, 0.0
        %v1103 = vmax.f32 %v1070, 0.0
        %v1104 = vmax.f32 %v1072, 0.0
        %v1105 = vmax.f32 %v1075, 0.0
        %v1106 = vmax.f32 %v1077, 0.0
        %v1107 = vmax.f32 %v1080, 0.0
        %v1108 = vmax.f32 %v1082, 0.0
        %v1109 = vmax.f32 %v1085, 0.0
        %v1110 = vmax.f32 %v1087, 0.0
        %v1111 = vmax.f32 %v1090, 0.0
        %v1112 = vmax.f32 %v1092, 0.0
        %v1113 = vmax.f32 %v1095, 0.0
        %v1114 = vmax.f32 %v1097, 0.0
        %v1115 = vld [vmem:[#allocation11] sm:$0xff]
        %v1116 = vld [vmem:[#allocation11 + $0x8] sm:$0xf]
        %v1117 = vld [vmem:[#allocation11 + $0xc] sm:$0xff]
        %v1118 = vld [vmem:[#allocation11 + $0x14] sm:$0xf]
        %v1119 = vld [vmem:[#allocation11 + $0x18] sm:$0xff]
        %v1120 = vld [vmem:[#allocation11 + $0x20] sm:$0xf]
        %v1121 = vld [vmem:[#allocation11 + $0x24] sm:$0xff]
        %v1122 = vld [vmem:[#allocation11 + $0x2c] sm:$0xf]
        %v1123 = vld [vmem:[#allocation11 + $0x30] sm:$0xff]
        %v1124 = vld [vmem:[#allocation11 + $0x38] sm:$0xf]
        %v1125 = vld [vmem:[#allocation11 + $0x3c] sm:$0xff]
        %v1126 = vld [vmem:[#allocation11 + $0x44] sm:$0xf]
        %v1127 = vld [vmem:[#allocation11 + $0x48] sm:$0xff]
        %v1128 = vld [vmem:[#allocation11 + $0x50] sm:$0xf]
        %v1129 = vld [vmem:[#allocation11 + $0x54] sm:$0xff]
        %v1130 = vld [vmem:[#allocation11 + $0x5c] sm:$0xf]
        %v1131 = vld [vmem:[#allocation11 + $0x60] sm:$0xff]
        %v1132 = vld [vmem:[#allocation11 + $0x68] sm:$0xf]
        %v1133 = vld [vmem:[#allocation11 + $0x6c] sm:$0xff]
        %v1134 = vld [vmem:[#allocation11 + $0x74] sm:$0xf]
        %v1135 = vld [vmem:[#allocation11 + $0x78] sm:$0xff]
        %v1136 = vld [vmem:[#allocation11 + $0x80] sm:$0xf]
        %v1137 = vld [vmem:[#allocation11 + $0x84] sm:$0xff]
        %v1138 = vld [vmem:[#allocation11 + $0x8c] sm:$0xf]
        %v1139 = vld [vmem:[#allocation11 + $0x90] sm:$0xff]
        %v1140 = vld [vmem:[#allocation11 + $0x98] sm:$0xf]
        %v1141 = vld [vmem:[#allocation11 + $0x9c] sm:$0xff]
        %v1142 = vld [vmem:[#allocation11 + $0xa4] sm:$0xf]
        %v1143 = vld [vmem:[#allocation11 + $0xa8] sm:$0xff]
        %v1144 = vld [vmem:[#allocation11 + $0xb0] sm:$0xf]
        %v1145 = vld [vmem:[#allocation11 + $0xb4] sm:$0xff]
        %v1146 = vld [vmem:[#allocation11 + $0xbc] sm:$0xf]
        %v1147 = vld [vmem:[#allocation14] sm:$0xf]
        %v1148 = vld [vmem:[#allocation14 + $0x4] sm:$0xf]
        %v1149 = vld [vmem:[#allocation14 + $0x8] sm:$0xf]
        %v1150 = vld [vmem:[#allocation14 + $0xc] sm:$0xf]
        %v1151 = vld [vmem:[#allocation14 + $0x10] sm:$0xf]
        %v1152 = vld [vmem:[#allocation14 + $0x14] sm:$0xf]
        %v1153 = vld [vmem:[#allocation14 + $0x18] sm:$0xf]
        %v1154 = vld [vmem:[#allocation14 + $0x1c] sm:$0xf]
        %v1155 = vld [vmem:[#allocation14 + $0x20] sm:$0xf]
        %v1156 = vld [vmem:[#allocation14 + $0x24] sm:$0xf]
        %v1157 = vld [vmem:[#allocation14 + $0x28] sm:$0xf]
        %v1158 = vld [vmem:[#allocation14 + $0x2c] sm:$0xf]
        %v1159 = vld [vmem:[#allocation14 + $0x30] sm:$0xf]
        %v1160 = vld [vmem:[#allocation14 + $0x34] sm:$0xf]
        %v1161 = vld [vmem:[#allocation14 + $0x38] sm:$0xf]
        %v1162 = vld [vmem:[#allocation14 + $0x3c] sm:$0xf]
        %v1163 = vpack.c.bf16 %v1100, %v1099
        %v1164 = vpack.c.bf16 %v1102, %v1101
        %v1165 = vpack.c.bf16 %v1104, %v1103
        %v1166 = vpack.c.bf16 %v1106, %v1105
        %v1167 = vpack.c.bf16 %v1108, %v1107
        %v1168 = vpack.c.bf16 %v1110, %v1109
        %v1169 = vpack.c.bf16 %v1112, %v1111
        %v1170 = vpack.c.bf16 %v1114, %v1113
        %v1171 = vld [vmem:[#allocation13] ss:$2 sm:$0x7]
        %v1173 = vperm.slane %v1171, 0
        %v1174 = vperm.slane %v1171, 1
        %v1175 = vperm.slane %v1171, 2
        %v1211 = vunpack.c.l.b16 %v1115
        %v1212 = vunpack.c.h.b16 %v1115
        %v1213 = vunpack.c.l.b16 %v1116
        %v1214 = vunpack.c.l.b16 %v1117
        %v1215 = vunpack.c.h.b16 %v1117
        %v1216 = vunpack.c.l.b16 %v1118
        %v1217 = vunpack.c.l.b16 %v1119
        %v1218 = vunpack.c.h.b16 %v1119
        %v1219 = vunpack.c.l.b16 %v1120
        %v1220 = vunpack.c.l.b16 %v1121
        %v1221 = vunpack.c.h.b16 %v1121
        %v1222 = vunpack.c.l.b16 %v1122
        %v1223 = vunpack.c.l.b16 %v1123
        %v1224 = vunpack.c.h.b16 %v1123
        %v1225 = vunpack.c.l.b16 %v1124
        %v1226 = vunpack.c.l.b16 %v1125
        %v1227 = vunpack.c.h.b16 %v1125
        %v1228 = vunpack.c.l.b16 %v1126
        %v1229 = vunpack.c.l.b16 %v1127
        %v1230 = vunpack.c.h.b16 %v1127
        %v1231 = vunpack.c.l.b16 %v1128
        %v1232 = vunpack.c.l.b16 %v1129
        %v1233 = vunpack.c.h.b16 %v1129
        %v1234 = vunpack.c.l.b16 %v1130
        %v1235 = vunpack.c.l.b16 %v1131
        %v1236 = vunpack.c.h.b16 %v1131
        %v1237 = vunpack.c.l.b16 %v1132
        %v1238 = vunpack.c.l.b16 %v1133
        %v1239 = vunpack.c.h.b16 %v1133
        %v1240 = vunpack.c.l.b16 %v1134
        %v1241 = vunpack.c.l.b16 %v1135
        %v1242 = vunpack.c.h.b16 %v1135
        %v1243 = vunpack.c.l.b16 %v1136
        %v1244 = vunpack.c.l.b16 %v1137
        %v1245 = vunpack.c.h.b16 %v1137
        %v1246 = vunpack.c.l.b16 %v1138
        %v1247 = vunpack.c.l.b16 %v1139
        %v1248 = vunpack.c.h.b16 %v1139
        %v1249 = vunpack.c.l.b16 %v1140
        %v1250 = vunpack.c.l.b16 %v1141
        %v1251 = vunpack.c.h.b16 %v1141
        %v1252 = vunpack.c.l.b16 %v1142
        %v1253 = vunpack.c.l.b16 %v1143
        %v1254 = vunpack.c.h.b16 %v1143
        %v1255 = vunpack.c.l.b16 %v1144
        %v1256 = vunpack.c.l.b16 %v1145
        %v1257 = vunpack.c.h.b16 %v1145
        %v1258 = vunpack.c.l.b16 %v1146
        %v1259 = vpack.c.b16 %v1214, %v1211
        %v1260 = vpack.c.b16 %v1215, %v1212
        %v1261 = vpack.c.b16 %v1216, %v1213
        %v1262 = vpack.c.b16 %v1220, %v1217
        %v1263 = vpack.c.b16 %v1221, %v1218
        %v1264 = vpack.c.b16 %v1222, %v1219
        %v1265 = vpack.c.b16 %v1226, %v1223
        %v1266 = vpack.c.b16 %v1227, %v1224
        %v1267 = vpack.c.b16 %v1228, %v1225
        %v1268 = vpack.c.b16 %v1232, %v1229
        %v1269 = vpack.c.b16 %v1233, %v1230
        %v1270 = vpack.c.b16 %v1234, %v1231
        %v1271 = vpack.c.b16 %v1238, %v1235
        %v1272 = vpack.c.b16 %v1239, %v1236
        %v1273 = vpack.c.b16 %v1240, %v1237
        %v1274 = vpack.c.b16 %v1244, %v1241
        %v1275 = vpack.c.b16 %v1245, %v1242
        %v1276 = vpack.c.b16 %v1246, %v1243
        %v1277 = vpack.c.b16 %v1250, %v1247
        %v1278 = vpack.c.b16 %v1251, %v1248
        %v1279 = vpack.c.b16 %v1252, %v1249
        %v1280 = vpack.c.b16 %v1256, %v1253
        %v1281 = vpack.c.b16 %v1257, %v1254
        %v1282 = vpack.c.b16 %v1258, %v1255
        %1307 = vmatpush.bf16.msra.mxu0 %v1280
        %1308 = vmatpush.bf16.msra.mxu0 %v1277
        %1309 = vmatpush.bf16.msra.mxu0 %v1274
        %1310 = vmatpush.bf16.msra.mxu0 %v1271
        %1311 = vmatpush.bf16.msra.mxu0 %v1268
        %1312 = vmatpush.bf16.msra.mxu0 %v1265
        %1313 = vmatpush.bf16.msra.mxu0 %v1262
        %1314 = vmatpush.bf16.msra.mxu0 %v1259
        %1315 = vmatmul.bf16.gmra.mxu0 %v1163
        %v1316 = vpop.f32.mrf.mxu0
        %v1317 = vadd.f32 %v1173, %v1316
        %v1318 = vpop.f32.mrf.mxu0
        %v1319 = vadd.f32 %v1173, %v1318
        %1320 = vmatmul.bf16.gmra.mxu0 %v1164
        %v1321 = vpop.f32.mrf.mxu0
        %v1322 = vadd.f32 %v1173, %v1321
        %v1323 = vpop.f32.mrf.mxu0
        %v1324 = vadd.f32 %v1173, %v1323
        %1325 = vmatmul.bf16.gmra.mxu0 %v1165
        %v1326 = vpop.f32.mrf.mxu0
        %v1327 = vadd.f32 %v1173, %v1326
        %v1328 = vpop.f32.mrf.mxu0
        %v1329 = vadd.f32 %v1173, %v1328
        %1330 = vmatmul.bf16.gmra.mxu0 %v1166
        %v1331 = vpop.f32.mrf.mxu0
        %v1332 = vadd.f32 %v1173, %v1331
        %v1333 = vpop.f32.mrf.mxu0
        %v1334 = vadd.f32 %v1173, %v1333
        %1335 = vmatmul.bf16.gmra.mxu0 %v1167
        %v1336 = vpop.f32.mrf.mxu0
        %v1337 = vadd.f32 %v1173, %v1336
        %v1338 = vpop.f32.mrf.mxu0
        %v1339 = vadd.f32 %v1173, %v1338
        %1340 = vmatmul.bf16.gmra.mxu0 %v1168
        %v1341 = vpop.f32.mrf.mxu0
        %v1342 = vadd.f32 %v1173, %v1341
        %v1343 = vpop.f32.mrf.mxu0
        %v1344 = vadd.f32 %v1173, %v1343
        %1345 = vmatmul.bf16.gmra.mxu0 %v1169
        %v1346 = vpop.f32.mrf.mxu0
        %v1347 = vadd.f32 %v1173, %v1346
        %v1348 = vpop.f32.mrf.mxu0
        %v1349 = vadd.f32 %v1173, %v1348
        %1350 = vmatmul.bf16.gmra.mxu0 %v1170
        %v1351 = vpop.f32.mrf.mxu0
        %v1352 = vadd.f32 %v1173, %v1351
        %v1353 = vpop.f32.mrf.mxu0
        %v1354 = vadd.f32 %v1173, %v1353
        %1355 = vdwg.mxu0
        %1356 = vmatpush.bf16.msra.mxu0 %v1281
        %1357 = vmatpush.bf16.msra.mxu0 %v1278
        %1358 = vmatpush.bf16.msra.mxu0 %v1275
        %1359 = vmatpush.bf16.msra.mxu0 %v1272
        %1360 = vmatpush.bf16.msra.mxu0 %v1269
        %1361 = vmatpush.bf16.msra.mxu0 %v1266
        %1362 = vmatpush.bf16.msra.mxu0 %v1263
        %1363 = vmatpush.bf16.msra.mxu0 %v1260
        %1364 = vmatmul.bf16.gmra.mxu0 %v1163
        %v1365 = vpop.f32.mrf.mxu0
        %v1366 = vadd.f32 %v1174, %v1365
        %v1367 = vpop.f32.mrf.mxu0
        %v1368 = vadd.f32 %v1174, %v1367
        %1369 = vmatmul.bf16.gmra.mxu0 %v1164
        %v1370 = vpop.f32.mrf.mxu0
        %v1371 = vadd.f32 %v1174, %v1370
        %v1372 = vpop.f32.mrf.mxu0
        %v1373 = vadd.f32 %v1174, %v1372
        %1374 = vmatmul.bf16.gmra.mxu0 %v1165
        %v1375 = vpop.f32.mrf.mxu0
        %v1376 = vadd.f32 %v1174, %v1375
        %v1377 = vpop.f32.mrf.mxu0
        %v1378 = vadd.f32 %v1174, %v1377
        %1379 = vmatmul.bf16.gmra.mxu0 %v1166
        %v1380 = vpop.f32.mrf.mxu0
        %v1381 = vadd.f32 %v1174, %v1380
        %v1382 = vpop.f32.mrf.mxu0
        %v1383 = vadd.f32 %v1174, %v1382
        %1384 = vmatmul.bf16.gmra.mxu0 %v1167
        %v1385 = vpop.f32.mrf.mxu0
        %v1386 = vadd.f32 %v1174, %v1385
        %v1387 = vpop.f32.mrf.mxu0
        %v1388 = vadd.f32 %v1174, %v1387
        %1389 = vmatmul.bf16.gmra.mxu0 %v1168
        %v1390 = vpop.f32.mrf.mxu0
        %v1391 = vadd.f32 %v1174, %v1390
        %v1392 = vpop.f32.mrf.mxu0
        %v1393 = vadd.f32 %v1174, %v1392
        %1394 = vmatmul.bf16.gmra.mxu0 %v1169
        %v1395 = vpop.f32.mrf.mxu0
        %v1396 = vadd.f32 %v1174, %v1395
        %v1397 = vpop.f32.mrf.mxu0
        %v1398 = vadd.f32 %v1174, %v1397
        %1399 = vmatmul.bf16.gmra.mxu0 %v1170
        %v1400 = vpop.f32.mrf.mxu0
        %v1401 = vadd.f32 %v1174, %v1400
        %v1402 = vpop.f32.mrf.mxu0
        %v1403 = vadd.f32 %v1174, %v1402
        %1404 = vdwg.mxu0
        %1405 = vmatpush.bf16.msra.mxu0 %v1282
        %1406 = vmatpush.bf16.msra.mxu0 %v1279
        %1407 = vmatpush.bf16.msra.mxu0 %v1276
        %1408 = vmatpush.bf16.msra.mxu0 %v1273
        %1409 = vmatpush.bf16.msra.mxu0 %v1270
        %1410 = vmatpush.bf16.msra.mxu0 %v1267
        %1411 = vmatpush.bf16.msra.mxu0 %v1264
        %1412 = vmatpush.bf16.msra.mxu0 %v1261
        %1413 = vmatmul.bf16.gmra.mxu0 %v1163
        %v1414 = vpop.f32.mrf.mxu0
        %v1415 = vadd.f32 %v1175, %v1414
        %v1416 = vpop.f32.mrf.mxu0
        %v1417 = vadd.f32 %v1175, %v1416
        %1418 = vmatmul.bf16.gmra.mxu0 %v1164
        %v1419 = vpop.f32.mrf.mxu0
        %v1420 = vadd.f32 %v1175, %v1419
        %v1421 = vpop.f32.mrf.mxu0
        %v1422 = vadd.f32 %v1175, %v1421
        %1423 = vmatmul.bf16.gmra.mxu0 %v1165
        %v1424 = vpop.f32.mrf.mxu0
        %v1425 = vadd.f32 %v1175, %v1424
        %v1426 = vpop.f32.mrf.mxu0
        %v1427 = vadd.f32 %v1175, %v1426
        %1428 = vmatmul.bf16.gmra.mxu0 %v1166
        %v1429 = vpop.f32.mrf.mxu0
        %v1430 = vadd.f32 %v1175, %v1429
        %v1431 = vpop.f32.mrf.mxu0
        %v1432 = vadd.f32 %v1175, %v1431
        %1433 = vmatmul.bf16.gmra.mxu0 %v1167
        %v1434 = vpop.f32.mrf.mxu0
        %v1435 = vadd.f32 %v1175, %v1434
        %v1436 = vpop.f32.mrf.mxu0
        %v1437 = vadd.f32 %v1175, %v1436
        %1438 = vmatmul.bf16.gmra.mxu0 %v1168
        %v1439 = vpop.f32.mrf.mxu0
        %v1440 = vadd.f32 %v1175, %v1439
        %v1441 = vpop.f32.mrf.mxu0
        %v1442 = vadd.f32 %v1175, %v1441
        %1443 = vmatmul.bf16.gmra.mxu0 %v1169
        %v1444 = vpop.f32.mrf.mxu0
        %v1445 = vadd.f32 %v1175, %v1444
        %v1446 = vpop.f32.mrf.mxu0
        %v1447 = vadd.f32 %v1175, %v1446
        %1448 = vmatmul.bf16.gmra.mxu0 %v1170
        %v1449 = vpop.f32.mrf.mxu0
        %v1450 = vadd.f32 %v1175, %v1449
        %v1451 = vpop.f32.mrf.mxu0
        %v1452 = vadd.f32 %v1175, %v1451
        %1453 = vdwg.mxu0
        %v1454 = vpack.c.bf16 %v1317, %v1317
        %v1455 = vpack.c.bf16 %v1319, %v1319
        %v1456 = vpack.c.bf16 %v1322, %v1322
        %v1457 = vpack.c.bf16 %v1324, %v1324
        %v1458 = vpack.c.bf16 %v1327, %v1327
        %v1459 = vpack.c.bf16 %v1329, %v1329
        %v1460 = vpack.c.bf16 %v1332, %v1332
        %v1461 = vpack.c.bf16 %v1334, %v1334
        %v1462 = vpack.c.bf16 %v1337, %v1337
        %v1463 = vpack.c.bf16 %v1339, %v1339
        %v1464 = vpack.c.bf16 %v1342, %v1342
        %v1465 = vpack.c.bf16 %v1344, %v1344
        %v1466 = vpack.c.bf16 %v1347, %v1347
        %v1467 = vpack.c.bf16 %v1349, %v1349
        %v1468 = vpack.c.bf16 %v1352, %v1352
        %v1469 = vpack.c.bf16 %v1354, %v1354
        %v1470 = vpack.c.bf16 %v1366, %v1366
        %v1471 = vpack.c.bf16 %v1368, %v1368
        %v1472 = vpack.c.bf16 %v1371, %v1371
        %v1473 = vpack.c.bf16 %v1373, %v1373
        %v1474 = vpack.c.bf16 %v1376, %v1376
        %v1475 = vpack.c.bf16 %v1378, %v1378
        %v1476 = vpack.c.bf16 %v1381, %v1381
        %v1477 = vpack.c.bf16 %v1383, %v1383
        %v1478 = vpack.c.bf16 %v1386, %v1386
        %v1479 = vpack.c.bf16 %v1388, %v1388
        %v1480 = vpack.c.bf16 %v1391, %v1391
        %v1481 = vpack.c.bf16 %v1393, %v1393
        %v1482 = vpack.c.bf16 %v1396, %v1396
        %v1483 = vpack.c.bf16 %v1398, %v1398
        %v1484 = vpack.c.bf16 %v1401, %v1401
        %v1485 = vpack.c.bf16 %v1403, %v1403
        %v1486 = vpack.c.bf16 %v1415, %v1415
        %v1487 = vpack.c.bf16 %v1417, %v1417
        %v1488 = vpack.c.bf16 %v1420, %v1420
        %v1489 = vpack.c.bf16 %v1422, %v1422
        %v1490 = vpack.c.bf16 %v1425, %v1425
        %v1491 = vpack.c.bf16 %v1427, %v1427
        %v1492 = vpack.c.bf16 %v1430, %v1430
        %v1493 = vpack.c.bf16 %v1432, %v1432
        %v1494 = vpack.c.bf16 %v1435, %v1435
        %v1495 = vpack.c.bf16 %v1437, %v1437
        %v1496 = vpack.c.bf16 %v1440, %v1440
        %v1497 = vpack.c.bf16 %v1442, %v1442
        %v1498 = vpack.c.bf16 %v1445, %v1445
        %v1499 = vpack.c.bf16 %v1447, %v1447
        %v1500 = vpack.c.bf16 %v1450, %v1450
        %v1501 = vpack.c.bf16 %v1452, %v1452
        %v1504 = vunpack.c.l.b16 %v1454
        %v1505 = vunpack.c.l.b16 %v1455
        %v1506 = vpack.c.b16 %v1505, %v1504
        %v1509 = vunpack.c.l.b16 %v1470
        %v1510 = vunpack.c.l.b16 %v1471
        %v1511 = vpack.c.b16 %v1510, %v1509
        %v1513 = vsel %vm884, %v1506, 0
        %v1516 = vsel %vm884, %v1511, 0
        %1518 = vmatpush.bf16.xpose.msra.mxu0 0
        %1519 = vmatpush.bf16.xpose.msra.mxu0 0
        %1520 = vmatpush.bf16.xpose.msra.mxu0 0
        %1521 = vmatpush.bf16.xpose.msra.mxu0 0
        %1522 = vmatpush.bf16.xpose.msra.mxu0 0
        %1523 = vmatpush.bf16.xpose.msra.mxu0 0
        %1524 = vmatpush.bf16.xpose.msra.mxu0 0
        %1525 = vmatpush.bf16.xpose.msra.mxu0 %v1516
        %1526 = vmatmul.bf16.gmra.mxu0 %v1513
        %v1527 = vpop.f32.mrf.mxu0
        %v1528 = vadd.f32 0.0, %v1527
        %v1529 = vpop.f32.mrf.mxu0
        %v1530 = vadd.f32 0.0, %v1529
        %1531 = vdwg.mxu0
        %v1534 = vunpack.c.l.b16 %v1456
        %v1535 = vunpack.c.l.b16 %v1457
        %v1536 = vpack.c.b16 %v1535, %v1534
        %v1539 = vunpack.c.l.b16 %v1472
        %v1540 = vunpack.c.l.b16 %v1473
        %v1541 = vpack.c.b16 %v1540, %v1539
        %v1543 = vsel %vm884, %v1536, 0
        %v1546 = vsel %vm884, %v1541, 0
        %1548 = vmatpush.bf16.xpose.msra.mxu0 0
        %1549 = vmatpush.bf16.xpose.msra.mxu0 0
        %1550 = vmatpush.bf16.xpose.msra.mxu0 0
        %1551 = vmatpush.bf16.xpose.msra.mxu0 0
        %1552 = vmatpush.bf16.xpose.msra.mxu0 0
        %1553 = vmatpush.bf16.xpose.msra.mxu0 0
        %1554 = vmatpush.bf16.xpose.msra.mxu0 0
        %1555 = vmatpush.bf16.xpose.msra.mxu0 %v1546
        %1556 = vmatmul.bf16.gmra.mxu0 %v1543
        %v1557 = vpop.f32.mrf.mxu0
        %v1558 = vadd.f32 0.0, %v1557
        %v1559 = vpop.f32.mrf.mxu0
        %v1560 = vadd.f32 0.0, %v1559
        %1561 = vdwg.mxu0
        %v1564 = vunpack.c.l.b16 %v1458
        %v1565 = vunpack.c.l.b16 %v1459
        %v1566 = vpack.c.b16 %v1565, %v1564
        %v1569 = vunpack.c.l.b16 %v1474
        %v1570 = vunpack.c.l.b16 %v1475
        %v1571 = vpack.c.b16 %v1570, %v1569
        %v1573 = vsel %vm884, %v1566, 0
        %v1576 = vsel %vm884, %v1571, 0
        %1578 = vmatpush.bf16.xpose.msra.mxu0 0
        %1579 = vmatpush.bf16.xpose.msra.mxu0 0
        %1580 = vmatpush.bf16.xpose.msra.mxu0 0
        %1581 = vmatpush.bf16.xpose.msra.mxu0 0
        %1582 = vmatpush.bf16.xpose.msra.mxu0 0
        %1583 = vmatpush.bf16.xpose.msra.mxu0 0
        %1584 = vmatpush.bf16.xpose.msra.mxu0 0
        %1585 = vmatpush.bf16.xpose.msra.mxu0 %v1576
        %1586 = vmatmul.bf16.gmra.mxu0 %v1573
        %v1587 = vpop.f32.mrf.mxu0
        %v1588 = vadd.f32 0.0, %v1587
        %v1589 = vpop.f32.mrf.mxu0
        %v1590 = vadd.f32 0.0, %v1589
        %1591 = vdwg.mxu0
        %v1594 = vunpack.c.l.b16 %v1460
        %v1595 = vunpack.c.l.b16 %v1461
        %v1596 = vpack.c.b16 %v1595, %v1594
        %v1599 = vunpack.c.l.b16 %v1476
        %v1600 = vunpack.c.l.b16 %v1477
        %v1601 = vpack.c.b16 %v1600, %v1599
        %v1603 = vsel %vm884, %v1596, 0
        %v1606 = vsel %vm884, %v1601, 0
        %1608 = vmatpush.bf16.xpose.msra.mxu0 0
        %1609 = vmatpush.bf16.xpose.msra.mxu0 0
        %1610 = vmatpush.bf16.xpose.msra.mxu0 0
        %1611 = vmatpush.bf16.xpose.msra.mxu0 0
        %1612 = vmatpush.bf16.xpose.msra.mxu0 0
        %1613 = vmatpush.bf16.xpose.msra.mxu0 0
        %1614 = vmatpush.bf16.xpose.msra.mxu0 0
        %1615 = vmatpush.bf16.xpose.msra.mxu0 %v1606
        %1616 = vmatmul.bf16.gmra.mxu0 %v1603
        %v1617 = vpop.f32.mrf.mxu0
        %v1618 = vadd.f32 0.0, %v1617
        %v1619 = vpop.f32.mrf.mxu0
        %v1620 = vadd.f32 0.0, %v1619
        %1621 = vdwg.mxu0
        %v1624 = vunpack.c.l.b16 %v1462
        %v1625 = vunpack.c.l.b16 %v1463
        %v1626 = vpack.c.b16 %v1625, %v1624
        %v1629 = vunpack.c.l.b16 %v1478
        %v1630 = vunpack.c.l.b16 %v1479
        %v1631 = vpack.c.b16 %v1630, %v1629
        %v1633 = vsel %vm884, %v1626, 0
        %v1636 = vsel %vm884, %v1631, 0
        %1638 = vmatpush.bf16.xpose.msra.mxu0 0
        %1639 = vmatpush.bf16.xpose.msra.mxu0 0
        %1640 = vmatpush.bf16.xpose.msra.mxu0 0
        %1641 = vmatpush.bf16.xpose.msra.mxu0 0
        %1642 = vmatpush.bf16.xpose.msra.mxu0 0
        %1643 = vmatpush.bf16.xpose.msra.mxu0 0
        %1644 = vmatpush.bf16.xpose.msra.mxu0 0
        %1645 = vmatpush.bf16.xpose.msra.mxu0 %v1636
        %1646 = vmatmul.bf16.gmra.mxu0 %v1633
        %v1647 = vpop.f32.mrf.mxu0
        %v1648 = vadd.f32 0.0, %v1647
        %v1649 = vpop.f32.mrf.mxu0
        %v1650 = vadd.f32 0.0, %v1649
        %1651 = vdwg.mxu0
        %v1654 = vunpack.c.l.b16 %v1464
        %v1655 = vunpack.c.l.b16 %v1465
        %v1656 = vpack.c.b16 %v1655, %v1654
        %v1659 = vunpack.c.l.b16 %v1480
        %v1660 = vunpack.c.l.b16 %v1481
        %v1661 = vpack.c.b16 %v1660, %v1659
        %v1663 = vsel %vm884, %v1656, 0
        %v1666 = vsel %vm884, %v1661, 0
        %1668 = vmatpush.bf16.xpose.msra.mxu0 0
        %1669 = vmatpush.bf16.xpose.msra.mxu0 0
        %1670 = vmatpush.bf16.xpose.msra.mxu0 0
        %1671 = vmatpush.bf16.xpose.msra.mxu0 0
        %1672 = vmatpush.bf16.xpose.msra.mxu0 0
        %1673 = vmatpush.bf16.xpose.msra.mxu0 0
        %1674 = vmatpush.bf16.xpose.msra.mxu0 0
        %1675 = vmatpush.bf16.xpose.msra.mxu0 %v1666
        %1676 = vmatmul.bf16.gmra.mxu0 %v1663
        %v1677 = vpop.f32.mrf.mxu0
        %v1678 = vadd.f32 0.0, %v1677
        %v1679 = vpop.f32.mrf.mxu0
        %v1680 = vadd.f32 0.0, %v1679
        %1681 = vdwg.mxu0
        %v1684 = vunpack.c.l.b16 %v1466
        %v1685 = vunpack.c.l.b16 %v1467
        %v1686 = vpack.c.b16 %v1685, %v1684
        %v1689 = vunpack.c.l.b16 %v1482
        %v1690 = vunpack.c.l.b16 %v1483
        %v1691 = vpack.c.b16 %v1690, %v1689
        %v1693 = vsel %vm884, %v1686, 0
        %v1696 = vsel %vm884, %v1691, 0
        %1698 = vmatpush.bf16.xpose.msra.mxu0 0
        %1699 = vmatpush.bf16.xpose.msra.mxu0 0
        %1700 = vmatpush.bf16.xpose.msra.mxu0 0
        %1701 = vmatpush.bf16.xpose.msra.mxu0 0
        %1702 = vmatpush.bf16.xpose.msra.mxu0 0
        %1703 = vmatpush.bf16.xpose.msra.mxu0 0
        %1704 = vmatpush.bf16.xpose.msra.mxu0 0
        %1705 = vmatpush.bf16.xpose.msra.mxu0 %v1696
        %1706 = vmatmul.bf16.gmra.mxu0 %v1693
        %v1707 = vpop.f32.mrf.mxu0
        %v1708 = vadd.f32 0.0, %v1707
        %v1709 = vpop.f32.mrf.mxu0
        %v1710 = vadd.f32 0.0, %v1709
        %1711 = vdwg.mxu0
        %v1714 = vunpack.c.l.b16 %v1468
        %v1715 = vunpack.c.l.b16 %v1469
        %v1716 = vpack.c.b16 %v1715, %v1714
        %v1719 = vunpack.c.l.b16 %v1484
        %v1720 = vunpack.c.l.b16 %v1485
        %v1721 = vpack.c.b16 %v1720, %v1719
        %v1723 = vsel %vm884, %v1716, 0
        %v1726 = vsel %vm884, %v1721, 0
        %1728 = vmatpush.bf16.xpose.msra.mxu0 0
        %1729 = vmatpush.bf16.xpose.msra.mxu0 0
        %1730 = vmatpush.bf16.xpose.msra.mxu0 0
        %1731 = vmatpush.bf16.xpose.msra.mxu0 0
        %1732 = vmatpush.bf16.xpose.msra.mxu0 0
        %1733 = vmatpush.bf16.xpose.msra.mxu0 0
        %1734 = vmatpush.bf16.xpose.msra.mxu0 0
        %1735 = vmatpush.bf16.xpose.msra.mxu0 %v1726
        %1736 = vmatmul.bf16.gmra.mxu0 %v1723
        %v1737 = vpop.f32.mrf.mxu0
        %v1738 = vadd.f32 0.0, %v1737
        %v1739 = vpop.f32.mrf.mxu0
        %v1740 = vadd.f32 0.0, %v1739
        %1741 = vdwg.mxu0
        %v1742 = vmul.f32 %v1528, 0.17677669
        %v1743 = vmul.f32 %v1530, 0.17677669
        %v1744 = vmul.f32 %v1558, 0.17677669
        %v1745 = vmul.f32 %v1560, 0.17677669
        %v1746 = vmul.f32 %v1588, 0.17677669
        %v1747 = vmul.f32 %v1590, 0.17677669
        %v1748 = vmul.f32 %v1618, 0.17677669
        %v1749 = vmul.f32 %v1620, 0.17677669
        %v1750 = vmul.f32 %v1648, 0.17677669
        %v1751 = vmul.f32 %v1650, 0.17677669
        %v1752 = vmul.f32 %v1678, 0.17677669
        %v1753 = vmul.f32 %v1680, 0.17677669
        %v1754 = vmul.f32 %v1708, 0.17677669
        %v1755 = vmul.f32 %v1710, 0.17677669
        %v1756 = vmul.f32 %v1738, 0.17677669
        %v1757 = vmul.f32 %v1740, 0.17677669
        %vm1758 = vcmask 130048
        %v1759 = vsel %vm1758, %v1742, -inf
        %1760 = vmax.xlane.f32.xlu0 %v1759
        %v1761 = vpop.xlane.xlu0 %1760
        %v1762 = vsel %vm1758, %v1743, -inf
        %1763 = vmax.xlane.f32.xlu0 %v1762
        %v1764 = vpop.xlane.xlu0 %1763
        %v1765 = vsel %vm1758, %v1744, -inf
        %1766 = vmax.xlane.f32.xlu0 %v1765
        %v1767 = vpop.xlane.xlu0 %1766
        %v1768 = vsel %vm1758, %v1745, -inf
        %1769 = vmax.xlane.f32.xlu0 %v1768
        %v1770 = vpop.xlane.xlu0 %1769
        %v1771 = vsel %vm1758, %v1746, -inf
        %1772 = vmax.xlane.f32.xlu0 %v1771
        %v1773 = vpop.xlane.xlu0 %1772
        %v1774 = vsel %vm1758, %v1747, -inf
        %1775 = vmax.xlane.f32.xlu0 %v1774
        %v1776 = vpop.xlane.xlu0 %1775
        %v1777 = vsel %vm1758, %v1748, -inf
        %1778 = vmax.xlane.f32.xlu0 %v1777
        %v1779 = vpop.xlane.xlu0 %1778
        %v1780 = vsel %vm1758, %v1749, -inf
        %1781 = vmax.xlane.f32.xlu0 %v1780
        %v1782 = vpop.xlane.xlu0 %1781
        %v1783 = vsel %vm1758, %v1750, -inf
        %1784 = vmax.xlane.f32.xlu0 %v1783
        %v1785 = vpop.xlane.xlu0 %1784
        %v1786 = vsel %vm1758, %v1751, -inf
        %1787 = vmax.xlane.f32.xlu0 %v1786
        %v1788 = vpop.xlane.xlu0 %1787
        %v1789 = vsel %vm1758, %v1752, -inf
        %1790 = vmax.xlane.f32.xlu0 %v1789
        %v1791 = vpop.xlane.xlu0 %1790
        %v1792 = vsel %vm1758, %v1753, -inf
        %1793 = vmax.xlane.f32.xlu0 %v1792
        %v1794 = vpop.xlane.xlu0 %1793
        %v1795 = vsel %vm1758, %v1754, -inf
        %1796 = vmax.xlane.f32.xlu0 %v1795
        %v1797 = vpop.xlane.xlu0 %1796
        %v1798 = vsel %vm1758, %v1755, -inf
        %1799 = vmax.xlane.f32.xlu0 %v1798
        %v1800 = vpop.xlane.xlu0 %1799
        %v1801 = vsel %vm1758, %v1756, -inf
        %1802 = vmax.xlane.f32.xlu0 %v1801
        %v1803 = vpop.xlane.xlu0 %1802
        %v1804 = vsel %vm1758, %v1757, -inf
        %1805 = vmax.xlane.f32.xlu0 %v1804
        %v1806 = vpop.xlane.xlu0 %1805
        %v1807 = vsub.f32 %v1742, %v1761
        %v1808 = vsub.f32 %v1743, %v1764
        %v1809 = vsub.f32 %v1744, %v1767
        %v1810 = vsub.f32 %v1745, %v1770
        %v1811 = vsub.f32 %v1746, %v1773
        %v1812 = vsub.f32 %v1747, %v1776
        %v1813 = vsub.f32 %v1748, %v1779
        %v1814 = vsub.f32 %v1749, %v1782
        %v1815 = vsub.f32 %v1750, %v1785
        %v1816 = vsub.f32 %v1751, %v1788
        %v1817 = vsub.f32 %v1752, %v1791
        %v1818 = vsub.f32 %v1753, %v1794
        %v1819 = vsub.f32 %v1754, %v1797
        %v1820 = vsub.f32 %v1755, %v1800
        %v1821 = vsub.f32 %v1756, %v1803
        %v1822 = vsub.f32 %v1757, %v1806
        %v1823 = vmul.f32 %v1807, 1.442695
        %v1824 = vpow.pop %v1823
        %v1825 = vmul.f32 %v1808, 1.442695
        %v1826 = vpow.pop %v1825
        %v1827 = vmul.f32 %v1809, 1.442695
        %v1828 = vpow.pop %v1827
        %v1829 = vmul.f32 %v1810, 1.442695
        %v1830 = vpow.pop %v1829
        %v1831 = vmul.f32 %v1811, 1.442695
        %v1832 = vpow.pop %v1831
        %v1833 = vmul.f32 %v1812, 1.442695
        %v1834 = vpow.pop %v1833
        %v1835 = vmul.f32 %v1813, 1.442695
        %v1836 = vpow.pop %v1835
        %v1837 = vmul.f32 %v1814, 1.442695
        %v1838 = vpow.pop %v1837
        %v1839 = vmul.f32 %v1815, 1.442695
        %v1840 = vpow.pop %v1839
        %v1841 = vmul.f32 %v1816, 1.442695
        %v1842 = vpow.pop %v1841
        %v1843 = vmul.f32 %v1817, 1.442695
        %v1844 = vpow.pop %v1843
        %v1845 = vmul.f32 %v1818, 1.442695
        %v1846 = vpow.pop %v1845
        %v1847 = vmul.f32 %v1819, 1.442695
        %v1848 = vpow.pop %v1847
        %v1849 = vmul.f32 %v1820, 1.442695
        %v1850 = vpow.pop %v1849
        %v1851 = vmul.f32 %v1821, 1.442695
        %v1852 = vpow.pop %v1851
        %v1853 = vmul.f32 %v1822, 1.442695
        %v1854 = vpow.pop %v1853
        %v1855 = vsel %vm1758, %v1824, 0.0
        %1856 = vadd.xlane.f32.xlu0 %v1855
        %v1857 = vpop.xlane.xlu0 %1856
        %v1858 = vsel %vm1758, %v1826, 0.0
        %1859 = vadd.xlane.f32.xlu0 %v1858
        %v1860 = vpop.xlane.xlu0 %1859
        %v1861 = vsel %vm1758, %v1828, 0.0
        %1862 = vadd.xlane.f32.xlu0 %v1861
        %v1863 = vpop.xlane.xlu0 %1862
        %v1864 = vsel %vm1758, %v1830, 0.0
        %1865 = vadd.xlane.f32.xlu0 %v1864
        %v1866 = vpop.xlane.xlu0 %1865
        %v1867 = vsel %vm1758, %v1832, 0.0
        %1868 = vadd.xlane.f32.xlu0 %v1867
        %v1869 = vpop.xlane.xlu0 %1868
        %v1870 = vsel %vm1758, %v1834, 0.0
        %1871 = vadd.xlane.f32.xlu0 %v1870
        %v1872 = vpop.xlane.xlu0 %1871
        %v1873 = vsel %vm1758, %v1836, 0.0
        %1874 = vadd.xlane.f32.xlu0 %v1873
        %v1875 = vpop.xlane.xlu0 %1874
        %v1876 = vsel %vm1758, %v1838, 0.0
        %1877 = vadd.xlane.f32.xlu0 %v1876
        %v1878 = vpop.xlane.xlu0 %1877
        %v1879 = vsel %vm1758, %v1840, 0.0
        %1880 = vadd.xlane.f32.xlu0 %v1879
        %v1881 = vpop.xlane.xlu0 %1880
        %v1882 = vsel %vm1758, %v1842, 0.0
        %1883 = vadd.xlane.f32.xlu0 %v1882
        %v1884 = vpop.xlane.xlu0 %1883
        %v1885 = vsel %vm1758, %v1844, 0.0
        %1886 = vadd.xlane.f32.xlu0 %v1885
        %v1887 = vpop.xlane.xlu0 %1886
        %v1888 = vsel %vm1758, %v1846, 0.0
        %1889 = vadd.xlane.f32.xlu0 %v1888
        %v1890 = vpop.xlane.xlu0 %1889
        %v1891 = vsel %vm1758, %v1848, 0.0
        %1892 = vadd.xlane.f32.xlu0 %v1891
        %v1893 = vpop.xlane.xlu0 %1892
        %v1894 = vsel %vm1758, %v1850, 0.0
        %1895 = vadd.xlane.f32.xlu0 %v1894
        %v1896 = vpop.xlane.xlu0 %1895
        %v1897 = vsel %vm1758, %v1852, 0.0
        %1898 = vadd.xlane.f32.xlu0 %v1897
        %v1899 = vpop.xlane.xlu0 %1898
        %v1900 = vsel %vm1758, %v1854, 0.0
        %1901 = vadd.xlane.f32.xlu0 %v1900
        %v1902 = vpop.xlane.xlu0 %1901
        %v1903 = vrcp.pop %v1857
        %v1904 = vrcp.pop %v1860
        %v1905 = vrcp.pop %v1863
        %v1906 = vrcp.pop %v1866
        %v1907 = vrcp.pop %v1869
        %v1908 = vrcp.pop %v1872
        %v1909 = vrcp.pop %v1875
        %v1910 = vrcp.pop %v1878
        %v1911 = vrcp.pop %v1881
        %v1912 = vrcp.pop %v1884
        %v1913 = vrcp.pop %v1887
        %v1914 = vrcp.pop %v1890
        %v1915 = vrcp.pop %v1893
        %v1916 = vrcp.pop %v1896
        %v1917 = vrcp.pop %v1899
        %v1918 = vrcp.pop %v1902
        %v1919 = vmul.f32 %v1824, %v1903
        %v1920 = vmul.f32 %v1826, %v1904
        %v1921 = vmul.f32 %v1828, %v1905
        %v1922 = vmul.f32 %v1830, %v1906
        %v1923 = vmul.f32 %v1832, %v1907
        %v1924 = vmul.f32 %v1834, %v1908
        %v1925 = vmul.f32 %v1836, %v1909
        %v1926 = vmul.f32 %v1838, %v1910
        %v1927 = vmul.f32 %v1840, %v1911
        %v1928 = vmul.f32 %v1842, %v1912
        %v1929 = vmul.f32 %v1844, %v1913
        %v1930 = vmul.f32 %v1846, %v1914
        %v1931 = vmul.f32 %v1848, %v1915
        %v1932 = vmul.f32 %v1850, %v1916
        %v1933 = vmul.f32 %v1852, %v1917
        %v1934 = vmul.f32 %v1854, %v1918
        %v1935 = vpack.c.bf16 %v1919, %v1919
        %v1936 = vpack.c.bf16 %v1920, %v1920
        %v1937 = vpack.c.bf16 %v1921, %v1921
        %v1938 = vpack.c.bf16 %v1922, %v1922
        %v1939 = vpack.c.bf16 %v1923, %v1923
        %v1940 = vpack.c.bf16 %v1924, %v1924
        %v1941 = vpack.c.bf16 %v1925, %v1925
        %v1942 = vpack.c.bf16 %v1926, %v1926
        %v1943 = vpack.c.bf16 %v1927, %v1927
        %v1944 = vpack.c.bf16 %v1928, %v1928
        %v1945 = vpack.c.bf16 %v1929, %v1929
        %v1946 = vpack.c.bf16 %v1930, %v1930
        %v1947 = vpack.c.bf16 %v1931, %v1931
        %v1948 = vpack.c.bf16 %v1932, %v1932
        %v1949 = vpack.c.bf16 %v1933, %v1933
        %v1950 = vpack.c.bf16 %v1934, %v1934
        %v1953 = vunpack.c.l.b16 %v1935
        %v1954 = vunpack.c.l.b16 %v1936
        %v1955 = vpack.c.b16 %v1954, %v1953
        %v1958 = vunpack.c.l.b16 %v1486
        %v1959 = vunpack.c.l.b16 %v1487
        %v1960 = vpack.c.b16 %v1959, %v1958
        %v1963 = vsel %vm1758, %v1955, 0
        %1965 = vmatpush.bf16.msra.mxu0 0
        %1966 = vmatpush.bf16.msra.mxu0 0
        %1967 = vmatpush.bf16.msra.mxu0 0
        %1968 = vmatpush.bf16.msra.mxu0 0
        %1969 = vmatpush.bf16.msra.mxu0 0
        %1970 = vmatpush.bf16.msra.mxu0 0
        %1971 = vmatpush.bf16.msra.mxu0 0
        %1972 = vmatpush.bf16.msra.mxu0 %v1960
        %1973 = vmatmul.bf16.gmra.mxu0 %v1963
        %v1974 = vpop.f32.mrf.mxu0
        %v1975 = vadd.f32 0.0, %v1974
        %v1976 = vpop.f32.mrf.mxu0
        %v1977 = vadd.f32 0.0, %v1976
        %1978 = vdwg.mxu0
        %v1981 = vunpack.c.l.b16 %v1937
        %v1982 = vunpack.c.l.b16 %v1938
        %v1983 = vpack.c.b16 %v1982, %v1981
        %v1986 = vunpack.c.l.b16 %v1488
        %v1987 = vunpack.c.l.b16 %v1489
        %v1988 = vpack.c.b16 %v1987, %v1986
        %v1991 = vsel %vm1758, %v1983, 0
        %1993 = vmatpush.bf16.msra.mxu0 0
        %1994 = vmatpush.bf16.msra.mxu0 0
        %1995 = vmatpush.bf16.msra.mxu0 0
        %1996 = vmatpush.bf16.msra.mxu0 0
        %1997 = vmatpush.bf16.msra.mxu0 0
        %1998 = vmatpush.bf16.msra.mxu0 0
        %1999 = vmatpush.bf16.msra.mxu0 0
        %2000 = vmatpush.bf16.msra.mxu0 %v1988
        %2001 = vmatmul.bf16.gmra.mxu0 %v1991
        %v2002 = vpop.f32.mrf.mxu0
        %v2003 = vadd.f32 0.0, %v2002
        %v2004 = vpop.f32.mrf.mxu0
        %v2005 = vadd.f32 0.0, %v2004
        %2006 = vdwg.mxu0
        %v2009 = vunpack.c.l.b16 %v1939
        %v2010 = vunpack.c.l.b16 %v1940
        %v2011 = vpack.c.b16 %v2010, %v2009
        %v2014 = vunpack.c.l.b16 %v1490
        %v2015 = vunpack.c.l.b16 %v1491
        %v2016 = vpack.c.b16 %v2015, %v2014
        %v2019 = vsel %vm1758, %v2011, 0
        %2021 = vmatpush.bf16.msra.mxu0 0
        %2022 = vmatpush.bf16.msra.mxu0 0
        %2023 = vmatpush.bf16.msra.mxu0 0
        %2024 = vmatpush.bf16.msra.mxu0 0
        %2025 = vmatpush.bf16.msra.mxu0 0
        %2026 = vmatpush.bf16.msra.mxu0 0
        %2027 = vmatpush.bf16.msra.mxu0 0
        %2028 = vmatpush.bf16.msra.mxu0 %v2016
        %2029 = vmatmul.bf16.gmra.mxu0 %v2019
        %v2030 = vpop.f32.mrf.mxu0
        %v2031 = vadd.f32 0.0, %v2030
        %v2032 = vpop.f32.mrf.mxu0
        %v2033 = vadd.f32 0.0, %v2032
        %2034 = vdwg.mxu0
        %v2037 = vunpack.c.l.b16 %v1941
        %v2038 = vunpack.c.l.b16 %v1942
        %v2039 = vpack.c.b16 %v2038, %v2037
        %v2042 = vunpack.c.l.b16 %v1492
        %v2043 = vunpack.c.l.b16 %v1493
        %v2044 = vpack.c.b16 %v2043, %v2042
        %v2047 = vsel %vm1758, %v2039, 0
        %2049 = vmatpush.bf16.msra.mxu0 0
        %2050 = vmatpush.bf16.msra.mxu0 0
        %2051 = vmatpush.bf16.msra.mxu0 0
        %2052 = vmatpush.bf16.msra.mxu0 0
        %2053 = vmatpush.bf16.msra.mxu0 0
        %2054 = vmatpush.bf16.msra.mxu0 0
        %2055 = vmatpush.bf16.msra.mxu0 0
        %2056 = vmatpush.bf16.msra.mxu0 %v2044
        %2057 = vmatmul.bf16.gmra.mxu0 %v2047
        %v2058 = vpop.f32.mrf.mxu0
        %v2059 = vadd.f32 0.0, %v2058
        %v2060 = vpop.f32.mrf.mxu0
        %v2061 = vadd.f32 0.0, %v2060
        %2062 = vdwg.mxu0
        %v2065 = vunpack.c.l.b16 %v1943
        %v2066 = vunpack.c.l.b16 %v1944
        %v2067 = vpack.c.b16 %v2066, %v2065
        %v2070 = vunpack.c.l.b16 %v1494
        %v2071 = vunpack.c.l.b16 %v1495
        %v2072 = vpack.c.b16 %v2071, %v2070
        %v2075 = vsel %vm1758, %v2067, 0
        %2077 = vmatpush.bf16.msra.mxu0 0
        %2078 = vmatpush.bf16.msra.mxu0 0
        %2079 = vmatpush.bf16.msra.mxu0 0
        %2080 = vmatpush.bf16.msra.mxu0 0
        %2081 = vmatpush.bf16.msra.mxu0 0
        %2082 = vmatpush.bf16.msra.mxu0 0
        %2083 = vmatpush.bf16.msra.mxu0 0
        %2084 = vmatpush.bf16.msra.mxu0 %v2072
        %2085 = vmatmul.bf16.gmra.mxu0 %v2075
        %v2086 = vpop.f32.mrf.mxu0
        %v2087 = vadd.f32 0.0, %v2086
        %v2088 = vpop.f32.mrf.mxu0
        %v2089 = vadd.f32 0.0, %v2088
        %2090 = vdwg.mxu0
        %v2093 = vunpack.c.l.b16 %v1945
        %v2094 = vunpack.c.l.b16 %v1946
        %v2095 = vpack.c.b16 %v2094, %v2093
        %v2098 = vunpack.c.l.b16 %v1496
        %v2099 = vunpack.c.l.b16 %v1497
        %v2100 = vpack.c.b16 %v2099, %v2098
        %v2103 = vsel %vm1758, %v2095, 0
        %2105 = vmatpush.bf16.msra.mxu0 0
        %2106 = vmatpush.bf16.msra.mxu0 0
        %2107 = vmatpush.bf16.msra.mxu0 0
        %2108 = vmatpush.bf16.msra.mxu0 0
        %2109 = vmatpush.bf16.msra.mxu0 0
        %2110 = vmatpush.bf16.msra.mxu0 0
        %2111 = vmatpush.bf16.msra.mxu0 0
        %2112 = vmatpush.bf16.msra.mxu0 %v2100
        %2113 = vmatmul.bf16.gmra.mxu0 %v2103
        %v2114 = vpop.f32.mrf.mxu0
        %v2115 = vadd.f32 0.0, %v2114
        %v2116 = vpop.f32.mrf.mxu0
        %v2117 = vadd.f32 0.0, %v2116
        %2118 = vdwg.mxu0
        %v2121 = vunpack.c.l.b16 %v1947
        %v2122 = vunpack.c.l.b16 %v1948
        %v2123 = vpack.c.b16 %v2122, %v2121
        %v2126 = vunpack.c.l.b16 %v1498
        %v2127 = vunpack.c.l.b16 %v1499
        %v2128 = vpack.c.b16 %v2127, %v2126
        %v2131 = vsel %vm1758, %v2123, 0
        %2133 = vmatpush.bf16.msra.mxu0 0
        %2134 = vmatpush.bf16.msra.mxu0 0
        %2135 = vmatpush.bf16.msra.mxu0 0
        %2136 = vmatpush.bf16.msra.mxu0 0
        %2137 = vmatpush.bf16.msra.mxu0 0
        %2138 = vmatpush.bf16.msra.mxu0 0
        %2139 = vmatpush.bf16.msra.mxu0 0
        %2140 = vmatpush.bf16.msra.mxu0 %v2128
        %2141 = vmatmul.bf16.gmra.mxu0 %v2131
        %v2142 = vpop.f32.mrf.mxu0
        %v2143 = vadd.f32 0.0, %v2142
        %v2144 = vpop.f32.mrf.mxu0
        %v2145 = vadd.f32 0.0, %v2144
        %2146 = vdwg.mxu0
        %v2149 = vunpack.c.l.b16 %v1949
        %v2150 = vunpack.c.l.b16 %v1950
        %v2151 = vpack.c.b16 %v2150, %v2149
        %v2154 = vunpack.c.l.b16 %v1500
        %v2155 = vunpack.c.l.b16 %v1501
        %v2156 = vpack.c.b16 %v2155, %v2154
        %v2159 = vsel %vm1758, %v2151, 0
        %2161 = vmatpush.bf16.msra.mxu0 0
        %2162 = vmatpush.bf16.msra.mxu0 0
        %2163 = vmatpush.bf16.msra.mxu0 0
        %2164 = vmatpush.bf16.msra.mxu0 0
        %2165 = vmatpush.bf16.msra.mxu0 0
        %2166 = vmatpush.bf16.msra.mxu0 0
        %2167 = vmatpush.bf16.msra.mxu0 0
        %2168 = vmatpush.bf16.msra.mxu0 %v2156
        %2169 = vmatmul.bf16.gmra.mxu0 %v2159
        %v2170 = vpop.f32.mrf.mxu0
        %v2171 = vadd.f32 0.0, %v2170
        %v2172 = vpop.f32.mrf.mxu0
        %v2173 = vadd.f32 0.0, %v2172
        %2174 = vdwg.mxu0
        %v2175 = vpack.c.bf16 %v1977, %v1975
        %v2176 = vpack.c.bf16 %v2005, %v2003
        %v2177 = vpack.c.bf16 %v2033, %v2031
        %v2178 = vpack.c.bf16 %v2061, %v2059
        %v2179 = vpack.c.bf16 %v2089, %v2087
        %v2180 = vpack.c.bf16 %v2117, %v2115
        %v2181 = vpack.c.bf16 %v2145, %v2143
        %v2182 = vpack.c.bf16 %v2173, %v2171
        %2183 = vrot.lane.b32.xlu0 %v1506, 96
        %v2184 = vpop.permute.xlu0 %2183
        %2185 = vrot.lane.b32.xlu0 %v1511, 96
        %v2186 = vpop.permute.xlu0 %2185
        %v2188 = vsel %vm884, %v2184, 0
        %v2191 = vsel %vm884, %v2186, 0
        %2193 = vmatpush.bf16.xpose.msra.mxu0 0
        %2194 = vmatpush.bf16.xpose.msra.mxu0 0
        %2195 = vmatpush.bf16.xpose.msra.mxu0 0
        %2196 = vmatpush.bf16.xpose.msra.mxu0 0
        %2197 = vmatpush.bf16.xpose.msra.mxu0 0
        %2198 = vmatpush.bf16.xpose.msra.mxu0 0
        %2199 = vmatpush.bf16.xpose.msra.mxu0 0
        %2200 = vmatpush.bf16.xpose.msra.mxu0 %v2191
        %2201 = vmatmul.bf16.gmra.mxu0 %v2188
        %v2202 = vpop.f32.mrf.mxu0
        %v2203 = vadd.f32 0.0, %v2202
        %v2204 = vpop.f32.mrf.mxu0
        %v2205 = vadd.f32 0.0, %v2204
        %2206 = vdwg.mxu0
        %2207 = vrot.lane.b32.xlu0 %v1536, 96
        %v2208 = vpop.permute.xlu0 %2207
        %2209 = vrot.lane.b32.xlu0 %v1541, 96
        %v2210 = vpop.permute.xlu0 %2209
        %v2212 = vsel %vm884, %v2208, 0
        %v2215 = vsel %vm884, %v2210, 0
        %2217 = vmatpush.bf16.xpose.msra.mxu0 0
        %2218 = vmatpush.bf16.xpose.msra.mxu0 0
        %2219 = vmatpush.bf16.xpose.msra.mxu0 0
        %2220 = vmatpush.bf16.xpose.msra.mxu0 0
        %2221 = vmatpush.bf16.xpose.msra.mxu0 0
        %2222 = vmatpush.bf16.xpose.msra.mxu0 0
        %2223 = vmatpush.bf16.xpose.msra.mxu0 0
        %2224 = vmatpush.bf16.xpose.msra.mxu0 %v2215
        %2225 = vmatmul.bf16.gmra.mxu0 %v2212
        %v2226 = vpop.f32.mrf.mxu0
        %v2227 = vadd.f32 0.0, %v2226
        %v2228 = vpop.f32.mrf.mxu0
        %v2229 = vadd.f32 0.0, %v2228
        %2230 = vdwg.mxu0
        %2231 = vrot.lane.b32.xlu0 %v1566, 96
        %v2232 = vpop.permute.xlu0 %2231
        %2233 = vrot.lane.b32.xlu0 %v1571, 96
        %v2234 = vpop.permute.xlu0 %2233
        %v2236 = vsel %vm884, %v2232, 0
        %v2239 = vsel %vm884, %v2234, 0
        %2241 = vmatpush.bf16.xpose.msra.mxu0 0
        %2242 = vmatpush.bf16.xpose.msra.mxu0 0
        %2243 = vmatpush.bf16.xpose.msra.mxu0 0
        %2244 = vmatpush.bf16.xpose.msra.mxu0 0
        %2245 = vmatpush.bf16.xpose.msra.mxu0 0
        %2246 = vmatpush.bf16.xpose.msra.mxu0 0
        %2247 = vmatpush.bf16.xpose.msra.mxu0 0
        %2248 = vmatpush.bf16.xpose.msra.mxu0 %v2239
        %2249 = vmatmul.bf16.gmra.mxu0 %v2236
        %v2250 = vpop.f32.mrf.mxu0
        %v2251 = vadd.f32 0.0, %v2250
        %v2252 = vpop.f32.mrf.mxu0
        %v2253 = vadd.f32 0.0, %v2252
        %2254 = vdwg.mxu0
        %2255 = vrot.lane.b32.xlu0 %v1596, 96
        %v2256 = vpop.permute.xlu0 %2255
        %2257 = vrot.lane.b32.xlu0 %v1601, 96
        %v2258 = vpop.permute.xlu0 %2257
        %v2260 = vsel %vm884, %v2256, 0
        %v2263 = vsel %vm884, %v2258, 0
        %2265 = vmatpush.bf16.xpose.msra.mxu0 0
        %2266 = vmatpush.bf16.xpose.msra.mxu0 0
        %2267 = vmatpush.bf16.xpose.msra.mxu0 0
        %2268 = vmatpush.bf16.xpose.msra.mxu0 0
        %2269 = vmatpush.bf16.xpose.msra.mxu0 0
        %2270 = vmatpush.bf16.xpose.msra.mxu0 0
        %2271 = vmatpush.bf16.xpose.msra.mxu0 0
        %2272 = vmatpush.bf16.xpose.msra.mxu0 %v2263
        %2273 = vmatmul.bf16.gmra.mxu0 %v2260
        %v2274 = vpop.f32.mrf.mxu0
        %v2275 = vadd.f32 0.0, %v2274
        %v2276 = vpop.f32.mrf.mxu0
        %v2277 = vadd.f32 0.0, %v2276
        %2278 = vdwg.mxu0
        %2279 = vrot.lane.b32.xlu0 %v1626, 96
        %v2280 = vpop.permute.xlu0 %2279
        %2281 = vrot.lane.b32.xlu0 %v1631, 96
        %v2282 = vpop.permute.xlu0 %2281
        %v2284 = vsel %vm884, %v2280, 0
        %v2287 = vsel %vm884, %v2282, 0
        %2289 = vmatpush.bf16.xpose.msra.mxu0 0
        %2290 = vmatpush.bf16.xpose.msra.mxu0 0
        %2291 = vmatpush.bf16.xpose.msra.mxu0 0
        %2292 = vmatpush.bf16.xpose.msra.mxu0 0
        %2293 = vmatpush.bf16.xpose.msra.mxu0 0
        %2294 = vmatpush.bf16.xpose.msra.mxu0 0
        %2295 = vmatpush.bf16.xpose.msra.mxu0 0
        %2296 = vmatpush.bf16.xpose.msra.mxu0 %v2287
        %2297 = vmatmul.bf16.gmra.mxu0 %v2284
        %v2298 = vpop.f32.mrf.mxu0
        %v2299 = vadd.f32 0.0, %v2298
        %v2300 = vpop.f32.mrf.mxu0
        %v2301 = vadd.f32 0.0, %v2300
        %2302 = vdwg.mxu0
        %2303 = vrot.lane.b32.xlu0 %v1656, 96
        %v2304 = vpop.permute.xlu0 %2303
        %2305 = vrot.lane.b32.xlu0 %v1661, 96
        %v2306 = vpop.permute.xlu0 %2305
        %v2308 = vsel %vm884, %v2304, 0
        %v2311 = vsel %vm884, %v2306, 0
        %2313 = vmatpush.bf16.xpose.msra.mxu0 0
        %2314 = vmatpush.bf16.xpose.msra.mxu0 0
        %2315 = vmatpush.bf16.xpose.msra.mxu0 0
        %2316 = vmatpush.bf16.xpose.msra.mxu0 0
        %2317 = vmatpush.bf16.xpose.msra.mxu0 0
        %2318 = vmatpush.bf16.xpose.msra.mxu0 0
        %2319 = vmatpush.bf16.xpose.msra.mxu0 0
        %2320 = vmatpush.bf16.xpose.msra.mxu0 %v2311
        %2321 = vmatmul.bf16.gmra.mxu0 %v2308
        %v2322 = vpop.f32.mrf.mxu0
        %v2323 = vadd.f32 0.0, %v2322
        %v2324 = vpop.f32.mrf.mxu0
        %v2325 = vadd.f32 0.0, %v2324
        %2326 = vdwg.mxu0
        %2327 = vrot.lane.b32.xlu0 %v1686, 96
        %v2328 = vpop.permute.xlu0 %2327
        %2329 = vrot.lane.b32.xlu0 %v1691, 96
        %v2330 = vpop.permute.xlu0 %2329
        %v2332 = vsel %vm884, %v2328, 0
        %v2335 = vsel %vm884, %v2330, 0
        %2337 = vmatpush.bf16.xpose.msra.mxu0 0
        %2338 = vmatpush.bf16.xpose.msra.mxu0 0
        %2339 = vmatpush.bf16.xpose.msra.mxu0 0
        %2340 = vmatpush.bf16.xpose.msra.mxu0 0
        %2341 = vmatpush.bf16.xpose.msra.mxu0 0
        %2342 = vmatpush.bf16.xpose.msra.mxu0 0
        %2343 = vmatpush.bf16.xpose.msra.mxu0 0
        %2344 = vmatpush.bf16.xpose.msra.mxu0 %v2335
        %2345 = vmatmul.bf16.gmra.mxu0 %v2332
        %v2346 = vpop.f32.mrf.mxu0
        %v2347 = vadd.f32 0.0, %v2346
        %v2348 = vpop.f32.mrf.mxu0
        %v2349 = vadd.f32 0.0, %v2348
        %2350 = vdwg.mxu0
        %2351 = vrot.lane.b32.xlu0 %v1716, 96
        %v2352 = vpop.permute.xlu0 %2351
        %2353 = vrot.lane.b32.xlu0 %v1721, 96
        %v2354 = vpop.permute.xlu0 %2353
        %v2356 = vsel %vm884, %v2352, 0
        %v2359 = vsel %vm884, %v2354, 0
        %2361 = vmatpush.bf16.xpose.msra.mxu0 0
        %2362 = vmatpush.bf16.xpose.msra.mxu0 0
        %2363 = vmatpush.bf16.xpose.msra.mxu0 0
        %2364 = vmatpush.bf16.xpose.msra.mxu0 0
        %2365 = vmatpush.bf16.xpose.msra.mxu0 0
        %2366 = vmatpush.bf16.xpose.msra.mxu0 0
        %2367 = vmatpush.bf16.xpose.msra.mxu0 0
        %2368 = vmatpush.bf16.xpose.msra.mxu0 %v2359
        %2369 = vmatmul.bf16.gmra.mxu0 %v2356
        %v2370 = vpop.f32.mrf.mxu0
        %v2371 = vadd.f32 0.0, %v2370
        %v2372 = vpop.f32.mrf.mxu0
        %v2373 = vadd.f32 0.0, %v2372
        %2374 = vdwg.mxu0
        %v2375 = vmul.f32 %v2203, 0.17677669
        %v2376 = vmul.f32 %v2205, 0.17677669
        %v2377 = vmul.f32 %v2227, 0.17677669
        %v2378 = vmul.f32 %v2229, 0.17677669
        %v2379 = vmul.f32 %v2251, 0.17677669
        %v2380 = vmul.f32 %v2253, 0.17677669
        %v2381 = vmul.f32 %v2275, 0.17677669
        %v2382 = vmul.f32 %v2277, 0.17677669
        %v2383 = vmul.f32 %v2299, 0.17677669
        %v2384 = vmul.f32 %v2301, 0.17677669
        %v2385 = vmul.f32 %v2323, 0.17677669
        %v2386 = vmul.f32 %v2325, 0.17677669
        %v2387 = vmul.f32 %v2347, 0.17677669
        %v2388 = vmul.f32 %v2349, 0.17677669
        %v2389 = vmul.f32 %v2371, 0.17677669
        %v2390 = vmul.f32 %v2373, 0.17677669
        %v2391 = vsel %vm1758, %v2375, -inf
        %2392 = vmax.xlane.f32.xlu0 %v2391
        %v2393 = vpop.xlane.xlu0 %2392
        %v2394 = vsel %vm1758, %v2376, -inf
        %2395 = vmax.xlane.f32.xlu0 %v2394
        %v2396 = vpop.xlane.xlu0 %2395
        %v2397 = vsel %vm1758, %v2377, -inf
        %2398 = vmax.xlane.f32.xlu0 %v2397
        %v2399 = vpop.xlane.xlu0 %2398
        %v2400 = vsel %vm1758, %v2378, -inf
        %2401 = vmax.xlane.f32.xlu0 %v2400
        %v2402 = vpop.xlane.xlu0 %2401
        %v2403 = vsel %vm1758, %v2379, -inf
        %2404 = vmax.xlane.f32.xlu0 %v2403
        %v2405 = vpop.xlane.xlu0 %2404
        %v2406 = vsel %vm1758, %v2380, -inf
        %2407 = vmax.xlane.f32.xlu0 %v2406
        %v2408 = vpop.xlane.xlu0 %2407
        %v2409 = vsel %vm1758, %v2381, -inf
        %2410 = vmax.xlane.f32.xlu0 %v2409
        %v2411 = vpop.xlane.xlu0 %2410
        %v2412 = vsel %vm1758, %v2382, -inf
        %2413 = vmax.xlane.f32.xlu0 %v2412
        %v2414 = vpop.xlane.xlu0 %2413
        %v2415 = vsel %vm1758, %v2383, -inf
        %2416 = vmax.xlane.f32.xlu0 %v2415
        %v2417 = vpop.xlane.xlu0 %2416
        %v2418 = vsel %vm1758, %v2384, -inf
        %2419 = vmax.xlane.f32.xlu0 %v2418
        %v2420 = vpop.xlane.xlu0 %2419
        %v2421 = vsel %vm1758, %v2385, -inf
        %2422 = vmax.xlane.f32.xlu0 %v2421
        %v2423 = vpop.xlane.xlu0 %2422
        %v2424 = vsel %vm1758, %v2386, -inf
        %2425 = vmax.xlane.f32.xlu0 %v2424
        %v2426 = vpop.xlane.xlu0 %2425
        %v2427 = vsel %vm1758, %v2387, -inf
        %2428 = vmax.xlane.f32.xlu0 %v2427
        %v2429 = vpop.xlane.xlu0 %2428
        %v2430 = vsel %vm1758, %v2388, -inf
        %2431 = vmax.xlane.f32.xlu0 %v2430
        %v2432 = vpop.xlane.xlu0 %2431
        %v2433 = vsel %vm1758, %v2389, -inf
        %2434 = vmax.xlane.f32.xlu0 %v2433
        %v2435 = vpop.xlane.xlu0 %2434
        %v2436 = vsel %vm1758, %v2390, -inf
        %2437 = vmax.xlane.f32.xlu0 %v2436
        %v2438 = vpop.xlane.xlu0 %2437
        %v2439 = vsub.f32 %v2375, %v2393
        %v2440 = vsub.f32 %v2376, %v2396
        %v2441 = vsub.f32 %v2377, %v2399
        %v2442 = vsub.f32 %v2378, %v2402
        %v2443 = vsub.f32 %v2379, %v2405
        %v2444 = vsub.f32 %v2380, %v2408
        %v2445 = vsub.f32 %v2381, %v2411
        %v2446 = vsub.f32 %v2382, %v2414
        %v2447 = vsub.f32 %v2383, %v2417
        %v2448 = vsub.f32 %v2384, %v2420
        %v2449 = vsub.f32 %v2385, %v2423
        %v2450 = vsub.f32 %v2386, %v2426
        %v2451 = vsub.f32 %v2387, %v2429
        %v2452 = vsub.f32 %v2388, %v2432
        %v2453 = vsub.f32 %v2389, %v2435
        %v2454 = vsub.f32 %v2390, %v2438
        %v2455 = vmul.f32 %v2439, 1.442695
        %v2456 = vpow.pop %v2455
        %v2457 = vmul.f32 %v2440, 1.442695
        %v2458 = vpow.pop %v2457
        %v2459 = vmul.f32 %v2441, 1.442695
        %v2460 = vpow.pop %v2459
        %v2461 = vmul.f32 %v2442, 1.442695
        %v2462 = vpow.pop %v2461
        %v2463 = vmul.f32 %v2443, 1.442695
        %v2464 = vpow.pop %v2463
        %v2465 = vmul.f32 %v2444, 1.442695
        %v2466 = vpow.pop %v2465
        %v2467 = vmul.f32 %v2445, 1.442695
        %v2468 = vpow.pop %v2467
        %v2469 = vmul.f32 %v2446, 1.442695
        %v2470 = vpow.pop %v2469
        %v2471 = vmul.f32 %v2447, 1.442695
        %v2472 = vpow.pop %v2471
        %v2473 = vmul.f32 %v2448, 1.442695
        %v2474 = vpow.pop %v2473
        %v2475 = vmul.f32 %v2449, 1.442695
        %v2476 = vpow.pop %v2475
        %v2477 = vmul.f32 %v2450, 1.442695
        %v2478 = vpow.pop %v2477
        %v2479 = vmul.f32 %v2451, 1.442695
        %v2480 = vpow.pop %v2479
        %v2481 = vmul.f32 %v2452, 1.442695
        %v2482 = vpow.pop %v2481
        %v2483 = vmul.f32 %v2453, 1.442695
        %v2484 = vpow.pop %v2483
        %v2485 = vmul.f32 %v2454, 1.442695
        %v2486 = vpow.pop %v2485
        %v2487 = vsel %vm1758, %v2456, 0.0
        %2488 = vadd.xlane.f32.xlu0 %v2487
        %v2489 = vpop.xlane.xlu0 %2488
        %v2490 = vsel %vm1758, %v2458, 0.0
        %2491 = vadd.xlane.f32.xlu0 %v2490
        %v2492 = vpop.xlane.xlu0 %2491
        %v2493 = vsel %vm1758, %v2460, 0.0
        %2494 = vadd.xlane.f32.xlu0 %v2493
        %v2495 = vpop.xlane.xlu0 %2494
        %v2496 = vsel %vm1758, %v2462, 0.0
        %2497 = vadd.xlane.f32.xlu0 %v2496
        %v2498 = vpop.xlane.xlu0 %2497
        %v2499 = vsel %vm1758, %v2464, 0.0
        %2500 = vadd.xlane.f32.xlu0 %v2499
        %v2501 = vpop.xlane.xlu0 %2500
        %v2502 = vsel %vm1758, %v2466, 0.0
        %2503 = vadd.xlane.f32.xlu0 %v2502
        %v2504 = vpop.xlane.xlu0 %2503
        %v2505 = vsel %vm1758, %v2468, 0.0
        %2506 = vadd.xlane.f32.xlu0 %v2505
        %v2507 = vpop.xlane.xlu0 %2506
        %v2508 = vsel %vm1758, %v2470, 0.0
        %2509 = vadd.xlane.f32.xlu0 %v2508
        %v2510 = vpop.xlane.xlu0 %2509
        %v2511 = vsel %vm1758, %v2472, 0.0
        %2512 = vadd.xlane.f32.xlu0 %v2511
        %v2513 = vpop.xlane.xlu0 %2512
        %v2514 = vsel %vm1758, %v2474, 0.0
        %2515 = vadd.xlane.f32.xlu0 %v2514
        %v2516 = vpop.xlane.xlu0 %2515
        %v2517 = vsel %vm1758, %v2476, 0.0
        %2518 = vadd.xlane.f32.xlu0 %v2517
        %v2519 = vpop.xlane.xlu0 %2518
        %v2520 = vsel %vm1758, %v2478, 0.0
        %2521 = vadd.xlane.f32.xlu0 %v2520
        %v2522 = vpop.xlane.xlu0 %2521
        %v2523 = vsel %vm1758, %v2480, 0.0
        %2524 = vadd.xlane.f32.xlu0 %v2523
        %v2525 = vpop.xlane.xlu0 %2524
        %v2526 = vsel %vm1758, %v2482, 0.0
        %2527 = vadd.xlane.f32.xlu0 %v2526
        %v2528 = vpop.xlane.xlu0 %2527
        %v2529 = vsel %vm1758, %v2484, 0.0
        %2530 = vadd.xlane.f32.xlu0 %v2529
        %v2531 = vpop.xlane.xlu0 %2530
        %v2532 = vsel %vm1758, %v2486, 0.0
        %2533 = vadd.xlane.f32.xlu0 %v2532
        %v2534 = vpop.xlane.xlu0 %2533
        %v2535 = vrcp.pop %v2489
        %v2536 = vrcp.pop %v2492
        %v2537 = vrcp.pop %v2495
        %v2538 = vrcp.pop %v2498
        %v2539 = vrcp.pop %v2501
        %v2540 = vrcp.pop %v2504
        %v2541 = vrcp.pop %v2507
        %v2542 = vrcp.pop %v2510
        %v2543 = vrcp.pop %v2513
        %v2544 = vrcp.pop %v2516
        %v2545 = vrcp.pop %v2519
        %v2546 = vrcp.pop %v2522
        %v2547 = vrcp.pop %v2525
        %v2548 = vrcp.pop %v2528
        %v2549 = vrcp.pop %v2531
        %v2550 = vrcp.pop %v2534
        %v2551 = vmul.f32 %v2456, %v2535
        %v2552 = vmul.f32 %v2458, %v2536
        %v2553 = vmul.f32 %v2460, %v2537
        %v2554 = vmul.f32 %v2462, %v2538
        %v2555 = vmul.f32 %v2464, %v2539
        %v2556 = vmul.f32 %v2466, %v2540
        %v2557 = vmul.f32 %v2468, %v2541
        %v2558 = vmul.f32 %v2470, %v2542
        %v2559 = vmul.f32 %v2472, %v2543
        %v2560 = vmul.f32 %v2474, %v2544
        %v2561 = vmul.f32 %v2476, %v2545
        %v2562 = vmul.f32 %v2478, %v2546
        %v2563 = vmul.f32 %v2480, %v2547
        %v2564 = vmul.f32 %v2482, %v2548
        %v2565 = vmul.f32 %v2484, %v2549
        %v2566 = vmul.f32 %v2486, %v2550
        %v2567 = vpack.c.bf16 %v2551, %v2551
        %v2568 = vpack.c.bf16 %v2552, %v2552
        %v2569 = vpack.c.bf16 %v2553, %v2553
        %v2570 = vpack.c.bf16 %v2554, %v2554
        %v2571 = vpack.c.bf16 %v2555, %v2555
        %v2572 = vpack.c.bf16 %v2556, %v2556
        %v2573 = vpack.c.bf16 %v2557, %v2557
        %v2574 = vpack.c.bf16 %v2558, %v2558
        %v2575 = vpack.c.bf16 %v2559, %v2559
        %v2576 = vpack.c.bf16 %v2560, %v2560
        %v2577 = vpack.c.bf16 %v2561, %v2561
        %v2578 = vpack.c.bf16 %v2562, %v2562
        %v2579 = vpack.c.bf16 %v2563, %v2563
        %v2580 = vpack.c.bf16 %v2564, %v2564
        %v2581 = vpack.c.bf16 %v2565, %v2565
        %v2582 = vpack.c.bf16 %v2566, %v2566
        %v2585 = vunpack.c.l.b16 %v2567
        %v2586 = vunpack.c.l.b16 %v2568
        %v2587 = vpack.c.b16 %v2586, %v2585
        %2588 = vrot.lane.b32.xlu0 %v1960, 96
        %v2589 = vpop.permute.xlu0 %2588
        %v2592 = vsel %vm1758, %v2587, 0
        %2594 = vmatpush.bf16.msra.mxu0 0
        %2595 = vmatpush.bf16.msra.mxu0 0
        %2596 = vmatpush.bf16.msra.mxu0 0
        %2597 = vmatpush.bf16.msra.mxu0 0
        %2598 = vmatpush.bf16.msra.mxu0 0
        %2599 = vmatpush.bf16.msra.mxu0 0
        %2600 = vmatpush.bf16.msra.mxu0 0
        %2601 = vmatpush.bf16.msra.mxu0 %v2589
        %2602 = vmatmul.bf16.gmra.mxu0 %v2592
        %v2603 = vpop.f32.mrf.mxu0
        %v2604 = vadd.f32 0.0, %v2603
        %v2605 = vpop.f32.mrf.mxu0
        %v2606 = vadd.f32 0.0, %v2605
        %2607 = vdwg.mxu0
        %v2610 = vunpack.c.l.b16 %v2569
        %v2611 = vunpack.c.l.b16 %v2570
        %v2612 = vpack.c.b16 %v2611, %v2610
        %2613 = vrot.lane.b32.xlu0 %v1988, 96
        %v2614 = vpop.permute.xlu0 %2613
        %v2617 = vsel %vm1758, %v2612, 0
        %2619 = vmatpush.bf16.msra.mxu0 0
        %2620 = vmatpush.bf16.msra.mxu0 0
        %2621 = vmatpush.bf16.msra.mxu0 0
        %2622 = vmatpush.bf16.msra.mxu0 0
        %2623 = vmatpush.bf16.msra.mxu0 0
        %2624 = vmatpush.bf16.msra.mxu0 0
        %2625 = vmatpush.bf16.msra.mxu0 0
        %2626 = vmatpush.bf16.msra.mxu0 %v2614
        %2627 = vmatmul.bf16.gmra.mxu0 %v2617
        %v2628 = vpop.f32.mrf.mxu0
        %v2629 = vadd.f32 0.0, %v2628
        %v2630 = vpop.f32.mrf.mxu0
        %v2631 = vadd.f32 0.0, %v2630
        %2632 = vdwg.mxu0
        %v2635 = vunpack.c.l.b16 %v2571
        %v2636 = vunpack.c.l.b16 %v2572
        %v2637 = vpack.c.b16 %v2636, %v2635
        %2638 = vrot.lane.b32.xlu0 %v2016, 96
        %v2639 = vpop.permute.xlu0 %2638
        %v2642 = vsel %vm1758, %v2637, 0
        %2644 = vmatpush.bf16.msra.mxu0 0
        %2645 = vmatpush.bf16.msra.mxu0 0
        %2646 = vmatpush.bf16.msra.mxu0 0
        %2647 = vmatpush.bf16.msra.mxu0 0
        %2648 = vmatpush.bf16.msra.mxu0 0
        %2649 = vmatpush.bf16.msra.mxu0 0
        %2650 = vmatpush.bf16.msra.mxu0 0
        %2651 = vmatpush.bf16.msra.mxu0 %v2639
        %2652 = vmatmul.bf16.gmra.mxu0 %v2642
        %v2653 = vpop.f32.mrf.mxu0
        %v2654 = vadd.f32 0.0, %v2653
        %v2655 = vpop.f32.mrf.mxu0
        %v2656 = vadd.f32 0.0, %v2655
        %2657 = vdwg.mxu0
        %v2660 = vunpack.c.l.b16 %v2573
        %v2661 = vunpack.c.l.b16 %v2574
        %v2662 = vpack.c.b16 %v2661, %v2660
        %2663 = vrot.lane.b32.xlu0 %v2044, 96
        %v2664 = vpop.permute.xlu0 %2663
        %v2667 = vsel %vm1758, %v2662, 0
        %2669 = vmatpush.bf16.msra.mxu0 0
        %2670 = vmatpush.bf16.msra.mxu0 0
        %2671 = vmatpush.bf16.msra.mxu0 0
        %2672 = vmatpush.bf16.msra.mxu0 0
        %2673 = vmatpush.bf16.msra.mxu0 0
        %2674 = vmatpush.bf16.msra.mxu0 0
        %2675 = vmatpush.bf16.msra.mxu0 0
        %2676 = vmatpush.bf16.msra.mxu0 %v2664
        %2677 = vmatmul.bf16.gmra.mxu0 %v2667
        %v2678 = vpop.f32.mrf.mxu0
        %v2679 = vadd.f32 0.0, %v2678
        %v2680 = vpop.f32.mrf.mxu0
        %v2681 = vadd.f32 0.0, %v2680
        %2682 = vdwg.mxu0
        %v2685 = vunpack.c.l.b16 %v2575
        %v2686 = vunpack.c.l.b16 %v2576
        %v2687 = vpack.c.b16 %v2686, %v2685
        %2688 = vrot.lane.b32.xlu0 %v2072, 96
        %v2689 = vpop.permute.xlu0 %2688
        %v2692 = vsel %vm1758, %v2687, 0
        %2694 = vmatpush.bf16.msra.mxu0 0
        %2695 = vmatpush.bf16.msra.mxu0 0
        %2696 = vmatpush.bf16.msra.mxu0 0
        %2697 = vmatpush.bf16.msra.mxu0 0
        %2698 = vmatpush.bf16.msra.mxu0 0
        %2699 = vmatpush.bf16.msra.mxu0 0
        %2700 = vmatpush.bf16.msra.mxu0 0
        %2701 = vmatpush.bf16.msra.mxu0 %v2689
        %2702 = vmatmul.bf16.gmra.mxu0 %v2692
        %v2703 = vpop.f32.mrf.mxu0
        %v2704 = vadd.f32 0.0, %v2703
        %v2705 = vpop.f32.mrf.mxu0
        %v2706 = vadd.f32 0.0, %v2705
        %2707 = vdwg.mxu0
        %v2710 = vunpack.c.l.b16 %v2577
        %v2711 = vunpack.c.l.b16 %v2578
        %v2712 = vpack.c.b16 %v2711, %v2710
        %2713 = vrot.lane.b32.xlu0 %v2100, 96
        %v2714 = vpop.permute.xlu0 %2713
        %v2717 = vsel %vm1758, %v2712, 0
        %2719 = vmatpush.bf16.msra.mxu0 0
        %2720 = vmatpush.bf16.msra.mxu0 0
        %2721 = vmatpush.bf16.msra.mxu0 0
        %2722 = vmatpush.bf16.msra.mxu0 0
        %2723 = vmatpush.bf16.msra.mxu0 0
        %2724 = vmatpush.bf16.msra.mxu0 0
        %2725 = vmatpush.bf16.msra.mxu0 0
        %2726 = vmatpush.bf16.msra.mxu0 %v2714
        %2727 = vmatmul.bf16.gmra.mxu0 %v2717
        %v2728 = vpop.f32.mrf.mxu0
        %v2729 = vadd.f32 0.0, %v2728
        %v2730 = vpop.f32.mrf.mxu0
        %v2731 = vadd.f32 0.0, %v2730
        %2732 = vdwg.mxu0
        %v2735 = vunpack.c.l.b16 %v2579
        %v2736 = vunpack.c.l.b16 %v2580
        %v2737 = vpack.c.b16 %v2736, %v2735
        %2738 = vrot.lane.b32.xlu0 %v2128, 96
        %v2739 = vpop.permute.xlu0 %2738
        %v2742 = vsel %vm1758, %v2737, 0
        %2744 = vmatpush.bf16.msra.mxu0 0
        %2745 = vmatpush.bf16.msra.mxu0 0
        %2746 = vmatpush.bf16.msra.mxu0 0
        %2747 = vmatpush.bf16.msra.mxu0 0
        %2748 = vmatpush.bf16.msra.mxu0 0
        %2749 = vmatpush.bf16.msra.mxu0 0
        %2750 = vmatpush.bf16.msra.mxu0 0
        %2751 = vmatpush.bf16.msra.mxu0 %v2739
        %2752 = vmatmul.bf16.gmra.mxu0 %v2742
        %v2753 = vpop.f32.mrf.mxu0
        %v2754 = vadd.f32 0.0, %v2753
        %v2755 = vpop.f32.mrf.mxu0
        %v2756 = vadd.f32 0.0, %v2755
        %2757 = vdwg.mxu0
        %v2760 = vunpack.c.l.b16 %v2581
        %v2761 = vunpack.c.l.b16 %v2582
        %v2762 = vpack.c.b16 %v2761, %v2760
        %2763 = vrot.lane.b32.xlu0 %v2156, 96
        %v2764 = vpop.permute.xlu0 %2763
        %v2767 = vsel %vm1758, %v2762, 0
        %2769 = vmatpush.bf16.msra.mxu0 0
        %2770 = vmatpush.bf16.msra.mxu0 0
        %2771 = vmatpush.bf16.msra.mxu0 0
        %2772 = vmatpush.bf16.msra.mxu0 0
        %2773 = vmatpush.bf16.msra.mxu0 0
        %2774 = vmatpush.bf16.msra.mxu0 0
        %2775 = vmatpush.bf16.msra.mxu0 0
        %2776 = vmatpush.bf16.msra.mxu0 %v2764
        %2777 = vmatmul.bf16.gmra.mxu0 %v2767
        %v2778 = vpop.f32.mrf.mxu0
        %v2779 = vadd.f32 0.0, %v2778
        %v2780 = vpop.f32.mrf.mxu0
        %v2781 = vadd.f32 0.0, %v2780
        %2782 = vdwg.mxu0
        %v2783 = vpack.c.bf16 %v2606, %v2604
        %v2784 = vpack.c.bf16 %v2631, %v2629
        %v2785 = vpack.c.bf16 %v2656, %v2654
        %v2786 = vpack.c.bf16 %v2681, %v2679
        %v2787 = vpack.c.bf16 %v2706, %v2704
        %v2788 = vpack.c.bf16 %v2731, %v2729
        %v2789 = vpack.c.bf16 %v2756, %v2754
        %v2790 = vpack.c.bf16 %v2781, %v2779
        %v2795 = vunpack.c.l.b16 %v1151
        %v2796 = vunpack.c.l.b16 %v1152
        %v2797 = vunpack.c.l.b16 %v1153
        %v2798 = vunpack.c.l.b16 %v1154
        %v2799 = vpack.c.b16 %v2796, %v2795
        %v2800 = vpack.c.b16 %v2798, %v2797
        %v2804 = vsel %vm884, %v2783, 0
        %v2807 = vsel %vm884, %v2784, 0
        %v2810 = vsel %vm884, %v2785, 0
        %v2813 = vsel %vm884, %v2786, 0
        %v2816 = vsel %vm884, %v2787, 0
        %v2819 = vsel %vm884, %v2788, 0
        %v2822 = vsel %vm884, %v2789, 0
        %v2825 = vsel %vm884, %v2790, 0
        %2827 = vmatpush.bf16.msra.mxu0 0
        %2828 = vmatpush.bf16.msra.mxu0 0
        %2829 = vmatpush.bf16.msra.mxu0 0
        %2830 = vmatpush.bf16.msra.mxu0 0
        %2831 = vmatpush.bf16.msra.mxu0 0
        %2832 = vmatpush.bf16.msra.mxu0 0
        %2833 = vmatpush.bf16.msra.mxu0 %v2800
        %2834 = vmatpush.bf16.msra.mxu0 %v2799
        %2835 = vmatmul.bf16.gmra.mxu0 %v2804
        %v2836 = vpop.f32.mrf.mxu0
        %v2837 = vadd.f32 0.0, %v2836
        %v2838 = vpop.f32.mrf.mxu0
        %v2839 = vadd.f32 0.0, %v2838
        %2840 = vmatmul.bf16.gmra.mxu0 %v2807
        %v2841 = vpop.f32.mrf.mxu0
        %v2842 = vadd.f32 0.0, %v2841
        %v2843 = vpop.f32.mrf.mxu0
        %v2844 = vadd.f32 0.0, %v2843
        %2845 = vmatmul.bf16.gmra.mxu0 %v2810
        %v2846 = vpop.f32.mrf.mxu0
        %v2847 = vadd.f32 0.0, %v2846
        %v2848 = vpop.f32.mrf.mxu0
        %v2849 = vadd.f32 0.0, %v2848
        %2850 = vmatmul.bf16.gmra.mxu0 %v2813
        %v2851 = vpop.f32.mrf.mxu0
        %v2852 = vadd.f32 0.0, %v2851
        %v2853 = vpop.f32.mrf.mxu0
        %v2854 = vadd.f32 0.0, %v2853
        %2855 = vmatmul.bf16.gmra.mxu0 %v2816
        %v2856 = vpop.f32.mrf.mxu0
        %v2857 = vadd.f32 0.0, %v2856
        %v2858 = vpop.f32.mrf.mxu0
        %v2859 = vadd.f32 0.0, %v2858
        %2860 = vmatmul.bf16.gmra.mxu0 %v2819
        %v2861 = vpop.f32.mrf.mxu0
        %v2862 = vadd.f32 0.0, %v2861
        %v2863 = vpop.f32.mrf.mxu0
        %v2864 = vadd.f32 0.0, %v2863
        %2865 = vmatmul.bf16.gmra.mxu0 %v2822
        %v2866 = vpop.f32.mrf.mxu0
        %v2867 = vadd.f32 0.0, %v2866
        %v2868 = vpop.f32.mrf.mxu0
        %v2869 = vadd.f32 0.0, %v2868
        %2870 = vmatmul.bf16.gmra.mxu0 %v2825
        %v2871 = vpop.f32.mrf.mxu0
        %v2872 = vadd.f32 0.0, %v2871
        %v2873 = vpop.f32.mrf.mxu0
        %v2874 = vadd.f32 0.0, %v2873
        %2875 = vdwg.mxu0
        %v2880 = vunpack.c.l.b16 %v1147
        %v2881 = vunpack.c.l.b16 %v1148
        %v2882 = vunpack.c.l.b16 %v1149
        %v2883 = vunpack.c.l.b16 %v1150
        %v2884 = vpack.c.b16 %v2881, %v2880
        %v2885 = vpack.c.b16 %v2883, %v2882
        %v2889 = vsel %vm884, %v2175, 0
        %v2892 = vsel %vm884, %v2176, 0
        %v2895 = vsel %vm884, %v2177, 0
        %v2898 = vsel %vm884, %v2178, 0
        %v2901 = vsel %vm884, %v2179, 0
        %v2904 = vsel %vm884, %v2180, 0
        %v2907 = vsel %vm884, %v2181, 0
        %v2910 = vsel %vm884, %v2182, 0
        %2912 = vmatpush.bf16.msra.mxu0 0
        %2913 = vmatpush.bf16.msra.mxu0 0
        %2914 = vmatpush.bf16.msra.mxu0 0
        %2915 = vmatpush.bf16.msra.mxu0 0
        %2916 = vmatpush.bf16.msra.mxu0 0
        %2917 = vmatpush.bf16.msra.mxu0 0
        %2918 = vmatpush.bf16.msra.mxu0 %v2885
        %2919 = vmatpush.bf16.msra.mxu0 %v2884
        %2920 = vmatmul.bf16.gmra.mxu0 %v2889
        %v2921 = vpop.f32.mrf.mxu0
        %v2922 = vadd.f32 %v2837, %v2921
        %v2923 = vpop.f32.mrf.mxu0
        %v2924 = vadd.f32 %v2839, %v2923
        %2925 = vmatmul.bf16.gmra.mxu0 %v2892
        %v2926 = vpop.f32.mrf.mxu0
        %v2927 = vadd.f32 %v2842, %v2926
        %v2928 = vpop.f32.mrf.mxu0
        %v2929 = vadd.f32 %v2844, %v2928
        %2930 = vmatmul.bf16.gmra.mxu0 %v2895
        %v2931 = vpop.f32.mrf.mxu0
        %v2932 = vadd.f32 %v2847, %v2931
        %v2933 = vpop.f32.mrf.mxu0
        %v2934 = vadd.f32 %v2849, %v2933
        %2935 = vmatmul.bf16.gmra.mxu0 %v2898
        %v2936 = vpop.f32.mrf.mxu0
        %v2937 = vadd.f32 %v2852, %v2936
        %v2938 = vpop.f32.mrf.mxu0
        %v2939 = vadd.f32 %v2854, %v2938
        %2940 = vmatmul.bf16.gmra.mxu0 %v2901
        %v2941 = vpop.f32.mrf.mxu0
        %v2942 = vadd.f32 %v2857, %v2941
        %v2943 = vpop.f32.mrf.mxu0
        %v2944 = vadd.f32 %v2859, %v2943
        %2945 = vmatmul.bf16.gmra.mxu0 %v2904
        %v2946 = vpop.f32.mrf.mxu0
        %v2947 = vadd.f32 %v2862, %v2946
        %v2948 = vpop.f32.mrf.mxu0
        %v2949 = vadd.f32 %v2864, %v2948
        %2950 = vmatmul.bf16.gmra.mxu0 %v2907
        %v2951 = vpop.f32.mrf.mxu0
        %v2952 = vadd.f32 %v2867, %v2951
        %v2953 = vpop.f32.mrf.mxu0
        %v2954 = vadd.f32 %v2869, %v2953
        %2955 = vmatmul.bf16.gmra.mxu0 %v2910
        %v2956 = vpop.f32.mrf.mxu0
        %v2957 = vadd.f32 %v2872, %v2956
        %v2958 = vpop.f32.mrf.mxu0
        %v2959 = vadd.f32 %v2874, %v2958
        %2960 = vdwg.mxu0
        %2961 = vrot.lane.b32.xlu0 %v1506, 64
        %v2962 = vpop.permute.xlu0 %2961
        %2963 = vrot.lane.b32.xlu0 %v1511, 64
        %v2964 = vpop.permute.xlu0 %2963
        %v2966 = vsel %vm884, %v2962, 0
        %v2969 = vsel %vm884, %v2964, 0
        %2971 = vmatpush.bf16.xpose.msra.mxu0 0
        %2972 = vmatpush.bf16.xpose.msra.mxu0 0
        %2973 = vmatpush.bf16.xpose.msra.mxu0 0
        %2974 = vmatpush.bf16.xpose.msra.mxu0 0
        %2975 = vmatpush.bf16.xpose.msra.mxu0 0
        %2976 = vmatpush.bf16.xpose.msra.mxu0 0
        %2977 = vmatpush.bf16.xpose.msra.mxu0 0
        %2978 = vmatpush.bf16.xpose.msra.mxu0 %v2969
        %2979 = vmatmul.bf16.gmra.mxu0 %v2966
        %v2980 = vpop.f32.mrf.mxu0
        %v2981 = vadd.f32 0.0, %v2980
        %v2982 = vpop.f32.mrf.mxu0
        %v2983 = vadd.f32 0.0, %v2982
        %2984 = vdwg.mxu0
        %2985 = vrot.lane.b32.xlu0 %v1536, 64
        %v2986 = vpop.permute.xlu0 %2985
        %2987 = vrot.lane.b32.xlu0 %v1541, 64
        %v2988 = vpop.permute.xlu0 %2987
        %v2990 = vsel %vm884, %v2986, 0
        %v2993 = vsel %vm884, %v2988, 0
        %2995 = vmatpush.bf16.xpose.msra.mxu0 0
        %2996 = vmatpush.bf16.xpose.msra.mxu0 0
        %2997 = vmatpush.bf16.xpose.msra.mxu0 0
        %2998 = vmatpush.bf16.xpose.msra.mxu0 0
        %2999 = vmatpush.bf16.xpose.msra.mxu0 0
        %3000 = vmatpush.bf16.xpose.msra.mxu0 0
        %3001 = vmatpush.bf16.xpose.msra.mxu0 0
        %3002 = vmatpush.bf16.xpose.msra.mxu0 %v2993
        %3003 = vmatmul.bf16.gmra.mxu0 %v2990
        %v3004 = vpop.f32.mrf.mxu0
        %v3005 = vadd.f32 0.0, %v3004
        %v3006 = vpop.f32.mrf.mxu0
        %v3007 = vadd.f32 0.0, %v3006
        %3008 = vdwg.mxu0
        %3009 = vrot.lane.b32.xlu0 %v1566, 64
        %v3010 = vpop.permute.xlu0 %3009
        %3011 = vrot.lane.b32.xlu0 %v1571, 64
        %v3012 = vpop.permute.xlu0 %3011
        %v3014 = vsel %vm884, %v3010, 0
        %v3017 = vsel %vm884, %v3012, 0
        %3019 = vmatpush.bf16.xpose.msra.mxu0 0
        %3020 = vmatpush.bf16.xpose.msra.mxu0 0
        %3021 = vmatpush.bf16.xpose.msra.mxu0 0
        %3022 = vmatpush.bf16.xpose.msra.mxu0 0
        %3023 = vmatpush.bf16.xpose.msra.mxu0 0
        %3024 = vmatpush.bf16.xpose.msra.mxu0 0
        %3025 = vmatpush.bf16.xpose.msra.mxu0 0
        %3026 = vmatpush.bf16.xpose.msra.mxu0 %v3017
        %3027 = vmatmul.bf16.gmra.mxu0 %v3014
        %v3028 = vpop.f32.mrf.mxu0
        %v3029 = vadd.f32 0.0, %v3028
        %v3030 = vpop.f32.mrf.mxu0
        %v3031 = vadd.f32 0.0, %v3030
        %3032 = vdwg.mxu0
        %3033 = vrot.lane.b32.xlu0 %v1596, 64
        %v3034 = vpop.permute.xlu0 %3033
        %3035 = vrot.lane.b32.xlu0 %v1601, 64
        %v3036 = vpop.permute.xlu0 %3035
        %v3038 = vsel %vm884, %v3034, 0
        %v3041 = vsel %vm884, %v3036, 0
        %3043 = vmatpush.bf16.xpose.msra.mxu0 0
        %3044 = vmatpush.bf16.xpose.msra.mxu0 0
        %3045 = vmatpush.bf16.xpose.msra.mxu0 0
        %3046 = vmatpush.bf16.xpose.msra.mxu0 0
        %3047 = vmatpush.bf16.xpose.msra.mxu0 0
        %3048 = vmatpush.bf16.xpose.msra.mxu0 0
        %3049 = vmatpush.bf16.xpose.msra.mxu0 0
        %3050 = vmatpush.bf16.xpose.msra.mxu0 %v3041
        %3051 = vmatmul.bf16.gmra.mxu0 %v3038
        %v3052 = vpop.f32.mrf.mxu0
        %v3053 = vadd.f32 0.0, %v3052
        %v3054 = vpop.f32.mrf.mxu0
        %v3055 = vadd.f32 0.0, %v3054
        %3056 = vdwg.mxu0
        %3057 = vrot.lane.b32.xlu0 %v1626, 64
        %v3058 = vpop.permute.xlu0 %3057
        %3059 = vrot.lane.b32.xlu0 %v1631, 64
        %v3060 = vpop.permute.xlu0 %3059
        %v3062 = vsel %vm884, %v3058, 0
        %v3065 = vsel %vm884, %v3060, 0
        %3067 = vmatpush.bf16.xpose.msra.mxu0 0
        %3068 = vmatpush.bf16.xpose.msra.mxu0 0
        %3069 = vmatpush.bf16.xpose.msra.mxu0 0
        %3070 = vmatpush.bf16.xpose.msra.mxu0 0
        %3071 = vmatpush.bf16.xpose.msra.mxu0 0
        %3072 = vmatpush.bf16.xpose.msra.mxu0 0
        %3073 = vmatpush.bf16.xpose.msra.mxu0 0
        %3074 = vmatpush.bf16.xpose.msra.mxu0 %v3065
        %3075 = vmatmul.bf16.gmra.mxu0 %v3062
        %v3076 = vpop.f32.mrf.mxu0
        %v3077 = vadd.f32 0.0, %v3076
        %v3078 = vpop.f32.mrf.mxu0
        %v3079 = vadd.f32 0.0, %v3078
        %3080 = vdwg.mxu0
        %3081 = vrot.lane.b32.xlu0 %v1656, 64
        %v3082 = vpop.permute.xlu0 %3081
        %3083 = vrot.lane.b32.xlu0 %v1661, 64
        %v3084 = vpop.permute.xlu0 %3083
        %v3086 = vsel %vm884, %v3082, 0
        %v3089 = vsel %vm884, %v3084, 0
        %3091 = vmatpush.bf16.xpose.msra.mxu0 0
        %3092 = vmatpush.bf16.xpose.msra.mxu0 0
        %3093 = vmatpush.bf16.xpose.msra.mxu0 0
        %3094 = vmatpush.bf16.xpose.msra.mxu0 0
        %3095 = vmatpush.bf16.xpose.msra.mxu0 0
        %3096 = vmatpush.bf16.xpose.msra.mxu0 0
        %3097 = vmatpush.bf16.xpose.msra.mxu0 0
        %3098 = vmatpush.bf16.xpose.msra.mxu0 %v3089
        %3099 = vmatmul.bf16.gmra.mxu0 %v3086
        %v3100 = vpop.f32.mrf.mxu0
        %v3101 = vadd.f32 0.0, %v3100
        %v3102 = vpop.f32.mrf.mxu0
        %v3103 = vadd.f32 0.0, %v3102
        %3104 = vdwg.mxu0
        %3105 = vrot.lane.b32.xlu0 %v1686, 64
        %v3106 = vpop.permute.xlu0 %3105
        %3107 = vrot.lane.b32.xlu0 %v1691, 64
        %v3108 = vpop.permute.xlu0 %3107
        %v3110 = vsel %vm884, %v3106, 0
        %v3113 = vsel %vm884, %v3108, 0
        %3115 = vmatpush.bf16.xpose.msra.mxu0 0
        %3116 = vmatpush.bf16.xpose.msra.mxu0 0
        %3117 = vmatpush.bf16.xpose.msra.mxu0 0
        %3118 = vmatpush.bf16.xpose.msra.mxu0 0
        %3119 = vmatpush.bf16.xpose.msra.mxu0 0
        %3120 = vmatpush.bf16.xpose.msra.mxu0 0
        %3121 = vmatpush.bf16.xpose.msra.mxu0 0
        %3122 = vmatpush.bf16.xpose.msra.mxu0 %v3113
        %3123 = vmatmul.bf16.gmra.mxu0 %v3110
        %v3124 = vpop.f32.mrf.mxu0
        %v3125 = vadd.f32 0.0, %v3124
        %v3126 = vpop.f32.mrf.mxu0
        %v3127 = vadd.f32 0.0, %v3126
        %3128 = vdwg.mxu0
        %3129 = vrot.lane.b32.xlu0 %v1716, 64
        %v3130 = vpop.permute.xlu0 %3129
        %3131 = vrot.lane.b32.xlu0 %v1721, 64
        %v3132 = vpop.permute.xlu0 %3131
        %v3134 = vsel %vm884, %v3130, 0
        %v3137 = vsel %vm884, %v3132, 0
        %3139 = vmatpush.bf16.xpose.msra.mxu0 0
        %3140 = vmatpush.bf16.xpose.msra.mxu0 0
        %3141 = vmatpush.bf16.xpose.msra.mxu0 0
        %3142 = vmatpush.bf16.xpose.msra.mxu0 0
        %3143 = vmatpush.bf16.xpose.msra.mxu0 0
        %3144 = vmatpush.bf16.xpose.msra.mxu0 0
        %3145 = vmatpush.bf16.xpose.msra.mxu0 0
        %3146 = vmatpush.bf16.xpose.msra.mxu0 %v3137
        %3147 = vmatmul.bf16.gmra.mxu0 %v3134
        %v3148 = vpop.f32.mrf.mxu0
        %v3149 = vadd.f32 0.0, %v3148
        %v3150 = vpop.f32.mrf.mxu0
        %v3151 = vadd.f32 0.0, %v3150
        %3152 = vdwg.mxu0
        %v3153 = vmul.f32 %v2981, 0.17677669
        %v3154 = vmul.f32 %v2983, 0.17677669
        %v3155 = vmul.f32 %v3005, 0.17677669
        %v3156 = vmul.f32 %v3007, 0.17677669
        %v3157 = vmul.f32 %v3029, 0.17677669
        %v3158 = vmul.f32 %v3031, 0.17677669
        %v3159 = vmul.f32 %v3053, 0.17677669
        %v3160 = vmul.f32 %v3055, 0.17677669
        %v3161 = vmul.f32 %v3077, 0.17677669
        %v3162 = vmul.f32 %v3079, 0.17677669
        %v3163 = vmul.f32 %v3101, 0.17677669
        %v3164 = vmul.f32 %v3103, 0.17677669
        %v3165 = vmul.f32 %v3125, 0.17677669
        %v3166 = vmul.f32 %v3127, 0.17677669
        %v3167 = vmul.f32 %v3149, 0.17677669
        %v3168 = vmul.f32 %v3151, 0.17677669
        %v3169 = vsel %vm1758, %v3153, -inf
        %3170 = vmax.xlane.f32.xlu0 %v3169
        %v3171 = vpop.xlane.xlu0 %3170
        %v3172 = vsel %vm1758, %v3154, -inf
        %3173 = vmax.xlane.f32.xlu0 %v3172
        %v3174 = vpop.xlane.xlu0 %3173
        %v3175 = vsel %vm1758, %v3155, -inf
        %3176 = vmax.xlane.f32.xlu0 %v3175
        %v3177 = vpop.xlane.xlu0 %3176
        %v3178 = vsel %vm1758, %v3156, -inf
        %3179 = vmax.xlane.f32.xlu0 %v3178
        %v3180 = vpop.xlane.xlu0 %3179
        %v3181 = vsel %vm1758, %v3157, -inf
        %3182 = vmax.xlane.f32.xlu0 %v3181
        %v3183 = vpop.xlane.xlu0 %3182
        %v3184 = vsel %vm1758, %v3158, -inf
        %3185 = vmax.xlane.f32.xlu0 %v3184
        %v3186 = vpop.xlane.xlu0 %3185
        %v3187 = vsel %vm1758, %v3159, -inf
        %3188 = vmax.xlane.f32.xlu0 %v3187
        %v3189 = vpop.xlane.xlu0 %3188
        %v3190 = vsel %vm1758, %v3160, -inf
        %3191 = vmax.xlane.f32.xlu0 %v3190
        %v3192 = vpop.xlane.xlu0 %3191
        %v3193 = vsel %vm1758, %v3161, -inf
        %3194 = vmax.xlane.f32.xlu0 %v3193
        %v3195 = vpop.xlane.xlu0 %3194
        %v3196 = vsel %vm1758, %v3162, -inf
        %3197 = vmax.xlane.f32.xlu0 %v3196
        %v3198 = vpop.xlane.xlu0 %3197
        %v3199 = vsel %vm1758, %v3163, -inf
        %3200 = vmax.xlane.f32.xlu0 %v3199
        %v3201 = vpop.xlane.xlu0 %3200
        %v3202 = vsel %vm1758, %v3164, -inf
        %3203 = vmax.xlane.f32.xlu0 %v3202
        %v3204 = vpop.xlane.xlu0 %3203
        %v3205 = vsel %vm1758, %v3165, -inf
        %3206 = vmax.xlane.f32.xlu0 %v3205
        %v3207 = vpop.xlane.xlu0 %3206
        %v3208 = vsel %vm1758, %v3166, -inf
        %3209 = vmax.xlane.f32.xlu0 %v3208
        %v3210 = vpop.xlane.xlu0 %3209
        %v3211 = vsel %vm1758, %v3167, -inf
        %3212 = vmax.xlane.f32.xlu0 %v3211
        %v3213 = vpop.xlane.xlu0 %3212
        %v3214 = vsel %vm1758, %v3168, -inf
        %3215 = vmax.xlane.f32.xlu0 %v3214
        %v3216 = vpop.xlane.xlu0 %3215
        %v3217 = vsub.f32 %v3153, %v3171
        %v3218 = vsub.f32 %v3154, %v3174
        %v3219 = vsub.f32 %v3155, %v3177
        %v3220 = vsub.f32 %v3156, %v3180
        %v3221 = vsub.f32 %v3157, %v3183
        %v3222 = vsub.f32 %v3158, %v3186
        %v3223 = vsub.f32 %v3159, %v3189
        %v3224 = vsub.f32 %v3160, %v3192
        %v3225 = vsub.f32 %v3161, %v3195
        %v3226 = vsub.f32 %v3162, %v3198
        %v3227 = vsub.f32 %v3163, %v3201
        %v3228 = vsub.f32 %v3164, %v3204
        %v3229 = vsub.f32 %v3165, %v3207
        %v3230 = vsub.f32 %v3166, %v3210
        %v3231 = vsub.f32 %v3167, %v3213
        %v3232 = vsub.f32 %v3168, %v3216
        %v3233 = vmul.f32 %v3217, 1.442695
        %v3234 = vpow.pop %v3233
        %v3235 = vmul.f32 %v3218, 1.442695
        %v3236 = vpow.pop %v3235
        %v3237 = vmul.f32 %v3219, 1.442695
        %v3238 = vpow.pop %v3237
        %v3239 = vmul.f32 %v3220, 1.442695
        %v3240 = vpow.pop %v3239
        %v3241 = vmul.f32 %v3221, 1.442695
        %v3242 = vpow.pop %v3241
        %v3243 = vmul.f32 %v3222, 1.442695
        %v3244 = vpow.pop %v3243
        %v3245 = vmul.f32 %v3223, 1.442695
        %v3246 = vpow.pop %v3245
        %v3247 = vmul.f32 %v3224, 1.442695
        %v3248 = vpow.pop %v3247
        %v3249 = vmul.f32 %v3225, 1.442695
        %v3250 = vpow.pop %v3249
        %v3251 = vmul.f32 %v3226, 1.442695
        %v3252 = vpow.pop %v3251
        %v3253 = vmul.f32 %v3227, 1.442695
        %v3254 = vpow.pop %v3253
        %v3255 = vmul.f32 %v3228, 1.442695
        %v3256 = vpow.pop %v3255
        %v3257 = vmul.f32 %v3229, 1.442695
        %v3258 = vpow.pop %v3257
        %v3259 = vmul.f32 %v3230, 1.442695
        %v3260 = vpow.pop %v3259
        %v3261 = vmul.f32 %v3231, 1.442695
        %v3262 = vpow.pop %v3261
        %v3263 = vmul.f32 %v3232, 1.442695
        %v3264 = vpow.pop %v3263
        %v3265 = vsel %vm1758, %v3234, 0.0
        %3266 = vadd.xlane.f32.xlu0 %v3265
        %v3267 = vpop.xlane.xlu0 %3266
        %v3268 = vsel %vm1758, %v3236, 0.0
        %3269 = vadd.xlane.f32.xlu0 %v3268
        %v3270 = vpop.xlane.xlu0 %3269
        %v3271 = vsel %vm1758, %v3238, 0.0
        %3272 = vadd.xlane.f32.xlu0 %v3271
        %v3273 = vpop.xlane.xlu0 %3272
        %v3274 = vsel %vm1758, %v3240, 0.0
        %3275 = vadd.xlane.f32.xlu0 %v3274
        %v3276 = vpop.xlane.xlu0 %3275
        %v3277 = vsel %vm1758, %v3242, 0.0
        %3278 = vadd.xlane.f32.xlu0 %v3277
        %v3279 = vpop.xlane.xlu0 %3278
        %v3280 = vsel %vm1758, %v3244, 0.0
        %3281 = vadd.xlane.f32.xlu0 %v3280
        %v3282 = vpop.xlane.xlu0 %3281
        %v3283 = vsel %vm1758, %v3246, 0.0
        %3284 = vadd.xlane.f32.xlu0 %v3283
        %v3285 = vpop.xlane.xlu0 %3284
        %v3286 = vsel %vm1758, %v3248, 0.0
        %3287 = vadd.xlane.f32.xlu0 %v3286
        %v3288 = vpop.xlane.xlu0 %3287
        %v3289 = vsel %vm1758, %v3250, 0.0
        %3290 = vadd.xlane.f32.xlu0 %v3289
        %v3291 = vpop.xlane.xlu0 %3290
        %v3292 = vsel %vm1758, %v3252, 0.0
        %3293 = vadd.xlane.f32.xlu0 %v3292
        %v3294 = vpop.xlane.xlu0 %3293
        %v3295 = vsel %vm1758, %v3254, 0.0
        %3296 = vadd.xlane.f32.xlu0 %v3295
        %v3297 = vpop.xlane.xlu0 %3296
        %v3298 = vsel %vm1758, %v3256, 0.0
        %3299 = vadd.xlane.f32.xlu0 %v3298
        %v3300 = vpop.xlane.xlu0 %3299
        %v3301 = vsel %vm1758, %v3258, 0.0
        %3302 = vadd.xlane.f32.xlu0 %v3301
        %v3303 = vpop.xlane.xlu0 %3302
        %v3304 = vsel %vm1758, %v3260, 0.0
        %3305 = vadd.xlane.f32.xlu0 %v3304
        %v3306 = vpop.xlane.xlu0 %3305
        %v3307 = vsel %vm1758, %v3262, 0.0
        %3308 = vadd.xlane.f32.xlu0 %v3307
        %v3309 = vpop.xlane.xlu0 %3308
        %v3310 = vsel %vm1758, %v3264, 0.0
        %3311 = vadd.xlane.f32.xlu0 %v3310
        %v3312 = vpop.xlane.xlu0 %3311
        %v3313 = vrcp.pop %v3267
        %v3314 = vrcp.pop %v3270
        %v3315 = vrcp.pop %v3273
        %v3316 = vrcp.pop %v3276
        %v3317 = vrcp.pop %v3279
        %v3318 = vrcp.pop %v3282
        %v3319 = vrcp.pop %v3285
        %v3320 = vrcp.pop %v3288
        %v3321 = vrcp.pop %v3291
        %v3322 = vrcp.pop %v3294
        %v3323 = vrcp.pop %v3297
        %v3324 = vrcp.pop %v3300
        %v3325 = vrcp.pop %v3303
        %v3326 = vrcp.pop %v3306
        %v3327 = vrcp.pop %v3309
        %v3328 = vrcp.pop %v3312
        %v3329 = vmul.f32 %v3234, %v3313
        %v3330 = vmul.f32 %v3236, %v3314
        %v3331 = vmul.f32 %v3238, %v3315
        %v3332 = vmul.f32 %v3240, %v3316
        %v3333 = vmul.f32 %v3242, %v3317
        %v3334 = vmul.f32 %v3244, %v3318
        %v3335 = vmul.f32 %v3246, %v3319
        %v3336 = vmul.f32 %v3248, %v3320
        %v3337 = vmul.f32 %v3250, %v3321
        %v3338 = vmul.f32 %v3252, %v3322
        %v3339 = vmul.f32 %v3254, %v3323
        %v3340 = vmul.f32 %v3256, %v3324
        %v3341 = vmul.f32 %v3258, %v3325
        %v3342 = vmul.f32 %v3260, %v3326
        %v3343 = vmul.f32 %v3262, %v3327
        %v3344 = vmul.f32 %v3264, %v3328
        %v3345 = vpack.c.bf16 %v3329, %v3329
        %v3346 = vpack.c.bf16 %v3330, %v3330
        %v3347 = vpack.c.bf16 %v3331, %v3331
        %v3348 = vpack.c.bf16 %v3332, %v3332
        %v3349 = vpack.c.bf16 %v3333, %v3333
        %v3350 = vpack.c.bf16 %v3334, %v3334
        %v3351 = vpack.c.bf16 %v3335, %v3335
        %v3352 = vpack.c.bf16 %v3336, %v3336
        %v3353 = vpack.c.bf16 %v3337, %v3337
        %v3354 = vpack.c.bf16 %v3338, %v3338
        %v3355 = vpack.c.bf16 %v3339, %v3339
        %v3356 = vpack.c.bf16 %v3340, %v3340
        %v3357 = vpack.c.bf16 %v3341, %v3341
        %v3358 = vpack.c.bf16 %v3342, %v3342
        %v3359 = vpack.c.bf16 %v3343, %v3343
        %v3360 = vpack.c.bf16 %v3344, %v3344
        %v3363 = vunpack.c.l.b16 %v3345
        %v3364 = vunpack.c.l.b16 %v3346
        %v3365 = vpack.c.b16 %v3364, %v3363
        %3366 = vrot.lane.b32.xlu0 %v1960, 64
        %v3367 = vpop.permute.xlu0 %3366
        %v3370 = vsel %vm1758, %v3365, 0
        %3372 = vmatpush.bf16.msra.mxu0 0
        %3373 = vmatpush.bf16.msra.mxu0 0
        %3374 = vmatpush.bf16.msra.mxu0 0
        %3375 = vmatpush.bf16.msra.mxu0 0
        %3376 = vmatpush.bf16.msra.mxu0 0
        %3377 = vmatpush.bf16.msra.mxu0 0
        %3378 = vmatpush.bf16.msra.mxu0 0
        %3379 = vmatpush.bf16.msra.mxu0 %v3367
        %3380 = vmatmul.bf16.gmra.mxu0 %v3370
        %v3381 = vpop.f32.mrf.mxu0
        %v3382 = vadd.f32 0.0, %v3381
        %v3383 = vpop.f32.mrf.mxu0
        %v3384 = vadd.f32 0.0, %v3383
        %3385 = vdwg.mxu0
        %v3388 = vunpack.c.l.b16 %v3347
        %v3389 = vunpack.c.l.b16 %v3348
        %v3390 = vpack.c.b16 %v3389, %v3388
        %3391 = vrot.lane.b32.xlu0 %v1988, 64
        %v3392 = vpop.permute.xlu0 %3391
        %v3395 = vsel %vm1758, %v3390, 0
        %3397 = vmatpush.bf16.msra.mxu0 0
        %3398 = vmatpush.bf16.msra.mxu0 0
        %3399 = vmatpush.bf16.msra.mxu0 0
        %3400 = vmatpush.bf16.msra.mxu0 0
        %3401 = vmatpush.bf16.msra.mxu0 0
        %3402 = vmatpush.bf16.msra.mxu0 0
        %3403 = vmatpush.bf16.msra.mxu0 0
        %3404 = vmatpush.bf16.msra.mxu0 %v3392
        %3405 = vmatmul.bf16.gmra.mxu0 %v3395
        %v3406 = vpop.f32.mrf.mxu0
        %v3407 = vadd.f32 0.0, %v3406
        %v3408 = vpop.f32.mrf.mxu0
        %v3409 = vadd.f32 0.0, %v3408
        %3410 = vdwg.mxu0
        %v3413 = vunpack.c.l.b16 %v3349
        %v3414 = vunpack.c.l.b16 %v3350
        %v3415 = vpack.c.b16 %v3414, %v3413
        %3416 = vrot.lane.b32.xlu0 %v2016, 64
        %v3417 = vpop.permute.xlu0 %3416
        %v3420 = vsel %vm1758, %v3415, 0
        %3422 = vmatpush.bf16.msra.mxu0 0
        %3423 = vmatpush.bf16.msra.mxu0 0
        %3424 = vmatpush.bf16.msra.mxu0 0
        %3425 = vmatpush.bf16.msra.mxu0 0
        %3426 = vmatpush.bf16.msra.mxu0 0
        %3427 = vmatpush.bf16.msra.mxu0 0
        %3428 = vmatpush.bf16.msra.mxu0 0
        %3429 = vmatpush.bf16.msra.mxu0 %v3417
        %3430 = vmatmul.bf16.gmra.mxu0 %v3420
        %v3431 = vpop.f32.mrf.mxu0
        %v3432 = vadd.f32 0.0, %v3431
        %v3433 = vpop.f32.mrf.mxu0
        %v3434 = vadd.f32 0.0, %v3433
        %3435 = vdwg.mxu0
        %v3438 = vunpack.c.l.b16 %v3351
        %v3439 = vunpack.c.l.b16 %v3352
        %v3440 = vpack.c.b16 %v3439, %v3438
        %3441 = vrot.lane.b32.xlu0 %v2044, 64
        %v3442 = vpop.permute.xlu0 %3441
        %v3445 = vsel %vm1758, %v3440, 0
        %3447 = vmatpush.bf16.msra.mxu0 0
        %3448 = vmatpush.bf16.msra.mxu0 0
        %3449 = vmatpush.bf16.msra.mxu0 0
        %3450 = vmatpush.bf16.msra.mxu0 0
        %3451 = vmatpush.bf16.msra.mxu0 0
        %3452 = vmatpush.bf16.msra.mxu0 0
        %3453 = vmatpush.bf16.msra.mxu0 0
        %3454 = vmatpush.bf16.msra.mxu0 %v3442
        %3455 = vmatmul.bf16.gmra.mxu0 %v3445
        %v3456 = vpop.f32.mrf.mxu0
        %v3457 = vadd.f32 0.0, %v3456
        %v3458 = vpop.f32.mrf.mxu0
        %v3459 = vadd.f32 0.0, %v3458
        %3460 = vdwg.mxu0
        %v3463 = vunpack.c.l.b16 %v3353
        %v3464 = vunpack.c.l.b16 %v3354
        %v3465 = vpack.c.b16 %v3464, %v3463
        %3466 = vrot.lane.b32.xlu0 %v2072, 64
        %v3467 = vpop.permute.xlu0 %3466
        %v3470 = vsel %vm1758, %v3465, 0
        %3472 = vmatpush.bf16.msra.mxu0 0
        %3473 = vmatpush.bf16.msra.mxu0 0
        %3474 = vmatpush.bf16.msra.mxu0 0
        %3475 = vmatpush.bf16.msra.mxu0 0
        %3476 = vmatpush.bf16.msra.mxu0 0
        %3477 = vmatpush.bf16.msra.mxu0 0
        %3478 = vmatpush.bf16.msra.mxu0 0
        %3479 = vmatpush.bf16.msra.mxu0 %v3467
        %3480 = vmatmul.bf16.gmra.mxu0 %v3470
        %v3481 = vpop.f32.mrf.mxu0
        %v3482 = vadd.f32 0.0, %v3481
        %v3483 = vpop.f32.mrf.mxu0
        %v3484 = vadd.f32 0.0, %v3483
        %3485 = vdwg.mxu0
        %v3488 = vunpack.c.l.b16 %v3355
        %v3489 = vunpack.c.l.b16 %v3356
        %v3490 = vpack.c.b16 %v3489, %v3488
        %3491 = vrot.lane.b32.xlu0 %v2100, 64
        %v3492 = vpop.permute.xlu0 %3491
        %v3495 = vsel %vm1758, %v3490, 0
        %3497 = vmatpush.bf16.msra.mxu0 0
        %3498 = vmatpush.bf16.msra.mxu0 0
        %3499 = vmatpush.bf16.msra.mxu0 0
        %3500 = vmatpush.bf16.msra.mxu0 0
        %3501 = vmatpush.bf16.msra.mxu0 0
        %3502 = vmatpush.bf16.msra.mxu0 0
        %3503 = vmatpush.bf16.msra.mxu0 0
        %3504 = vmatpush.bf16.msra.mxu0 %v3492
        %3505 = vmatmul.bf16.gmra.mxu0 %v3495
        %v3506 = vpop.f32.mrf.mxu0
        %v3507 = vadd.f32 0.0, %v3506
        %v3508 = vpop.f32.mrf.mxu0
        %v3509 = vadd.f32 0.0, %v3508
        %3510 = vdwg.mxu0
        %v3513 = vunpack.c.l.b16 %v3357
        %v3514 = vunpack.c.l.b16 %v3358
        %v3515 = vpack.c.b16 %v3514, %v3513
        %3516 = vrot.lane.b32.xlu0 %v2128, 64
        %v3517 = vpop.permute.xlu0 %3516
        %v3520 = vsel %vm1758, %v3515, 0
        %3522 = vmatpush.bf16.msra.mxu0 0
        %3523 = vmatpush.bf16.msra.mxu0 0
        %3524 = vmatpush.bf16.msra.mxu0 0
        %3525 = vmatpush.bf16.msra.mxu0 0
        %3526 = vmatpush.bf16.msra.mxu0 0
        %3527 = vmatpush.bf16.msra.mxu0 0
        %3528 = vmatpush.bf16.msra.mxu0 0
        %3529 = vmatpush.bf16.msra.mxu0 %v3517
        %3530 = vmatmul.bf16.gmra.mxu0 %v3520
        %v3531 = vpop.f32.mrf.mxu0
        %v3532 = vadd.f32 0.0, %v3531
        %v3533 = vpop.f32.mrf.mxu0
        %v3534 = vadd.f32 0.0, %v3533
        %3535 = vdwg.mxu0
        %v3538 = vunpack.c.l.b16 %v3359
        %v3539 = vunpack.c.l.b16 %v3360
        %v3540 = vpack.c.b16 %v3539, %v3538
        %3541 = vrot.lane.b32.xlu0 %v2156, 64
        %v3542 = vpop.permute.xlu0 %3541
        %v3545 = vsel %vm1758, %v3540, 0
        %3547 = vmatpush.bf16.msra.mxu0 0
        %3548 = vmatpush.bf16.msra.mxu0 0
        %3549 = vmatpush.bf16.msra.mxu0 0
        %3550 = vmatpush.bf16.msra.mxu0 0
        %3551 = vmatpush.bf16.msra.mxu0 0
        %3552 = vmatpush.bf16.msra.mxu0 0
        %3553 = vmatpush.bf16.msra.mxu0 0
        %3554 = vmatpush.bf16.msra.mxu0 %v3542
        %3555 = vmatmul.bf16.gmra.mxu0 %v3545
        %v3556 = vpop.f32.mrf.mxu0
        %v3557 = vadd.f32 0.0, %v3556
        %v3558 = vpop.f32.mrf.mxu0
        %v3559 = vadd.f32 0.0, %v3558
        %3560 = vdwg.mxu0
        %v3561 = vpack.c.bf16 %v3384, %v3382
        %v3562 = vpack.c.bf16 %v3409, %v3407
        %v3563 = vpack.c.bf16 %v3434, %v3432
        %v3564 = vpack.c.bf16 %v3459, %v3457
        %v3565 = vpack.c.bf16 %v3484, %v3482
        %v3566 = vpack.c.bf16 %v3509, %v3507
        %v3567 = vpack.c.bf16 %v3534, %v3532
        %v3568 = vpack.c.bf16 %v3559, %v3557
        %v3573 = vunpack.c.l.b16 %v1155
        %v3574 = vunpack.c.l.b16 %v1156
        %v3575 = vunpack.c.l.b16 %v1157
        %v3576 = vunpack.c.l.b16 %v1158
        %v3577 = vpack.c.b16 %v3574, %v3573
        %v3578 = vpack.c.b16 %v3576, %v3575
        %v3582 = vsel %vm884, %v3561, 0
        %v3585 = vsel %vm884, %v3562, 0
        %v3588 = vsel %vm884, %v3563, 0
        %v3591 = vsel %vm884, %v3564, 0
        %v3594 = vsel %vm884, %v3565, 0
        %v3597 = vsel %vm884, %v3566, 0
        %v3600 = vsel %vm884, %v3567, 0
        %v3603 = vsel %vm884, %v3568, 0
        %3605 = vmatpush.bf16.msra.mxu0 0
        %3606 = vmatpush.bf16.msra.mxu0 0
        %3607 = vmatpush.bf16.msra.mxu0 0
        %3608 = vmatpush.bf16.msra.mxu0 0
        %3609 = vmatpush.bf16.msra.mxu0 0
        %3610 = vmatpush.bf16.msra.mxu0 0
        %3611 = vmatpush.bf16.msra.mxu0 %v3578
        %3612 = vmatpush.bf16.msra.mxu0 %v3577
        %3613 = vmatmul.bf16.gmra.mxu0 %v3582
        %v3614 = vpop.f32.mrf.mxu0
        %v3615 = vadd.f32 0.0, %v3614
        %v3616 = vpop.f32.mrf.mxu0
        %v3617 = vadd.f32 0.0, %v3616
        %3618 = vmatmul.bf16.gmra.mxu0 %v3585
        %v3619 = vpop.f32.mrf.mxu0
        %v3620 = vadd.f32 0.0, %v3619
        %v3621 = vpop.f32.mrf.mxu0
        %v3622 = vadd.f32 0.0, %v3621
        %3623 = vmatmul.bf16.gmra.mxu0 %v3588
        %v3624 = vpop.f32.mrf.mxu0
        %v3625 = vadd.f32 0.0, %v3624
        %v3626 = vpop.f32.mrf.mxu0
        %v3627 = vadd.f32 0.0, %v3626
        %3628 = vmatmul.bf16.gmra.mxu0 %v3591
        %v3629 = vpop.f32.mrf.mxu0
        %v3630 = vadd.f32 0.0, %v3629
        %v3631 = vpop.f32.mrf.mxu0
        %v3632 = vadd.f32 0.0, %v3631
        %3633 = vmatmul.bf16.gmra.mxu0 %v3594
        %v3634 = vpop.f32.mrf.mxu0
        %v3635 = vadd.f32 0.0, %v3634
        %v3636 = vpop.f32.mrf.mxu0
        %v3637 = vadd.f32 0.0, %v3636
        %3638 = vmatmul.bf16.gmra.mxu0 %v3597
        %v3639 = vpop.f32.mrf.mxu0
        %v3640 = vadd.f32 0.0, %v3639
        %v3641 = vpop.f32.mrf.mxu0
        %v3642 = vadd.f32 0.0, %v3641
        %3643 = vmatmul.bf16.gmra.mxu0 %v3600
        %v3644 = vpop.f32.mrf.mxu0
        %v3645 = vadd.f32 0.0, %v3644
        %v3646 = vpop.f32.mrf.mxu0
        %v3647 = vadd.f32 0.0, %v3646
        %3648 = vmatmul.bf16.gmra.mxu0 %v3603
        %v3649 = vpop.f32.mrf.mxu0
        %v3650 = vadd.f32 0.0, %v3649
        %v3651 = vpop.f32.mrf.mxu0
        %v3652 = vadd.f32 0.0, %v3651
        %3653 = vdwg.mxu0
        %v3654 = vadd.f32 %v2922, %v3615
        %v3655 = vadd.f32 %v2924, %v3617
        %v3656 = vadd.f32 %v2927, %v3620
        %v3657 = vadd.f32 %v2929, %v3622
        %v3658 = vadd.f32 %v2932, %v3625
        %v3659 = vadd.f32 %v2934, %v3627
        %v3660 = vadd.f32 %v2937, %v3630
        %v3661 = vadd.f32 %v2939, %v3632
        %v3662 = vadd.f32 %v2942, %v3635
        %v3663 = vadd.f32 %v2944, %v3637
        %v3664 = vadd.f32 %v2947, %v3640
        %v3665 = vadd.f32 %v2949, %v3642
        %v3666 = vadd.f32 %v2952, %v3645
        %v3667 = vadd.f32 %v2954, %v3647
        %v3668 = vadd.f32 %v2957, %v3650
        %v3669 = vadd.f32 %v2959, %v3652
        %3670 = vrot.lane.b32.xlu0 %v1506, 32
        %v3671 = vpop.permute.xlu0 %3670
        %3672 = vrot.lane.b32.xlu0 %v1511, 32
        %v3673 = vpop.permute.xlu0 %3672
        %v3675 = vsel %vm884, %v3671, 0
        %v3678 = vsel %vm884, %v3673, 0
        %3680 = vmatpush.bf16.xpose.msra.mxu0 0
        %3681 = vmatpush.bf16.xpose.msra.mxu0 0
        %3682 = vmatpush.bf16.xpose.msra.mxu0 0
        %3683 = vmatpush.bf16.xpose.msra.mxu0 0
        %3684 = vmatpush.bf16.xpose.msra.mxu0 0
        %3685 = vmatpush.bf16.xpose.msra.mxu0 0
        %3686 = vmatpush.bf16.xpose.msra.mxu0 0
        %3687 = vmatpush.bf16.xpose.msra.mxu0 %v3678
        %3688 = vmatmul.bf16.gmra.mxu0 %v3675
        %v3689 = vpop.f32.mrf.mxu0
        %v3690 = vadd.f32 0.0, %v3689
        %v3691 = vpop.f32.mrf.mxu0
        %v3692 = vadd.f32 0.0, %v3691
        %3693 = vdwg.mxu0
        %3694 = vrot.lane.b32.xlu0 %v1536, 32
        %v3695 = vpop.permute.xlu0 %3694
        %3696 = vrot.lane.b32.xlu0 %v1541, 32
        %v3697 = vpop.permute.xlu0 %3696
        %v3699 = vsel %vm884, %v3695, 0
        %v3702 = vsel %vm884, %v3697, 0
        %3704 = vmatpush.bf16.xpose.msra.mxu0 0
        %3705 = vmatpush.bf16.xpose.msra.mxu0 0
        %3706 = vmatpush.bf16.xpose.msra.mxu0 0
        %3707 = vmatpush.bf16.xpose.msra.mxu0 0
        %3708 = vmatpush.bf16.xpose.msra.mxu0 0
        %3709 = vmatpush.bf16.xpose.msra.mxu0 0
        %3710 = vmatpush.bf16.xpose.msra.mxu0 0
        %3711 = vmatpush.bf16.xpose.msra.mxu0 %v3702
        %3712 = vmatmul.bf16.gmra.mxu0 %v3699
        %v3713 = vpop.f32.mrf.mxu0
        %v3714 = vadd.f32 0.0, %v3713
        %v3715 = vpop.f32.mrf.mxu0
        %v3716 = vadd.f32 0.0, %v3715
        %3717 = vdwg.mxu0
        %3718 = vrot.lane.b32.xlu0 %v1566, 32
        %v3719 = vpop.permute.xlu0 %3718
        %3720 = vrot.lane.b32.xlu0 %v1571, 32
        %v3721 = vpop.permute.xlu0 %3720
        %v3723 = vsel %vm884, %v3719, 0
        %v3726 = vsel %vm884, %v3721, 0
        %3728 = vmatpush.bf16.xpose.msra.mxu0 0
        %3729 = vmatpush.bf16.xpose.msra.mxu0 0
        %3730 = vmatpush.bf16.xpose.msra.mxu0 0
        %3731 = vmatpush.bf16.xpose.msra.mxu0 0
        %3732 = vmatpush.bf16.xpose.msra.mxu0 0
        %3733 = vmatpush.bf16.xpose.msra.mxu0 0
        %3734 = vmatpush.bf16.xpose.msra.mxu0 0
        %3735 = vmatpush.bf16.xpose.msra.mxu0 %v3726
        %3736 = vmatmul.bf16.gmra.mxu0 %v3723
        %v3737 = vpop.f32.mrf.mxu0
        %v3738 = vadd.f32 0.0, %v3737
        %v3739 = vpop.f32.mrf.mxu0
        %v3740 = vadd.f32 0.0, %v3739
        %3741 = vdwg.mxu0
        %3742 = vrot.lane.b32.xlu0 %v1596, 32
        %v3743 = vpop.permute.xlu0 %3742
        %3744 = vrot.lane.b32.xlu0 %v1601, 32
        %v3745 = vpop.permute.xlu0 %3744
        %v3747 = vsel %vm884, %v3743, 0
        %v3750 = vsel %vm884, %v3745, 0
        %3752 = vmatpush.bf16.xpose.msra.mxu0 0
        %3753 = vmatpush.bf16.xpose.msra.mxu0 0
        %3754 = vmatpush.bf16.xpose.msra.mxu0 0
        %3755 = vmatpush.bf16.xpose.msra.mxu0 0
        %3756 = vmatpush.bf16.xpose.msra.mxu0 0
        %3757 = vmatpush.bf16.xpose.msra.mxu0 0
        %3758 = vmatpush.bf16.xpose.msra.mxu0 0
        %3759 = vmatpush.bf16.xpose.msra.mxu0 %v3750
        %3760 = vmatmul.bf16.gmra.mxu0 %v3747
        %v3761 = vpop.f32.mrf.mxu0
        %v3762 = vadd.f32 0.0, %v3761
        %v3763 = vpop.f32.mrf.mxu0
        %v3764 = vadd.f32 0.0, %v3763
        %3765 = vdwg.mxu0
        %3766 = vrot.lane.b32.xlu0 %v1626, 32
        %v3767 = vpop.permute.xlu0 %3766
        %3768 = vrot.lane.b32.xlu0 %v1631, 32
        %v3769 = vpop.permute.xlu0 %3768
        %v3771 = vsel %vm884, %v3767, 0
        %v3774 = vsel %vm884, %v3769, 0
        %3776 = vmatpush.bf16.xpose.msra.mxu0 0
        %3777 = vmatpush.bf16.xpose.msra.mxu0 0
        %3778 = vmatpush.bf16.xpose.msra.mxu0 0
        %3779 = vmatpush.bf16.xpose.msra.mxu0 0
        %3780 = vmatpush.bf16.xpose.msra.mxu0 0
        %3781 = vmatpush.bf16.xpose.msra.mxu0 0
        %3782 = vmatpush.bf16.xpose.msra.mxu0 0
        %3783 = vmatpush.bf16.xpose.msra.mxu0 %v3774
        %3784 = vmatmul.bf16.gmra.mxu0 %v3771
        %v3785 = vpop.f32.mrf.mxu0
        %v3786 = vadd.f32 0.0, %v3785
        %v3787 = vpop.f32.mrf.mxu0
        %v3788 = vadd.f32 0.0, %v3787
        %3789 = vdwg.mxu0
        %3790 = vrot.lane.b32.xlu0 %v1656, 32
        %v3791 = vpop.permute.xlu0 %3790
        %3792 = vrot.lane.b32.xlu0 %v1661, 32
        %v3793 = vpop.permute.xlu0 %3792
        %v3795 = vsel %vm884, %v3791, 0
        %v3798 = vsel %vm884, %v3793, 0
        %3800 = vmatpush.bf16.xpose.msra.mxu0 0
        %3801 = vmatpush.bf16.xpose.msra.mxu0 0
        %3802 = vmatpush.bf16.xpose.msra.mxu0 0
        %3803 = vmatpush.bf16.xpose.msra.mxu0 0
        %3804 = vmatpush.bf16.xpose.msra.mxu0 0
        %3805 = vmatpush.bf16.xpose.msra.mxu0 0
        %3806 = vmatpush.bf16.xpose.msra.mxu0 0
        %3807 = vmatpush.bf16.xpose.msra.mxu0 %v3798
        %3808 = vmatmul.bf16.gmra.mxu0 %v3795
        %v3809 = vpop.f32.mrf.mxu0
        %v3810 = vadd.f32 0.0, %v3809
        %v3811 = vpop.f32.mrf.mxu0
        %v3812 = vadd.f32 0.0, %v3811
        %3813 = vdwg.mxu0
        %3814 = vrot.lane.b32.xlu0 %v1686, 32
        %v3815 = vpop.permute.xlu0 %3814
        %3816 = vrot.lane.b32.xlu0 %v1691, 32
        %v3817 = vpop.permute.xlu0 %3816
        %v3819 = vsel %vm884, %v3815, 0
        %v3822 = vsel %vm884, %v3817, 0
        %3824 = vmatpush.bf16.xpose.msra.mxu0 0
        %3825 = vmatpush.bf16.xpose.msra.mxu0 0
        %3826 = vmatpush.bf16.xpose.msra.mxu0 0
        %3827 = vmatpush.bf16.xpose.msra.mxu0 0
        %3828 = vmatpush.bf16.xpose.msra.mxu0 0
        %3829 = vmatpush.bf16.xpose.msra.mxu0 0
        %3830 = vmatpush.bf16.xpose.msra.mxu0 0
        %3831 = vmatpush.bf16.xpose.msra.mxu0 %v3822
        %3832 = vmatmul.bf16.gmra.mxu0 %v3819
        %v3833 = vpop.f32.mrf.mxu0
        %v3834 = vadd.f32 0.0, %v3833
        %v3835 = vpop.f32.mrf.mxu0
        %v3836 = vadd.f32 0.0, %v3835
        %3837 = vdwg.mxu0
        %3838 = vrot.lane.b32.xlu0 %v1716, 32
        %v3839 = vpop.permute.xlu0 %3838
        %3840 = vrot.lane.b32.xlu0 %v1721, 32
        %v3841 = vpop.permute.xlu0 %3840
        %v3843 = vsel %vm884, %v3839, 0
        %v3846 = vsel %vm884, %v3841, 0
        %3848 = vmatpush.bf16.xpose.msra.mxu0 0
        %3849 = vmatpush.bf16.xpose.msra.mxu0 0
        %3850 = vmatpush.bf16.xpose.msra.mxu0 0
        %3851 = vmatpush.bf16.xpose.msra.mxu0 0
        %3852 = vmatpush.bf16.xpose.msra.mxu0 0
        %3853 = vmatpush.bf16.xpose.msra.mxu0 0
        %3854 = vmatpush.bf16.xpose.msra.mxu0 0
        %3855 = vmatpush.bf16.xpose.msra.mxu0 %v3846
        %3856 = vmatmul.bf16.gmra.mxu0 %v3843
        %v3857 = vpop.f32.mrf.mxu0
        %v3858 = vadd.f32 0.0, %v3857
        %v3859 = vpop.f32.mrf.mxu0
        %v3860 = vadd.f32 0.0, %v3859
        %3861 = vdwg.mxu0
        %v3862 = vmul.f32 %v3690, 0.17677669
        %v3863 = vmul.f32 %v3692, 0.17677669
        %v3864 = vmul.f32 %v3714, 0.17677669
        %v3865 = vmul.f32 %v3716, 0.17677669
        %v3866 = vmul.f32 %v3738, 0.17677669
        %v3867 = vmul.f32 %v3740, 0.17677669
        %v3868 = vmul.f32 %v3762, 0.17677669
        %v3869 = vmul.f32 %v3764, 0.17677669
        %v3870 = vmul.f32 %v3786, 0.17677669
        %v3871 = vmul.f32 %v3788, 0.17677669
        %v3872 = vmul.f32 %v3810, 0.17677669
        %v3873 = vmul.f32 %v3812, 0.17677669
        %v3874 = vmul.f32 %v3834, 0.17677669
        %v3875 = vmul.f32 %v3836, 0.17677669
        %v3876 = vmul.f32 %v3858, 0.17677669
        %v3877 = vmul.f32 %v3860, 0.17677669
        %v3878 = vsel %vm1758, %v3862, -inf
        %3879 = vmax.xlane.f32.xlu0 %v3878
        %v3880 = vpop.xlane.xlu0 %3879
        %v3881 = vsel %vm1758, %v3863, -inf
        %3882 = vmax.xlane.f32.xlu0 %v3881
        %v3883 = vpop.xlane.xlu0 %3882
        %v3884 = vsel %vm1758, %v3864, -inf
        %3885 = vmax.xlane.f32.xlu0 %v3884
        %v3886 = vpop.xlane.xlu0 %3885
        %v3887 = vsel %vm1758, %v3865, -inf
        %3888 = vmax.xlane.f32.xlu0 %v3887
        %v3889 = vpop.xlane.xlu0 %3888
        %v3890 = vsel %vm1758, %v3866, -inf
        %3891 = vmax.xlane.f32.xlu0 %v3890
        %v3892 = vpop.xlane.xlu0 %3891
        %v3893 = vsel %vm1758, %v3867, -inf
        %3894 = vmax.xlane.f32.xlu0 %v3893
        %v3895 = vpop.xlane.xlu0 %3894
        %v3896 = vsel %vm1758, %v3868, -inf
        %3897 = vmax.xlane.f32.xlu0 %v3896
        %v3898 = vpop.xlane.xlu0 %3897
        %v3899 = vsel %vm1758, %v3869, -inf
        %3900 = vmax.xlane.f32.xlu0 %v3899
        %v3901 = vpop.xlane.xlu0 %3900
        %v3902 = vsel %vm1758, %v3870, -inf
        %3903 = vmax.xlane.f32.xlu0 %v3902
        %v3904 = vpop.xlane.xlu0 %3903
        %v3905 = vsel %vm1758, %v3871, -inf
        %3906 = vmax.xlane.f32.xlu0 %v3905
        %v3907 = vpop.xlane.xlu0 %3906
        %v3908 = vsel %vm1758, %v3872, -inf
        %3909 = vmax.xlane.f32.xlu0 %v3908
        %v3910 = vpop.xlane.xlu0 %3909
        %v3911 = vsel %vm1758, %v3873, -inf
        %3912 = vmax.xlane.f32.xlu0 %v3911
        %v3913 = vpop.xlane.xlu0 %3912
        %v3914 = vsel %vm1758, %v3874, -inf
        %3915 = vmax.xlane.f32.xlu0 %v3914
        %v3916 = vpop.xlane.xlu0 %3915
        %v3917 = vsel %vm1758, %v3875, -inf
        %3918 = vmax.xlane.f32.xlu0 %v3917
        %v3919 = vpop.xlane.xlu0 %3918
        %v3920 = vsel %vm1758, %v3876, -inf
        %3921 = vmax.xlane.f32.xlu0 %v3920
        %v3922 = vpop.xlane.xlu0 %3921
        %v3923 = vsel %vm1758, %v3877, -inf
        %3924 = vmax.xlane.f32.xlu0 %v3923
        %v3925 = vpop.xlane.xlu0 %3924
        %v3926 = vsub.f32 %v3862, %v3880
        %v3927 = vsub.f32 %v3863, %v3883
        %v3928 = vsub.f32 %v3864, %v3886
        %v3929 = vsub.f32 %v3865, %v3889
        %v3930 = vsub.f32 %v3866, %v3892
        %v3931 = vsub.f32 %v3867, %v3895
        %v3932 = vsub.f32 %v3868, %v3898
        %v3933 = vsub.f32 %v3869, %v3901
        %v3934 = vsub.f32 %v3870, %v3904
        %v3935 = vsub.f32 %v3871, %v3907
        %v3936 = vsub.f32 %v3872, %v3910
        %v3937 = vsub.f32 %v3873, %v3913
        %v3938 = vsub.f32 %v3874, %v3916
        %v3939 = vsub.f32 %v3875, %v3919
        %v3940 = vsub.f32 %v3876, %v3922
        %v3941 = vsub.f32 %v3877, %v3925
        %v3942 = vmul.f32 %v3926, 1.442695
        %v3943 = vpow.pop %v3942
        %v3944 = vmul.f32 %v3927, 1.442695
        %v3945 = vpow.pop %v3944
        %v3946 = vmul.f32 %v3928, 1.442695
        %v3947 = vpow.pop %v3946
        %v3948 = vmul.f32 %v3929, 1.442695
        %v3949 = vpow.pop %v3948
        %v3950 = vmul.f32 %v3930, 1.442695
        %v3951 = vpow.pop %v3950
        %v3952 = vmul.f32 %v3931, 1.442695
        %v3953 = vpow.pop %v3952
        %v3954 = vmul.f32 %v3932, 1.442695
        %v3955 = vpow.pop %v3954
        %v3956 = vmul.f32 %v3933, 1.442695
        %v3957 = vpow.pop %v3956
        %v3958 = vmul.f32 %v3934, 1.442695
        %v3959 = vpow.pop %v3958
        %v3960 = vmul.f32 %v3935, 1.442695
        %v3961 = vpow.pop %v3960
        %v3962 = vmul.f32 %v3936, 1.442695
        %v3963 = vpow.pop %v3962
        %v3964 = vmul.f32 %v3937, 1.442695
        %v3965 = vpow.pop %v3964
        %v3966 = vmul.f32 %v3938, 1.442695
        %v3967 = vpow.pop %v3966
        %v3968 = vmul.f32 %v3939, 1.442695
        %v3969 = vpow.pop %v3968
        %v3970 = vmul.f32 %v3940, 1.442695
        %v3971 = vpow.pop %v3970
        %v3972 = vmul.f32 %v3941, 1.442695
        %v3973 = vpow.pop %v3972
        %v3974 = vsel %vm1758, %v3943, 0.0
        %3975 = vadd.xlane.f32.xlu0 %v3974
        %v3976 = vpop.xlane.xlu0 %3975
        %v3977 = vsel %vm1758, %v3945, 0.0
        %3978 = vadd.xlane.f32.xlu0 %v3977
        %v3979 = vpop.xlane.xlu0 %3978
        %v3980 = vsel %vm1758, %v3947, 0.0
        %3981 = vadd.xlane.f32.xlu0 %v3980
        %v3982 = vpop.xlane.xlu0 %3981
        %v3983 = vsel %vm1758, %v3949, 0.0
        %3984 = vadd.xlane.f32.xlu0 %v3983
        %v3985 = vpop.xlane.xlu0 %3984
        %v3986 = vsel %vm1758, %v3951, 0.0
        %3987 = vadd.xlane.f32.xlu0 %v3986
        %v3988 = vpop.xlane.xlu0 %3987
        %v3989 = vsel %vm1758, %v3953, 0.0
        %3990 = vadd.xlane.f32.xlu0 %v3989
        %v3991 = vpop.xlane.xlu0 %3990
        %v3992 = vsel %vm1758, %v3955, 0.0
        %3993 = vadd.xlane.f32.xlu0 %v3992
        %v3994 = vpop.xlane.xlu0 %3993
        %v3995 = vsel %vm1758, %v3957, 0.0
        %3996 = vadd.xlane.f32.xlu0 %v3995
        %v3997 = vpop.xlane.xlu0 %3996
        %v3998 = vsel %vm1758, %v3959, 0.0
        %3999 = vadd.xlane.f32.xlu0 %v3998
        %v4000 = vpop.xlane.xlu0 %3999
        %v4001 = vsel %vm1758, %v3961, 0.0
        %4002 = vadd.xlane.f32.xlu0 %v4001
        %v4003 = vpop.xlane.xlu0 %4002
        %v4004 = vsel %vm1758, %v3963, 0.0
        %4005 = vadd.xlane.f32.xlu0 %v4004
        %v4006 = vpop.xlane.xlu0 %4005
        %v4007 = vsel %vm1758, %v3965, 0.0
        %4008 = vadd.xlane.f32.xlu0 %v4007
        %v4009 = vpop.xlane.xlu0 %4008
        %v4010 = vsel %vm1758, %v3967, 0.0
        %4011 = vadd.xlane.f32.xlu0 %v4010
        %v4012 = vpop.xlane.xlu0 %4011
        %v4013 = vsel %vm1758, %v3969, 0.0
        %4014 = vadd.xlane.f32.xlu0 %v4013
        %v4015 = vpop.xlane.xlu0 %4014
        %v4016 = vsel %vm1758, %v3971, 0.0
        %4017 = vadd.xlane.f32.xlu0 %v4016
        %v4018 = vpop.xlane.xlu0 %4017
        %v4019 = vsel %vm1758, %v3973, 0.0
        %4020 = vadd.xlane.f32.xlu0 %v4019
        %v4021 = vpop.xlane.xlu0 %4020
        %v4022 = vrcp.pop %v3976
        %v4023 = vrcp.pop %v3979
        %v4024 = vrcp.pop %v3982
        %v4025 = vrcp.pop %v3985
        %v4026 = vrcp.pop %v3988
        %v4027 = vrcp.pop %v3991
        %v4028 = vrcp.pop %v3994
        %v4029 = vrcp.pop %v3997
        %v4030 = vrcp.pop %v4000
        %v4031 = vrcp.pop %v4003
        %v4032 = vrcp.pop %v4006
        %v4033 = vrcp.pop %v4009
        %v4034 = vrcp.pop %v4012
        %v4035 = vrcp.pop %v4015
        %v4036 = vrcp.pop %v4018
        %v4037 = vrcp.pop %v4021
        %v4038 = vmul.f32 %v3943, %v4022
        %v4039 = vmul.f32 %v3945, %v4023
        %v4040 = vmul.f32 %v3947, %v4024
        %v4041 = vmul.f32 %v3949, %v4025
        %v4042 = vmul.f32 %v3951, %v4026
        %v4043 = vmul.f32 %v3953, %v4027
        %v4044 = vmul.f32 %v3955, %v4028
        %v4045 = vmul.f32 %v3957, %v4029
        %v4046 = vmul.f32 %v3959, %v4030
        %v4047 = vmul.f32 %v3961, %v4031
        %v4048 = vmul.f32 %v3963, %v4032
        %v4049 = vmul.f32 %v3965, %v4033
        %v4050 = vmul.f32 %v3967, %v4034
        %v4051 = vmul.f32 %v3969, %v4035
        %v4052 = vmul.f32 %v3971, %v4036
        %v4053 = vmul.f32 %v3973, %v4037
        %v4054 = vpack.c.bf16 %v4038, %v4038
        %v4055 = vpack.c.bf16 %v4039, %v4039
        %v4056 = vpack.c.bf16 %v4040, %v4040
        %v4057 = vpack.c.bf16 %v4041, %v4041
        %v4058 = vpack.c.bf16 %v4042, %v4042
        %v4059 = vpack.c.bf16 %v4043, %v4043
        %v4060 = vpack.c.bf16 %v4044, %v4044
        %v4061 = vpack.c.bf16 %v4045, %v4045
        %v4062 = vpack.c.bf16 %v4046, %v4046
        %v4063 = vpack.c.bf16 %v4047, %v4047
        %v4064 = vpack.c.bf16 %v4048, %v4048
        %v4065 = vpack.c.bf16 %v4049, %v4049
        %v4066 = vpack.c.bf16 %v4050, %v4050
        %v4067 = vpack.c.bf16 %v4051, %v4051
        %v4068 = vpack.c.bf16 %v4052, %v4052
        %v4069 = vpack.c.bf16 %v4053, %v4053
        %v4072 = vunpack.c.l.b16 %v4054
        %v4073 = vunpack.c.l.b16 %v4055
        %v4074 = vpack.c.b16 %v4073, %v4072
        %4075 = vrot.lane.b32.xlu0 %v1960, 32
        %v4076 = vpop.permute.xlu0 %4075
        %v4079 = vsel %vm1758, %v4074, 0
        %4081 = vmatpush.bf16.msra.mxu0 0
        %4082 = vmatpush.bf16.msra.mxu0 0
        %4083 = vmatpush.bf16.msra.mxu0 0
        %4084 = vmatpush.bf16.msra.mxu0 0
        %4085 = vmatpush.bf16.msra.mxu0 0
        %4086 = vmatpush.bf16.msra.mxu0 0
        %4087 = vmatpush.bf16.msra.mxu0 0
        %4088 = vmatpush.bf16.msra.mxu0 %v4076
        %4089 = vmatmul.bf16.gmra.mxu0 %v4079
        %v4090 = vpop.f32.mrf.mxu0
        %v4091 = vadd.f32 0.0, %v4090
        %v4092 = vpop.f32.mrf.mxu0
        %v4093 = vadd.f32 0.0, %v4092
        %4094 = vdwg.mxu0
        %v4097 = vunpack.c.l.b16 %v4056
        %v4098 = vunpack.c.l.b16 %v4057
        %v4099 = vpack.c.b16 %v4098, %v4097
        %4100 = vrot.lane.b32.xlu0 %v1988, 32
        %v4101 = vpop.permute.xlu0 %4100
        %v4104 = vsel %vm1758, %v4099, 0
        %4106 = vmatpush.bf16.msra.mxu0 0
        %4107 = vmatpush.bf16.msra.mxu0 0
        %4108 = vmatpush.bf16.msra.mxu0 0
        %4109 = vmatpush.bf16.msra.mxu0 0
        %4110 = vmatpush.bf16.msra.mxu0 0
        %4111 = vmatpush.bf16.msra.mxu0 0
        %4112 = vmatpush.bf16.msra.mxu0 0
        %4113 = vmatpush.bf16.msra.mxu0 %v4101
        %4114 = vmatmul.bf16.gmra.mxu0 %v4104
        %v4115 = vpop.f32.mrf.mxu0
        %v4116 = vadd.f32 0.0, %v4115
        %v4117 = vpop.f32.mrf.mxu0
        %v4118 = vadd.f32 0.0, %v4117
        %4119 = vdwg.mxu0
        %v4122 = vunpack.c.l.b16 %v4058
        %v4123 = vunpack.c.l.b16 %v4059
        %v4124 = vpack.c.b16 %v4123, %v4122
        %4125 = vrot.lane.b32.xlu0 %v2016, 32
        %v4126 = vpop.permute.xlu0 %4125
        %v4129 = vsel %vm1758, %v4124, 0
        %4131 = vmatpush.bf16.msra.mxu0 0
        %4132 = vmatpush.bf16.msra.mxu0 0
        %4133 = vmatpush.bf16.msra.mxu0 0
        %4134 = vmatpush.bf16.msra.mxu0 0
        %4135 = vmatpush.bf16.msra.mxu0 0
        %4136 = vmatpush.bf16.msra.mxu0 0
        %4137 = vmatpush.bf16.msra.mxu0 0
        %4138 = vmatpush.bf16.msra.mxu0 %v4126
        %4139 = vmatmul.bf16.gmra.mxu0 %v4129
        %v4140 = vpop.f32.mrf.mxu0
        %v4141 = vadd.f32 0.0, %v4140
        %v4142 = vpop.f32.mrf.mxu0
        %v4143 = vadd.f32 0.0, %v4142
        %4144 = vdwg.mxu0
        %v4147 = vunpack.c.l.b16 %v4060
        %v4148 = vunpack.c.l.b16 %v4061
        %v4149 = vpack.c.b16 %v4148, %v4147
        %4150 = vrot.lane.b32.xlu0 %v2044, 32
        %v4151 = vpop.permute.xlu0 %4150
        %v4154 = vsel %vm1758, %v4149, 0
        %4156 = vmatpush.bf16.msra.mxu0 0
        %4157 = vmatpush.bf16.msra.mxu0 0
        %4158 = vmatpush.bf16.msra.mxu0 0
        %4159 = vmatpush.bf16.msra.mxu0 0
        %4160 = vmatpush.bf16.msra.mxu0 0
        %4161 = vmatpush.bf16.msra.mxu0 0
        %4162 = vmatpush.bf16.msra.mxu0 0
        %4163 = vmatpush.bf16.msra.mxu0 %v4151
        %4164 = vmatmul.bf16.gmra.mxu0 %v4154
        %v4165 = vpop.f32.mrf.mxu0
        %v4166 = vadd.f32 0.0, %v4165
        %v4167 = vpop.f32.mrf.mxu0
        %v4168 = vadd.f32 0.0, %v4167
        %4169 = vdwg.mxu0
        %v4172 = vunpack.c.l.b16 %v4062
        %v4173 = vunpack.c.l.b16 %v4063
        %v4174 = vpack.c.b16 %v4173, %v4172
        %4175 = vrot.lane.b32.xlu0 %v2072, 32
        %v4176 = vpop.permute.xlu0 %4175
        %v4179 = vsel %vm1758, %v4174, 0
        %4181 = vmatpush.bf16.msra.mxu0 0
        %4182 = vmatpush.bf16.msra.mxu0 0
        %4183 = vmatpush.bf16.msra.mxu0 0
        %4184 = vmatpush.bf16.msra.mxu0 0
        %4185 = vmatpush.bf16.msra.mxu0 0
        %4186 = vmatpush.bf16.msra.mxu0 0
        %4187 = vmatpush.bf16.msra.mxu0 0
        %4188 = vmatpush.bf16.msra.mxu0 %v4176
        %4189 = vmatmul.bf16.gmra.mxu0 %v4179
        %v4190 = vpop.f32.mrf.mxu0
        %v4191 = vadd.f32 0.0, %v4190
        %v4192 = vpop.f32.mrf.mxu0
        %v4193 = vadd.f32 0.0, %v4192
        %4194 = vdwg.mxu0
        %v4197 = vunpack.c.l.b16 %v4064
        %v4198 = vunpack.c.l.b16 %v4065
        %v4199 = vpack.c.b16 %v4198, %v4197
        %4200 = vrot.lane.b32.xlu0 %v2100, 32
        %v4201 = vpop.permute.xlu0 %4200
        %v4204 = vsel %vm1758, %v4199, 0
        %4206 = vmatpush.bf16.msra.mxu0 0
        %4207 = vmatpush.bf16.msra.mxu0 0
        %4208 = vmatpush.bf16.msra.mxu0 0
        %4209 = vmatpush.bf16.msra.mxu0 0
        %4210 = vmatpush.bf16.msra.mxu0 0
        %4211 = vmatpush.bf16.msra.mxu0 0
        %4212 = vmatpush.bf16.msra.mxu0 0
        %4213 = vmatpush.bf16.msra.mxu0 %v4201
        %4214 = vmatmul.bf16.gmra.mxu0 %v4204
        %v4215 = vpop.f32.mrf.mxu0
        %v4216 = vadd.f32 0.0, %v4215
        %v4217 = vpop.f32.mrf.mxu0
        %v4218 = vadd.f32 0.0, %v4217
        %4219 = vdwg.mxu0
        %v4222 = vunpack.c.l.b16 %v4066
        %v4223 = vunpack.c.l.b16 %v4067
        %v4224 = vpack.c.b16 %v4223, %v4222
        %4225 = vrot.lane.b32.xlu0 %v2128, 32
        %v4226 = vpop.permute.xlu0 %4225
        %v4229 = vsel %vm1758, %v4224, 0
        %4231 = vmatpush.bf16.msra.mxu0 0
        %4232 = vmatpush.bf16.msra.mxu0 0
        %4233 = vmatpush.bf16.msra.mxu0 0
        %4234 = vmatpush.bf16.msra.mxu0 0
        %4235 = vmatpush.bf16.msra.mxu0 0
        %4236 = vmatpush.bf16.msra.mxu0 0
        %4237 = vmatpush.bf16.msra.mxu0 0
        %4238 = vmatpush.bf16.msra.mxu0 %v4226
        %4239 = vmatmul.bf16.gmra.mxu0 %v4229
        %v4240 = vpop.f32.mrf.mxu0
        %v4241 = vadd.f32 0.0, %v4240
        %v4242 = vpop.f32.mrf.mxu0
        %v4243 = vadd.f32 0.0, %v4242
        %4244 = vdwg.mxu0
        %v4247 = vunpack.c.l.b16 %v4068
        %v4248 = vunpack.c.l.b16 %v4069
        %v4249 = vpack.c.b16 %v4248, %v4247
        %4250 = vrot.lane.b32.xlu0 %v2156, 32
        %v4251 = vpop.permute.xlu0 %4250
        %v4254 = vsel %vm1758, %v4249, 0
        %4256 = vmatpush.bf16.msra.mxu0 0
        %4257 = vmatpush.bf16.msra.mxu0 0
        %4258 = vmatpush.bf16.msra.mxu0 0
        %4259 = vmatpush.bf16.msra.mxu0 0
        %4260 = vmatpush.bf16.msra.mxu0 0
        %4261 = vmatpush.bf16.msra.mxu0 0
        %4262 = vmatpush.bf16.msra.mxu0 0
        %4263 = vmatpush.bf16.msra.mxu0 %v4251
        %4264 = vmatmul.bf16.gmra.mxu0 %v4254
        %v4265 = vpop.f32.mrf.mxu0
        %v4266 = vadd.f32 0.0, %v4265
        %v4267 = vpop.f32.mrf.mxu0
        %v4268 = vadd.f32 0.0, %v4267
        %4269 = vdwg.mxu0
        %v4270 = vpack.c.bf16 %v4093, %v4091
        %v4271 = vpack.c.bf16 %v4118, %v4116
        %v4272 = vpack.c.bf16 %v4143, %v4141
        %v4273 = vpack.c.bf16 %v4168, %v4166
        %v4274 = vpack.c.bf16 %v4193, %v4191
        %v4275 = vpack.c.bf16 %v4218, %v4216
        %v4276 = vpack.c.bf16 %v4243, %v4241
        %v4277 = vpack.c.bf16 %v4268, %v4266
        %v4282 = vunpack.c.l.b16 %v1159
        %v4283 = vunpack.c.l.b16 %v1160
        %v4284 = vunpack.c.l.b16 %v1161
        %v4285 = vunpack.c.l.b16 %v1162
        %v4286 = vpack.c.b16 %v4283, %v4282
        %v4287 = vpack.c.b16 %v4285, %v4284
        %v4291 = vsel %vm884, %v4270, 0
        %v4294 = vsel %vm884, %v4271, 0
        %v4297 = vsel %vm884, %v4272, 0
        %v4300 = vsel %vm884, %v4273, 0
        %v4303 = vsel %vm884, %v4274, 0
        %v4306 = vsel %vm884, %v4275, 0
        %v4309 = vsel %vm884, %v4276, 0
        %v4312 = vsel %vm884, %v4277, 0
        %4314 = vmatpush.bf16.msra.mxu0 0
        %4315 = vmatpush.bf16.msra.mxu0 0
        %4316 = vmatpush.bf16.msra.mxu0 0
        %4317 = vmatpush.bf16.msra.mxu0 0
        %4318 = vmatpush.bf16.msra.mxu0 0
        %4319 = vmatpush.bf16.msra.mxu0 0
        %4320 = vmatpush.bf16.msra.mxu0 %v4287
        %4321 = vmatpush.bf16.msra.mxu0 %v4286
        %4322 = vmatmul.bf16.gmra.mxu0 %v4291
        %v4323 = vpop.f32.mrf.mxu0
        %v4324 = vadd.f32 0.0, %v4323
        %v4325 = vpop.f32.mrf.mxu0
        %v4326 = vadd.f32 0.0, %v4325
        %4327 = vmatmul.bf16.gmra.mxu0 %v4294
        %v4328 = vpop.f32.mrf.mxu0
        %v4329 = vadd.f32 0.0, %v4328
        %v4330 = vpop.f32.mrf.mxu0
        %v4331 = vadd.f32 0.0, %v4330
        %4332 = vmatmul.bf16.gmra.mxu0 %v4297
        %v4333 = vpop.f32.mrf.mxu0
        %v4334 = vadd.f32 0.0, %v4333
        %v4335 = vpop.f32.mrf.mxu0
        %v4336 = vadd.f32 0.0, %v4335
        %4337 = vmatmul.bf16.gmra.mxu0 %v4300
        %v4338 = vpop.f32.mrf.mxu0
        %v4339 = vadd.f32 0.0, %v4338
        %v4340 = vpop.f32.mrf.mxu0
        %v4341 = vadd.f32 0.0, %v4340
        %4342 = vmatmul.bf16.gmra.mxu0 %v4303
        %v4343 = vpop.f32.mrf.mxu0
        %v4344 = vadd.f32 0.0, %v4343
        %v4345 = vpop.f32.mrf.mxu0
        %v4346 = vadd.f32 0.0, %v4345
        %4347 = vmatmul.bf16.gmra.mxu0 %v4306
        %v4348 = vpop.f32.mrf.mxu0
        %v4349 = vadd.f32 0.0, %v4348
        %v4350 = vpop.f32.mrf.mxu0
        %v4351 = vadd.f32 0.0, %v4350
        %4352 = vmatmul.bf16.gmra.mxu0 %v4309
        %v4353 = vpop.f32.mrf.mxu0
        %v4354 = vadd.f32 0.0, %v4353
        %v4355 = vpop.f32.mrf.mxu0
        %v4356 = vadd.f32 0.0, %v4355
        %4357 = vmatmul.bf16.gmra.mxu0 %v4312
        %v4358 = vpop.f32.mrf.mxu0
        %v4359 = vadd.f32 0.0, %v4358
        %v4360 = vpop.f32.mrf.mxu0
        %v4361 = vadd.f32 0.0, %v4360
        %4362 = vdwg.mxu0
        %v4363 = vadd.f32 %v3654, %v4324
        %v4364 = vadd.f32 %v3655, %v4326
        %v4365 = vadd.f32 %v3656, %v4329
        %v4366 = vadd.f32 %v3657, %v4331
        %v4367 = vadd.f32 %v3658, %v4334
        %v4368 = vadd.f32 %v3659, %v4336
        %v4369 = vadd.f32 %v3660, %v4339
        %v4370 = vadd.f32 %v3661, %v4341
        %v4371 = vadd.f32 %v3662, %v4344
        %v4372 = vadd.f32 %v3663, %v4346
        %v4373 = vadd.f32 %v3664, %v4349
        %v4374 = vadd.f32 %v3665, %v4351
        %v4375 = vadd.f32 %v3666, %v4354
        %v4376 = vadd.f32 %v3667, %v4356
        %v4377 = vadd.f32 %v3668, %v4359
        %v4378 = vadd.f32 %v3669, %v4361
        %v4379 = vld [vmem:[%s8] sm:$0x1]
        %v4380 = vperm.slane %v4379, 0
        %v4381 = vadd.f32 %v4363, %v4380
        %v4382 = vadd.f32 %v4364, %v4380
        %v4383 = vadd.f32 %v4365, %v4380
        %v4384 = vadd.f32 %v4366, %v4380
        %v4385 = vadd.f32 %v4367, %v4380
        %v4386 = vadd.f32 %v4368, %v4380
        %v4387 = vadd.f32 %v4369, %v4380
        %v4388 = vadd.f32 %v4370, %v4380
        %v4389 = vadd.f32 %v4371, %v4380
        %v4390 = vadd.f32 %v4372, %v4380
        %v4391 = vadd.f32 %v4373, %v4380
        %v4392 = vadd.f32 %v4374, %v4380
        %v4393 = vadd.f32 %v4375, %v4380
        %v4394 = vadd.f32 %v4376, %v4380
        %v4395 = vadd.f32 %v4377, %v4380
        %v4396 = vadd.f32 %v4378, %v4380
        %v4397 = vadd.f32 %v1099, %v4381
        %v4398 = vadd.f32 %v1100, %v4382
        %v4399 = vadd.f32 %v1101, %v4383
        %v4400 = vadd.f32 %v1102, %v4384
        %v4401 = vadd.f32 %v1103, %v4385
        %v4402 = vadd.f32 %v1104, %v4386
        %v4403 = vadd.f32 %v1105, %v4387
        %v4404 = vadd.f32 %v1106, %v4388
        %v4405 = vadd.f32 %v1107, %v4389
        %v4406 = vadd.f32 %v1108, %v4390
        %v4407 = vadd.f32 %v1109, %v4391
        %v4408 = vadd.f32 %v1110, %v4392
        %v4409 = vadd.f32 %v1111, %v4393
        %v4410 = vadd.f32 %v1112, %v4394
        %v4411 = vadd.f32 %v1113, %v4395
        %v4412 = vadd.f32 %v1114, %v4396
        %v4413 = vld [vmem:[%s9] sm:$0x1]
        %v4414 = vld [vmem:[#allocation16] sm:$0x1]
        %4415 = vadd.xlane.f32.xlu0 %v4397
        %v4416 = vpop.xlane.xlu0 %4415
        %4417 = vadd.xlane.f32.xlu0 %v4398
        %v4418 = vpop.xlane.xlu0 %4417
        %4419 = vadd.xlane.f32.xlu0 %v4399
        %v4420 = vpop.xlane.xlu0 %4419
        %4421 = vadd.xlane.f32.xlu0 %v4400
        %v4422 = vpop.xlane.xlu0 %4421
        %4423 = vadd.xlane.f32.xlu0 %v4401
        %v4424 = vpop.xlane.xlu0 %4423
        %4425 = vadd.xlane.f32.xlu0 %v4402
        %v4426 = vpop.xlane.xlu0 %4425
        %4427 = vadd.xlane.f32.xlu0 %v4403
        %v4428 = vpop.xlane.xlu0 %4427
        %4429 = vadd.xlane.f32.xlu0 %v4404
        %v4430 = vpop.xlane.xlu0 %4429
        %4431 = vadd.xlane.f32.xlu0 %v4405
        %v4432 = vpop.xlane.xlu0 %4431
        %4433 = vadd.xlane.f32.xlu0 %v4406
        %v4434 = vpop.xlane.xlu0 %4433
        %4435 = vadd.xlane.f32.xlu0 %v4407
        %v4436 = vpop.xlane.xlu0 %4435
        %4437 = vadd.xlane.f32.xlu0 %v4408
        %v4438 = vpop.xlane.xlu0 %4437
        %4439 = vadd.xlane.f32.xlu0 %v4409
        %v4440 = vpop.xlane.xlu0 %4439
        %4441 = vadd.xlane.f32.xlu0 %v4410
        %v4442 = vpop.xlane.xlu0 %4441
        %4443 = vadd.xlane.f32.xlu0 %v4411
        %v4444 = vpop.xlane.xlu0 %4443
        %4445 = vadd.xlane.f32.xlu0 %v4412
        %v4446 = vpop.xlane.xlu0 %4445
        %v4447 = vrcp.pop 128.0
        %v4448 = vmul.f32 128.0, %v4447
        %v4449 = vsub.f32 1.0, %v4448
        %v4450 = vmul.f32 %v4447, %v4449
        %v4451 = vadd.f32 %v4447, %v4450
        %vm4452 = vweird.f32 %v4447
        %v4453 = vsel %vm4452, %v4447, %v4451
        %v4454 = vmul.f32 %v4416, %v4453
        %v4455 = vmul.f32 %v4418, %v4453
        %v4456 = vmul.f32 %v4420, %v4453
        %v4457 = vmul.f32 %v4422, %v4453
        %v4458 = vmul.f32 %v4424, %v4453
        %v4459 = vmul.f32 %v4426, %v4453
        %v4460 = vmul.f32 %v4428, %v4453
        %v4461 = vmul.f32 %v4430, %v4453
        %v4462 = vmul.f32 %v4432, %v4453
        %v4463 = vmul.f32 %v4434, %v4453
        %v4464 = vmul.f32 %v4436, %v4453
        %v4465 = vmul.f32 %v4438, %v4453
        %v4466 = vmul.f32 %v4440, %v4453
        %v4467 = vmul.f32 %v4442, %v4453
        %v4468 = vmul.f32 %v4444, %v4453
        %v4469 = vmul.f32 %v4446, %v4453
        %v4470 = vsub.f32 %v4397, %v4454
        %v4471 = vsub.f32 %v4398, %v4455
        %v4472 = vsub.f32 %v4399, %v4456
        %v4473 = vsub.f32 %v4400, %v4457
        %v4474 = vsub.f32 %v4401, %v4458
        %v4475 = vsub.f32 %v4402, %v4459
        %v4476 = vsub.f32 %v4403, %v4460
        %v4477 = vsub.f32 %v4404, %v4461
        %v4478 = vsub.f32 %v4405, %v4462
        %v4479 = vsub.f32 %v4406, %v4463
        %v4480 = vsub.f32 %v4407, %v4464
        %v4481 = vsub.f32 %v4408, %v4465
        %v4482 = vsub.f32 %v4409, %v4466
        %v4483 = vsub.f32 %v4410, %v4467
        %v4484 = vsub.f32 %v4411, %v4468
        %v4485 = vsub.f32 %v4412, %v4469
        %v4486 = vmul.f32 %v4470, %v4470
        %v4487 = vmul.f32 %v4471, %v4471
        %v4488 = vmul.f32 %v4472, %v4472
        %v4489 = vmul.f32 %v4473, %v4473
        %v4490 = vmul.f32 %v4474, %v4474
        %v4491 = vmul.f32 %v4475, %v4475
        %v4492 = vmul.f32 %v4476, %v4476
        %v4493 = vmul.f32 %v4477, %v4477
        %v4494 = vmul.f32 %v4478, %v4478
        %v4495 = vmul.f32 %v4479, %v4479
        %v4496 = vmul.f32 %v4480, %v4480
        %v4497 = vmul.f32 %v4481, %v4481
        %v4498 = vmul.f32 %v4482, %v4482
        %v4499 = vmul.f32 %v4483, %v4483
        %v4500 = vmul.f32 %v4484, %v4484
        %v4501 = vmul.f32 %v4485, %v4485
        %4502 = vadd.xlane.f32.xlu0 %v4486
        %v4503 = vpop.xlane.xlu0 %4502
        %4504 = vadd.xlane.f32.xlu0 %v4487
        %v4505 = vpop.xlane.xlu0 %4504
        %4506 = vadd.xlane.f32.xlu0 %v4488
        %v4507 = vpop.xlane.xlu0 %4506
        %4508 = vadd.xlane.f32.xlu0 %v4489
        %v4509 = vpop.xlane.xlu0 %4508
        %4510 = vadd.xlane.f32.xlu0 %v4490
        %v4511 = vpop.xlane.xlu0 %4510
        %4512 = vadd.xlane.f32.xlu0 %v4491
        %v4513 = vpop.xlane.xlu0 %4512
        %4514 = vadd.xlane.f32.xlu0 %v4492
        %v4515 = vpop.xlane.xlu0 %4514
        %4516 = vadd.xlane.f32.xlu0 %v4493
        %v4517 = vpop.xlane.xlu0 %4516
        %4518 = vadd.xlane.f32.xlu0 %v4494
        %v4519 = vpop.xlane.xlu0 %4518
        %4520 = vadd.xlane.f32.xlu0 %v4495
        %v4521 = vpop.xlane.xlu0 %4520
        %4522 = vadd.xlane.f32.xlu0 %v4496
        %v4523 = vpop.xlane.xlu0 %4522
        %4524 = vadd.xlane.f32.xlu0 %v4497
        %v4525 = vpop.xlane.xlu0 %4524
        %4526 = vadd.xlane.f32.xlu0 %v4498
        %v4527 = vpop.xlane.xlu0 %4526
        %4528 = vadd.xlane.f32.xlu0 %v4499
        %v4529 = vpop.xlane.xlu0 %4528
        %4530 = vadd.xlane.f32.xlu0 %v4500
        %v4531 = vpop.xlane.xlu0 %4530
        %4532 = vadd.xlane.f32.xlu0 %v4501
        %v4533 = vpop.xlane.xlu0 %4532
        %v4534 = vmul.f32 %v4503, %v4453
        %v4535 = vmul.f32 %v4505, %v4453
        %v4536 = vmul.f32 %v4507, %v4453
        %v4537 = vmul.f32 %v4509, %v4453
        %v4538 = vmul.f32 %v4511, %v4453
        %v4539 = vmul.f32 %v4513, %v4453
        %v4540 = vmul.f32 %v4515, %v4453
        %v4541 = vmul.f32 %v4517, %v4453
        %v4542 = vmul.f32 %v4519, %v4453
        %v4543 = vmul.f32 %v4521, %v4453
        %v4544 = vmul.f32 %v4523, %v4453
        %v4545 = vmul.f32 %v4525, %v4453
        %v4546 = vmul.f32 %v4527, %v4453
        %v4547 = vmul.f32 %v4529, %v4453
        %v4548 = vmul.f32 %v4531, %v4453
        %v4549 = vmul.f32 %v4533, %v4453
        %v4550 = vadd.f32 %v4534, 1e-05
        %v4551 = vadd.f32 %v4535, 1e-05
        %v4552 = vadd.f32 %v4536, 1e-05
        %v4553 = vadd.f32 %v4537, 1e-05
        %v4554 = vadd.f32 %v4538, 1e-05
        %v4555 = vadd.f32 %v4539, 1e-05
        %v4556 = vadd.f32 %v4540, 1e-05
        %v4557 = vadd.f32 %v4541, 1e-05
        %v4558 = vadd.f32 %v4542, 1e-05
        %v4559 = vadd.f32 %v4543, 1e-05
        %v4560 = vadd.f32 %v4544, 1e-05
        %v4561 = vadd.f32 %v4545, 1e-05
        %v4562 = vadd.f32 %v4546, 1e-05
        %v4563 = vadd.f32 %v4547, 1e-05
        %v4564 = vadd.f32 %v4548, 1e-05
        %v4565 = vadd.f32 %v4549, 1e-05
        %v4566 = vrsqrt.pop %v4550
        %v4567 = vmul.f32 %v4566, %v4550
        %v4568 = vmul.f32 %v4567, %v4566
        %v4569 = vmul.f32 0.5, %v4568
        %v4570 = vsub.f32 1.5, %v4569
        %v4571 = vmul.f32 %v4566, %v4570
        %vm4572 = vweird.f32 %v4550
        %vm4573 = vweird.f32 %v4566
        %vm4574 = vmor %vm4572, %vm4573
        %v4575 = vsel %vm4574, %v4566, %v4571
        %v4576 = vrsqrt.pop %v4551
        %v4577 = vmul.f32 %v4576, %v4551
        %v4578 = vmul.f32 %v4577, %v4576
        %v4579 = vmul.f32 0.5, %v4578
        %v4580 = vsub.f32 1.5, %v4579
        %v4581 = vmul.f32 %v4576, %v4580
        %vm4582 = vweird.f32 %v4551
        %vm4583 = vweird.f32 %v4576
        %vm4584 = vmor %vm4582, %vm4583
        %v4585 = vsel %vm4584, %v4576, %v4581
        %v4586 = vrsqrt.pop %v4552
        %v4587 = vmul.f32 %v4586, %v4552
        %v4588 = vmul.f32 %v4587, %v4586
        %v4589 = vmul.f32 0.5, %v4588
        %v4590 = vsub.f32 1.5, %v4589
        %v4591 = vmul.f32 %v4586, %v4590
        %vm4592 = vweird.f32 %v4552
        %vm4593 = vweird.f32 %v4586
        %vm4594 = vmor %vm4592, %vm4593
        %v4595 = vsel %vm4594, %v4586, %v4591
        %v4596 = vrsqrt.pop %v4553
        %v4597 = vmul.f32 %v4596, %v4553
        %v4598 = vmul.f32 %v4597, %v4596
        %v4599 = vmul.f32 0.5, %v4598
        %v4600 = vsub.f32 1.5, %v4599
        %v4601 = vmul.f32 %v4596, %v4600
        %vm4602 = vweird.f32 %v4553
        %vm4603 = vweird.f32 %v4596
        %vm4604 = vmor %vm4602, %vm4603
        %v4605 = vsel %vm4604, %v4596, %v4601
        %v4606 = vrsqrt.pop %v4554
        %v4607 = vmul.f32 %v4606, %v4554
        %v4608 = vmul.f32 %v4607, %v4606
        %v4609 = vmul.f32 0.5, %v4608
        %v4610 = vsub.f32 1.5, %v4609
        %v4611 = vmul.f32 %v4606, %v4610
        %vm4612 = vweird.f32 %v4554
        %vm4613 = vweird.f32 %v4606
        %vm4614 = vmor %vm4612, %vm4613
        %v4615 = vsel %vm4614, %v4606, %v4611
        %v4616 = vrsqrt.pop %v4555
        %v4617 = vmul.f32 %v4616, %v4555
        %v4618 = vmul.f32 %v4617, %v4616
        %v4619 = vmul.f32 0.5, %v4618
        %v4620 = vsub.f32 1.5, %v4619
        %v4621 = vmul.f32 %v4616, %v4620
        %vm4622 = vweird.f32 %v4555
        %vm4623 = vweird.f32 %v4616
        %vm4624 = vmor %vm4622, %vm4623
        %v4625 = vsel %vm4624, %v4616, %v4621
        %v4626 = vrsqrt.pop %v4556
        %v4627 = vmul.f32 %v4626, %v4556
        %v4628 = vmul.f32 %v4627, %v4626
        %v4629 = vmul.f32 0.5, %v4628
        %v4630 = vsub.f32 1.5, %v4629
        %v4631 = vmul.f32 %v4626, %v4630
        %vm4632 = vweird.f32 %v4556
        %vm4633 = vweird.f32 %v4626
        %vm4634 = vmor %vm4632, %vm4633
        %v4635 = vsel %vm4634, %v4626, %v4631
        %v4636 = vrsqrt.pop %v4557
        %v4637 = vmul.f32 %v4636, %v4557
        %v4638 = vmul.f32 %v4637, %v4636
        %v4639 = vmul.f32 0.5, %v4638
        %v4640 = vsub.f32 1.5, %v4639
        %v4641 = vmul.f32 %v4636, %v4640
        %vm4642 = vweird.f32 %v4557
        %vm4643 = vweird.f32 %v4636
        %vm4644 = vmor %vm4642, %vm4643
        %v4645 = vsel %vm4644, %v4636, %v4641
        %v4646 = vrsqrt.pop %v4558
        %v4647 = vmul.f32 %v4646, %v4558
        %v4648 = vmul.f32 %v4647, %v4646
        %v4649 = vmul.f32 0.5, %v4648
        %v4650 = vsub.f32 1.5, %v4649
        %v4651 = vmul.f32 %v4646, %v4650
        %vm4652 = vweird.f32 %v4558
        %vm4653 = vweird.f32 %v4646
        %vm4654 = vmor %vm4652, %vm4653
        %v4655 = vsel %vm4654, %v4646, %v4651
        %v4656 = vrsqrt.pop %v4559
        %v4657 = vmul.f32 %v4656, %v4559
        %v4658 = vmul.f32 %v4657, %v4656
        %v4659 = vmul.f32 0.5, %v4658
        %v4660 = vsub.f32 1.5, %v4659
        %v4661 = vmul.f32 %v4656, %v4660
        %vm4662 = vweird.f32 %v4559
        %vm4663 = vweird.f32 %v4656
        %vm4664 = vmor %vm4662, %vm4663
        %v4665 = vsel %vm4664, %v4656, %v4661
        %v4666 = vrsqrt.pop %v4560
        %v4667 = vmul.f32 %v4666, %v4560
        %v4668 = vmul.f32 %v4667, %v4666
        %v4669 = vmul.f32 0.5, %v4668
        %v4670 = vsub.f32 1.5, %v4669
        %v4671 = vmul.f32 %v4666, %v4670
        %vm4672 = vweird.f32 %v4560
        %vm4673 = vweird.f32 %v4666
        %vm4674 = vmor %vm4672, %vm4673
        %v4675 = vsel %vm4674, %v4666, %v4671
        %v4676 = vrsqrt.pop %v4561
        %v4677 = vmul.f32 %v4676, %v4561
        %v4678 = vmul.f32 %v4677, %v4676
        %v4679 = vmul.f32 0.5, %v4678
        %v4680 = vsub.f32 1.5, %v4679
        %v4681 = vmul.f32 %v4676, %v4680
        %vm4682 = vweird.f32 %v4561
        %vm4683 = vweird.f32 %v4676
        %vm4684 = vmor %vm4682, %vm4683
        %v4685 = vsel %vm4684, %v4676, %v4681
        %v4686 = vrsqrt.pop %v4562
        %v4687 = vmul.f32 %v4686, %v4562
        %v4688 = vmul.f32 %v4687, %v4686
        %v4689 = vmul.f32 0.5, %v4688
        %v4690 = vsub.f32 1.5, %v4689
        %v4691 = vmul.f32 %v4686, %v4690
        %vm4692 = vweird.f32 %v4562
        %vm4693 = vweird.f32 %v4686
        %vm4694 = vmor %vm4692, %vm4693
        %v4695 = vsel %vm4694, %v4686, %v4691
        %v4696 = vrsqrt.pop %v4563
        %v4697 = vmul.f32 %v4696, %v4563
        %v4698 = vmul.f32 %v4697, %v4696
        %v4699 = vmul.f32 0.5, %v4698
        %v4700 = vsub.f32 1.5, %v4699
        %v4701 = vmul.f32 %v4696, %v4700
        %vm4702 = vweird.f32 %v4563
        %vm4703 = vweird.f32 %v4696
        %vm4704 = vmor %vm4702, %vm4703
        %v4705 = vsel %vm4704, %v4696, %v4701
        %v4706 = vrsqrt.pop %v4564
        %v4707 = vmul.f32 %v4706, %v4564
        %v4708 = vmul.f32 %v4707, %v4706
        %v4709 = vmul.f32 0.5, %v4708
        %v4710 = vsub.f32 1.5, %v4709
        %v4711 = vmul.f32 %v4706, %v4710
        %vm4712 = vweird.f32 %v4564
        %vm4713 = vweird.f32 %v4706
        %vm4714 = vmor %vm4712, %vm4713
        %v4715 = vsel %vm4714, %v4706, %v4711
        %v4716 = vrsqrt.pop %v4565
        %v4717 = vmul.f32 %v4716, %v4565
        %v4718 = vmul.f32 %v4717, %v4716
        %v4719 = vmul.f32 0.5, %v4718
        %v4720 = vsub.f32 1.5, %v4719
        %v4721 = vmul.f32 %v4716, %v4720
        %vm4722 = vweird.f32 %v4565
        %vm4723 = vweird.f32 %v4716
        %vm4724 = vmor %vm4722, %vm4723
        %v4725 = vsel %vm4724, %v4716, %v4721
        %v4726 = vmul.f32 %v4470, %v4575
        %v4727 = vmul.f32 %v4471, %v4585
        %v4728 = vmul.f32 %v4472, %v4595
        %v4729 = vmul.f32 %v4473, %v4605
        %v4730 = vmul.f32 %v4474, %v4615
        %v4731 = vmul.f32 %v4475, %v4625
        %v4732 = vmul.f32 %v4476, %v4635
        %v4733 = vmul.f32 %v4477, %v4645
        %v4734 = vmul.f32 %v4478, %v4655
        %v4735 = vmul.f32 %v4479, %v4665
        %v4736 = vmul.f32 %v4480, %v4675
        %v4737 = vmul.f32 %v4481, %v4685
        %v4738 = vmul.f32 %v4482, %v4695
        %v4739 = vmul.f32 %v4483, %v4705
        %v4740 = vmul.f32 %v4484, %v4715
        %v4741 = vmul.f32 %v4485, %v4725
        %v4742 = vperm.slane %v4413, 0
        %v4743 = vmul.f32 %v4726, %v4742
        %v4744 = vmul.f32 %v4727, %v4742
        %v4745 = vmul.f32 %v4728, %v4742
        %v4746 = vmul.f32 %v4729, %v4742
        %v4747 = vmul.f32 %v4730, %v4742
        %v4748 = vmul.f32 %v4731, %v4742
        %v4749 = vmul.f32 %v4732, %v4742
        %v4750 = vmul.f32 %v4733, %v4742
        %v4751 = vmul.f32 %v4734, %v4742
        %v4752 = vmul.f32 %v4735, %v4742
        %v4753 = vmul.f32 %v4736, %v4742
        %v4754 = vmul.f32 %v4737, %v4742
        %v4755 = vmul.f32 %v4738, %v4742
        %v4756 = vmul.f32 %v4739, %v4742
        %v4757 = vmul.f32 %v4740, %v4742
        %v4758 = vmul.f32 %v4741, %v4742
        %v4759 = vperm.slane %v4414, 0
        %v4760 = vadd.f32 %v4743, %v4759
        %v4761 = vadd.f32 %v4744, %v4759
        %v4762 = vadd.f32 %v4745, %v4759
        %v4763 = vadd.f32 %v4746, %v4759
        %v4764 = vadd.f32 %v4747, %v4759
        %v4765 = vadd.f32 %v4748, %v4759
        %v4766 = vadd.f32 %v4749, %v4759
        %v4767 = vadd.f32 %v4750, %v4759
        %v4768 = vadd.f32 %v4751, %v4759
        %v4769 = vadd.f32 %v4752, %v4759
        %v4770 = vadd.f32 %v4753, %v4759
        %v4771 = vadd.f32 %v4754, %v4759
        %v4772 = vadd.f32 %v4755, %v4759
        %v4773 = vadd.f32 %v4756, %v4759
        %v4774 = vadd.f32 %v4757, %v4759
        %v4775 = vadd.f32 %v4758, %v4759
        %v4776 = vld [vmem:[#allocation17] sm:$0xff]
        %v4777 = vld [vmem:[#allocation17 + $0x8] sm:$0xff]
        %v4778 = vld [vmem:[#allocation17 + $0x10] sm:$0xff]
        %v4779 = vld [vmem:[#allocation17 + $0x18] sm:$0xff]
        %v4780 = vld [vmem:[#allocation17 + $0x20] sm:$0xff]
        %v4781 = vld [vmem:[#allocation17 + $0x28] sm:$0xff]
        %v4782 = vld [vmem:[#allocation17 + $0x30] sm:$0xff]
        %v4783 = vld [vmem:[#allocation17 + $0x38] sm:$0xff]
        %v4784 = vld [vmem:[#allocation17 + $0x40] sm:$0xff]
        %v4785 = vld [vmem:[#allocation17 + $0x48] sm:$0xff]
        %v4786 = vld [vmem:[#allocation17 + $0x50] sm:$0xff]
        %v4787 = vld [vmem:[#allocation17 + $0x58] sm:$0xff]
        %v4788 = vld [vmem:[#allocation17 + $0x60] sm:$0xff]
        %v4789 = vld [vmem:[#allocation17 + $0x68] sm:$0xff]
        %v4790 = vld [vmem:[#allocation17 + $0x70] sm:$0xff]
        %v4791 = vld [vmem:[#allocation17 + $0x78] sm:$0xff]
        %v4792 = vpack.c.bf16 %v4761, %v4760
        %v4793 = vpack.c.bf16 %v4763, %v4762
        %v4794 = vpack.c.bf16 %v4765, %v4764
        %v4795 = vpack.c.bf16 %v4767, %v4766
        %v4796 = vpack.c.bf16 %v4769, %v4768
        %v4797 = vpack.c.bf16 %v4771, %v4770
        %v4798 = vpack.c.bf16 %v4773, %v4772
        %v4799 = vpack.c.bf16 %v4775, %v4774
        %v4800 = vld [vmem:[%s12] ss:$2 sm:$0x3]
        %v4802 = vperm.slane %v4800, 0
        %v4803 = vperm.slane %v4800, 1
        %v4822 = vunpack.c.l.b16 %v4776
        %v4823 = vunpack.c.h.b16 %v4776
        %v4824 = vunpack.c.l.b16 %v4777
        %v4825 = vunpack.c.h.b16 %v4777
        %v4826 = vunpack.c.l.b16 %v4778
        %v4827 = vunpack.c.h.b16 %v4778
        %v4828 = vunpack.c.l.b16 %v4779
        %v4829 = vunpack.c.h.b16 %v4779
        %v4830 = vunpack.c.l.b16 %v4780
        %v4831 = vunpack.c.h.b16 %v4780
        %v4832 = vunpack.c.l.b16 %v4781
        %v4833 = vunpack.c.h.b16 %v4781
        %v4834 = vunpack.c.l.b16 %v4782
        %v4835 = vunpack.c.h.b16 %v4782
        %v4836 = vunpack.c.l.b16 %v4783
        %v4837 = vunpack.c.h.b16 %v4783
        %v4838 = vunpack.c.l.b16 %v4784
        %v4839 = vunpack.c.h.b16 %v4784
        %v4840 = vunpack.c.l.b16 %v4785
        %v4841 = vunpack.c.h.b16 %v4785
        %v4842 = vunpack.c.l.b16 %v4786
        %v4843 = vunpack.c.h.b16 %v4786
        %v4844 = vunpack.c.l.b16 %v4787
        %v4845 = vunpack.c.h.b16 %v4787
        %v4846 = vunpack.c.l.b16 %v4788
        %v4847 = vunpack.c.h.b16 %v4788
        %v4848 = vunpack.c.l.b16 %v4789
        %v4849 = vunpack.c.h.b16 %v4789
        %v4850 = vunpack.c.l.b16 %v4790
        %v4851 = vunpack.c.h.b16 %v4790
        %v4852 = vunpack.c.l.b16 %v4791
        %v4853 = vunpack.c.h.b16 %v4791
        %v4854 = vpack.c.b16 %v4824, %v4822
        %v4855 = vpack.c.b16 %v4825, %v4823
        %v4856 = vpack.c.b16 %v4828, %v4826
        %v4857 = vpack.c.b16 %v4829, %v4827
        %v4858 = vpack.c.b16 %v4832, %v4830
        %v4859 = vpack.c.b16 %v4833, %v4831
        %v4860 = vpack.c.b16 %v4836, %v4834
        %v4861 = vpack.c.b16 %v4837, %v4835
        %v4862 = vpack.c.b16 %v4840, %v4838
        %v4863 = vpack.c.b16 %v4841, %v4839
        %v4864 = vpack.c.b16 %v4844, %v4842
        %v4865 = vpack.c.b16 %v4845, %v4843
        %v4866 = vpack.c.b16 %v4848, %v4846
        %v4867 = vpack.c.b16 %v4849, %v4847
        %v4868 = vpack.c.b16 %v4852, %v4850
        %v4869 = vpack.c.b16 %v4853, %v4851
        %4886 = vmatpush.bf16.msra.mxu0 %v4868
        %4887 = vmatpush.bf16.msra.mxu0 %v4866
        %4888 = vmatpush.bf16.msra.mxu0 %v4864
        %4889 = vmatpush.bf16.msra.mxu0 %v4862
        %4890 = vmatpush.bf16.msra.mxu0 %v4860
        %4891 = vmatpush.bf16.msra.mxu0 %v4858
        %4892 = vmatpush.bf16.msra.mxu0 %v4856
        %4893 = vmatpush.bf16.msra.mxu0 %v4854
        %4894 = vmatmul.bf16.gmra.mxu0 %v4792
        %v4895 = vpop.f32.mrf.mxu0
        %v4896 = vadd.f32 %v4802, %v4895
        %v4897 = vpop.f32.mrf.mxu0
        %v4898 = vadd.f32 %v4802, %v4897
        %4899 = vmatmul.bf16.gmra.mxu0 %v4793
        %v4900 = vpop.f32.mrf.mxu0
        %v4901 = vadd.f32 %v4802, %v4900
        %v4902 = vpop.f32.mrf.mxu0
        %v4903 = vadd.f32 %v4802, %v4902
        %4904 = vmatmul.bf16.gmra.mxu0 %v4794
        %v4905 = vpop.f32.mrf.mxu0
        %v4906 = vadd.f32 %v4802, %v4905
        %v4907 = vpop.f32.mrf.mxu0
        %v4908 = vadd.f32 %v4802, %v4907
        %4909 = vmatmul.bf16.gmra.mxu0 %v4795
        %v4910 = vpop.f32.mrf.mxu0
        %v4911 = vadd.f32 %v4802, %v4910
        %v4912 = vpop.f32.mrf.mxu0
        %v4913 = vadd.f32 %v4802, %v4912
        %4914 = vmatmul.bf16.gmra.mxu0 %v4796
        %v4915 = vpop.f32.mrf.mxu0
        %v4916 = vadd.f32 %v4802, %v4915
        %v4917 = vpop.f32.mrf.mxu0
        %v4918 = vadd.f32 %v4802, %v4917
        %4919 = vmatmul.bf16.gmra.mxu0 %v4797
        %v4920 = vpop.f32.mrf.mxu0
        %v4921 = vadd.f32 %v4802, %v4920
        %v4922 = vpop.f32.mrf.mxu0
        %v4923 = vadd.f32 %v4802, %v4922
        %4924 = vmatmul.bf16.gmra.mxu0 %v4798
        %v4925 = vpop.f32.mrf.mxu0
        %v4926 = vadd.f32 %v4802, %v4925
        %v4927 = vpop.f32.mrf.mxu0
        %v4928 = vadd.f32 %v4802, %v4927
        %4929 = vmatmul.bf16.gmra.mxu0 %v4799
        %v4930 = vpop.f32.mrf.mxu0
        %v4931 = vadd.f32 %v4802, %v4930
        %v4932 = vpop.f32.mrf.mxu0
        %v4933 = vadd.f32 %v4802, %v4932
        %4934 = vdwg.mxu0
        %4935 = vmatpush.bf16.msra.mxu0 %v4869
        %4936 = vmatpush.bf16.msra.mxu0 %v4867
        %4937 = vmatpush.bf16.msra.mxu0 %v4865
        %4938 = vmatpush.bf16.msra.mxu0 %v4863
        %4939 = vmatpush.bf16.msra.mxu0 %v4861
        %4940 = vmatpush.bf16.msra.mxu0 %v4859
        %4941 = vmatpush.bf16.msra.mxu0 %v4857
        %4942 = vmatpush.bf16.msra.mxu0 %v4855
        %4943 = vmatmul.bf16.gmra.mxu0 %v4792
        %v4944 = vpop.f32.mrf.mxu0
        %v4945 = vadd.f32 %v4803, %v4944
        %v4946 = vpop.f32.mrf.mxu0
        %v4947 = vadd.f32 %v4803, %v4946
        %4948 = vmatmul.bf16.gmra.mxu0 %v4793
        %v4949 = vpop.f32.mrf.mxu0
        %v4950 = vadd.f32 %v4803, %v4949
        %v4951 = vpop.f32.mrf.mxu0
        %v4952 = vadd.f32 %v4803, %v4951
        %4953 = vmatmul.bf16.gmra.mxu0 %v4794
        %v4954 = vpop.f32.mrf.mxu0
        %v4955 = vadd.f32 %v4803, %v4954
        %v4956 = vpop.f32.mrf.mxu0
        %v4957 = vadd.f32 %v4803, %v4956
        %4958 = vmatmul.bf16.gmra.mxu0 %v4795
        %v4959 = vpop.f32.mrf.mxu0
        %v4960 = vadd.f32 %v4803, %v4959
        %v4961 = vpop.f32.mrf.mxu0
        %v4962 = vadd.f32 %v4803, %v4961
        %4963 = vmatmul.bf16.gmra.mxu0 %v4796
        %v4964 = vpop.f32.mrf.mxu0
        %v4965 = vadd.f32 %v4803, %v4964
        %v4966 = vpop.f32.mrf.mxu0
        %v4967 = vadd.f32 %v4803, %v4966
        %4968 = vmatmul.bf16.gmra.mxu0 %v4797
        %v4969 = vpop.f32.mrf.mxu0
        %v4970 = vadd.f32 %v4803, %v4969
        %v4971 = vpop.f32.mrf.mxu0
        %v4972 = vadd.f32 %v4803, %v4971
        %4973 = vmatmul.bf16.gmra.mxu0 %v4798
        %v4974 = vpop.f32.mrf.mxu0
        %v4975 = vadd.f32 %v4803, %v4974
        %v4976 = vpop.f32.mrf.mxu0
        %v4977 = vadd.f32 %v4803, %v4976
        %4978 = vmatmul.bf16.gmra.mxu0 %v4799
        %v4979 = vpop.f32.mrf.mxu0
        %v4980 = vadd.f32 %v4803, %v4979
        %v4981 = vpop.f32.mrf.mxu0
        %v4982 = vadd.f32 %v4803, %v4981
        %4983 = vdwg.mxu0
        %v4984 = vmax.f32 %v4896, 0.0
        %v4985 = vmax.f32 %v4945, 0.0
        %v4986 = vmax.f32 %v4898, 0.0
        %v4987 = vmax.f32 %v4947, 0.0
        %v4988 = vmax.f32 %v4901, 0.0
        %v4989 = vmax.f32 %v4950, 0.0
        %v4990 = vmax.f32 %v4903, 0.0
        %v4991 = vmax.f32 %v4952, 0.0
        %v4992 = vmax.f32 %v4906, 0.0
        %v4993 = vmax.f32 %v4955, 0.0
        %v4994 = vmax.f32 %v4908, 0.0
        %v4995 = vmax.f32 %v4957, 0.0
        %v4996 = vmax.f32 %v4911, 0.0
        %v4997 = vmax.f32 %v4960, 0.0
        %v4998 = vmax.f32 %v4913, 0.0
        %v4999 = vmax.f32 %v4962, 0.0
        %v5000 = vmax.f32 %v4916, 0.0
        %v5001 = vmax.f32 %v4965, 0.0
        %v5002 = vmax.f32 %v4918, 0.0
        %v5003 = vmax.f32 %v4967, 0.0
        %v5004 = vmax.f32 %v4921, 0.0
        %v5005 = vmax.f32 %v4970, 0.0
        %v5006 = vmax.f32 %v4923, 0.0
        %v5007 = vmax.f32 %v4972, 0.0
        %v5008 = vmax.f32 %v4926, 0.0
        %v5009 = vmax.f32 %v4975, 0.0
        %v5010 = vmax.f32 %v4928, 0.0
        %v5011 = vmax.f32 %v4977, 0.0
        %v5012 = vmax.f32 %v4931, 0.0
        %v5013 = vmax.f32 %v4980, 0.0
        %v5014 = vmax.f32 %v4933, 0.0
        %v5015 = vmax.f32 %v4982, 0.0
        %v5016 = vld [vmem:[#allocation19] sm:$0xf]
        %v5017 = vld [vmem:[#allocation19 + $0x4] sm:$0xf]
        %v5018 = vld [vmem:[#allocation19 + $0x8] sm:$0xf]
        %v5019 = vld [vmem:[#allocation19 + $0xc] sm:$0xf]
        %v5020 = vld [vmem:[#allocation19 + $0x10] sm:$0xf]
        %v5021 = vld [vmem:[#allocation19 + $0x14] sm:$0xf]
        %v5022 = vld [vmem:[#allocation19 + $0x18] sm:$0xf]
        %v5023 = vld [vmem:[#allocation19 + $0x1c] sm:$0xf]
        %v5024 = vld [vmem:[#allocation19 + $0x20] sm:$0xf]
        %v5025 = vld [vmem:[#allocation19 + $0x24] sm:$0xf]
        %v5026 = vld [vmem:[#allocation19 + $0x28] sm:$0xf]
        %v5027 = vld [vmem:[#allocation19 + $0x2c] sm:$0xf]
        %v5028 = vld [vmem:[#allocation19 + $0x30] sm:$0xf]
        %v5029 = vld [vmem:[#allocation19 + $0x34] sm:$0xf]
        %v5030 = vld [vmem:[#allocation19 + $0x38] sm:$0xf]
        %v5031 = vld [vmem:[#allocation19 + $0x3c] sm:$0xf]
        %v5032 = vld [vmem:[#allocation19 + $0x40] sm:$0xf]
        %v5033 = vld [vmem:[#allocation19 + $0x44] sm:$0xf]
        %v5034 = vld [vmem:[#allocation19 + $0x48] sm:$0xf]
        %v5035 = vld [vmem:[#allocation19 + $0x4c] sm:$0xf]
        %v5036 = vld [vmem:[#allocation19 + $0x50] sm:$0xf]
        %v5037 = vld [vmem:[#allocation19 + $0x54] sm:$0xf]
        %v5038 = vld [vmem:[#allocation19 + $0x58] sm:$0xf]
        %v5039 = vld [vmem:[#allocation19 + $0x5c] sm:$0xf]
        %v5040 = vld [vmem:[#allocation19 + $0x60] sm:$0xf]
        %v5041 = vld [vmem:[#allocation19 + $0x64] sm:$0xf]
        %v5042 = vld [vmem:[#allocation19 + $0x68] sm:$0xf]
        %v5043 = vld [vmem:[#allocation19 + $0x6c] sm:$0xf]
        %v5044 = vld [vmem:[#allocation19 + $0x70] sm:$0xf]
        %v5045 = vld [vmem:[#allocation19 + $0x74] sm:$0xf]
        %v5046 = vld [vmem:[#allocation19 + $0x78] sm:$0xf]
        %v5047 = vld [vmem:[#allocation19 + $0x7c] sm:$0xf]
        %v5048 = vpack.c.bf16 %v4986, %v4984
        %v5049 = vpack.c.bf16 %v4987, %v4985
        %v5050 = vpack.c.bf16 %v4990, %v4988
        %v5051 = vpack.c.bf16 %v4991, %v4989
        %v5052 = vpack.c.bf16 %v4994, %v4992
        %v5053 = vpack.c.bf16 %v4995, %v4993
        %v5054 = vpack.c.bf16 %v4998, %v4996
        %v5055 = vpack.c.bf16 %v4999, %v4997
        %v5056 = vpack.c.bf16 %v5002, %v5000
        %v5057 = vpack.c.bf16 %v5003, %v5001
        %v5058 = vpack.c.bf16 %v5006, %v5004
        %v5059 = vpack.c.bf16 %v5007, %v5005
        %v5060 = vpack.c.bf16 %v5010, %v5008
        %v5061 = vpack.c.bf16 %v5011, %v5009
        %v5062 = vpack.c.bf16 %v5014, %v5012
        %v5063 = vpack.c.bf16 %v5015, %v5013
        %v5064 = vld [vmem:[%s14] sm:$0x1]
        %v5065 = vperm.slane %v5064, 0
        %v5098 = vunpack.c.l.b16 %v5016
        %v5099 = vunpack.c.l.b16 %v5017
        %v5100 = vunpack.c.l.b16 %v5018
        %v5101 = vunpack.c.l.b16 %v5019
        %v5102 = vunpack.c.l.b16 %v5020
        %v5103 = vunpack.c.l.b16 %v5021
        %v5104 = vunpack.c.l.b16 %v5022
        %v5105 = vunpack.c.l.b16 %v5023
        %v5106 = vunpack.c.l.b16 %v5024
        %v5107 = vunpack.c.l.b16 %v5025
        %v5108 = vunpack.c.l.b16 %v5026
        %v5109 = vunpack.c.l.b16 %v5027
        %v5110 = vunpack.c.l.b16 %v5028
        %v5111 = vunpack.c.l.b16 %v5029
        %v5112 = vunpack.c.l.b16 %v5030
        %v5113 = vunpack.c.l.b16 %v5031
        %v5114 = vunpack.c.l.b16 %v5032
        %v5115 = vunpack.c.l.b16 %v5033
        %v5116 = vunpack.c.l.b16 %v5034
        %v5117 = vunpack.c.l.b16 %v5035
        %v5118 = vunpack.c.l.b16 %v5036
        %v5119 = vunpack.c.l.b16 %v5037
        %v5120 = vunpack.c.l.b16 %v5038
        %v5121 = vunpack.c.l.b16 %v5039
        %v5122 = vunpack.c.l.b16 %v5040
        %v5123 = vunpack.c.l.b16 %v5041
        %v5124 = vunpack.c.l.b16 %v5042
        %v5125 = vunpack.c.l.b16 %v5043
        %v5126 = vunpack.c.l.b16 %v5044
        %v5127 = vunpack.c.l.b16 %v5045
        %v5128 = vunpack.c.l.b16 %v5046
        %v5129 = vunpack.c.l.b16 %v5047
        %v5130 = vpack.c.b16 %v5099, %v5098
        %v5131 = vpack.c.b16 %v5101, %v5100
        %v5132 = vpack.c.b16 %v5103, %v5102
        %v5133 = vpack.c.b16 %v5105, %v5104
        %v5134 = vpack.c.b16 %v5107, %v5106
        %v5135 = vpack.c.b16 %v5109, %v5108
        %v5136 = vpack.c.b16 %v5111, %v5110
        %v5137 = vpack.c.b16 %v5113, %v5112
        %v5138 = vpack.c.b16 %v5115, %v5114
        %v5139 = vpack.c.b16 %v5117, %v5116
        %v5140 = vpack.c.b16 %v5119, %v5118
        %v5141 = vpack.c.b16 %v5121, %v5120
        %v5142 = vpack.c.b16 %v5123, %v5122
        %v5143 = vpack.c.b16 %v5125, %v5124
        %v5144 = vpack.c.b16 %v5127, %v5126
        %v5145 = vpack.c.b16 %v5129, %v5128
        %5162 = vmatpush.bf16.msra.mxu0 %v5137
        %5163 = vmatpush.bf16.msra.mxu0 %v5136
        %5164 = vmatpush.bf16.msra.mxu0 %v5135
        %5165 = vmatpush.bf16.msra.mxu0 %v5134
        %5166 = vmatpush.bf16.msra.mxu0 %v5133
        %5167 = vmatpush.bf16.msra.mxu0 %v5132
        %5168 = vmatpush.bf16.msra.mxu0 %v5131
        %5169 = vmatpush.bf16.msra.mxu0 %v5130
        %5170 = vmatmul.bf16.gmra.mxu0 %v5048
        %v5171 = vpop.f32.mrf.mxu0
        %v5172 = vadd.f32 %v5065, %v5171
        %v5173 = vpop.f32.mrf.mxu0
        %v5174 = vadd.f32 %v5065, %v5173
        %5175 = vmatmul.bf16.gmra.mxu0 %v5050
        %v5176 = vpop.f32.mrf.mxu0
        %v5177 = vadd.f32 %v5065, %v5176
        %v5178 = vpop.f32.mrf.mxu0
        %v5179 = vadd.f32 %v5065, %v5178
        %5180 = vmatmul.bf16.gmra.mxu0 %v5052
        %v5181 = vpop.f32.mrf.mxu0
        %v5182 = vadd.f32 %v5065, %v5181
        %v5183 = vpop.f32.mrf.mxu0
        %v5184 = vadd.f32 %v5065, %v5183
        %5185 = vmatmul.bf16.gmra.mxu0 %v5054
        %v5186 = vpop.f32.mrf.mxu0
        %v5187 = vadd.f32 %v5065, %v5186
        %v5188 = vpop.f32.mrf.mxu0
        %v5189 = vadd.f32 %v5065, %v5188
        %5190 = vmatmul.bf16.gmra.mxu0 %v5056
        %v5191 = vpop.f32.mrf.mxu0
        %v5192 = vadd.f32 %v5065, %v5191
        %v5193 = vpop.f32.mrf.mxu0
        %v5194 = vadd.f32 %v5065, %v5193
        %5195 = vmatmul.bf16.gmra.mxu0 %v5058
        %v5196 = vpop.f32.mrf.mxu0
        %v5197 = vadd.f32 %v5065, %v5196
        %v5198 = vpop.f32.mrf.mxu0
        %v5199 = vadd.f32 %v5065, %v5198
        %5200 = vmatmul.bf16.gmra.mxu0 %v5060
        %v5201 = vpop.f32.mrf.mxu0
        %v5202 = vadd.f32 %v5065, %v5201
        %v5203 = vpop.f32.mrf.mxu0
        %v5204 = vadd.f32 %v5065, %v5203
        %5205 = vmatmul.bf16.gmra.mxu0 %v5062
        %v5206 = vpop.f32.mrf.mxu0
        %v5207 = vadd.f32 %v5065, %v5206
        %v5208 = vpop.f32.mrf.mxu0
        %v5209 = vadd.f32 %v5065, %v5208
        %5210 = vdwg.mxu0
        %5211 = vmatpush.bf16.msra.mxu0 %v5145
        %5212 = vmatpush.bf16.msra.mxu0 %v5144
        %5213 = vmatpush.bf16.msra.mxu0 %v5143
        %5214 = vmatpush.bf16.msra.mxu0 %v5142
        %5215 = vmatpush.bf16.msra.mxu0 %v5141
        %5216 = vmatpush.bf16.msra.mxu0 %v5140
        %5217 = vmatpush.bf16.msra.mxu0 %v5139
        %5218 = vmatpush.bf16.msra.mxu0 %v5138
        %5219 = vmatmul.bf16.gmra.mxu0 %v5049
        %v5220 = vpop.f32.mrf.mxu0
        %v5221 = vadd.f32 %v5172, %v5220
        %v5222 = vpop.f32.mrf.mxu0
        %v5223 = vadd.f32 %v5174, %v5222
        %5224 = vmatmul.bf16.gmra.mxu0 %v5051
        %v5225 = vpop.f32.mrf.mxu0
        %v5226 = vadd.f32 %v5177, %v5225
        %v5227 = vpop.f32.mrf.mxu0
        %v5228 = vadd.f32 %v5179, %v5227
        %5229 = vmatmul.bf16.gmra.mxu0 %v5053
        %v5230 = vpop.f32.mrf.mxu0
        %v5231 = vadd.f32 %v5182, %v5230
        %v5232 = vpop.f32.mrf.mxu0
        %v5233 = vadd.f32 %v5184, %v5232
        %5234 = vmatmul.bf16.gmra.mxu0 %v5055
        %v5235 = vpop.f32.mrf.mxu0
        %v5236 = vadd.f32 %v5187, %v5235
        %v5237 = vpop.f32.mrf.mxu0
        %v5238 = vadd.f32 %v5189, %v5237
        %5239 = vmatmul.bf16.gmra.mxu0 %v5057
        %v5240 = vpop.f32.mrf.mxu0
        %v5241 = vadd.f32 %v5192, %v5240
        %v5242 = vpop.f32.mrf.mxu0
        %v5243 = vadd.f32 %v5194, %v5242
        %5244 = vmatmul.bf16.gmra.mxu0 %v5059
        %v5245 = vpop.f32.mrf.mxu0
        %v5246 = vadd.f32 %v5197, %v5245
        %v5247 = vpop.f32.mrf.mxu0
        %v5248 = vadd.f32 %v5199, %v5247
        %5249 = vmatmul.bf16.gmra.mxu0 %v5061
        %v5250 = vpop.f32.mrf.mxu0
        %v5251 = vadd.f32 %v5202, %v5250
        %v5252 = vpop.f32.mrf.mxu0
        %v5253 = vadd.f32 %v5204, %v5252
        %5254 = vmatmul.bf16.gmra.mxu0 %v5063
        %v5255 = vpop.f32.mrf.mxu0
        %v5256 = vadd.f32 %v5207, %v5255
        %v5257 = vpop.f32.mrf.mxu0
        %v5258 = vadd.f32 %v5209, %v5257
        %5259 = vdwg.mxu0
        %v5260 = vadd.f32 %v4760, %v5221
        %v5261 = vadd.f32 %v4761, %v5223
        %v5262 = vadd.f32 %v4762, %v5226
        %v5263 = vadd.f32 %v4763, %v5228
        %v5264 = vadd.f32 %v4764, %v5231
        %v5265 = vadd.f32 %v4765, %v5233
        %v5266 = vadd.f32 %v4766, %v5236
        %v5267 = vadd.f32 %v4767, %v5238
        %v5268 = vadd.f32 %v4768, %v5241
        %v5269 = vadd.f32 %v4769, %v5243
        %v5270 = vadd.f32 %v4770, %v5246
        %v5271 = vadd.f32 %v4771, %v5248
        %v5272 = vadd.f32 %v4772, %v5251
        %v5273 = vadd.f32 %v4773, %v5253
        %v5274 = vadd.f32 %v4774, %v5256
        %v5275 = vadd.f32 %v4775, %v5258
        %v5276 = vld [vmem:[%s15] sm:$0x1]
        %v5277 = vld [vmem:[%s16] sm:$0x1]
        %5278 = vadd.xlane.f32.xlu0 %v5260
        %v5279 = vpop.xlane.xlu0 %5278
        %5280 = vadd.xlane.f32.xlu0 %v5261
        %v5281 = vpop.xlane.xlu0 %5280
        %5282 = vadd.xlane.f32.xlu0 %v5262
        %v5283 = vpop.xlane.xlu0 %5282
        %5284 = vadd.xlane.f32.xlu0 %v5263
        %v5285 = vpop.xlane.xlu0 %5284
        %5286 = vadd.xlane.f32.xlu0 %v5264
        %v5287 = vpop.xlane.xlu0 %5286
        %5288 = vadd.xlane.f32.xlu0 %v5265
        %v5289 = vpop.xlane.xlu0 %5288
        %5290 = vadd.xlane.f32.xlu0 %v5266
        %v5291 = vpop.xlane.xlu0 %5290
        %5292 = vadd.xlane.f32.xlu0 %v5267
        %v5293 = vpop.xlane.xlu0 %5292
        %5294 = vadd.xlane.f32.xlu0 %v5268
        %v5295 = vpop.xlane.xlu0 %5294
        %5296 = vadd.xlane.f32.xlu0 %v5269
        %v5297 = vpop.xlane.xlu0 %5296
        %5298 = vadd.xlane.f32.xlu0 %v5270
        %v5299 = vpop.xlane.xlu0 %5298
        %5300 = vadd.xlane.f32.xlu0 %v5271
        %v5301 = vpop.xlane.xlu0 %5300
        %5302 = vadd.xlane.f32.xlu0 %v5272
        %v5303 = vpop.xlane.xlu0 %5302
        %5304 = vadd.xlane.f32.xlu0 %v5273
        %v5305 = vpop.xlane.xlu0 %5304
        %5306 = vadd.xlane.f32.xlu0 %v5274
        %v5307 = vpop.xlane.xlu0 %5306
        %5308 = vadd.xlane.f32.xlu0 %v5275
        %v5309 = vpop.xlane.xlu0 %5308
        %v5310 = vmul.f32 %v5279, %v4453
        %v5311 = vmul.f32 %v5281, %v4453
        %v5312 = vmul.f32 %v5283, %v4453
        %v5313 = vmul.f32 %v5285, %v4453
        %v5314 = vmul.f32 %v5287, %v4453
        %v5315 = vmul.f32 %v5289, %v4453
        %v5316 = vmul.f32 %v5291, %v4453
        %v5317 = vmul.f32 %v5293, %v4453
        %v5318 = vmul.f32 %v5295, %v4453
        %v5319 = vmul.f32 %v5297, %v4453
        %v5320 = vmul.f32 %v5299, %v4453
        %v5321 = vmul.f32 %v5301, %v4453
        %v5322 = vmul.f32 %v5303, %v4453
        %v5323 = vmul.f32 %v5305, %v4453
        %v5324 = vmul.f32 %v5307, %v4453
        %v5325 = vmul.f32 %v5309, %v4453
        %v5326 = vsub.f32 %v5260, %v5310
        %v5327 = vsub.f32 %v5261, %v5311
        %v5328 = vsub.f32 %v5262, %v5312
        %v5329 = vsub.f32 %v5263, %v5313
        %v5330 = vsub.f32 %v5264, %v5314
        %v5331 = vsub.f32 %v5265, %v5315
        %v5332 = vsub.f32 %v5266, %v5316
        %v5333 = vsub.f32 %v5267, %v5317
        %v5334 = vsub.f32 %v5268, %v5318
        %v5335 = vsub.f32 %v5269, %v5319
        %v5336 = vsub.f32 %v5270, %v5320
        %v5337 = vsub.f32 %v5271, %v5321
        %v5338 = vsub.f32 %v5272, %v5322
        %v5339 = vsub.f32 %v5273, %v5323
        %v5340 = vsub.f32 %v5274, %v5324
        %v5341 = vsub.f32 %v5275, %v5325
        %v5342 = vmul.f32 %v5326, %v5326
        %v5343 = vmul.f32 %v5327, %v5327
        %v5344 = vmul.f32 %v5328, %v5328
        %v5345 = vmul.f32 %v5329, %v5329
        %v5346 = vmul.f32 %v5330, %v5330
        %v5347 = vmul.f32 %v5331, %v5331
        %v5348 = vmul.f32 %v5332, %v5332
        %v5349 = vmul.f32 %v5333, %v5333
        %v5350 = vmul.f32 %v5334, %v5334
        %v5351 = vmul.f32 %v5335, %v5335
        %v5352 = vmul.f32 %v5336, %v5336
        %v5353 = vmul.f32 %v5337, %v5337
        %v5354 = vmul.f32 %v5338, %v5338
        %v5355 = vmul.f32 %v5339, %v5339
        %v5356 = vmul.f32 %v5340, %v5340
        %v5357 = vmul.f32 %v5341, %v5341
        %5358 = vadd.xlane.f32.xlu0 %v5342
        %v5359 = vpop.xlane.xlu0 %5358
        %5360 = vadd.xlane.f32.xlu0 %v5343
        %v5361 = vpop.xlane.xlu0 %5360
        %5362 = vadd.xlane.f32.xlu0 %v5344
        %v5363 = vpop.xlane.xlu0 %5362
        %5364 = vadd.xlane.f32.xlu0 %v5345
        %v5365 = vpop.xlane.xlu0 %5364
        %5366 = vadd.xlane.f32.xlu0 %v5346
        %v5367 = vpop.xlane.xlu0 %5366
        %5368 = vadd.xlane.f32.xlu0 %v5347
        %v5369 = vpop.xlane.xlu0 %5368
        %5370 = vadd.xlane.f32.xlu0 %v5348
        %v5371 = vpop.xlane.xlu0 %5370
        %5372 = vadd.xlane.f32.xlu0 %v5349
        %v5373 = vpop.xlane.xlu0 %5372
        %5374 = vadd.xlane.f32.xlu0 %v5350
        %v5375 = vpop.xlane.xlu0 %5374
        %5376 = vadd.xlane.f32.xlu0 %v5351
        %v5377 = vpop.xlane.xlu0 %5376
        %5378 = vadd.xlane.f32.xlu0 %v5352
        %v5379 = vpop.xlane.xlu0 %5378
        %5380 = vadd.xlane.f32.xlu0 %v5353
        %v5381 = vpop.xlane.xlu0 %5380
        %5382 = vadd.xlane.f32.xlu0 %v5354
        %v5383 = vpop.xlane.xlu0 %5382
        %5384 = vadd.xlane.f32.xlu0 %v5355
        %v5385 = vpop.xlane.xlu0 %5384
        %5386 = vadd.xlane.f32.xlu0 %v5356
        %v5387 = vpop.xlane.xlu0 %5386
        %5388 = vadd.xlane.f32.xlu0 %v5357
        %v5389 = vpop.xlane.xlu0 %5388
        %v5390 = vmul.f32 %v5359, %v4453
        %v5391 = vmul.f32 %v5361, %v4453
        %v5392 = vmul.f32 %v5363, %v4453
        %v5393 = vmul.f32 %v5365, %v4453
        %v5394 = vmul.f32 %v5367, %v4453
        %v5395 = vmul.f32 %v5369, %v4453
        %v5396 = vmul.f32 %v5371, %v4453
        %v5397 = vmul.f32 %v5373, %v4453
        %v5398 = vmul.f32 %v5375, %v4453
        %v5399 = vmul.f32 %v5377, %v4453
        %v5400 = vmul.f32 %v5379, %v4453
        %v5401 = vmul.f32 %v5381, %v4453
        %v5402 = vmul.f32 %v5383, %v4453
        %v5403 = vmul.f32 %v5385, %v4453
        %v5404 = vmul.f32 %v5387, %v4453
        %v5405 = vmul.f32 %v5389, %v4453
        %v5406 = vadd.f32 %v5390, 1e-05
        %v5407 = vadd.f32 %v5391, 1e-05
        %v5408 = vadd.f32 %v5392, 1e-05
        %v5409 = vadd.f32 %v5393, 1e-05
        %v5410 = vadd.f32 %v5394, 1e-05
        %v5411 = vadd.f32 %v5395, 1e-05
        %v5412 = vadd.f32 %v5396, 1e-05
        %v5413 = vadd.f32 %v5397, 1e-05
        %v5414 = vadd.f32 %v5398, 1e-05
        %v5415 = vadd.f32 %v5399, 1e-05
        %v5416 = vadd.f32 %v5400, 1e-05
        %v5417 = vadd.f32 %v5401, 1e-05
        %v5418 = vadd.f32 %v5402, 1e-05
        %v5419 = vadd.f32 %v5403, 1e-05
        %v5420 = vadd.f32 %v5404, 1e-05
        %v5421 = vadd.f32 %v5405, 1e-05
        %v5422 = vrsqrt.pop %v5406
        %v5423 = vmul.f32 %v5422, %v5406
        %v5424 = vmul.f32 %v5423, %v5422
        %v5425 = vmul.f32 0.5, %v5424
        %v5426 = vsub.f32 1.5, %v5425
        %v5427 = vmul.f32 %v5422, %v5426
        %vm5428 = vweird.f32 %v5406
        %vm5429 = vweird.f32 %v5422
        %vm5430 = vmor %vm5428, %vm5429
        %v5431 = vsel %vm5430, %v5422, %v5427
        %v5432 = vrsqrt.pop %v5407
        %v5433 = vmul.f32 %v5432, %v5407
        %v5434 = vmul.f32 %v5433, %v5432
        %v5435 = vmul.f32 0.5, %v5434
        %v5436 = vsub.f32 1.5, %v5435
        %v5437 = vmul.f32 %v5432, %v5436
        %vm5438 = vweird.f32 %v5407
        %vm5439 = vweird.f32 %v5432
        %vm5440 = vmor %vm5438, %vm5439
        %v5441 = vsel %vm5440, %v5432, %v5437
        %v5442 = vrsqrt.pop %v5408
        %v5443 = vmul.f32 %v5442, %v5408
        %v5444 = vmul.f32 %v5443, %v5442
        %v5445 = vmul.f32 0.5, %v5444
        %v5446 = vsub.f32 1.5, %v5445
        %v5447 = vmul.f32 %v5442, %v5446
        %vm5448 = vweird.f32 %v5408
        %vm5449 = vweird.f32 %v5442
        %vm5450 = vmor %vm5448, %vm5449
        %v5451 = vsel %vm5450, %v5442, %v5447
        %v5452 = vrsqrt.pop %v5409
        %v5453 = vmul.f32 %v5452, %v5409
        %v5454 = vmul.f32 %v5453, %v5452
        %v5455 = vmul.f32 0.5, %v5454
        %v5456 = vsub.f32 1.5, %v5455
        %v5457 = vmul.f32 %v5452, %v5456
        %vm5458 = vweird.f32 %v5409
        %vm5459 = vweird.f32 %v5452
        %vm5460 = vmor %vm5458, %vm5459
        %v5461 = vsel %vm5460, %v5452, %v5457
        %v5462 = vrsqrt.pop %v5410
        %v5463 = vmul.f32 %v5462, %v5410
        %v5464 = vmul.f32 %v5463, %v5462
        %v5465 = vmul.f32 0.5, %v5464
        %v5466 = vsub.f32 1.5, %v5465
        %v5467 = vmul.f32 %v5462, %v5466
        %vm5468 = vweird.f32 %v5410
        %vm5469 = vweird.f32 %v5462
        %vm5470 = vmor %vm5468, %vm5469
        %v5471 = vsel %vm5470, %v5462, %v5467
        %v5472 = vrsqrt.pop %v5411
        %v5473 = vmul.f32 %v5472, %v5411
        %v5474 = vmul.f32 %v5473, %v5472
        %v5475 = vmul.f32 0.5, %v5474
        %v5476 = vsub.f32 1.5, %v5475
        %v5477 = vmul.f32 %v5472, %v5476
        %vm5478 = vweird.f32 %v5411
        %vm5479 = vweird.f32 %v5472
        %vm5480 = vmor %vm5478, %vm5479
        %v5481 = vsel %vm5480, %v5472, %v5477
        %v5482 = vrsqrt.pop %v5412
        %v5483 = vmul.f32 %v5482, %v5412
        %v5484 = vmul.f32 %v5483, %v5482
        %v5485 = vmul.f32 0.5, %v5484
        %v5486 = vsub.f32 1.5, %v5485
        %v5487 = vmul.f32 %v5482, %v5486
        %vm5488 = vweird.f32 %v5412
        %vm5489 = vweird.f32 %v5482
        %vm5490 = vmor %vm5488, %vm5489
        %v5491 = vsel %vm5490, %v5482, %v5487
        %v5492 = vrsqrt.pop %v5413
        %v5493 = vmul.f32 %v5492, %v5413
        %v5494 = vmul.f32 %v5493, %v5492
        %v5495 = vmul.f32 0.5, %v5494
        %v5496 = vsub.f32 1.5, %v5495
        %v5497 = vmul.f32 %v5492, %v5496
        %vm5498 = vweird.f32 %v5413
        %vm5499 = vweird.f32 %v5492
        %vm5500 = vmor %vm5498, %vm5499
        %v5501 = vsel %vm5500, %v5492, %v5497
        %v5502 = vrsqrt.pop %v5414
        %v5503 = vmul.f32 %v5502, %v5414
        %v5504 = vmul.f32 %v5503, %v5502
        %v5505 = vmul.f32 0.5, %v5504
        %v5506 = vsub.f32 1.5, %v5505
        %v5507 = vmul.f32 %v5502, %v5506
        %vm5508 = vweird.f32 %v5414
        %vm5509 = vweird.f32 %v5502
        %vm5510 = vmor %vm5508, %vm5509
        %v5511 = vsel %vm5510, %v5502, %v5507
        %v5512 = vrsqrt.pop %v5415
        %v5513 = vmul.f32 %v5512, %v5415
        %v5514 = vmul.f32 %v5513, %v5512
        %v5515 = vmul.f32 0.5, %v5514
        %v5516 = vsub.f32 1.5, %v5515
        %v5517 = vmul.f32 %v5512, %v5516
        %vm5518 = vweird.f32 %v5415
        %vm5519 = vweird.f32 %v5512
        %vm5520 = vmor %vm5518, %vm5519
        %v5521 = vsel %vm5520, %v5512, %v5517
        %v5522 = vrsqrt.pop %v5416
        %v5523 = vmul.f32 %v5522, %v5416
        %v5524 = vmul.f32 %v5523, %v5522
        %v5525 = vmul.f32 0.5, %v5524
        %v5526 = vsub.f32 1.5, %v5525
        %v5527 = vmul.f32 %v5522, %v5526
        %vm5528 = vweird.f32 %v5416
        %vm5529 = vweird.f32 %v5522
        %vm5530 = vmor %vm5528, %vm5529
        %v5531 = vsel %vm5530, %v5522, %v5527
        %v5532 = vrsqrt.pop %v5417
        %v5533 = vmul.f32 %v5532, %v5417
        %v5534 = vmul.f32 %v5533, %v5532
        %v5535 = vmul.f32 0.5, %v5534
        %v5536 = vsub.f32 1.5, %v5535
        %v5537 = vmul.f32 %v5532, %v5536
        %vm5538 = vweird.f32 %v5417
        %vm5539 = vweird.f32 %v5532
        %vm5540 = vmor %vm5538, %vm5539
        %v5541 = vsel %vm5540, %v5532, %v5537
        %v5542 = vrsqrt.pop %v5418
        %v5543 = vmul.f32 %v5542, %v5418
        %v5544 = vmul.f32 %v5543, %v5542
        %v5545 = vmul.f32 0.5, %v5544
        %v5546 = vsub.f32 1.5, %v5545
        %v5547 = vmul.f32 %v5542, %v5546
        %vm5548 = vweird.f32 %v5418
        %vm5549 = vweird.f32 %v5542
        %vm5550 = vmor %vm5548, %vm5549
        %v5551 = vsel %vm5550, %v5542, %v5547
        %v5552 = vrsqrt.pop %v5419
        %v5553 = vmul.f32 %v5552, %v5419
        %v5554 = vmul.f32 %v5553, %v5552
        %v5555 = vmul.f32 0.5, %v5554
        %v5556 = vsub.f32 1.5, %v5555
        %v5557 = vmul.f32 %v5552, %v5556
        %vm5558 = vweird.f32 %v5419
        %vm5559 = vweird.f32 %v5552
        %vm5560 = vmor %vm5558, %vm5559
        %v5561 = vsel %vm5560, %v5552, %v5557
        %v5562 = vrsqrt.pop %v5420
        %v5563 = vmul.f32 %v5562, %v5420
        %v5564 = vmul.f32 %v5563, %v5562
        %v5565 = vmul.f32 0.5, %v5564
        %v5566 = vsub.f32 1.5, %v5565
        %v5567 = vmul.f32 %v5562, %v5566
        %vm5568 = vweird.f32 %v5420
        %vm5569 = vweird.f32 %v5562
        %vm5570 = vmor %vm5568, %vm5569
        %v5571 = vsel %vm5570, %v5562, %v5567
        %v5572 = vrsqrt.pop %v5421
        %v5573 = vmul.f32 %v5572, %v5421
        %v5574 = vmul.f32 %v5573, %v5572
        %v5575 = vmul.f32 0.5, %v5574
        %v5576 = vsub.f32 1.5, %v5575
        %v5577 = vmul.f32 %v5572, %v5576
        %vm5578 = vweird.f32 %v5421
        %vm5579 = vweird.f32 %v5572
        %vm5580 = vmor %vm5578, %vm5579
        %v5581 = vsel %vm5580, %v5572, %v5577
        %v5582 = vmul.f32 %v5326, %v5431
        %v5583 = vmul.f32 %v5327, %v5441
        %v5584 = vmul.f32 %v5328, %v5451
        %v5585 = vmul.f32 %v5329, %v5461
        %v5586 = vmul.f32 %v5330, %v5471
        %v5587 = vmul.f32 %v5331, %v5481
        %v5588 = vmul.f32 %v5332, %v5491
        %v5589 = vmul.f32 %v5333, %v5501
        %v5590 = vmul.f32 %v5334, %v5511
        %v5591 = vmul.f32 %v5335, %v5521
        %v5592 = vmul.f32 %v5336, %v5531
        %v5593 = vmul.f32 %v5337, %v5541
        %v5594 = vmul.f32 %v5338, %v5551
        %v5595 = vmul.f32 %v5339, %v5561
        %v5596 = vmul.f32 %v5340, %v5571
        %v5597 = vmul.f32 %v5341, %v5581
        %v5598 = vperm.slane %v5276, 0
        %v5599 = vmul.f32 %v5582, %v5598
        %v5600 = vmul.f32 %v5583, %v5598
        %v5601 = vmul.f32 %v5584, %v5598
        %v5602 = vmul.f32 %v5585, %v5598
        %v5603 = vmul.f32 %v5586, %v5598
        %v5604 = vmul.f32 %v5587, %v5598
        %v5605 = vmul.f32 %v5588, %v5598
        %v5606 = vmul.f32 %v5589, %v5598
        %v5607 = vmul.f32 %v5590, %v5598
        %v5608 = vmul.f32 %v5591, %v5598
        %v5609 = vmul.f32 %v5592, %v5598
        %v5610 = vmul.f32 %v5593, %v5598
        %v5611 = vmul.f32 %v5594, %v5598
        %v5612 = vmul.f32 %v5595, %v5598
        %v5613 = vmul.f32 %v5596, %v5598
        %v5614 = vmul.f32 %v5597, %v5598
        %v5615 = vperm.slane %v5277, 0
        %v5616 = vadd.f32 %v5599, %v5615
        %v5617 = vadd.f32 %v5600, %v5615
        %v5618 = vadd.f32 %v5601, %v5615
        %v5619 = vadd.f32 %v5602, %v5615
        %v5620 = vadd.f32 %v5603, %v5615
        %v5621 = vadd.f32 %v5604, %v5615
        %v5622 = vadd.f32 %v5605, %v5615
        %v5623 = vadd.f32 %v5606, %v5615
        %v5624 = vadd.f32 %v5607, %v5615
        %v5625 = vadd.f32 %v5608, %v5615
        %v5626 = vadd.f32 %v5609, %v5615
        %v5627 = vadd.f32 %v5610, %v5615
        %v5628 = vadd.f32 %v5611, %v5615
        %v5629 = vadd.f32 %v5612, %v5615
        %v5630 = vadd.f32 %v5613, %v5615
        %v5631 = vadd.f32 %v5614, %v5615
        %s5632 = scalar_lea.vmem [#allocation11], 192
        %v5633 = vld [vmem:[%s5632] sm:$0xff]
        %v5634 = vld [vmem:[%s5632 + $0x8] sm:$0xf]
        %v5635 = vld [vmem:[%s5632 + $0xc] sm:$0xff]
        %v5636 = vld [vmem:[%s5632 + $0x14] sm:$0xf]
        %v5637 = vld [vmem:[%s5632 + $0x18] sm:$0xff]
        %v5638 = vld [vmem:[%s5632 + $0x20] sm:$0xf]
        %v5639 = vld [vmem:[%s5632 + $0x24] sm:$0xff]
        %v5640 = vld [vmem:[%s5632 + $0x2c] sm:$0xf]
        %v5641 = vld [vmem:[%s5632 + $0x30] sm:$0xff]
        %v5642 = vld [vmem:[%s5632 + $0x38] sm:$0xf]
        %v5643 = vld [vmem:[%s5632 + $0x3c] sm:$0xff]
        %v5644 = vld [vmem:[%s5632 + $0x44] sm:$0xf]
        %v5645 = vld [vmem:[%s5632 + $0x48] sm:$0xff]
        %v5646 = vld [vmem:[%s5632 + $0x50] sm:$0xf]
        %v5647 = vld [vmem:[%s5632 + $0x54] sm:$0xff]
        %v5648 = vld [vmem:[%s5632 + $0x5c] sm:$0xf]
        %v5649 = vld [vmem:[%s5632 + $0x60] sm:$0xff]
        %v5650 = vld [vmem:[%s5632 + $0x68] sm:$0xf]
        %v5651 = vld [vmem:[%s5632 + $0x6c] sm:$0xff]
        %v5652 = vld [vmem:[%s5632 + $0x74] sm:$0xf]
        %v5653 = vld [vmem:[%s5632 + $0x78] sm:$0xff]
        %v5654 = vld [vmem:[%s5632 + $0x80] sm:$0xf]
        %v5655 = vld [vmem:[%s5632 + $0x84] sm:$0xff]
        %v5656 = vld [vmem:[%s5632 + $0x8c] sm:$0xf]
        %v5657 = vld [vmem:[%s5632 + $0x90] sm:$0xff]
        %v5658 = vld [vmem:[%s5632 + $0x98] sm:$0xf]
        %v5659 = vld [vmem:[%s5632 + $0x9c] sm:$0xff]
        %v5660 = vld [vmem:[%s5632 + $0xa4] sm:$0xf]
        %v5661 = vld [vmem:[%s5632 + $0xa8] sm:$0xff]
        %v5662 = vld [vmem:[%s5632 + $0xb0] sm:$0xf]
        %v5663 = vld [vmem:[%s5632 + $0xb4] sm:$0xff]
        %v5664 = vld [vmem:[%s5632 + $0xbc] sm:$0xf]
        %s5665 = scalar_lea.vmem [#allocation14], 64
        %v5666 = vld [vmem:[%s5665] sm:$0xf]
        %v5667 = vld [vmem:[%s5665 + $0x4] sm:$0xf]
        %v5668 = vld [vmem:[%s5665 + $0x8] sm:$0xf]
        %v5669 = vld [vmem:[%s5665 + $0xc] sm:$0xf]
        %v5670 = vld [vmem:[%s5665 + $0x10] sm:$0xf]
        %v5671 = vld [vmem:[%s5665 + $0x14] sm:$0xf]
        %v5672 = vld [vmem:[%s5665 + $0x18] sm:$0xf]
        %v5673 = vld [vmem:[%s5665 + $0x1c] sm:$0xf]
        %v5674 = vld [vmem:[%s5665 + $0x20] sm:$0xf]
        %v5675 = vld [vmem:[%s5665 + $0x24] sm:$0xf]
        %v5676 = vld [vmem:[%s5665 + $0x28] sm:$0xf]
        %v5677 = vld [vmem:[%s5665 + $0x2c] sm:$0xf]
        %v5678 = vld [vmem:[%s5665 + $0x30] sm:$0xf]
        %v5679 = vld [vmem:[%s5665 + $0x34] sm:$0xf]
        %v5680 = vld [vmem:[%s5665 + $0x38] sm:$0xf]
        %v5681 = vld [vmem:[%s5665 + $0x3c] sm:$0xf]
        %v5682 = vpack.c.bf16 %v5617, %v5616
        %v5683 = vpack.c.bf16 %v5619, %v5618
        %v5684 = vpack.c.bf16 %v5621, %v5620
        %v5685 = vpack.c.bf16 %v5623, %v5622
        %v5686 = vpack.c.bf16 %v5625, %v5624
        %v5687 = vpack.c.bf16 %v5627, %v5626
        %v5688 = vpack.c.bf16 %v5629, %v5628
        %v5689 = vpack.c.bf16 %v5631, %v5630
        %s5690 = scalar_lea.vmem [#allocation13], 1
        %v5691 = vld [vmem:[%s5690] ss:$2 sm:$0x7]
        %v5693 = vperm.slane %v5691, 0
        %v5694 = vperm.slane %v5691, 1
        %v5695 = vperm.slane %v5691, 2
        %v5731 = vunpack.c.l.b16 %v5633
        %v5732 = vunpack.c.h.b16 %v5633
        %v5733 = vunpack.c.l.b16 %v5634
        %v5734 = vunpack.c.l.b16 %v5635
        %v5735 = vunpack.c.h.b16 %v5635
        %v5736 = vunpack.c.l.b16 %v5636
        %v5737 = vunpack.c.l.b16 %v5637
        %v5738 = vunpack.c.h.b16 %v5637
        %v5739 = vunpack.c.l.b16 %v5638
        %v5740 = vunpack.c.l.b16 %v5639
        %v5741 = vunpack.c.h.b16 %v5639
        %v5742 = vunpack.c.l.b16 %v5640
        %v5743 = vunpack.c.l.b16 %v5641
        %v5744 = vunpack.c.h.b16 %v5641
        %v5745 = vunpack.c.l.b16 %v5642
        %v5746 = vunpack.c.l.b16 %v5643
        %v5747 = vunpack.c.h.b16 %v5643
        %v5748 = vunpack.c.l.b16 %v5644
        %v5749 = vunpack.c.l.b16 %v5645
        %v5750 = vunpack.c.h.b16 %v5645
        %v5751 = vunpack.c.l.b16 %v5646
        %v5752 = vunpack.c.l.b16 %v5647
        %v5753 = vunpack.c.h.b16 %v5647
        %v5754 = vunpack.c.l.b16 %v5648
        %v5755 = vunpack.c.l.b16 %v5649
        %v5756 = vunpack.c.h.b16 %v5649
        %v5757 = vunpack.c.l.b16 %v5650
        %v5758 = vunpack.c.l.b16 %v5651
        %v5759 = vunpack.c.h.b16 %v5651
        %v5760 = vunpack.c.l.b16 %v5652
        %v5761 = vunpack.c.l.b16 %v5653
        %v5762 = vunpack.c.h.b16 %v5653
        %v5763 = vunpack.c.l.b16 %v5654
        %v5764 = vunpack.c.l.b16 %v5655
        %v5765 = vunpack.c.h.b16 %v5655
        %v5766 = vunpack.c.l.b16 %v5656
        %v5767 = vunpack.c.l.b16 %v5657
        %v5768 = vunpack.c.h.b16 %v5657
        %v5769 = vunpack.c.l.b16 %v5658
        %v5770 = vunpack.c.l.b16 %v5659
        %v5771 = vunpack.c.h.b16 %v5659
        %v5772 = vunpack.c.l.b16 %v5660
        %v5773 = vunpack.c.l.b16 %v5661
        %v5774 = vunpack.c.h.b16 %v5661
        %v5775 = vunpack.c.l.b16 %v5662
        %v5776 = vunpack.c.l.b16 %v5663
        %v5777 = vunpack.c.h.b16 %v5663
        %v5778 = vunpack.c.l.b16 %v5664
        %v5779 = vpack.c.b16 %v5734, %v5731
        %v5780 = vpack.c.b16 %v5735, %v5732
        %v5781 = vpack.c.b16 %v5736, %v5733
        %v5782 = vpack.c.b16 %v5740, %v5737
        %v5783 = vpack.c.b16 %v5741, %v5738
        %v5784 = vpack.c.b16 %v5742, %v5739
        %v5785 = vpack.c.b16 %v5746, %v5743
        %v5786 = vpack.c.b16 %v5747, %v5744
        %v5787 = vpack.c.b16 %v5748, %v5745
        %v5788 = vpack.c.b16 %v5752, %v5749
        %v5789 = vpack.c.b16 %v5753, %v5750
        %v5790 = vpack.c.b16 %v5754, %v5751
        %v5791 = vpack.c.b16 %v5758, %v5755
        %v5792 = vpack.c.b16 %v5759, %v5756
        %v5793 = vpack.c.b16 %v5760, %v5757
        %v5794 = vpack.c.b16 %v5764, %v5761
        %v5795 = vpack.c.b16 %v5765, %v5762
        %v5796 = vpack.c.b16 %v5766, %v5763
        %v5797 = vpack.c.b16 %v5770, %v5767
        %v5798 = vpack.c.b16 %v5771, %v5768
        %v5799 = vpack.c.b16 %v5772, %v5769
        %v5800 = vpack.c.b16 %v5776, %v5773
        %v5801 = vpack.c.b16 %v5777, %v5774
        %v5802 = vpack.c.b16 %v5778, %v5775
        %5827 = vmatpush.bf16.msra.mxu0 %v5800
        %5828 = vmatpush.bf16.msra.mxu0 %v5797
        %5829 = vmatpush.bf16.msra.mxu0 %v5794
        %5830 = vmatpush.bf16.msra.mxu0 %v5791
        %5831 = vmatpush.bf16.msra.mxu0 %v5788
        %5832 = vmatpush.bf16.msra.mxu0 %v5785
        %5833 = vmatpush.bf16.msra.mxu0 %v5782
        %5834 = vmatpush.bf16.msra.mxu0 %v5779
        %5835 = vmatmul.bf16.gmra.mxu0 %v5682
        %v5836 = vpop.f32.mrf.mxu0
        %v5837 = vadd.f32 %v5693, %v5836
        %v5838 = vpop.f32.mrf.mxu0
        %v5839 = vadd.f32 %v5693, %v5838
        %5840 = vmatmul.bf16.gmra.mxu0 %v5683
        %v5841 = vpop.f32.mrf.mxu0
        %v5842 = vadd.f32 %v5693, %v5841
        %v5843 = vpop.f32.mrf.mxu0
        %v5844 = vadd.f32 %v5693, %v5843
        %5845 = vmatmul.bf16.gmra.mxu0 %v5684
        %v5846 = vpop.f32.mrf.mxu0
        %v5847 = vadd.f32 %v5693, %v5846
        %v5848 = vpop.f32.mrf.mxu0
        %v5849 = vadd.f32 %v5693, %v5848
        %5850 = vmatmul.bf16.gmra.mxu0 %v5685
        %v5851 = vpop.f32.mrf.mxu0
        %v5852 = vadd.f32 %v5693, %v5851
        %v5853 = vpop.f32.mrf.mxu0
        %v5854 = vadd.f32 %v5693, %v5853
        %5855 = vmatmul.bf16.gmra.mxu0 %v5686
        %v5856 = vpop.f32.mrf.mxu0
        %v5857 = vadd.f32 %v5693, %v5856
        %v5858 = vpop.f32.mrf.mxu0
        %v5859 = vadd.f32 %v5693, %v5858
        %5860 = vmatmul.bf16.gmra.mxu0 %v5687
        %v5861 = vpop.f32.mrf.mxu0
        %v5862 = vadd.f32 %v5693, %v5861
        %v5863 = vpop.f32.mrf.mxu0
        %v5864 = vadd.f32 %v5693, %v5863
        %5865 = vmatmul.bf16.gmra.mxu0 %v5688
        %v5866 = vpop.f32.mrf.mxu0
        %v5867 = vadd.f32 %v5693, %v5866
        %v5868 = vpop.f32.mrf.mxu0
        %v5869 = vadd.f32 %v5693, %v5868
        %5870 = vmatmul.bf16.gmra.mxu0 %v5689
        %v5871 = vpop.f32.mrf.mxu0
        %v5872 = vadd.f32 %v5693, %v5871
        %v5873 = vpop.f32.mrf.mxu0
        %v5874 = vadd.f32 %v5693, %v5873
        %5875 = vdwg.mxu0
        %5876 = vmatpush.bf16.msra.mxu0 %v5801
        %5877 = vmatpush.bf16.msra.mxu0 %v5798
        %5878 = vmatpush.bf16.msra.mxu0 %v5795
        %5879 = vmatpush.bf16.msra.mxu0 %v5792
        %5880 = vmatpush.bf16.msra.mxu0 %v5789
        %5881 = vmatpush.bf16.msra.mxu0 %v5786
        %5882 = vmatpush.bf16.msra.mxu0 %v5783
        %5883 = vmatpush.bf16.msra.mxu0 %v5780
        %5884 = vmatmul.bf16.gmra.mxu0 %v5682
        %v5885 = vpop.f32.mrf.mxu0
        %v5886 = vadd.f32 %v5694, %v5885
        %v5887 = vpop.f32.mrf.mxu0
        %v5888 = vadd.f32 %v5694, %v5887
        %5889 = vmatmul.bf16.gmra.mxu0 %v5683
        %v5890 = vpop.f32.mrf.mxu0
        %v5891 = vadd.f32 %v5694, %v5890
        %v5892 = vpop.f32.mrf.mxu0
        %v5893 = vadd.f32 %v5694, %v5892
        %5894 = vmatmul.bf16.gmra.mxu0 %v5684
        %v5895 = vpop.f32.mrf.mxu0
        %v5896 = vadd.f32 %v5694, %v5895
        %v5897 = vpop.f32.mrf.mxu0
        %v5898 = vadd.f32 %v5694, %v5897
        %5899 = vmatmul.bf16.gmra.mxu0 %v5685
        %v5900 = vpop.f32.mrf.mxu0
        %v5901 = vadd.f32 %v5694, %v5900
        %v5902 = vpop.f32.mrf.mxu0
        %v5903 = vadd.f32 %v5694, %v5902
        %5904 = vmatmul.bf16.gmra.mxu0 %v5686
        %v5905 = vpop.f32.mrf.mxu0
        %v5906 = vadd.f32 %v5694, %v5905
        %v5907 = vpop.f32.mrf.mxu0
        %v5908 = vadd.f32 %v5694, %v5907
        %5909 = vmatmul.bf16.gmra.mxu0 %v5687
        %v5910 = vpop.f32.mrf.mxu0
        %v5911 = vadd.f32 %v5694, %v5910
        %v5912 = vpop.f32.mrf.mxu0
        %v5913 = vadd.f32 %v5694, %v5912
        %5914 = vmatmul.bf16.gmra.mxu0 %v5688
        %v5915 = vpop.f32.mrf.mxu0
        %v5916 = vadd.f32 %v5694, %v5915
        %v5917 = vpop.f32.mrf.mxu0
        %v5918 = vadd.f32 %v5694, %v5917
        %5919 = vmatmul.bf16.gmra.mxu0 %v5689
        %v5920 = vpop.f32.mrf.mxu0
        %v5921 = vadd.f32 %v5694, %v5920
        %v5922 = vpop.f32.mrf.mxu0
        %v5923 = vadd.f32 %v5694, %v5922
        %5924 = vdwg.mxu0
        %5925 = vmatpush.bf16.msra.mxu0 %v5802
        %5926 = vmatpush.bf16.msra.mxu0 %v5799
        %5927 = vmatpush.bf16.msra.mxu0 %v5796
        %5928 = vmatpush.bf16.msra.mxu0 %v5793
        %5929 = vmatpush.bf16.msra.mxu0 %v5790
        %5930 = vmatpush.bf16.msra.mxu0 %v5787
        %5931 = vmatpush.bf16.msra.mxu0 %v5784
        %5932 = vmatpush.bf16.msra.mxu0 %v5781
        %5933 = vmatmul.bf16.gmra.mxu0 %v5682
        %v5934 = vpop.f32.mrf.mxu0
        %v5935 = vadd.f32 %v5695, %v5934
        %v5936 = vpop.f32.mrf.mxu0
        %v5937 = vadd.f32 %v5695, %v5936
        %5938 = vmatmul.bf16.gmra.mxu0 %v5683
        %v5939 = vpop.f32.mrf.mxu0
        %v5940 = vadd.f32 %v5695, %v5939
        %v5941 = vpop.f32.mrf.mxu0
        %v5942 = vadd.f32 %v5695, %v5941
        %5943 = vmatmul.bf16.gmra.mxu0 %v5684
        %v5944 = vpop.f32.mrf.mxu0
        %v5945 = vadd.f32 %v5695, %v5944
        %v5946 = vpop.f32.mrf.mxu0
        %v5947 = vadd.f32 %v5695, %v5946
        %5948 = vmatmul.bf16.gmra.mxu0 %v5685
        %v5949 = vpop.f32.mrf.mxu0
        %v5950 = vadd.f32 %v5695, %v5949
        %v5951 = vpop.f32.mrf.mxu0
        %v5952 = vadd.f32 %v5695, %v5951
        %5953 = vmatmul.bf16.gmra.mxu0 %v5686
        %v5954 = vpop.f32.mrf.mxu0
        %v5955 = vadd.f32 %v5695, %v5954
        %v5956 = vpop.f32.mrf.mxu0
        %v5957 = vadd.f32 %v5695, %v5956
        %5958 = vmatmul.bf16.gmra.mxu0 %v5687
        %v5959 = vpop.f32.mrf.mxu0
        %v5960 = vadd.f32 %v5695, %v5959
        %v5961 = vpop.f32.mrf.mxu0
        %v5962 = vadd.f32 %v5695, %v5961
        %5963 = vmatmul.bf16.gmra.mxu0 %v5688
        %v5964 = vpop.f32.mrf.mxu0
        %v5965 = vadd.f32 %v5695, %v5964
        %v5966 = vpop.f32.mrf.mxu0
        %v5967 = vadd.f32 %v5695, %v5966
        %5968 = vmatmul.bf16.gmra.mxu0 %v5689
        %v5969 = vpop.f32.mrf.mxu0
        %v5970 = vadd.f32 %v5695, %v5969
        %v5971 = vpop.f32.mrf.mxu0
        %v5972 = vadd.f32 %v5695, %v5971
        %5973 = vdwg.mxu0
        %v5974 = vpack.c.bf16 %v5837, %v5837
        %v5975 = vpack.c.bf16 %v5839, %v5839
        %v5976 = vpack.c.bf16 %v5842, %v5842
        %v5977 = vpack.c.bf16 %v5844, %v5844
        %v5978 = vpack.c.bf16 %v5847, %v5847
        %v5979 = vpack.c.bf16 %v5849, %v5849
        %v5980 = vpack.c.bf16 %v5852, %v5852
        %v5981 = vpack.c.bf16 %v5854, %v5854
        %v5982 = vpack.c.bf16 %v5857, %v5857
        %v5983 = vpack.c.bf16 %v5859, %v5859
        %v5984 = vpack.c.bf16 %v5862, %v5862
        %v5985 = vpack.c.bf16 %v5864, %v5864
        %v5986 = vpack.c.bf16 %v5867, %v5867
        %v5987 = vpack.c.bf16 %v5869, %v5869
        %v5988 = vpack.c.bf16 %v5872, %v5872
        %v5989 = vpack.c.bf16 %v5874, %v5874
        %v5990 = vpack.c.bf16 %v5886, %v5886
        %v5991 = vpack.c.bf16 %v5888, %v5888
        %v5992 = vpack.c.bf16 %v5891, %v5891
        %v5993 = vpack.c.bf16 %v5893, %v5893
        %v5994 = vpack.c.bf16 %v5896, %v5896
        %v5995 = vpack.c.bf16 %v5898, %v5898
        %v5996 = vpack.c.bf16 %v5901, %v5901
        %v5997 = vpack.c.bf16 %v5903, %v5903
        %v5998 = vpack.c.bf16 %v5906, %v5906
        %v5999 = vpack.c.bf16 %v5908, %v5908
        %v6000 = vpack.c.bf16 %v5911, %v5911
        %v6001 = vpack.c.bf16 %v5913, %v5913
        %v6002 = vpack.c.bf16 %v5916, %v5916
        %v6003 = vpack.c.bf16 %v5918, %v5918
        %v6004 = vpack.c.bf16 %v5921, %v5921
        %v6005 = vpack.c.bf16 %v5923, %v5923
        %v6006 = vpack.c.bf16 %v5935, %v5935
        %v6007 = vpack.c.bf16 %v5937, %v5937
        %v6008 = vpack.c.bf16 %v5940, %v5940
        %v6009 = vpack.c.bf16 %v5942, %v5942
        %v6010 = vpack.c.bf16 %v5945, %v5945
        %v6011 = vpack.c.bf16 %v5947, %v5947
        %v6012 = vpack.c.bf16 %v5950, %v5950
        %v6013 = vpack.c.bf16 %v5952, %v5952
        %v6014 = vpack.c.bf16 %v5955, %v5955
        %v6015 = vpack.c.bf16 %v5957, %v5957
        %v6016 = vpack.c.bf16 %v5960, %v5960
        %v6017 = vpack.c.bf16 %v5962, %v5962
        %v6018 = vpack.c.bf16 %v5965, %v5965
        %v6019 = vpack.c.bf16 %v5967, %v5967
        %v6020 = vpack.c.bf16 %v5970, %v5970
        %v6021 = vpack.c.bf16 %v5972, %v5972
        %v6024 = vunpack.c.l.b16 %v5974
        %v6025 = vunpack.c.l.b16 %v5975
        %v6026 = vpack.c.b16 %v6025, %v6024
        %v6029 = vunpack.c.l.b16 %v5990
        %v6030 = vunpack.c.l.b16 %v5991
        %v6031 = vpack.c.b16 %v6030, %v6029
        %v6033 = vsel %vm884, %v6026, 0
        %v6036 = vsel %vm884, %v6031, 0
        %6038 = vmatpush.bf16.xpose.msra.mxu0 0
        %6039 = vmatpush.bf16.xpose.msra.mxu0 0
        %6040 = vmatpush.bf16.xpose.msra.mxu0 0
        %6041 = vmatpush.bf16.xpose.msra.mxu0 0
        %6042 = vmatpush.bf16.xpose.msra.mxu0 0
        %6043 = vmatpush.bf16.xpose.msra.mxu0 0
        %6044 = vmatpush.bf16.xpose.msra.mxu0 0
        %6045 = vmatpush.bf16.xpose.msra.mxu0 %v6036
        %6046 = vmatmul.bf16.gmra.mxu0 %v6033
        %v6047 = vpop.f32.mrf.mxu0
        %v6048 = vadd.f32 0.0, %v6047
        %v6049 = vpop.f32.mrf.mxu0
        %v6050 = vadd.f32 0.0, %v6049
        %6051 = vdwg.mxu0
        %v6054 = vunpack.c.l.b16 %v5976
        %v6055 = vunpack.c.l.b16 %v5977
        %v6056 = vpack.c.b16 %v6055, %v6054
        %v6059 = vunpack.c.l.b16 %v5992
        %v6060 = vunpack.c.l.b16 %v5993
        %v6061 = vpack.c.b16 %v6060, %v6059
        %v6063 = vsel %vm884, %v6056, 0
        %v6066 = vsel %vm884, %v6061, 0
        %6068 = vmatpush.bf16.xpose.msra.mxu0 0
        %6069 = vmatpush.bf16.xpose.msra.mxu0 0
        %6070 = vmatpush.bf16.xpose.msra.mxu0 0
        %6071 = vmatpush.bf16.xpose.msra.mxu0 0
        %6072 = vmatpush.bf16.xpose.msra.mxu0 0
        %6073 = vmatpush.bf16.xpose.msra.mxu0 0
        %6074 = vmatpush.bf16.xpose.msra.mxu0 0
        %6075 = vmatpush.bf16.xpose.msra.mxu0 %v6066
        %6076 = vmatmul.bf16.gmra.mxu0 %v6063
        %v6077 = vpop.f32.mrf.mxu0
        %v6078 = vadd.f32 0.0, %v6077
        %v6079 = vpop.f32.mrf.mxu0
        %v6080 = vadd.f32 0.0, %v6079
        %6081 = vdwg.mxu0
        %v6084 = vunpack.c.l.b16 %v5978
        %v6085 = vunpack.c.l.b16 %v5979
        %v6086 = vpack.c.b16 %v6085, %v6084
        %v6089 = vunpack.c.l.b16 %v5994
        %v6090 = vunpack.c.l.b16 %v5995
        %v6091 = vpack.c.b16 %v6090, %v6089
        %v6093 = vsel %vm884, %v6086, 0
        %v6096 = vsel %vm884, %v6091, 0
        %6098 = vmatpush.bf16.xpose.msra.mxu0 0
        %6099 = vmatpush.bf16.xpose.msra.mxu0 0
        %6100 = vmatpush.bf16.xpose.msra.mxu0 0
        %6101 = vmatpush.bf16.xpose.msra.mxu0 0
        %6102 = vmatpush.bf16.xpose.msra.mxu0 0
        %6103 = vmatpush.bf16.xpose.msra.mxu0 0
        %6104 = vmatpush.bf16.xpose.msra.mxu0 0
        %6105 = vmatpush.bf16.xpose.msra.mxu0 %v6096
        %6106 = vmatmul.bf16.gmra.mxu0 %v6093
        %v6107 = vpop.f32.mrf.mxu0
        %v6108 = vadd.f32 0.0, %v6107
        %v6109 = vpop.f32.mrf.mxu0
        %v6110 = vadd.f32 0.0, %v6109
        %6111 = vdwg.mxu0
        %v6114 = vunpack.c.l.b16 %v5980
        %v6115 = vunpack.c.l.b16 %v5981
        %v6116 = vpack.c.b16 %v6115, %v6114
        %v6119 = vunpack.c.l.b16 %v5996
        %v6120 = vunpack.c.l.b16 %v5997
        %v6121 = vpack.c.b16 %v6120, %v6119
        %v6123 = vsel %vm884, %v6116, 0
        %v6126 = vsel %vm884, %v6121, 0
        %6128 = vmatpush.bf16.xpose.msra.mxu0 0
        %6129 = vmatpush.bf16.xpose.msra.mxu0 0
        %6130 = vmatpush.bf16.xpose.msra.mxu0 0
        %6131 = vmatpush.bf16.xpose.msra.mxu0 0
        %6132 = vmatpush.bf16.xpose.msra.mxu0 0
        %6133 = vmatpush.bf16.xpose.msra.mxu0 0
        %6134 = vmatpush.bf16.xpose.msra.mxu0 0
        %6135 = vmatpush.bf16.xpose.msra.mxu0 %v6126
        %6136 = vmatmul.bf16.gmra.mxu0 %v6123
        %v6137 = vpop.f32.mrf.mxu0
        %v6138 = vadd.f32 0.0, %v6137
        %v6139 = vpop.f32.mrf.mxu0
        %v6140 = vadd.f32 0.0, %v6139
        %6141 = vdwg.mxu0
        %v6144 = vunpack.c.l.b16 %v5982
        %v6145 = vunpack.c.l.b16 %v5983
        %v6146 = vpack.c.b16 %v6145, %v6144
        %v6149 = vunpack.c.l.b16 %v5998
        %v6150 = vunpack.c.l.b16 %v5999
        %v6151 = vpack.c.b16 %v6150, %v6149
        %v6153 = vsel %vm884, %v6146, 0
        %v6156 = vsel %vm884, %v6151, 0
        %6158 = vmatpush.bf16.xpose.msra.mxu0 0
        %6159 = vmatpush.bf16.xpose.msra.mxu0 0
        %6160 = vmatpush.bf16.xpose.msra.mxu0 0
        %6161 = vmatpush.bf16.xpose.msra.mxu0 0
        %6162 = vmatpush.bf16.xpose.msra.mxu0 0
        %6163 = vmatpush.bf16.xpose.msra.mxu0 0
        %6164 = vmatpush.bf16.xpose.msra.mxu0 0
        %6165 = vmatpush.bf16.xpose.msra.mxu0 %v6156
        %6166 = vmatmul.bf16.gmra.mxu0 %v6153
        %v6167 = vpop.f32.mrf.mxu0
        %v6168 = vadd.f32 0.0, %v6167
        %v6169 = vpop.f32.mrf.mxu0
        %v6170 = vadd.f32 0.0, %v6169
        %6171 = vdwg.mxu0
        %v6174 = vunpack.c.l.b16 %v5984
        %v6175 = vunpack.c.l.b16 %v5985
        %v6176 = vpack.c.b16 %v6175, %v6174
        %v6179 = vunpack.c.l.b16 %v6000
        %v6180 = vunpack.c.l.b16 %v6001
        %v6181 = vpack.c.b16 %v6180, %v6179
        %v6183 = vsel %vm884, %v6176, 0
        %v6186 = vsel %vm884, %v6181, 0
        %6188 = vmatpush.bf16.xpose.msra.mxu0 0
        %6189 = vmatpush.bf16.xpose.msra.mxu0 0
        %6190 = vmatpush.bf16.xpose.msra.mxu0 0
        %6191 = vmatpush.bf16.xpose.msra.mxu0 0
        %6192 = vmatpush.bf16.xpose.msra.mxu0 0
        %6193 = vmatpush.bf16.xpose.msra.mxu0 0
        %6194 = vmatpush.bf16.xpose.msra.mxu0 0
        %6195 = vmatpush.bf16.xpose.msra.mxu0 %v6186
        %6196 = vmatmul.bf16.gmra.mxu0 %v6183
        %v6197 = vpop.f32.mrf.mxu0
        %v6198 = vadd.f32 0.0, %v6197
        %v6199 = vpop.f32.mrf.mxu0
        %v6200 = vadd.f32 0.0, %v6199
        %6201 = vdwg.mxu0
        %v6204 = vunpack.c.l.b16 %v5986
        %v6205 = vunpack.c.l.b16 %v5987
        %v6206 = vpack.c.b16 %v6205, %v6204
        %v6209 = vunpack.c.l.b16 %v6002
        %v6210 = vunpack.c.l.b16 %v6003
        %v6211 = vpack.c.b16 %v6210, %v6209
        %v6213 = vsel %vm884, %v6206, 0
        %v6216 = vsel %vm884, %v6211, 0
        %6218 = vmatpush.bf16.xpose.msra.mxu0 0
        %6219 = vmatpush.bf16.xpose.msra.mxu0 0
        %6220 = vmatpush.bf16.xpose.msra.mxu0 0
        %6221 = vmatpush.bf16.xpose.msra.mxu0 0
        %6222 = vmatpush.bf16.xpose.msra.mxu0 0
        %6223 = vmatpush.bf16.xpose.msra.mxu0 0
        %6224 = vmatpush.bf16.xpose.msra.mxu0 0
        %6225 = vmatpush.bf16.xpose.msra.mxu0 %v6216
        %6226 = vmatmul.bf16.gmra.mxu0 %v6213
        %v6227 = vpop.f32.mrf.mxu0
        %v6228 = vadd.f32 0.0, %v6227
        %v6229 = vpop.f32.mrf.mxu0
        %v6230 = vadd.f32 0.0, %v6229
        %6231 = vdwg.mxu0
        %v6234 = vunpack.c.l.b16 %v5988
        %v6235 = vunpack.c.l.b16 %v5989
        %v6236 = vpack.c.b16 %v6235, %v6234
        %v6239 = vunpack.c.l.b16 %v6004
        %v6240 = vunpack.c.l.b16 %v6005
        %v6241 = vpack.c.b16 %v6240, %v6239
        %v6243 = vsel %vm884, %v6236, 0
        %v6246 = vsel %vm884, %v6241, 0
        %6248 = vmatpush.bf16.xpose.msra.mxu0 0
        %6249 = vmatpush.bf16.xpose.msra.mxu0 0
        %6250 = vmatpush.bf16.xpose.msra.mxu0 0
        %6251 = vmatpush.bf16.xpose.msra.mxu0 0
        %6252 = vmatpush.bf16.xpose.msra.mxu0 0
        %6253 = vmatpush.bf16.xpose.msra.mxu0 0
        %6254 = vmatpush.bf16.xpose.msra.mxu0 0
        %6255 = vmatpush.bf16.xpose.msra.mxu0 %v6246
        %6256 = vmatmul.bf16.gmra.mxu0 %v6243
        %v6257 = vpop.f32.mrf.mxu0
        %v6258 = vadd.f32 0.0, %v6257
        %v6259 = vpop.f32.mrf.mxu0
        %v6260 = vadd.f32 0.0, %v6259
        %6261 = vdwg.mxu0
        %v6262 = vmul.f32 %v6048, 0.17677669
        %v6263 = vmul.f32 %v6050, 0.17677669
        %v6264 = vmul.f32 %v6078, 0.17677669
        %v6265 = vmul.f32 %v6080, 0.17677669
        %v6266 = vmul.f32 %v6108, 0.17677669
        %v6267 = vmul.f32 %v6110, 0.17677669
        %v6268 = vmul.f32 %v6138, 0.17677669
        %v6269 = vmul.f32 %v6140, 0.17677669
        %v6270 = vmul.f32 %v6168, 0.17677669
        %v6271 = vmul.f32 %v6170, 0.17677669
        %v6272 = vmul.f32 %v6198, 0.17677669
        %v6273 = vmul.f32 %v6200, 0.17677669
        %v6274 = vmul.f32 %v6228, 0.17677669
        %v6275 = vmul.f32 %v6230, 0.17677669
        %v6276 = vmul.f32 %v6258, 0.17677669
        %v6277 = vmul.f32 %v6260, 0.17677669
        %v6278 = vsel %vm1758, %v6262, -inf
        %6279 = vmax.xlane.f32.xlu0 %v6278
        %v6280 = vpop.xlane.xlu0 %6279
        %v6281 = vsel %vm1758, %v6263, -inf
        %6282 = vmax.xlane.f32.xlu0 %v6281
        %v6283 = vpop.xlane.xlu0 %6282
        %v6284 = vsel %vm1758, %v6264, -inf
        %6285 = vmax.xlane.f32.xlu0 %v6284
        %v6286 = vpop.xlane.xlu0 %6285
        %v6287 = vsel %vm1758, %v6265, -inf
        %6288 = vmax.xlane.f32.xlu0 %v6287
        %v6289 = vpop.xlane.xlu0 %6288
        %v6290 = vsel %vm1758, %v6266, -inf
        %6291 = vmax.xlane.f32.xlu0 %v6290
        %v6292 = vpop.xlane.xlu0 %6291
        %v6293 = vsel %vm1758, %v6267, -inf
        %6294 = vmax.xlane.f32.xlu0 %v6293
        %v6295 = vpop.xlane.xlu0 %6294
        %v6296 = vsel %vm1758, %v6268, -inf
        %6297 = vmax.xlane.f32.xlu0 %v6296
        %v6298 = vpop.xlane.xlu0 %6297
        %v6299 = vsel %vm1758, %v6269, -inf
        %6300 = vmax.xlane.f32.xlu0 %v6299
        %v6301 = vpop.xlane.xlu0 %6300
        %v6302 = vsel %vm1758, %v6270, -inf
        %6303 = vmax.xlane.f32.xlu0 %v6302
        %v6304 = vpop.xlane.xlu0 %6303
        %v6305 = vsel %vm1758, %v6271, -inf
        %6306 = vmax.xlane.f32.xlu0 %v6305
        %v6307 = vpop.xlane.xlu0 %6306
        %v6308 = vsel %vm1758, %v6272, -inf
        %6309 = vmax.xlane.f32.xlu0 %v6308
        %v6310 = vpop.xlane.xlu0 %6309
        %v6311 = vsel %vm1758, %v6273, -inf
        %6312 = vmax.xlane.f32.xlu0 %v6311
        %v6313 = vpop.xlane.xlu0 %6312
        %v6314 = vsel %vm1758, %v6274, -inf
        %6315 = vmax.xlane.f32.xlu0 %v6314
        %v6316 = vpop.xlane.xlu0 %6315
        %v6317 = vsel %vm1758, %v6275, -inf
        %6318 = vmax.xlane.f32.xlu0 %v6317
        %v6319 = vpop.xlane.xlu0 %6318
        %v6320 = vsel %vm1758, %v6276, -inf
        %6321 = vmax.xlane.f32.xlu0 %v6320
        %v6322 = vpop.xlane.xlu0 %6321
        %v6323 = vsel %vm1758, %v6277, -inf
        %6324 = vmax.xlane.f32.xlu0 %v6323
        %v6325 = vpop.xlane.xlu0 %6324
        %v6326 = vsub.f32 %v6262, %v6280
        %v6327 = vsub.f32 %v6263, %v6283
        %v6328 = vsub.f32 %v6264, %v6286
        %v6329 = vsub.f32 %v6265, %v6289
        %v6330 = vsub.f32 %v6266, %v6292
        %v6331 = vsub.f32 %v6267, %v6295
        %v6332 = vsub.f32 %v6268, %v6298
        %v6333 = vsub.f32 %v6269, %v6301
        %v6334 = vsub.f32 %v6270, %v6304
        %v6335 = vsub.f32 %v6271, %v6307
        %v6336 = vsub.f32 %v6272, %v6310
        %v6337 = vsub.f32 %v6273, %v6313
        %v6338 = vsub.f32 %v6274, %v6316
        %v6339 = vsub.f32 %v6275, %v6319
        %v6340 = vsub.f32 %v6276, %v6322
        %v6341 = vsub.f32 %v6277, %v6325
        %v6342 = vmul.f32 %v6326, 1.442695
        %v6343 = vpow.pop %v6342
        %v6344 = vmul.f32 %v6327, 1.442695
        %v6345 = vpow.pop %v6344
        %v6346 = vmul.f32 %v6328, 1.442695
        %v6347 = vpow.pop %v6346
        %v6348 = vmul.f32 %v6329, 1.442695
        %v6349 = vpow.pop %v6348
        %v6350 = vmul.f32 %v6330, 1.442695
        %v6351 = vpow.pop %v6350
        %v6352 = vmul.f32 %v6331, 1.442695
        %v6353 = vpow.pop %v6352
        %v6354 = vmul.f32 %v6332, 1.442695
        %v6355 = vpow.pop %v6354
        %v6356 = vmul.f32 %v6333, 1.442695
        %v6357 = vpow.pop %v6356
        %v6358 = vmul.f32 %v6334, 1.442695
        %v6359 = vpow.pop %v6358
        %v6360 = vmul.f32 %v6335, 1.442695
        %v6361 = vpow.pop %v6360
        %v6362 = vmul.f32 %v6336, 1.442695
        %v6363 = vpow.pop %v6362
        %v6364 = vmul.f32 %v6337, 1.442695
        %v6365 = vpow.pop %v6364
        %v6366 = vmul.f32 %v6338, 1.442695
        %v6367 = vpow.pop %v6366
        %v6368 = vmul.f32 %v6339, 1.442695
        %v6369 = vpow.pop %v6368
        %v6370 = vmul.f32 %v6340, 1.442695
        %v6371 = vpow.pop %v6370
        %v6372 = vmul.f32 %v6341, 1.442695
        %v6373 = vpow.pop %v6372
        %v6374 = vsel %vm1758, %v6343, 0.0
        %6375 = vadd.xlane.f32.xlu0 %v6374
        %v6376 = vpop.xlane.xlu0 %6375
        %v6377 = vsel %vm1758, %v6345, 0.0
        %6378 = vadd.xlane.f32.xlu0 %v6377
        %v6379 = vpop.xlane.xlu0 %6378
        %v6380 = vsel %vm1758, %v6347, 0.0
        %6381 = vadd.xlane.f32.xlu0 %v6380
        %v6382 = vpop.xlane.xlu0 %6381
        %v6383 = vsel %vm1758, %v6349, 0.0
        %6384 = vadd.xlane.f32.xlu0 %v6383
        %v6385 = vpop.xlane.xlu0 %6384
        %v6386 = vsel %vm1758, %v6351, 0.0
        %6387 = vadd.xlane.f32.xlu0 %v6386
        %v6388 = vpop.xlane.xlu0 %6387
        %v6389 = vsel %vm1758, %v6353, 0.0
        %6390 = vadd.xlane.f32.xlu0 %v6389
        %v6391 = vpop.xlane.xlu0 %6390
        %v6392 = vsel %vm1758, %v6355, 0.0
        %6393 = vadd.xlane.f32.xlu0 %v6392
        %v6394 = vpop.xlane.xlu0 %6393
        %v6395 = vsel %vm1758, %v6357, 0.0
        %6396 = vadd.xlane.f32.xlu0 %v6395
        %v6397 = vpop.xlane.xlu0 %6396
        %v6398 = vsel %vm1758, %v6359, 0.0
        %6399 = vadd.xlane.f32.xlu0 %v6398
        %v6400 = vpop.xlane.xlu0 %6399
        %v6401 = vsel %vm1758, %v6361, 0.0
        %6402 = vadd.xlane.f32.xlu0 %v6401
        %v6403 = vpop.xlane.xlu0 %6402
        %v6404 = vsel %vm1758, %v6363, 0.0
        %6405 = vadd.xlane.f32.xlu0 %v6404
        %v6406 = vpop.xlane.xlu0 %6405
        %v6407 = vsel %vm1758, %v6365, 0.0
        %6408 = vadd.xlane.f32.xlu0 %v6407
        %v6409 = vpop.xlane.xlu0 %6408
        %v6410 = vsel %vm1758, %v6367, 0.0
        %6411 = vadd.xlane.f32.xlu0 %v6410
        %v6412 = vpop.xlane.xlu0 %6411
        %v6413 = vsel %vm1758, %v6369, 0.0
        %6414 = vadd.xlane.f32.xlu0 %v6413
        %v6415 = vpop.xlane.xlu0 %6414
        %v6416 = vsel %vm1758, %v6371, 0.0
        %6417 = vadd.xlane.f32.xlu0 %v6416
        %v6418 = vpop.xlane.xlu0 %6417
        %v6419 = vsel %vm1758, %v6373, 0.0
        %6420 = vadd.xlane.f32.xlu0 %v6419
        %v6421 = vpop.xlane.xlu0 %6420
        %v6422 = vrcp.pop %v6376
        %v6423 = vrcp.pop %v6379
        %v6424 = vrcp.pop %v6382
        %v6425 = vrcp.pop %v6385
        %v6426 = vrcp.pop %v6388
        %v6427 = vrcp.pop %v6391
        %v6428 = vrcp.pop %v6394
        %v6429 = vrcp.pop %v6397
        %v6430 = vrcp.pop %v6400
        %v6431 = vrcp.pop %v6403
        %v6432 = vrcp.pop %v6406
        %v6433 = vrcp.pop %v6409
        %v6434 = vrcp.pop %v6412
        %v6435 = vrcp.pop %v6415
        %v6436 = vrcp.pop %v6418
        %v6437 = vrcp.pop %v6421
        %v6438 = vmul.f32 %v6343, %v6422
        %v6439 = vmul.f32 %v6345, %v6423
        %v6440 = vmul.f32 %v6347, %v6424
        %v6441 = vmul.f32 %v6349, %v6425
        %v6442 = vmul.f32 %v6351, %v6426
        %v6443 = vmul.f32 %v6353, %v6427
        %v6444 = vmul.f32 %v6355, %v6428
        %v6445 = vmul.f32 %v6357, %v6429
        %v6446 = vmul.f32 %v6359, %v6430
        %v6447 = vmul.f32 %v6361, %v6431
        %v6448 = vmul.f32 %v6363, %v6432
        %v6449 = vmul.f32 %v6365, %v6433
        %v6450 = vmul.f32 %v6367, %v6434
        %v6451 = vmul.f32 %v6369, %v6435
        %v6452 = vmul.f32 %v6371, %v6436
        %v6453 = vmul.f32 %v6373, %v6437
        %v6454 = vpack.c.bf16 %v6438, %v6438
        %v6455 = vpack.c.bf16 %v6439, %v6439
        %v6456 = vpack.c.bf16 %v6440, %v6440
        %v6457 = vpack.c.bf16 %v6441, %v6441
        %v6458 = vpack.c.bf16 %v6442, %v6442
        %v6459 = vpack.c.bf16 %v6443, %v6443
        %v6460 = vpack.c.bf16 %v6444, %v6444
        %v6461 = vpack.c.bf16 %v6445, %v6445
        %v6462 = vpack.c.bf16 %v6446, %v6446
        %v6463 = vpack.c.bf16 %v6447, %v6447
        %v6464 = vpack.c.bf16 %v6448, %v6448
        %v6465 = vpack.c.bf16 %v6449, %v6449
        %v6466 = vpack.c.bf16 %v6450, %v6450
        %v6467 = vpack.c.bf16 %v6451, %v6451
        %v6468 = vpack.c.bf16 %v6452, %v6452
        %v6469 = vpack.c.bf16 %v6453, %v6453
        %v6472 = vunpack.c.l.b16 %v6454
        %v6473 = vunpack.c.l.b16 %v6455
        %v6474 = vpack.c.b16 %v6473, %v6472
        %v6477 = vunpack.c.l.b16 %v6006
        %v6478 = vunpack.c.l.b16 %v6007
        %v6479 = vpack.c.b16 %v6478, %v6477
        %v6482 = vsel %vm1758, %v6474, 0
        %6484 = vmatpush.bf16.msra.mxu0 0
        %6485 = vmatpush.bf16.msra.mxu0 0
        %6486 = vmatpush.bf16.msra.mxu0 0
        %6487 = vmatpush.bf16.msra.mxu0 0
        %6488 = vmatpush.bf16.msra.mxu0 0
        %6489 = vmatpush.bf16.msra.mxu0 0
        %6490 = vmatpush.bf16.msra.mxu0 0
        %6491 = vmatpush.bf16.msra.mxu0 %v6479
        %6492 = vmatmul.bf16.gmra.mxu0 %v6482
        %v6493 = vpop.f32.mrf.mxu0
        %v6494 = vadd.f32 0.0, %v6493
        %v6495 = vpop.f32.mrf.mxu0
        %v6496 = vadd.f32 0.0, %v6495
        %6497 = vdwg.mxu0
        %v6500 = vunpack.c.l.b16 %v6456
        %v6501 = vunpack.c.l.b16 %v6457
        %v6502 = vpack.c.b16 %v6501, %v6500
        %v6505 = vunpack.c.l.b16 %v6008
        %v6506 = vunpack.c.l.b16 %v6009
        %v6507 = vpack.c.b16 %v6506, %v6505
        %v6510 = vsel %vm1758, %v6502, 0
        %6512 = vmatpush.bf16.msra.mxu0 0
        %6513 = vmatpush.bf16.msra.mxu0 0
        %6514 = vmatpush.bf16.msra.mxu0 0
        %6515 = vmatpush.bf16.msra.mxu0 0
        %6516 = vmatpush.bf16.msra.mxu0 0
        %6517 = vmatpush.bf16.msra.mxu0 0
        %6518 = vmatpush.bf16.msra.mxu0 0
        %6519 = vmatpush.bf16.msra.mxu0 %v6507
        %6520 = vmatmul.bf16.gmra.mxu0 %v6510
        %v6521 = vpop.f32.mrf.mxu0
        %v6522 = vadd.f32 0.0, %v6521
        %v6523 = vpop.f32.mrf.mxu0
        %v6524 = vadd.f32 0.0, %v6523
        %6525 = vdwg.mxu0
        %v6528 = vunpack.c.l.b16 %v6458
        %v6529 = vunpack.c.l.b16 %v6459
        %v6530 = vpack.c.b16 %v6529, %v6528
        %v6533 = vunpack.c.l.b16 %v6010
        %v6534 = vunpack.c.l.b16 %v6011
        %v6535 = vpack.c.b16 %v6534, %v6533
        %v6538 = vsel %vm1758, %v6530, 0
        %6540 = vmatpush.bf16.msra.mxu0 0
        %6541 = vmatpush.bf16.msra.mxu0 0
        %6542 = vmatpush.bf16.msra.mxu0 0
        %6543 = vmatpush.bf16.msra.mxu0 0
        %6544 = vmatpush.bf16.msra.mxu0 0
        %6545 = vmatpush.bf16.msra.mxu0 0
        %6546 = vmatpush.bf16.msra.mxu0 0
        %6547 = vmatpush.bf16.msra.mxu0 %v6535
        %6548 = vmatmul.bf16.gmra.mxu0 %v6538
        %v6549 = vpop.f32.mrf.mxu0
        %v6550 = vadd.f32 0.0, %v6549
        %v6551 = vpop.f32.mrf.mxu0
        %v6552 = vadd.f32 0.0, %v6551
        %6553 = vdwg.mxu0
        %v6556 = vunpack.c.l.b16 %v6460
        %v6557 = vunpack.c.l.b16 %v6461
        %v6558 = vpack.c.b16 %v6557, %v6556
        %v6561 = vunpack.c.l.b16 %v6012
        %v6562 = vunpack.c.l.b16 %v6013
        %v6563 = vpack.c.b16 %v6562, %v6561
        %v6566 = vsel %vm1758, %v6558, 0
        %6568 = vmatpush.bf16.msra.mxu0 0
        %6569 = vmatpush.bf16.msra.mxu0 0
        %6570 = vmatpush.bf16.msra.mxu0 0
        %6571 = vmatpush.bf16.msra.mxu0 0
        %6572 = vmatpush.bf16.msra.mxu0 0
        %6573 = vmatpush.bf16.msra.mxu0 0
        %6574 = vmatpush.bf16.msra.mxu0 0
        %6575 = vmatpush.bf16.msra.mxu0 %v6563
        %6576 = vmatmul.bf16.gmra.mxu0 %v6566
        %v6577 = vpop.f32.mrf.mxu0
        %v6578 = vadd.f32 0.0, %v6577
        %v6579 = vpop.f32.mrf.mxu0
        %v6580 = vadd.f32 0.0, %v6579
        %6581 = vdwg.mxu0
        %v6584 = vunpack.c.l.b16 %v6462
        %v6585 = vunpack.c.l.b16 %v6463
        %v6586 = vpack.c.b16 %v6585, %v6584
        %v6589 = vunpack.c.l.b16 %v6014
        %v6590 = vunpack.c.l.b16 %v6015
        %v6591 = vpack.c.b16 %v6590, %v6589
        %v6594 = vsel %vm1758, %v6586, 0
        %6596 = vmatpush.bf16.msra.mxu0 0
        %6597 = vmatpush.bf16.msra.mxu0 0
        %6598 = vmatpush.bf16.msra.mxu0 0
        %6599 = vmatpush.bf16.msra.mxu0 0
        %6600 = vmatpush.bf16.msra.mxu0 0
        %6601 = vmatpush.bf16.msra.mxu0 0
        %6602 = vmatpush.bf16.msra.mxu0 0
        %6603 = vmatpush.bf16.msra.mxu0 %v6591
        %6604 = vmatmul.bf16.gmra.mxu0 %v6594
        %v6605 = vpop.f32.mrf.mxu0
        %v6606 = vadd.f32 0.0, %v6605
        %v6607 = vpop.f32.mrf.mxu0
        %v6608 = vadd.f32 0.0, %v6607
        %6609 = vdwg.mxu0
        %v6612 = vunpack.c.l.b16 %v6464
        %v6613 = vunpack.c.l.b16 %v6465
        %v6614 = vpack.c.b16 %v6613, %v6612
        %v6617 = vunpack.c.l.b16 %v6016
        %v6618 = vunpack.c.l.b16 %v6017
        %v6619 = vpack.c.b16 %v6618, %v6617
        %v6622 = vsel %vm1758, %v6614, 0
        %6624 = vmatpush.bf16.msra.mxu0 0
        %6625 = vmatpush.bf16.msra.mxu0 0
        %6626 = vmatpush.bf16.msra.mxu0 0
        %6627 = vmatpush.bf16.msra.mxu0 0
        %6628 = vmatpush.bf16.msra.mxu0 0
        %6629 = vmatpush.bf16.msra.mxu0 0
        %6630 = vmatpush.bf16.msra.mxu0 0
        %6631 = vmatpush.bf16.msra.mxu0 %v6619
        %6632 = vmatmul.bf16.gmra.mxu0 %v6622
        %v6633 = vpop.f32.mrf.mxu0
        %v6634 = vadd.f32 0.0, %v6633
        %v6635 = vpop.f32.mrf.mxu0
        %v6636 = vadd.f32 0.0, %v6635
        %6637 = vdwg.mxu0
        %v6640 = vunpack.c.l.b16 %v6466
        %v6641 = vunpack.c.l.b16 %v6467
        %v6642 = vpack.c.b16 %v6641, %v6640
        %v6645 = vunpack.c.l.b16 %v6018
        %v6646 = vunpack.c.l.b16 %v6019
        %v6647 = vpack.c.b16 %v6646, %v6645
        %v6650 = vsel %vm1758, %v6642, 0
        %6652 = vmatpush.bf16.msra.mxu0 0
        %6653 = vmatpush.bf16.msra.mxu0 0
        %6654 = vmatpush.bf16.msra.mxu0 0
        %6655 = vmatpush.bf16.msra.mxu0 0
        %6656 = vmatpush.bf16.msra.mxu0 0
        %6657 = vmatpush.bf16.msra.mxu0 0
        %6658 = vmatpush.bf16.msra.mxu0 0
        %6659 = vmatpush.bf16.msra.mxu0 %v6647
        %6660 = vmatmul.bf16.gmra.mxu0 %v6650
        %v6661 = vpop.f32.mrf.mxu0
        %v6662 = vadd.f32 0.0, %v6661
        %v6663 = vpop.f32.mrf.mxu0
        %v6664 = vadd.f32 0.0, %v6663
        %6665 = vdwg.mxu0
        %v6668 = vunpack.c.l.b16 %v6468
        %v6669 = vunpack.c.l.b16 %v6469
        %v6670 = vpack.c.b16 %v6669, %v6668
        %v6673 = vunpack.c.l.b16 %v6020
        %v6674 = vunpack.c.l.b16 %v6021
        %v6675 = vpack.c.b16 %v6674, %v6673
        %v6678 = vsel %vm1758, %v6670, 0
        %6680 = vmatpush.bf16.msra.mxu0 0
        %6681 = vmatpush.bf16.msra.mxu0 0
        %6682 = vmatpush.bf16.msra.mxu0 0
        %6683 = vmatpush.bf16.msra.mxu0 0
        %6684 = vmatpush.bf16.msra.mxu0 0
        %6685 = vmatpush.bf16.msra.mxu0 0
        %6686 = vmatpush.bf16.msra.mxu0 0
        %6687 = vmatpush.bf16.msra.mxu0 %v6675
        %6688 = vmatmul.bf16.gmra.mxu0 %v6678
        %v6689 = vpop.f32.mrf.mxu0
        %v6690 = vadd.f32 0.0, %v6689
        %v6691 = vpop.f32.mrf.mxu0
        %v6692 = vadd.f32 0.0, %v6691
        %6693 = vdwg.mxu0
        %v6694 = vpack.c.bf16 %v6496, %v6494
        %v6695 = vpack.c.bf16 %v6524, %v6522
        %v6696 = vpack.c.bf16 %v6552, %v6550
        %v6697 = vpack.c.bf16 %v6580, %v6578
        %v6698 = vpack.c.bf16 %v6608, %v6606
        %v6699 = vpack.c.bf16 %v6636, %v6634
        %v6700 = vpack.c.bf16 %v6664, %v6662
        %v6701 = vpack.c.bf16 %v6692, %v6690
        %6702 = vrot.lane.b32.xlu0 %v6026, 96
        %v6703 = vpop.permute.xlu0 %6702
        %6704 = vrot.lane.b32.xlu0 %v6031, 96
        %v6705 = vpop.permute.xlu0 %6704
        %v6707 = vsel %vm884, %v6703, 0
        %v6710 = vsel %vm884, %v6705, 0
        %6712 = vmatpush.bf16.xpose.msra.mxu0 0
        %6713 = vmatpush.bf16.xpose.msra.mxu0 0
        %6714 = vmatpush.bf16.xpose.msra.mxu0 0
        %6715 = vmatpush.bf16.xpose.msra.mxu0 0
        %6716 = vmatpush.bf16.xpose.msra.mxu0 0
        %6717 = vmatpush.bf16.xpose.msra.mxu0 0
        %6718 = vmatpush.bf16.xpose.msra.mxu0 0
        %6719 = vmatpush.bf16.xpose.msra.mxu0 %v6710
        %6720 = vmatmul.bf16.gmra.mxu0 %v6707
        %v6721 = vpop.f32.mrf.mxu0
        %v6722 = vadd.f32 0.0, %v6721
        %v6723 = vpop.f32.mrf.mxu0
        %v6724 = vadd.f32 0.0, %v6723
        %6725 = vdwg.mxu0
        %6726 = vrot.lane.b32.xlu0 %v6056, 96
        %v6727 = vpop.permute.xlu0 %6726
        %6728 = vrot.lane.b32.xlu0 %v6061, 96
        %v6729 = vpop.permute.xlu0 %6728
        %v6731 = vsel %vm884, %v6727, 0
        %v6734 = vsel %vm884, %v6729, 0
        %6736 = vmatpush.bf16.xpose.msra.mxu0 0
        %6737 = vmatpush.bf16.xpose.msra.mxu0 0
        %6738 = vmatpush.bf16.xpose.msra.mxu0 0
        %6739 = vmatpush.bf16.xpose.msra.mxu0 0
        %6740 = vmatpush.bf16.xpose.msra.mxu0 0
        %6741 = vmatpush.bf16.xpose.msra.mxu0 0
        %6742 = vmatpush.bf16.xpose.msra.mxu0 0
        %6743 = vmatpush.bf16.xpose.msra.mxu0 %v6734
        %6744 = vmatmul.bf16.gmra.mxu0 %v6731
        %v6745 = vpop.f32.mrf.mxu0
        %v6746 = vadd.f32 0.0, %v6745
        %v6747 = vpop.f32.mrf.mxu0
        %v6748 = vadd.f32 0.0, %v6747
        %6749 = vdwg.mxu0
        %6750 = vrot.lane.b32.xlu0 %v6086, 96
        %v6751 = vpop.permute.xlu0 %6750
        %6752 = vrot.lane.b32.xlu0 %v6091, 96
        %v6753 = vpop.permute.xlu0 %6752
        %v6755 = vsel %vm884, %v6751, 0
        %v6758 = vsel %vm884, %v6753, 0
        %6760 = vmatpush.bf16.xpose.msra.mxu0 0
        %6761 = vmatpush.bf16.xpose.msra.mxu0 0
        %6762 = vmatpush.bf16.xpose.msra.mxu0 0
        %6763 = vmatpush.bf16.xpose.msra.mxu0 0
        %6764 = vmatpush.bf16.xpose.msra.mxu0 0
        %6765 = vmatpush.bf16.xpose.msra.mxu0 0
        %6766 = vmatpush.bf16.xpose.msra.mxu0 0
        %6767 = vmatpush.bf16.xpose.msra.mxu0 %v6758
        %6768 = vmatmul.bf16.gmra.mxu0 %v6755
        %v6769 = vpop.f32.mrf.mxu0
        %v6770 = vadd.f32 0.0, %v6769
        %v6771 = vpop.f32.mrf.mxu0
        %v6772 = vadd.f32 0.0, %v6771
        %6773 = vdwg.mxu0
        %6774 = vrot.lane.b32.xlu0 %v6116, 96
        %v6775 = vpop.permute.xlu0 %6774
        %6776 = vrot.lane.b32.xlu0 %v6121, 96
        %v6777 = vpop.permute.xlu0 %6776
        %v6779 = vsel %vm884, %v6775, 0
        %v6782 = vsel %vm884, %v6777, 0
        %6784 = vmatpush.bf16.xpose.msra.mxu0 0
        %6785 = vmatpush.bf16.xpose.msra.mxu0 0
        %6786 = vmatpush.bf16.xpose.msra.mxu0 0
        %6787 = vmatpush.bf16.xpose.msra.mxu0 0
        %6788 = vmatpush.bf16.xpose.msra.mxu0 0
        %6789 = vmatpush.bf16.xpose.msra.mxu0 0
        %6790 = vmatpush.bf16.xpose.msra.mxu0 0
        %6791 = vmatpush.bf16.xpose.msra.mxu0 %v6782
        %6792 = vmatmul.bf16.gmra.mxu0 %v6779
        %v6793 = vpop.f32.mrf.mxu0
        %v6794 = vadd.f32 0.0, %v6793
        %v6795 = vpop.f32.mrf.mxu0
        %v6796 = vadd.f32 0.0, %v6795
        %6797 = vdwg.mxu0
        %6798 = vrot.lane.b32.xlu0 %v6146, 96
        %v6799 = vpop.permute.xlu0 %6798
        %6800 = vrot.lane.b32.xlu0 %v6151, 96
        %v6801 = vpop.permute.xlu0 %6800
        %v6803 = vsel %vm884, %v6799, 0
        %v6806 = vsel %vm884, %v6801, 0
        %6808 = vmatpush.bf16.xpose.msra.mxu0 0
        %6809 = vmatpush.bf16.xpose.msra.mxu0 0
        %6810 = vmatpush.bf16.xpose.msra.mxu0 0
        %6811 = vmatpush.bf16.xpose.msra.mxu0 0
        %6812 = vmatpush.bf16.xpose.msra.mxu0 0
        %6813 = vmatpush.bf16.xpose.msra.mxu0 0
        %6814 = vmatpush.bf16.xpose.msra.mxu0 0
        %6815 = vmatpush.bf16.xpose.msra.mxu0 %v6806
        %6816 = vmatmul.bf16.gmra.mxu0 %v6803
        %v6817 = vpop.f32.mrf.mxu0
        %v6818 = vadd.f32 0.0, %v6817
        %v6819 = vpop.f32.mrf.mxu0
        %v6820 = vadd.f32 0.0, %v6819
        %6821 = vdwg.mxu0
        %6822 = vrot.lane.b32.xlu0 %v6176, 96
        %v6823 = vpop.permute.xlu0 %6822
        %6824 = vrot.lane.b32.xlu0 %v6181, 96
        %v6825 = vpop.permute.xlu0 %6824
        %v6827 = vsel %vm884, %v6823, 0
        %v6830 = vsel %vm884, %v6825, 0
        %6832 = vmatpush.bf16.xpose.msra.mxu0 0
        %6833 = vmatpush.bf16.xpose.msra.mxu0 0
        %6834 = vmatpush.bf16.xpose.msra.mxu0 0
        %6835 = vmatpush.bf16.xpose.msra.mxu0 0
        %6836 = vmatpush.bf16.xpose.msra.mxu0 0
        %6837 = vmatpush.bf16.xpose.msra.mxu0 0
        %6838 = vmatpush.bf16.xpose.msra.mxu0 0
        %6839 = vmatpush.bf16.xpose.msra.mxu0 %v6830
        %6840 = vmatmul.bf16.gmra.mxu0 %v6827
        %v6841 = vpop.f32.mrf.mxu0
        %v6842 = vadd.f32 0.0, %v6841
        %v6843 = vpop.f32.mrf.mxu0
        %v6844 = vadd.f32 0.0, %v6843
        %6845 = vdwg.mxu0
        %6846 = vrot.lane.b32.xlu0 %v6206, 96
        %v6847 = vpop.permute.xlu0 %6846
        %6848 = vrot.lane.b32.xlu0 %v6211, 96
        %v6849 = vpop.permute.xlu0 %6848
        %v6851 = vsel %vm884, %v6847, 0
        %v6854 = vsel %vm884, %v6849, 0
        %6856 = vmatpush.bf16.xpose.msra.mxu0 0
        %6857 = vmatpush.bf16.xpose.msra.mxu0 0
        %6858 = vmatpush.bf16.xpose.msra.mxu0 0
        %6859 = vmatpush.bf16.xpose.msra.mxu0 0
        %6860 = vmatpush.bf16.xpose.msra.mxu0 0
        %6861 = vmatpush.bf16.xpose.msra.mxu0 0
        %6862 = vmatpush.bf16.xpose.msra.mxu0 0
        %6863 = vmatpush.bf16.xpose.msra.mxu0 %v6854
        %6864 = vmatmul.bf16.gmra.mxu0 %v6851
        %v6865 = vpop.f32.mrf.mxu0
        %v6866 = vadd.f32 0.0, %v6865
        %v6867 = vpop.f32.mrf.mxu0
        %v6868 = vadd.f32 0.0, %v6867
        %6869 = vdwg.mxu0
        %6870 = vrot.lane.b32.xlu0 %v6236, 96
        %v6871 = vpop.permute.xlu0 %6870
        %6872 = vrot.lane.b32.xlu0 %v6241, 96
        %v6873 = vpop.permute.xlu0 %6872
        %v6875 = vsel %vm884, %v6871, 0
        %v6878 = vsel %vm884, %v6873, 0
        %6880 = vmatpush.bf16.xpose.msra.mxu0 0
        %6881 = vmatpush.bf16.xpose.msra.mxu0 0
        %6882 = vmatpush.bf16.xpose.msra.mxu0 0
        %6883 = vmatpush.bf16.xpose.msra.mxu0 0
        %6884 = vmatpush.bf16.xpose.msra.mxu0 0
        %6885 = vmatpush.bf16.xpose.msra.mxu0 0
        %6886 = vmatpush.bf16.xpose.msra.mxu0 0
        %6887 = vmatpush.bf16.xpose.msra.mxu0 %v6878
        %6888 = vmatmul.bf16.gmra.mxu0 %v6875
        %v6889 = vpop.f32.mrf.mxu0
        %v6890 = vadd.f32 0.0, %v6889
        %v6891 = vpop.f32.mrf.mxu0
        %v6892 = vadd.f32 0.0, %v6891
        %6893 = vdwg.mxu0
        %v6894 = vmul.f32 %v6722, 0.17677669
        %v6895 = vmul.f32 %v6724, 0.17677669
        %v6896 = vmul.f32 %v6746, 0.17677669
        %v6897 = vmul.f32 %v6748, 0.17677669
        %v6898 = vmul.f32 %v6770, 0.17677669
        %v6899 = vmul.f32 %v6772, 0.17677669
        %v6900 = vmul.f32 %v6794, 0.17677669
        %v6901 = vmul.f32 %v6796, 0.17677669
        %v6902 = vmul.f32 %v6818, 0.17677669
        %v6903 = vmul.f32 %v6820, 0.17677669
        %v6904 = vmul.f32 %v6842, 0.17677669
        %v6905 = vmul.f32 %v6844, 0.17677669
        %v6906 = vmul.f32 %v6866, 0.17677669
        %v6907 = vmul.f32 %v6868, 0.17677669
        %v6908 = vmul.f32 %v6890, 0.17677669
        %v6909 = vmul.f32 %v6892, 0.17677669
        %v6910 = vsel %vm1758, %v6894, -inf
        %6911 = vmax.xlane.f32.xlu0 %v6910
        %v6912 = vpop.xlane.xlu0 %6911
        %v6913 = vsel %vm1758, %v6895, -inf
        %6914 = vmax.xlane.f32.xlu0 %v6913
        %v6915 = vpop.xlane.xlu0 %6914
        %v6916 = vsel %vm1758, %v6896, -inf
        %6917 = vmax.xlane.f32.xlu0 %v6916
        %v6918 = vpop.xlane.xlu0 %6917
        %v6919 = vsel %vm1758, %v6897, -inf
        %6920 = vmax.xlane.f32.xlu0 %v6919
        %v6921 = vpop.xlane.xlu0 %6920
        %v6922 = vsel %vm1758, %v6898, -inf
        %6923 = vmax.xlane.f32.xlu0 %v6922
        %v6924 = vpop.xlane.xlu0 %6923
        %v6925 = vsel %vm1758, %v6899, -inf
        %6926 = vmax.xlane.f32.xlu0 %v6925
        %v6927 = vpop.xlane.xlu0 %6926
        %v6928 = vsel %vm1758, %v6900, -inf
        %6929 = vmax.xlane.f32.xlu0 %v6928
        %v6930 = vpop.xlane.xlu0 %6929
        %v6931 = vsel %vm1758, %v6901, -inf
        %6932 = vmax.xlane.f32.xlu0 %v6931
        %v6933 = vpop.xlane.xlu0 %6932
        %v6934 = vsel %vm1758, %v6902, -inf
        %6935 = vmax.xlane.f32.xlu0 %v6934
        %v6936 = vpop.xlane.xlu0 %6935
        %v6937 = vsel %vm1758, %v6903, -inf
        %6938 = vmax.xlane.f32.xlu0 %v6937
        %v6939 = vpop.xlane.xlu0 %6938
        %v6940 = vsel %vm1758, %v6904, -inf
        %6941 = vmax.xlane.f32.xlu0 %v6940
        %v6942 = vpop.xlane.xlu0 %6941
        %v6943 = vsel %vm1758, %v6905, -inf
        %6944 = vmax.xlane.f32.xlu0 %v6943
        %v6945 = vpop.xlane.xlu0 %6944
        %v6946 = vsel %vm1758, %v6906, -inf
        %6947 = vmax.xlane.f32.xlu0 %v6946
        %v6948 = vpop.xlane.xlu0 %6947
        %v6949 = vsel %vm1758, %v6907, -inf
        %6950 = vmax.xlane.f32.xlu0 %v6949
        %v6951 = vpop.xlane.xlu0 %6950
        %v6952 = vsel %vm1758, %v6908, -inf
        %6953 = vmax.xlane.f32.xlu0 %v6952
        %v6954 = vpop.xlane.xlu0 %6953
        %v6955 = vsel %vm1758, %v6909, -inf
        %6956 = vmax.xlane.f32.xlu0 %v6955
        %v6957 = vpop.xlane.xlu0 %6956
        %v6958 = vsub.f32 %v6894, %v6912
        %v6959 = vsub.f32 %v6895, %v6915
        %v6960 = vsub.f32 %v6896, %v6918
        %v6961 = vsub.f32 %v6897, %v6921
        %v6962 = vsub.f32 %v6898, %v6924
        %v6963 = vsub.f32 %v6899, %v6927
        %v6964 = vsub.f32 %v6900, %v6930
        %v6965 = vsub.f32 %v6901, %v6933
        %v6966 = vsub.f32 %v6902, %v6936
        %v6967 = vsub.f32 %v6903, %v6939
        %v6968 = vsub.f32 %v6904, %v6942
        %v6969 = vsub.f32 %v6905, %v6945
        %v6970 = vsub.f32 %v6906, %v6948
        %v6971 = vsub.f32 %v6907, %v6951
        %v6972 = vsub.f32 %v6908, %v6954
        %v6973 = vsub.f32 %v6909, %v6957
        %v6974 = vmul.f32 %v6958, 1.442695
        %v6975 = vpow.pop %v6974
        %v6976 = vmul.f32 %v6959, 1.442695
        %v6977 = vpow.pop %v6976
        %v6978 = vmul.f32 %v6960, 1.442695
        %v6979 = vpow.pop %v6978
        %v6980 = vmul.f32 %v6961, 1.442695
        %v6981 = vpow.pop %v6980
        %v6982 = vmul.f32 %v6962, 1.442695
        %v6983 = vpow.pop %v6982
        %v6984 = vmul.f32 %v6963, 1.442695
        %v6985 = vpow.pop %v6984
        %v6986 = vmul.f32 %v6964, 1.442695
        %v6987 = vpow.pop %v6986
        %v6988 = vmul.f32 %v6965, 1.442695
        %v6989 = vpow.pop %v6988
        %v6990 = vmul.f32 %v6966, 1.442695
        %v6991 = vpow.pop %v6990
        %v6992 = vmul.f32 %v6967, 1.442695
        %v6993 = vpow.pop %v6992
        %v6994 = vmul.f32 %v6968, 1.442695
        %v6995 = vpow.pop %v6994
        %v6996 = vmul.f32 %v6969, 1.442695
        %v6997 = vpow.pop %v6996
        %v6998 = vmul.f32 %v6970, 1.442695
        %v6999 = vpow.pop %v6998
        %v7000 = vmul.f32 %v6971, 1.442695
        %v7001 = vpow.pop %v7000
        %v7002 = vmul.f32 %v6972, 1.442695
        %v7003 = vpow.pop %v7002
        %v7004 = vmul.f32 %v6973, 1.442695
        %v7005 = vpow.pop %v7004
        %v7006 = vsel %vm1758, %v6975, 0.0
        %7007 = vadd.xlane.f32.xlu0 %v7006
        %v7008 = vpop.xlane.xlu0 %7007
        %v7009 = vsel %vm1758, %v6977, 0.0
        %7010 = vadd.xlane.f32.xlu0 %v7009
        %v7011 = vpop.xlane.xlu0 %7010
        %v7012 = vsel %vm1758, %v6979, 0.0
        %7013 = vadd.xlane.f32.xlu0 %v7012
        %v7014 = vpop.xlane.xlu0 %7013
        %v7015 = vsel %vm1758, %v6981, 0.0
        %7016 = vadd.xlane.f32.xlu0 %v7015
        %v7017 = vpop.xlane.xlu0 %7016
        %v7018 = vsel %vm1758, %v6983, 0.0
        %7019 = vadd.xlane.f32.xlu0 %v7018
        %v7020 = vpop.xlane.xlu0 %7019
        %v7021 = vsel %vm1758, %v6985, 0.0
        %7022 = vadd.xlane.f32.xlu0 %v7021
        %v7023 = vpop.xlane.xlu0 %7022
        %v7024 = vsel %vm1758, %v6987, 0.0
        %7025 = vadd.xlane.f32.xlu0 %v7024
        %v7026 = vpop.xlane.xlu0 %7025
        %v7027 = vsel %vm1758, %v6989, 0.0
        %7028 = vadd.xlane.f32.xlu0 %v7027
        %v7029 = vpop.xlane.xlu0 %7028
        %v7030 = vsel %vm1758, %v6991, 0.0
        %7031 = vadd.xlane.f32.xlu0 %v7030
        %v7032 = vpop.xlane.xlu0 %7031
        %v7033 = vsel %vm1758, %v6993, 0.0
        %7034 = vadd.xlane.f32.xlu0 %v7033
        %v7035 = vpop.xlane.xlu0 %7034
        %v7036 = vsel %vm1758, %v6995, 0.0
        %7037 = vadd.xlane.f32.xlu0 %v7036
        %v7038 = vpop.xlane.xlu0 %7037
        %v7039 = vsel %vm1758, %v6997, 0.0
        %7040 = vadd.xlane.f32.xlu0 %v7039
        %v7041 = vpop.xlane.xlu0 %7040
        %v7042 = vsel %vm1758, %v6999, 0.0
        %7043 = vadd.xlane.f32.xlu0 %v7042
        %v7044 = vpop.xlane.xlu0 %7043
        %v7045 = vsel %vm1758, %v7001, 0.0
        %7046 = vadd.xlane.f32.xlu0 %v7045
        %v7047 = vpop.xlane.xlu0 %7046
        %v7048 = vsel %vm1758, %v7003, 0.0
        %7049 = vadd.xlane.f32.xlu0 %v7048
        %v7050 = vpop.xlane.xlu0 %7049
        %v7051 = vsel %vm1758, %v7005, 0.0
        %7052 = vadd.xlane.f32.xlu0 %v7051
        %v7053 = vpop.xlane.xlu0 %7052
        %v7054 = vrcp.pop %v7008
        %v7055 = vrcp.pop %v7011
        %v7056 = vrcp.pop %v7014
        %v7057 = vrcp.pop %v7017
        %v7058 = vrcp.pop %v7020
        %v7059 = vrcp.pop %v7023
        %v7060 = vrcp.pop %v7026
        %v7061 = vrcp.pop %v7029
        %v7062 = vrcp.pop %v7032
        %v7063 = vrcp.pop %v7035
        %v7064 = vrcp.pop %v7038
        %v7065 = vrcp.pop %v7041
        %v7066 = vrcp.pop %v7044
        %v7067 = vrcp.pop %v7047
        %v7068 = vrcp.pop %v7050
        %v7069 = vrcp.pop %v7053
        %v7070 = vmul.f32 %v6975, %v7054
        %v7071 = vmul.f32 %v6977, %v7055
        %v7072 = vmul.f32 %v6979, %v7056
        %v7073 = vmul.f32 %v6981, %v7057
        %v7074 = vmul.f32 %v6983, %v7058
        %v7075 = vmul.f32 %v6985, %v7059
        %v7076 = vmul.f32 %v6987, %v7060
        %v7077 = vmul.f32 %v6989, %v7061
        %v7078 = vmul.f32 %v6991, %v7062
        %v7079 = vmul.f32 %v6993, %v7063
        %v7080 = vmul.f32 %v6995, %v7064
        %v7081 = vmul.f32 %v6997, %v7065
        %v7082 = vmul.f32 %v6999, %v7066
        %v7083 = vmul.f32 %v7001, %v7067
        %v7084 = vmul.f32 %v7003, %v7068
        %v7085 = vmul.f32 %v7005, %v7069
        %v7086 = vpack.c.bf16 %v7070, %v7070
        %v7087 = vpack.c.bf16 %v7071, %v7071
        %v7088 = vpack.c.bf16 %v7072, %v7072
        %v7089 = vpack.c.bf16 %v7073, %v7073
        %v7090 = vpack.c.bf16 %v7074, %v7074
        %v7091 = vpack.c.bf16 %v7075, %v7075
        %v7092 = vpack.c.bf16 %v7076, %v7076
        %v7093 = vpack.c.bf16 %v7077, %v7077
        %v7094 = vpack.c.bf16 %v7078, %v7078
        %v7095 = vpack.c.bf16 %v7079, %v7079
        %v7096 = vpack.c.bf16 %v7080, %v7080
        %v7097 = vpack.c.bf16 %v7081, %v7081
        %v7098 = vpack.c.bf16 %v7082, %v7082
        %v7099 = vpack.c.bf16 %v7083, %v7083
        %v7100 = vpack.c.bf16 %v7084, %v7084
        %v7101 = vpack.c.bf16 %v7085, %v7085
        %v7104 = vunpack.c.l.b16 %v7086
        %v7105 = vunpack.c.l.b16 %v7087
        %v7106 = vpack.c.b16 %v7105, %v7104
        %7107 = vrot.lane.b32.xlu0 %v6479, 96
        %v7108 = vpop.permute.xlu0 %7107
        %v7111 = vsel %vm1758, %v7106, 0
        %7113 = vmatpush.bf16.msra.mxu0 0
        %7114 = vmatpush.bf16.msra.mxu0 0
        %7115 = vmatpush.bf16.msra.mxu0 0
        %7116 = vmatpush.bf16.msra.mxu0 0
        %7117 = vmatpush.bf16.msra.mxu0 0
        %7118 = vmatpush.bf16.msra.mxu0 0
        %7119 = vmatpush.bf16.msra.mxu0 0
        %7120 = vmatpush.bf16.msra.mxu0 %v7108
        %7121 = vmatmul.bf16.gmra.mxu0 %v7111
        %v7122 = vpop.f32.mrf.mxu0
        %v7123 = vadd.f32 0.0, %v7122
        %v7124 = vpop.f32.mrf.mxu0
        %v7125 = vadd.f32 0.0, %v7124
        %7126 = vdwg.mxu0
        %v7129 = vunpack.c.l.b16 %v7088
        %v7130 = vunpack.c.l.b16 %v7089
        %v7131 = vpack.c.b16 %v7130, %v7129
        %7132 = vrot.lane.b32.xlu0 %v6507, 96
        %v7133 = vpop.permute.xlu0 %7132
        %v7136 = vsel %vm1758, %v7131, 0
        %7138 = vmatpush.bf16.msra.mxu0 0
        %7139 = vmatpush.bf16.msra.mxu0 0
        %7140 = vmatpush.bf16.msra.mxu0 0
        %7141 = vmatpush.bf16.msra.mxu0 0
        %7142 = vmatpush.bf16.msra.mxu0 0
        %7143 = vmatpush.bf16.msra.mxu0 0
        %7144 = vmatpush.bf16.msra.mxu0 0
        %7145 = vmatpush.bf16.msra.mxu0 %v7133
        %7146 = vmatmul.bf16.gmra.mxu0 %v7136
        %v7147 = vpop.f32.mrf.mxu0
        %v7148 = vadd.f32 0.0, %v7147
        %v7149 = vpop.f32.mrf.mxu0
        %v7150 = vadd.f32 0.0, %v7149
        %7151 = vdwg.mxu0
        %v7154 = vunpack.c.l.b16 %v7090
        %v7155 = vunpack.c.l.b16 %v7091
        %v7156 = vpack.c.b16 %v7155, %v7154
        %7157 = vrot.lane.b32.xlu0 %v6535, 96
        %v7158 = vpop.permute.xlu0 %7157
        %v7161 = vsel %vm1758, %v7156, 0
        %7163 = vmatpush.bf16.msra.mxu0 0
        %7164 = vmatpush.bf16.msra.mxu0 0
        %7165 = vmatpush.bf16.msra.mxu0 0
        %7166 = vmatpush.bf16.msra.mxu0 0
        %7167 = vmatpush.bf16.msra.mxu0 0
        %7168 = vmatpush.bf16.msra.mxu0 0
        %7169 = vmatpush.bf16.msra.mxu0 0
        %7170 = vmatpush.bf16.msra.mxu0 %v7158
        %7171 = vmatmul.bf16.gmra.mxu0 %v7161
        %v7172 = vpop.f32.mrf.mxu0
        %v7173 = vadd.f32 0.0, %v7172
        %v7174 = vpop.f32.mrf.mxu0
        %v7175 = vadd.f32 0.0, %v7174
        %7176 = vdwg.mxu0
        %v7179 = vunpack.c.l.b16 %v7092
        %v7180 = vunpack.c.l.b16 %v7093
        %v7181 = vpack.c.b16 %v7180, %v7179
        %7182 = vrot.lane.b32.xlu0 %v6563, 96
        %v7183 = vpop.permute.xlu0 %7182
        %v7186 = vsel %vm1758, %v7181, 0
        %7188 = vmatpush.bf16.msra.mxu0 0
        %7189 = vmatpush.bf16.msra.mxu0 0
        %7190 = vmatpush.bf16.msra.mxu0 0
        %7191 = vmatpush.bf16.msra.mxu0 0
        %7192 = vmatpush.bf16.msra.mxu0 0
        %7193 = vmatpush.bf16.msra.mxu0 0
        %7194 = vmatpush.bf16.msra.mxu0 0
        %7195 = vmatpush.bf16.msra.mxu0 %v7183
        %7196 = vmatmul.bf16.gmra.mxu0 %v7186
        %v7197 = vpop.f32.mrf.mxu0
        %v7198 = vadd.f32 0.0, %v7197
        %v7199 = vpop.f32.mrf.mxu0
        %v7200 = vadd.f32 0.0, %v7199
        %7201 = vdwg.mxu0
        %v7204 = vunpack.c.l.b16 %v7094
        %v7205 = vunpack.c.l.b16 %v7095
        %v7206 = vpack.c.b16 %v7205, %v7204
        %7207 = vrot.lane.b32.xlu0 %v6591, 96
        %v7208 = vpop.permute.xlu0 %7207
        %v7211 = vsel %vm1758, %v7206, 0
        %7213 = vmatpush.bf16.msra.mxu0 0
        %7214 = vmatpush.bf16.msra.mxu0 0
        %7215 = vmatpush.bf16.msra.mxu0 0
        %7216 = vmatpush.bf16.msra.mxu0 0
        %7217 = vmatpush.bf16.msra.mxu0 0
        %7218 = vmatpush.bf16.msra.mxu0 0
        %7219 = vmatpush.bf16.msra.mxu0 0
        %7220 = vmatpush.bf16.msra.mxu0 %v7208
        %7221 = vmatmul.bf16.gmra.mxu0 %v7211
        %v7222 = vpop.f32.mrf.mxu0
        %v7223 = vadd.f32 0.0, %v7222
        %v7224 = vpop.f32.mrf.mxu0
        %v7225 = vadd.f32 0.0, %v7224
        %7226 = vdwg.mxu0
        %v7229 = vunpack.c.l.b16 %v7096
        %v7230 = vunpack.c.l.b16 %v7097
        %v7231 = vpack.c.b16 %v7230, %v7229
        %7232 = vrot.lane.b32.xlu0 %v6619, 96
        %v7233 = vpop.permute.xlu0 %7232
        %v7236 = vsel %vm1758, %v7231, 0
        %7238 = vmatpush.bf16.msra.mxu0 0
        %7239 = vmatpush.bf16.msra.mxu0 0
        %7240 = vmatpush.bf16.msra.mxu0 0
        %7241 = vmatpush.bf16.msra.mxu0 0
        %7242 = vmatpush.bf16.msra.mxu0 0
        %7243 = vmatpush.bf16.msra.mxu0 0
        %7244 = vmatpush.bf16.msra.mxu0 0
        %7245 = vmatpush.bf16.msra.mxu0 %v7233
        %7246 = vmatmul.bf16.gmra.mxu0 %v7236
        %v7247 = vpop.f32.mrf.mxu0
        %v7248 = vadd.f32 0.0, %v7247
        %v7249 = vpop.f32.mrf.mxu0
        %v7250 = vadd.f32 0.0, %v7249
        %7251 = vdwg.mxu0
        %v7254 = vunpack.c.l.b16 %v7098
        %v7255 = vunpack.c.l.b16 %v7099
        %v7256 = vpack.c.b16 %v7255, %v7254
        %7257 = vrot.lane.b32.xlu0 %v6647, 96
        %v7258 = vpop.permute.xlu0 %7257
        %v7261 = vsel %vm1758, %v7256, 0
        %7263 = vmatpush.bf16.msra.mxu0 0
        %7264 = vmatpush.bf16.msra.mxu0 0
        %7265 = vmatpush.bf16.msra.mxu0 0
        %7266 = vmatpush.bf16.msra.mxu0 0
        %7267 = vmatpush.bf16.msra.mxu0 0
        %7268 = vmatpush.bf16.msra.mxu0 0
        %7269 = vmatpush.bf16.msra.mxu0 0
        %7270 = vmatpush.bf16.msra.mxu0 %v7258
        %7271 = vmatmul.bf16.gmra.mxu0 %v7261
        %v7272 = vpop.f32.mrf.mxu0
        %v7273 = vadd.f32 0.0, %v7272
        %v7274 = vpop.f32.mrf.mxu0
        %v7275 = vadd.f32 0.0, %v7274
        %7276 = vdwg.mxu0
        %v7279 = vunpack.c.l.b16 %v7100
        %v7280 = vunpack.c.l.b16 %v7101
        %v7281 = vpack.c.b16 %v7280, %v7279
        %7282 = vrot.lane.b32.xlu0 %v6675, 96
        %v7283 = vpop.permute.xlu0 %7282
        %v7286 = vsel %vm1758, %v7281, 0
        %7288 = vmatpush.bf16.msra.mxu0 0
        %7289 = vmatpush.bf16.msra.mxu0 0
        %7290 = vmatpush.bf16.msra.mxu0 0
        %7291 = vmatpush.bf16.msra.mxu0 0
        %7292 = vmatpush.bf16.msra.mxu0 0
        %7293 = vmatpush.bf16.msra.mxu0 0
        %7294 = vmatpush.bf16.msra.mxu0 0
        %7295 = vmatpush.bf16.msra.mxu0 %v7283
        %7296 = vmatmul.bf16.gmra.mxu0 %v7286
        %v7297 = vpop.f32.mrf.mxu0
        %v7298 = vadd.f32 0.0, %v7297
        %v7299 = vpop.f32.mrf.mxu0
        %v7300 = vadd.f32 0.0, %v7299
        %7301 = vdwg.mxu0
        %v7302 = vpack.c.bf16 %v7125, %v7123
        %v7303 = vpack.c.bf16 %v7150, %v7148
        %v7304 = vpack.c.bf16 %v7175, %v7173
        %v7305 = vpack.c.bf16 %v7200, %v7198
        %v7306 = vpack.c.bf16 %v7225, %v7223
        %v7307 = vpack.c.bf16 %v7250, %v7248
        %v7308 = vpack.c.bf16 %v7275, %v7273
        %v7309 = vpack.c.bf16 %v7300, %v7298
        %v7314 = vunpack.c.l.b16 %v5670
        %v7315 = vunpack.c.l.b16 %v5671
        %v7316 = vunpack.c.l.b16 %v5672
        %v7317 = vunpack.c.l.b16 %v5673
        %v7318 = vpack.c.b16 %v7315, %v7314
        %v7319 = vpack.c.b16 %v7317, %v7316
        %v7323 = vsel %vm884, %v7302, 0
        %v7326 = vsel %vm884, %v7303, 0
        %v7329 = vsel %vm884, %v7304, 0
        %v7332 = vsel %vm884, %v7305, 0
        %v7335 = vsel %vm884, %v7306, 0
        %v7338 = vsel %vm884, %v7307, 0
        %v7341 = vsel %vm884, %v7308, 0
        %v7344 = vsel %vm884, %v7309, 0
        %7346 = vmatpush.bf16.msra.mxu0 0
        %7347 = vmatpush.bf16.msra.mxu0 0
        %7348 = vmatpush.bf16.msra.mxu0 0
        %7349 = vmatpush.bf16.msra.mxu0 0
        %7350 = vmatpush.bf16.msra.mxu0 0
        %7351 = vmatpush.bf16.msra.mxu0 0
        %7352 = vmatpush.bf16.msra.mxu0 %v7319
        %7353 = vmatpush.bf16.msra.mxu0 %v7318
        %7354 = vmatmul.bf16.gmra.mxu0 %v7323
        %v7355 = vpop.f32.mrf.mxu0
        %v7356 = vadd.f32 0.0, %v7355
        %v7357 = vpop.f32.mrf.mxu0
        %v7358 = vadd.f32 0.0, %v7357
        %7359 = vmatmul.bf16.gmra.mxu0 %v7326
        %v7360 = vpop.f32.mrf.mxu0
        %v7361 = vadd.f32 0.0, %v7360
        %v7362 = vpop.f32.mrf.mxu0
        %v7363 = vadd.f32 0.0, %v7362
        %7364 = vmatmul.bf16.gmra.mxu0 %v7329
        %v7365 = vpop.f32.mrf.mxu0
        %v7366 = vadd.f32 0.0, %v7365
        %v7367 = vpop.f32.mrf.mxu0
        %v7368 = vadd.f32 0.0, %v7367
        %7369 = vmatmul.bf16.gmra.mxu0 %v7332
        %v7370 = vpop.f32.mrf.mxu0
        %v7371 = vadd.f32 0.0, %v7370
        %v7372 = vpop.f32.mrf.mxu0
        %v7373 = vadd.f32 0.0, %v7372
        %7374 = vmatmul.bf16.gmra.mxu0 %v7335
        %v7375 = vpop.f32.mrf.mxu0
        %v7376 = vadd.f32 0.0, %v7375
        %v7377 = vpop.f32.mrf.mxu0
        %v7378 = vadd.f32 0.0, %v7377
        %7379 = vmatmul.bf16.gmra.mxu0 %v7338
        %v7380 = vpop.f32.mrf.mxu0
        %v7381 = vadd.f32 0.0, %v7380
        %v7382 = vpop.f32.mrf.mxu0
        %v7383 = vadd.f32 0.0, %v7382
        %7384 = vmatmul.bf16.gmra.mxu0 %v7341
        %v7385 = vpop.f32.mrf.mxu0
        %v7386 = vadd.f32 0.0, %v7385
        %v7387 = vpop.f32.mrf.mxu0
        %v7388 = vadd.f32 0.0, %v7387
        %7389 = vmatmul.bf16.gmra.mxu0 %v7344
        %v7390 = vpop.f32.mrf.mxu0
        %v7391 = vadd.f32 0.0, %v7390
        %v7392 = vpop.f32.mrf.mxu0
        %v7393 = vadd.f32 0.0, %v7392
        %7394 = vdwg.mxu0
        %v7399 = vunpack.c.l.b16 %v5666
        %v7400 = vunpack.c.l.b16 %v5667
        %v7401 = vunpack.c.l.b16 %v5668
        %v7402 = vunpack.c.l.b16 %v5669
        %v7403 = vpack.c.b16 %v7400, %v7399
        %v7404 = vpack.c.b16 %v7402, %v7401
        %v7408 = vsel %vm884, %v6694, 0
        %v7411 = vsel %vm884, %v6695, 0
        %v7414 = vsel %vm884, %v6696, 0
        %v7417 = vsel %vm884, %v6697, 0
        %v7420 = vsel %vm884, %v6698, 0
        %v7423 = vsel %vm884, %v6699, 0
        %v7426 = vsel %vm884, %v6700, 0
        %v7429 = vsel %vm884, %v6701, 0
        %7431 = vmatpush.bf16.msra.mxu0 0
        %7432 = vmatpush.bf16.msra.mxu0 0
        %7433 = vmatpush.bf16.msra.mxu0 0
        %7434 = vmatpush.bf16.msra.mxu0 0
        %7435 = vmatpush.bf16.msra.mxu0 0
        %7436 = vmatpush.bf16.msra.mxu0 0
        %7437 = vmatpush.bf16.msra.mxu0 %v7404
        %7438 = vmatpush.bf16.msra.mxu0 %v7403
        %7439 = vmatmul.bf16.gmra.mxu0 %v7408
        %v7440 = vpop.f32.mrf.mxu0
        %v7441 = vadd.f32 %v7356, %v7440
        %v7442 = vpop.f32.mrf.mxu0
        %v7443 = vadd.f32 %v7358, %v7442
        %7444 = vmatmul.bf16.gmra.mxu0 %v7411
        %v7445 = vpop.f32.mrf.mxu0
        %v7446 = vadd.f32 %v7361, %v7445
        %v7447 = vpop.f32.mrf.mxu0
        %v7448 = vadd.f32 %v7363, %v7447
        %7449 = vmatmul.bf16.gmra.mxu0 %v7414
        %v7450 = vpop.f32.mrf.mxu0
        %v7451 = vadd.f32 %v7366, %v7450
        %v7452 = vpop.f32.mrf.mxu0
        %v7453 = vadd.f32 %v7368, %v7452
        %7454 = vmatmul.bf16.gmra.mxu0 %v7417
        %v7455 = vpop.f32.mrf.mxu0
        %v7456 = vadd.f32 %v7371, %v7455
        %v7457 = vpop.f32.mrf.mxu0
        %v7458 = vadd.f32 %v7373, %v7457
        %7459 = vmatmul.bf16.gmra.mxu0 %v7420
        %v7460 = vpop.f32.mrf.mxu0
        %v7461 = vadd.f32 %v7376, %v7460
        %v7462 = vpop.f32.mrf.mxu0
        %v7463 = vadd.f32 %v7378, %v7462
        %7464 = vmatmul.bf16.gmra.mxu0 %v7423
        %v7465 = vpop.f32.mrf.mxu0
        %v7466 = vadd.f32 %v7381, %v7465
        %v7467 = vpop.f32.mrf.mxu0
        %v7468 = vadd.f32 %v7383, %v7467
        %7469 = vmatmul.bf16.gmra.mxu0 %v7426
        %v7470 = vpop.f32.mrf.mxu0
        %v7471 = vadd.f32 %v7386, %v7470
        %v7472 = vpop.f32.mrf.mxu0
        %v7473 = vadd.f32 %v7388, %v7472
        %7474 = vmatmul.bf16.gmra.mxu0 %v7429
        %v7475 = vpop.f32.mrf.mxu0
        %v7476 = vadd.f32 %v7391, %v7475
        %v7477 = vpop.f32.mrf.mxu0
        %v7478 = vadd.f32 %v7393, %v7477
        %7479 = vdwg.mxu0
        %7480 = vrot.lane.b32.xlu0 %v6026, 64
        %v7481 = vpop.permute.xlu0 %7480
        %7482 = vrot.lane.b32.xlu0 %v6031, 64
        %v7483 = vpop.permute.xlu0 %7482
        %v7485 = vsel %vm884, %v7481, 0
        %v7488 = vsel %vm884, %v7483, 0
        %7490 = vmatpush.bf16.xpose.msra.mxu0 0
        %7491 = vmatpush.bf16.xpose.msra.mxu0 0
        %7492 = vmatpush.bf16.xpose.msra.mxu0 0
        %7493 = vmatpush.bf16.xpose.msra.mxu0 0
        %7494 = vmatpush.bf16.xpose.msra.mxu0 0
        %7495 = vmatpush.bf16.xpose.msra.mxu0 0
        %7496 = vmatpush.bf16.xpose.msra.mxu0 0
        %7497 = vmatpush.bf16.xpose.msra.mxu0 %v7488
        %7498 = vmatmul.bf16.gmra.mxu0 %v7485
        %v7499 = vpop.f32.mrf.mxu0
        %v7500 = vadd.f32 0.0, %v7499
        %v7501 = vpop.f32.mrf.mxu0
        %v7502 = vadd.f32 0.0, %v7501
        %7503 = vdwg.mxu0
        %7504 = vrot.lane.b32.xlu0 %v6056, 64
        %v7505 = vpop.permute.xlu0 %7504
        %7506 = vrot.lane.b32.xlu0 %v6061, 64
        %v7507 = vpop.permute.xlu0 %7506
        %v7509 = vsel %vm884, %v7505, 0
        %v7512 = vsel %vm884, %v7507, 0
        %7514 = vmatpush.bf16.xpose.msra.mxu0 0
        %7515 = vmatpush.bf16.xpose.msra.mxu0 0
        %7516 = vmatpush.bf16.xpose.msra.mxu0 0
        %7517 = vmatpush.bf16.xpose.msra.mxu0 0
        %7518 = vmatpush.bf16.xpose.msra.mxu0 0
        %7519 = vmatpush.bf16.xpose.msra.mxu0 0
        %7520 = vmatpush.bf16.xpose.msra.mxu0 0
        %7521 = vmatpush.bf16.xpose.msra.mxu0 %v7512
        %7522 = vmatmul.bf16.gmra.mxu0 %v7509
        %v7523 = vpop.f32.mrf.mxu0
        %v7524 = vadd.f32 0.0, %v7523
        %v7525 = vpop.f32.mrf.mxu0
        %v7526 = vadd.f32 0.0, %v7525
        %7527 = vdwg.mxu0
        %7528 = vrot.lane.b32.xlu0 %v6086, 64
        %v7529 = vpop.permute.xlu0 %7528
        %7530 = vrot.lane.b32.xlu0 %v6091, 64
        %v7531 = vpop.permute.xlu0 %7530
        %v7533 = vsel %vm884, %v7529, 0
        %v7536 = vsel %vm884, %v7531, 0
        %7538 = vmatpush.bf16.xpose.msra.mxu0 0
        %7539 = vmatpush.bf16.xpose.msra.mxu0 0
        %7540 = vmatpush.bf16.xpose.msra.mxu0 0
        %7541 = vmatpush.bf16.xpose.msra.mxu0 0
        %7542 = vmatpush.bf16.xpose.msra.mxu0 0
        %7543 = vmatpush.bf16.xpose.msra.mxu0 0
        %7544 = vmatpush.bf16.xpose.msra.mxu0 0
        %7545 = vmatpush.bf16.xpose.msra.mxu0 %v7536
        %7546 = vmatmul.bf16.gmra.mxu0 %v7533
        %v7547 = vpop.f32.mrf.mxu0
        %v7548 = vadd.f32 0.0, %v7547
        %v7549 = vpop.f32.mrf.mxu0
        %v7550 = vadd.f32 0.0, %v7549
        %7551 = vdwg.mxu0
        %7552 = vrot.lane.b32.xlu0 %v6116, 64
        %v7553 = vpop.permute.xlu0 %7552
        %7554 = vrot.lane.b32.xlu0 %v6121, 64
        %v7555 = vpop.permute.xlu0 %7554
        %v7557 = vsel %vm884, %v7553, 0
        %v7560 = vsel %vm884, %v7555, 0
        %7562 = vmatpush.bf16.xpose.msra.mxu0 0
        %7563 = vmatpush.bf16.xpose.msra.mxu0 0
        %7564 = vmatpush.bf16.xpose.msra.mxu0 0
        %7565 = vmatpush.bf16.xpose.msra.mxu0 0
        %7566 = vmatpush.bf16.xpose.msra.mxu0 0
        %7567 = vmatpush.bf16.xpose.msra.mxu0 0
        %7568 = vmatpush.bf16.xpose.msra.mxu0 0
        %7569 = vmatpush.bf16.xpose.msra.mxu0 %v7560
        %7570 = vmatmul.bf16.gmra.mxu0 %v7557
        %v7571 = vpop.f32.mrf.mxu0
        %v7572 = vadd.f32 0.0, %v7571
        %v7573 = vpop.f32.mrf.mxu0
        %v7574 = vadd.f32 0.0, %v7573
        %7575 = vdwg.mxu0
        %7576 = vrot.lane.b32.xlu0 %v6146, 64
        %v7577 = vpop.permute.xlu0 %7576
        %7578 = vrot.lane.b32.xlu0 %v6151, 64
        %v7579 = vpop.permute.xlu0 %7578
        %v7581 = vsel %vm884, %v7577, 0
        %v7584 = vsel %vm884, %v7579, 0
        %7586 = vmatpush.bf16.xpose.msra.mxu0 0
        %7587 = vmatpush.bf16.xpose.msra.mxu0 0
        %7588 = vmatpush.bf16.xpose.msra.mxu0 0
        %7589 = vmatpush.bf16.xpose.msra.mxu0 0
        %7590 = vmatpush.bf16.xpose.msra.mxu0 0
        %7591 = vmatpush.bf16.xpose.msra.mxu0 0
        %7592 = vmatpush.bf16.xpose.msra.mxu0 0
        %7593 = vmatpush.bf16.xpose.msra.mxu0 %v7584
        %7594 = vmatmul.bf16.gmra.mxu0 %v7581
        %v7595 = vpop.f32.mrf.mxu0
        %v7596 = vadd.f32 0.0, %v7595
        %v7597 = vpop.f32.mrf.mxu0
        %v7598 = vadd.f32 0.0, %v7597
        %7599 = vdwg.mxu0
        %7600 = vrot.lane.b32.xlu0 %v6176, 64
        %v7601 = vpop.permute.xlu0 %7600
        %7602 = vrot.lane.b32.xlu0 %v6181, 64
        %v7603 = vpop.permute.xlu0 %7602
        %v7605 = vsel %vm884, %v7601, 0
        %v7608 = vsel %vm884, %v7603, 0
        %7610 = vmatpush.bf16.xpose.msra.mxu0 0
        %7611 = vmatpush.bf16.xpose.msra.mxu0 0
        %7612 = vmatpush.bf16.xpose.msra.mxu0 0
        %7613 = vmatpush.bf16.xpose.msra.mxu0 0
        %7614 = vmatpush.bf16.xpose.msra.mxu0 0
        %7615 = vmatpush.bf16.xpose.msra.mxu0 0
        %7616 = vmatpush.bf16.xpose.msra.mxu0 0
        %7617 = vmatpush.bf16.xpose.msra.mxu0 %v7608
        %7618 = vmatmul.bf16.gmra.mxu0 %v7605
        %v7619 = vpop.f32.mrf.mxu0
        %v7620 = vadd.f32 0.0, %v7619
        %v7621 = vpop.f32.mrf.mxu0
        %v7622 = vadd.f32 0.0, %v7621
        %7623 = vdwg.mxu0
        %7624 = vrot.lane.b32.xlu0 %v6206, 64
        %v7625 = vpop.permute.xlu0 %7624
        %7626 = vrot.lane.b32.xlu0 %v6211, 64
        %v7627 = vpop.permute.xlu0 %7626
        %v7629 = vsel %vm884, %v7625, 0
        %v7632 = vsel %vm884, %v7627, 0
        %7634 = vmatpush.bf16.xpose.msra.mxu0 0
        %7635 = vmatpush.bf16.xpose.msra.mxu0 0
        %7636 = vmatpush.bf16.xpose.msra.mxu0 0
        %7637 = vmatpush.bf16.xpose.msra.mxu0 0
        %7638 = vmatpush.bf16.xpose.msra.mxu0 0
        %7639 = vmatpush.bf16.xpose.msra.mxu0 0
        %7640 = vmatpush.bf16.xpose.msra.mxu0 0
        %7641 = vmatpush.bf16.xpose.msra.mxu0 %v7632
        %7642 = vmatmul.bf16.gmra.mxu0 %v7629
        %v7643 = vpop.f32.mrf.mxu0
        %v7644 = vadd.f32 0.0, %v7643
        %v7645 = vpop.f32.mrf.mxu0
        %v7646 = vadd.f32 0.0, %v7645
        %7647 = vdwg.mxu0
        %7648 = vrot.lane.b32.xlu0 %v6236, 64
        %v7649 = vpop.permute.xlu0 %7648
        %7650 = vrot.lane.b32.xlu0 %v6241, 64
        %v7651 = vpop.permute.xlu0 %7650
        %v7653 = vsel %vm884, %v7649, 0
        %v7656 = vsel %vm884, %v7651, 0
        %7658 = vmatpush.bf16.xpose.msra.mxu0 0
        %7659 = vmatpush.bf16.xpose.msra.mxu0 0
        %7660 = vmatpush.bf16.xpose.msra.mxu0 0
        %7661 = vmatpush.bf16.xpose.msra.mxu0 0
        %7662 = vmatpush.bf16.xpose.msra.mxu0 0
        %7663 = vmatpush.bf16.xpose.msra.mxu0 0
        %7664 = vmatpush.bf16.xpose.msra.mxu0 0
        %7665 = vmatpush.bf16.xpose.msra.mxu0 %v7656
        %7666 = vmatmul.bf16.gmra.mxu0 %v7653
        %v7667 = vpop.f32.mrf.mxu0
        %v7668 = vadd.f32 0.0, %v7667
        %v7669 = vpop.f32.mrf.mxu0
        %v7670 = vadd.f32 0.0, %v7669
        %7671 = vdwg.mxu0
        %v7672 = vmul.f32 %v7500, 0.17677669
        %v7673 = vmul.f32 %v7502, 0.17677669
        %v7674 = vmul.f32 %v7524, 0.17677669
        %v7675 = vmul.f32 %v7526, 0.17677669
        %v7676 = vmul.f32 %v7548, 0.17677669
        %v7677 = vmul.f32 %v7550, 0.17677669
        %v7678 = vmul.f32 %v7572, 0.17677669
        %v7679 = vmul.f32 %v7574, 0.17677669
        %v7680 = vmul.f32 %v7596, 0.17677669
        %v7681 = vmul.f32 %v7598, 0.17677669
        %v7682 = vmul.f32 %v7620, 0.17677669
        %v7683 = vmul.f32 %v7622, 0.17677669
        %v7684 = vmul.f32 %v7644, 0.17677669
        %v7685 = vmul.f32 %v7646, 0.17677669
        %v7686 = vmul.f32 %v7668, 0.17677669
        %v7687 = vmul.f32 %v7670, 0.17677669
        %v7688 = vsel %vm1758, %v7672, -inf
        %7689 = vmax.xlane.f32.xlu0 %v7688
        %v7690 = vpop.xlane.xlu0 %7689
        %v7691 = vsel %vm1758, %v7673, -inf
        %7692 = vmax.xlane.f32.xlu0 %v7691
        %v7693 = vpop.xlane.xlu0 %7692
        %v7694 = vsel %vm1758, %v7674, -inf
        %7695 = vmax.xlane.f32.xlu0 %v7694
        %v7696 = vpop.xlane.xlu0 %7695
        %v7697 = vsel %vm1758, %v7675, -inf
        %7698 = vmax.xlane.f32.xlu0 %v7697
        %v7699 = vpop.xlane.xlu0 %7698
        %v7700 = vsel %vm1758, %v7676, -inf
        %7701 = vmax.xlane.f32.xlu0 %v7700
        %v7702 = vpop.xlane.xlu0 %7701
        %v7703 = vsel %vm1758, %v7677, -inf
        %7704 = vmax.xlane.f32.xlu0 %v7703
        %v7705 = vpop.xlane.xlu0 %7704
        %v7706 = vsel %vm1758, %v7678, -inf
        %7707 = vmax.xlane.f32.xlu0 %v7706
        %v7708 = vpop.xlane.xlu0 %7707
        %v7709 = vsel %vm1758, %v7679, -inf
        %7710 = vmax.xlane.f32.xlu0 %v7709
        %v7711 = vpop.xlane.xlu0 %7710
        %v7712 = vsel %vm1758, %v7680, -inf
        %7713 = vmax.xlane.f32.xlu0 %v7712
        %v7714 = vpop.xlane.xlu0 %7713
        %v7715 = vsel %vm1758, %v7681, -inf
        %7716 = vmax.xlane.f32.xlu0 %v7715
        %v7717 = vpop.xlane.xlu0 %7716
        %v7718 = vsel %vm1758, %v7682, -inf
        %7719 = vmax.xlane.f32.xlu0 %v7718
        %v7720 = vpop.xlane.xlu0 %7719
        %v7721 = vsel %vm1758, %v7683, -inf
        %7722 = vmax.xlane.f32.xlu0 %v7721
        %v7723 = vpop.xlane.xlu0 %7722
        %v7724 = vsel %vm1758, %v7684, -inf
        %7725 = vmax.xlane.f32.xlu0 %v7724
        %v7726 = vpop.xlane.xlu0 %7725
        %v7727 = vsel %vm1758, %v7685, -inf
        %7728 = vmax.xlane.f32.xlu0 %v7727
        %v7729 = vpop.xlane.xlu0 %7728
        %v7730 = vsel %vm1758, %v7686, -inf
        %7731 = vmax.xlane.f32.xlu0 %v7730
        %v7732 = vpop.xlane.xlu0 %7731
        %v7733 = vsel %vm1758, %v7687, -inf
        %7734 = vmax.xlane.f32.xlu0 %v7733
        %v7735 = vpop.xlane.xlu0 %7734
        %v7736 = vsub.f32 %v7672, %v7690
        %v7737 = vsub.f32 %v7673, %v7693
        %v7738 = vsub.f32 %v7674, %v7696
        %v7739 = vsub.f32 %v7675, %v7699
        %v7740 = vsub.f32 %v7676, %v7702
        %v7741 = vsub.f32 %v7677, %v7705
        %v7742 = vsub.f32 %v7678, %v7708
        %v7743 = vsub.f32 %v7679, %v7711
        %v7744 = vsub.f32 %v7680, %v7714
        %v7745 = vsub.f32 %v7681, %v7717
        %v7746 = vsub.f32 %v7682, %v7720
        %v7747 = vsub.f32 %v7683, %v7723
        %v7748 = vsub.f32 %v7684, %v7726
        %v7749 = vsub.f32 %v7685, %v7729
        %v7750 = vsub.f32 %v7686, %v7732
        %v7751 = vsub.f32 %v7687, %v7735
        %v7752 = vmul.f32 %v7736, 1.442695
        %v7753 = vpow.pop %v7752
        %v7754 = vmul.f32 %v7737, 1.442695
        %v7755 = vpow.pop %v7754
        %v7756 = vmul.f32 %v7738, 1.442695
        %v7757 = vpow.pop %v7756
        %v7758 = vmul.f32 %v7739, 1.442695
        %v7759 = vpow.pop %v7758
        %v7760 = vmul.f32 %v7740, 1.442695
        %v7761 = vpow.pop %v7760
        %v7762 = vmul.f32 %v7741, 1.442695
        %v7763 = vpow.pop %v7762
        %v7764 = vmul.f32 %v7742, 1.442695
        %v7765 = vpow.pop %v7764
        %v7766 = vmul.f32 %v7743, 1.442695
        %v7767 = vpow.pop %v7766
        %v7768 = vmul.f32 %v7744, 1.442695
        %v7769 = vpow.pop %v7768
        %v7770 = vmul.f32 %v7745, 1.442695
        %v7771 = vpow.pop %v7770
        %v7772 = vmul.f32 %v7746, 1.442695
        %v7773 = vpow.pop %v7772
        %v7774 = vmul.f32 %v7747, 1.442695
        %v7775 = vpow.pop %v7774
        %v7776 = vmul.f32 %v7748, 1.442695
        %v7777 = vpow.pop %v7776
        %v7778 = vmul.f32 %v7749, 1.442695
        %v7779 = vpow.pop %v7778
        %v7780 = vmul.f32 %v7750, 1.442695
        %v7781 = vpow.pop %v7780
        %v7782 = vmul.f32 %v7751, 1.442695
        %v7783 = vpow.pop %v7782
        %v7784 = vsel %vm1758, %v7753, 0.0
        %7785 = vadd.xlane.f32.xlu0 %v7784
        %v7786 = vpop.xlane.xlu0 %7785
        %v7787 = vsel %vm1758, %v7755, 0.0
        %7788 = vadd.xlane.f32.xlu0 %v7787
        %v7789 = vpop.xlane.xlu0 %7788
        %v7790 = vsel %vm1758, %v7757, 0.0
        %7791 = vadd.xlane.f32.xlu0 %v7790
        %v7792 = vpop.xlane.xlu0 %7791
        %v7793 = vsel %vm1758, %v7759, 0.0
        %7794 = vadd.xlane.f32.xlu0 %v7793
        %v7795 = vpop.xlane.xlu0 %7794
        %v7796 = vsel %vm1758, %v7761, 0.0
        %7797 = vadd.xlane.f32.xlu0 %v7796
        %v7798 = vpop.xlane.xlu0 %7797
        %v7799 = vsel %vm1758, %v7763, 0.0
        %7800 = vadd.xlane.f32.xlu0 %v7799
        %v7801 = vpop.xlane.xlu0 %7800
        %v7802 = vsel %vm1758, %v7765, 0.0
        %7803 = vadd.xlane.f32.xlu0 %v7802
        %v7804 = vpop.xlane.xlu0 %7803
        %v7805 = vsel %vm1758, %v7767, 0.0
        %7806 = vadd.xlane.f32.xlu0 %v7805
        %v7807 = vpop.xlane.xlu0 %7806
        %v7808 = vsel %vm1758, %v7769, 0.0
        %7809 = vadd.xlane.f32.xlu0 %v7808
        %v7810 = vpop.xlane.xlu0 %7809
        %v7811 = vsel %vm1758, %v7771, 0.0
        %7812 = vadd.xlane.f32.xlu0 %v7811
        %v7813 = vpop.xlane.xlu0 %7812
        %v7814 = vsel %vm1758, %v7773, 0.0
        %7815 = vadd.xlane.f32.xlu0 %v7814
        %v7816 = vpop.xlane.xlu0 %7815
        %v7817 = vsel %vm1758, %v7775, 0.0
        %7818 = vadd.xlane.f32.xlu0 %v7817
        %v7819 = vpop.xlane.xlu0 %7818
        %v7820 = vsel %vm1758, %v7777, 0.0
        %7821 = vadd.xlane.f32.xlu0 %v7820
        %v7822 = vpop.xlane.xlu0 %7821
        %v7823 = vsel %vm1758, %v7779, 0.0
        %7824 = vadd.xlane.f32.xlu0 %v7823
        %v7825 = vpop.xlane.xlu0 %7824
        %v7826 = vsel %vm1758, %v7781, 0.0
        %7827 = vadd.xlane.f32.xlu0 %v7826
        %v7828 = vpop.xlane.xlu0 %7827
        %v7829 = vsel %vm1758, %v7783, 0.0
        %7830 = vadd.xlane.f32.xlu0 %v7829
        %v7831 = vpop.xlane.xlu0 %7830
        %v7832 = vrcp.pop %v7786
        %v7833 = vrcp.pop %v7789
        %v7834 = vrcp.pop %v7792
        %v7835 = vrcp.pop %v7795
        %v7836 = vrcp.pop %v7798
        %v7837 = vrcp.pop %v7801
        %v7838 = vrcp.pop %v7804
        %v7839 = vrcp.pop %v7807
        %v7840 = vrcp.pop %v7810
        %v7841 = vrcp.pop %v7813
        %v7842 = vrcp.pop %v7816
        %v7843 = vrcp.pop %v7819
        %v7844 = vrcp.pop %v7822
        %v7845 = vrcp.pop %v7825
        %v7846 = vrcp.pop %v7828
        %v7847 = vrcp.pop %v7831
        %v7848 = vmul.f32 %v7753, %v7832
        %v7849 = vmul.f32 %v7755, %v7833
        %v7850 = vmul.f32 %v7757, %v7834
        %v7851 = vmul.f32 %v7759, %v7835
        %v7852 = vmul.f32 %v7761, %v7836
        %v7853 = vmul.f32 %v7763, %v7837
        %v7854 = vmul.f32 %v7765, %v7838
        %v7855 = vmul.f32 %v7767, %v7839
        %v7856 = vmul.f32 %v7769, %v7840
        %v7857 = vmul.f32 %v7771, %v7841
        %v7858 = vmul.f32 %v7773, %v7842
        %v7859 = vmul.f32 %v7775, %v7843
        %v7860 = vmul.f32 %v7777, %v7844
        %v7861 = vmul.f32 %v7779, %v7845
        %v7862 = vmul.f32 %v7781, %v7846
        %v7863 = vmul.f32 %v7783, %v7847
        %v7864 = vpack.c.bf16 %v7848, %v7848
        %v7865 = vpack.c.bf16 %v7849, %v7849
        %v7866 = vpack.c.bf16 %v7850, %v7850
        %v7867 = vpack.c.bf16 %v7851, %v7851
        %v7868 = vpack.c.bf16 %v7852, %v7852
        %v7869 = vpack.c.bf16 %v7853, %v7853
        %v7870 = vpack.c.bf16 %v7854, %v7854
        %v7871 = vpack.c.bf16 %v7855, %v7855
        %v7872 = vpack.c.bf16 %v7856, %v7856
        %v7873 = vpack.c.bf16 %v7857, %v7857
        %v7874 = vpack.c.bf16 %v7858, %v7858
        %v7875 = vpack.c.bf16 %v7859, %v7859
        %v7876 = vpack.c.bf16 %v7860, %v7860
        %v7877 = vpack.c.bf16 %v7861, %v7861
        %v7878 = vpack.c.bf16 %v7862, %v7862
        %v7879 = vpack.c.bf16 %v7863, %v7863
        %v7882 = vunpack.c.l.b16 %v7864
        %v7883 = vunpack.c.l.b16 %v7865
        %v7884 = vpack.c.b16 %v7883, %v7882
        %7885 = vrot.lane.b32.xlu0 %v6479, 64
        %v7886 = vpop.permute.xlu0 %7885
        %v7889 = vsel %vm1758, %v7884, 0
        %7891 = vmatpush.bf16.msra.mxu0 0
        %7892 = vmatpush.bf16.msra.mxu0 0
        %7893 = vmatpush.bf16.msra.mxu0 0
        %7894 = vmatpush.bf16.msra.mxu0 0
        %7895 = vmatpush.bf16.msra.mxu0 0
        %7896 = vmatpush.bf16.msra.mxu0 0
        %7897 = vmatpush.bf16.msra.mxu0 0
        %7898 = vmatpush.bf16.msra.mxu0 %v7886
        %7899 = vmatmul.bf16.gmra.mxu0 %v7889
        %v7900 = vpop.f32.mrf.mxu0
        %v7901 = vadd.f32 0.0, %v7900
        %v7902 = vpop.f32.mrf.mxu0
        %v7903 = vadd.f32 0.0, %v7902
        %7904 = vdwg.mxu0
        %v7907 = vunpack.c.l.b16 %v7866
        %v7908 = vunpack.c.l.b16 %v7867
        %v7909 = vpack.c.b16 %v7908, %v7907
        %7910 = vrot.lane.b32.xlu0 %v6507, 64
        %v7911 = vpop.permute.xlu0 %7910
        %v7914 = vsel %vm1758, %v7909, 0
        %7916 = vmatpush.bf16.msra.mxu0 0
        %7917 = vmatpush.bf16.msra.mxu0 0
        %7918 = vmatpush.bf16.msra.mxu0 0
        %7919 = vmatpush.bf16.msra.mxu0 0
        %7920 = vmatpush.bf16.msra.mxu0 0
        %7921 = vmatpush.bf16.msra.mxu0 0
        %7922 = vmatpush.bf16.msra.mxu0 0
        %7923 = vmatpush.bf16.msra.mxu0 %v7911
        %7924 = vmatmul.bf16.gmra.mxu0 %v7914
        %v7925 = vpop.f32.mrf.mxu0
        %v7926 = vadd.f32 0.0, %v7925
        %v7927 = vpop.f32.mrf.mxu0
        %v7928 = vadd.f32 0.0, %v7927
        %7929 = vdwg.mxu0
        %v7932 = vunpack.c.l.b16 %v7868
        %v7933 = vunpack.c.l.b16 %v7869
        %v7934 = vpack.c.b16 %v7933, %v7932
        %7935 = vrot.lane.b32.xlu0 %v6535, 64
        %v7936 = vpop.permute.xlu0 %7935
        %v7939 = vsel %vm1758, %v7934, 0
        %7941 = vmatpush.bf16.msra.mxu0 0
        %7942 = vmatpush.bf16.msra.mxu0 0
        %7943 = vmatpush.bf16.msra.mxu0 0
        %7944 = vmatpush.bf16.msra.mxu0 0
        %7945 = vmatpush.bf16.msra.mxu0 0
        %7946 = vmatpush.bf16.msra.mxu0 0
        %7947 = vmatpush.bf16.msra.mxu0 0
        %7948 = vmatpush.bf16.msra.mxu0 %v7936
        %7949 = vmatmul.bf16.gmra.mxu0 %v7939
        %v7950 = vpop.f32.mrf.mxu0
        %v7951 = vadd.f32 0.0, %v7950
        %v7952 = vpop.f32.mrf.mxu0
        %v7953 = vadd.f32 0.0, %v7952
        %7954 = vdwg.mxu0
        %v7957 = vunpack.c.l.b16 %v7870
        %v7958 = vunpack.c.l.b16 %v7871
        %v7959 = vpack.c.b16 %v7958, %v7957
        %7960 = vrot.lane.b32.xlu0 %v6563, 64
        %v7961 = vpop.permute.xlu0 %7960
        %v7964 = vsel %vm1758, %v7959, 0
        %7966 = vmatpush.bf16.msra.mxu0 0
        %7967 = vmatpush.bf16.msra.mxu0 0
        %7968 = vmatpush.bf16.msra.mxu0 0
        %7969 = vmatpush.bf16.msra.mxu0 0
        %7970 = vmatpush.bf16.msra.mxu0 0
        %7971 = vmatpush.bf16.msra.mxu0 0
        %7972 = vmatpush.bf16.msra.mxu0 0
        %7973 = vmatpush.bf16.msra.mxu0 %v7961
        %7974 = vmatmul.bf16.gmra.mxu0 %v7964
        %v7975 = vpop.f32.mrf.mxu0
        %v7976 = vadd.f32 0.0, %v7975
        %v7977 = vpop.f32.mrf.mxu0
        %v7978 = vadd.f32 0.0, %v7977
        %7979 = vdwg.mxu0
        %v7982 = vunpack.c.l.b16 %v7872
        %v7983 = vunpack.c.l.b16 %v7873
        %v7984 = vpack.c.b16 %v7983, %v7982
        %7985 = vrot.lane.b32.xlu0 %v6591, 64
        %v7986 = vpop.permute.xlu0 %7985
        %v7989 = vsel %vm1758, %v7984, 0
        %7991 = vmatpush.bf16.msra.mxu0 0
        %7992 = vmatpush.bf16.msra.mxu0 0
        %7993 = vmatpush.bf16.msra.mxu0 0
        %7994 = vmatpush.bf16.msra.mxu0 0
        %7995 = vmatpush.bf16.msra.mxu0 0
        %7996 = vmatpush.bf16.msra.mxu0 0
        %7997 = vmatpush.bf16.msra.mxu0 0
        %7998 = vmatpush.bf16.msra.mxu0 %v7986
        %7999 = vmatmul.bf16.gmra.mxu0 %v7989
        %v8000 = vpop.f32.mrf.mxu0
        %v8001 = vadd.f32 0.0, %v8000
        %v8002 = vpop.f32.mrf.mxu0
        %v8003 = vadd.f32 0.0, %v8002
        %8004 = vdwg.mxu0
        %v8007 = vunpack.c.l.b16 %v7874
        %v8008 = vunpack.c.l.b16 %v7875
        %v8009 = vpack.c.b16 %v8008, %v8007
        %8010 = vrot.lane.b32.xlu0 %v6619, 64
        %v8011 = vpop.permute.xlu0 %8010
        %v8014 = vsel %vm1758, %v8009, 0
        %8016 = vmatpush.bf16.msra.mxu0 0
        %8017 = vmatpush.bf16.msra.mxu0 0
        %8018 = vmatpush.bf16.msra.mxu0 0
        %8019 = vmatpush.bf16.msra.mxu0 0
        %8020 = vmatpush.bf16.msra.mxu0 0
        %8021 = vmatpush.bf16.msra.mxu0 0
        %8022 = vmatpush.bf16.msra.mxu0 0
        %8023 = vmatpush.bf16.msra.mxu0 %v8011
        %8024 = vmatmul.bf16.gmra.mxu0 %v8014
        %v8025 = vpop.f32.mrf.mxu0
        %v8026 = vadd.f32 0.0, %v8025
        %v8027 = vpop.f32.mrf.mxu0
        %v8028 = vadd.f32 0.0, %v8027
        %8029 = vdwg.mxu0
        %v8032 = vunpack.c.l.b16 %v7876
        %v8033 = vunpack.c.l.b16 %v7877
        %v8034 = vpack.c.b16 %v8033, %v8032
        %8035 = vrot.lane.b32.xlu0 %v6647, 64
        %v8036 = vpop.permute.xlu0 %8035
        %v8039 = vsel %vm1758, %v8034, 0
        %8041 = vmatpush.bf16.msra.mxu0 0
        %8042 = vmatpush.bf16.msra.mxu0 0
        %8043 = vmatpush.bf16.msra.mxu0 0
        %8044 = vmatpush.bf16.msra.mxu0 0
        %8045 = vmatpush.bf16.msra.mxu0 0
        %8046 = vmatpush.bf16.msra.mxu0 0
        %8047 = vmatpush.bf16.msra.mxu0 0
        %8048 = vmatpush.bf16.msra.mxu0 %v8036
        %8049 = vmatmul.bf16.gmra.mxu0 %v8039
        %v8050 = vpop.f32.mrf.mxu0
        %v8051 = vadd.f32 0.0, %v8050
        %v8052 = vpop.f32.mrf.mxu0
        %v8053 = vadd.f32 0.0, %v8052
        %8054 = vdwg.mxu0
        %v8057 = vunpack.c.l.b16 %v7878
        %v8058 = vunpack.c.l.b16 %v7879
        %v8059 = vpack.c.b16 %v8058, %v8057
        %8060 = vrot.lane.b32.xlu0 %v6675, 64
        %v8061 = vpop.permute.xlu0 %8060
        %v8064 = vsel %vm1758, %v8059, 0
        %8066 = vmatpush.bf16.msra.mxu0 0
        %8067 = vmatpush.bf16.msra.mxu0 0
        %8068 = vmatpush.bf16.msra.mxu0 0
        %8069 = vmatpush.bf16.msra.mxu0 0
        %8070 = vmatpush.bf16.msra.mxu0 0
        %8071 = vmatpush.bf16.msra.mxu0 0
        %8072 = vmatpush.bf16.msra.mxu0 0
        %8073 = vmatpush.bf16.msra.mxu0 %v8061
        %8074 = vmatmul.bf16.gmra.mxu0 %v8064
        %v8075 = vpop.f32.mrf.mxu0
        %v8076 = vadd.f32 0.0, %v8075
        %v8077 = vpop.f32.mrf.mxu0
        %v8078 = vadd.f32 0.0, %v8077
        %8079 = vdwg.mxu0
        %v8080 = vpack.c.bf16 %v7903, %v7901
        %v8081 = vpack.c.bf16 %v7928, %v7926
        %v8082 = vpack.c.bf16 %v7953, %v7951
        %v8083 = vpack.c.bf16 %v7978, %v7976
        %v8084 = vpack.c.bf16 %v8003, %v8001
        %v8085 = vpack.c.bf16 %v8028, %v8026
        %v8086 = vpack.c.bf16 %v8053, %v8051
        %v8087 = vpack.c.bf16 %v8078, %v8076
        %v8092 = vunpack.c.l.b16 %v5674
        %v8093 = vunpack.c.l.b16 %v5675
        %v8094 = vunpack.c.l.b16 %v5676
        %v8095 = vunpack.c.l.b16 %v5677
        %v8096 = vpack.c.b16 %v8093, %v8092
        %v8097 = vpack.c.b16 %v8095, %v8094
        %v8101 = vsel %vm884, %v8080, 0
        %v8104 = vsel %vm884, %v8081, 0
        %v8107 = vsel %vm884, %v8082, 0
        %v8110 = vsel %vm884, %v8083, 0
        %v8113 = vsel %vm884, %v8084, 0
        %v8116 = vsel %vm884, %v8085, 0
        %v8119 = vsel %vm884, %v8086, 0
        %v8122 = vsel %vm884, %v8087, 0
        %8124 = vmatpush.bf16.msra.mxu0 0
        %8125 = vmatpush.bf16.msra.mxu0 0
        %8126 = vmatpush.bf16.msra.mxu0 0
        %8127 = vmatpush.bf16.msra.mxu0 0
        %8128 = vmatpush.bf16.msra.mxu0 0
        %8129 = vmatpush.bf16.msra.mxu0 0
        %8130 = vmatpush.bf16.msra.mxu0 %v8097
        %8131 = vmatpush.bf16.msra.mxu0 %v8096
        %8132 = vmatmul.bf16.gmra.mxu0 %v8101
        %v8133 = vpop.f32.mrf.mxu0
        %v8134 = vadd.f32 0.0, %v8133
        %v8135 = vpop.f32.mrf.mxu0
        %v8136 = vadd.f32 0.0, %v8135
        %8137 = vmatmul.bf16.gmra.mxu0 %v8104
        %v8138 = vpop.f32.mrf.mxu0
        %v8139 = vadd.f32 0.0, %v8138
        %v8140 = vpop.f32.mrf.mxu0
        %v8141 = vadd.f32 0.0, %v8140
        %8142 = vmatmul.bf16.gmra.mxu0 %v8107
        %v8143 = vpop.f32.mrf.mxu0
        %v8144 = vadd.f32 0.0, %v8143
        %v8145 = vpop.f32.mrf.mxu0
        %v8146 = vadd.f32 0.0, %v8145
        %8147 = vmatmul.bf16.gmra.mxu0 %v8110
        %v8148 = vpop.f32.mrf.mxu0
        %v8149 = vadd.f32 0.0, %v8148
        %v8150 = vpop.f32.mrf.mxu0
        %v8151 = vadd.f32 0.0, %v8150
        %8152 = vmatmul.bf16.gmra.mxu0 %v8113
        %v8153 = vpop.f32.mrf.mxu0
        %v8154 = vadd.f32 0.0, %v8153
        %v8155 = vpop.f32.mrf.mxu0
        %v8156 = vadd.f32 0.0, %v8155
        %8157 = vmatmul.bf16.gmra.mxu0 %v8116
        %v8158 = vpop.f32.mrf.mxu0
        %v8159 = vadd.f32 0.0, %v8158
        %v8160 = vpop.f32.mrf.mxu0
        %v8161 = vadd.f32 0.0, %v8160
        %8162 = vmatmul.bf16.gmra.mxu0 %v8119
        %v8163 = vpop.f32.mrf.mxu0
        %v8164 = vadd.f32 0.0, %v8163
        %v8165 = vpop.f32.mrf.mxu0
        %v8166 = vadd.f32 0.0, %v8165
        %8167 = vmatmul.bf16.gmra.mxu0 %v8122
        %v8168 = vpop.f32.mrf.mxu0
        %v8169 = vadd.f32 0.0, %v8168
        %v8170 = vpop.f32.mrf.mxu0
        %v8171 = vadd.f32 0.0, %v8170
        %8172 = vdwg.mxu0
        %v8173 = vadd.f32 %v7441, %v8134
        %v8174 = vadd.f32 %v7443, %v8136
        %v8175 = vadd.f32 %v7446, %v8139
        %v8176 = vadd.f32 %v7448, %v8141
        %v8177 = vadd.f32 %v7451, %v8144
        %v8178 = vadd.f32 %v7453, %v8146
        %v8179 = vadd.f32 %v7456, %v8149
        %v8180 = vadd.f32 %v7458, %v8151
        %v8181 = vadd.f32 %v7461, %v8154
        %v8182 = vadd.f32 %v7463, %v8156
        %v8183 = vadd.f32 %v7466, %v8159
        %v8184 = vadd.f32 %v7468, %v8161
        %v8185 = vadd.f32 %v7471, %v8164
        %v8186 = vadd.f32 %v7473, %v8166
        %v8187 = vadd.f32 %v7476, %v8169
        %v8188 = vadd.f32 %v7478, %v8171
        %8189 = vrot.lane.b32.xlu0 %v6026, 32
        %v8190 = vpop.permute.xlu0 %8189
        %8191 = vrot.lane.b32.xlu0 %v6031, 32
        %v8192 = vpop.permute.xlu0 %8191
        %v8194 = vsel %vm884, %v8190, 0
        %v8197 = vsel %vm884, %v8192, 0
        %8199 = vmatpush.bf16.xpose.msra.mxu0 0
        %8200 = vmatpush.bf16.xpose.msra.mxu0 0
        %8201 = vmatpush.bf16.xpose.msra.mxu0 0
        %8202 = vmatpush.bf16.xpose.msra.mxu0 0
        %8203 = vmatpush.bf16.xpose.msra.mxu0 0
        %8204 = vmatpush.bf16.xpose.msra.mxu0 0
        %8205 = vmatpush.bf16.xpose.msra.mxu0 0
        %8206 = vmatpush.bf16.xpose.msra.mxu0 %v8197
        %8207 = vmatmul.bf16.gmra.mxu0 %v8194
        %v8208 = vpop.f32.mrf.mxu0
        %v8209 = vadd.f32 0.0, %v8208
        %v8210 = vpop.f32.mrf.mxu0
        %v8211 = vadd.f32 0.0, %v8210
        %8212 = vdwg.mxu0
        %8213 = vrot.lane.b32.xlu0 %v6056, 32
        %v8214 = vpop.permute.xlu0 %8213
        %8215 = vrot.lane.b32.xlu0 %v6061, 32
        %v8216 = vpop.permute.xlu0 %8215
        %v8218 = vsel %vm884, %v8214, 0
        %v8221 = vsel %vm884, %v8216, 0
        %8223 = vmatpush.bf16.xpose.msra.mxu0 0
        %8224 = vmatpush.bf16.xpose.msra.mxu0 0
        %8225 = vmatpush.bf16.xpose.msra.mxu0 0
        %8226 = vmatpush.bf16.xpose.msra.mxu0 0
        %8227 = vmatpush.bf16.xpose.msra.mxu0 0
        %8228 = vmatpush.bf16.xpose.msra.mxu0 0
        %8229 = vmatpush.bf16.xpose.msra.mxu0 0
        %8230 = vmatpush.bf16.xpose.msra.mxu0 %v8221
        %8231 = vmatmul.bf16.gmra.mxu0 %v8218
        %v8232 = vpop.f32.mrf.mxu0
        %v8233 = vadd.f32 0.0, %v8232
        %v8234 = vpop.f32.mrf.mxu0
        %v8235 = vadd.f32 0.0, %v8234
        %8236 = vdwg.mxu0
        %8237 = vrot.lane.b32.xlu0 %v6086, 32
        %v8238 = vpop.permute.xlu0 %8237
        %8239 = vrot.lane.b32.xlu0 %v6091, 32
        %v8240 = vpop.permute.xlu0 %8239
        %v8242 = vsel %vm884, %v8238, 0
        %v8245 = vsel %vm884, %v8240, 0
        %8247 = vmatpush.bf16.xpose.msra.mxu0 0
        %8248 = vmatpush.bf16.xpose.msra.mxu0 0
        %8249 = vmatpush.bf16.xpose.msra.mxu0 0
        %8250 = vmatpush.bf16.xpose.msra.mxu0 0
        %8251 = vmatpush.bf16.xpose.msra.mxu0 0
        %8252 = vmatpush.bf16.xpose.msra.mxu0 0
        %8253 = vmatpush.bf16.xpose.msra.mxu0 0
        %8254 = vmatpush.bf16.xpose.msra.mxu0 %v8245
        %8255 = vmatmul.bf16.gmra.mxu0 %v8242
        %v8256 = vpop.f32.mrf.mxu0
        %v8257 = vadd.f32 0.0, %v8256
        %v8258 = vpop.f32.mrf.mxu0
        %v8259 = vadd.f32 0.0, %v8258
        %8260 = vdwg.mxu0
        %8261 = vrot.lane.b32.xlu0 %v6116, 32
        %v8262 = vpop.permute.xlu0 %8261
        %8263 = vrot.lane.b32.xlu0 %v6121, 32
        %v8264 = vpop.permute.xlu0 %8263
        %v8266 = vsel %vm884, %v8262, 0
        %v8269 = vsel %vm884, %v8264, 0
        %8271 = vmatpush.bf16.xpose.msra.mxu0 0
        %8272 = vmatpush.bf16.xpose.msra.mxu0 0
        %8273 = vmatpush.bf16.xpose.msra.mxu0 0
        %8274 = vmatpush.bf16.xpose.msra.mxu0 0
        %8275 = vmatpush.bf16.xpose.msra.mxu0 0
        %8276 = vmatpush.bf16.xpose.msra.mxu0 0
        %8277 = vmatpush.bf16.xpose.msra.mxu0 0
        %8278 = vmatpush.bf16.xpose.msra.mxu0 %v8269
        %8279 = vmatmul.bf16.gmra.mxu0 %v8266
        %v8280 = vpop.f32.mrf.mxu0
        %v8281 = vadd.f32 0.0, %v8280
        %v8282 = vpop.f32.mrf.mxu0
        %v8283 = vadd.f32 0.0, %v8282
        %8284 = vdwg.mxu0
        %8285 = vrot.lane.b32.xlu0 %v6146, 32
        %v8286 = vpop.permute.xlu0 %8285
        %8287 = vrot.lane.b32.xlu0 %v6151, 32
        %v8288 = vpop.permute.xlu0 %8287
        %v8290 = vsel %vm884, %v8286, 0
        %v8293 = vsel %vm884, %v8288, 0
        %8295 = vmatpush.bf16.xpose.msra.mxu0 0
        %8296 = vmatpush.bf16.xpose.msra.mxu0 0
        %8297 = vmatpush.bf16.xpose.msra.mxu0 0
        %8298 = vmatpush.bf16.xpose.msra.mxu0 0
        %8299 = vmatpush.bf16.xpose.msra.mxu0 0
        %8300 = vmatpush.bf16.xpose.msra.mxu0 0
        %8301 = vmatpush.bf16.xpose.msra.mxu0 0
        %8302 = vmatpush.bf16.xpose.msra.mxu0 %v8293
        %8303 = vmatmul.bf16.gmra.mxu0 %v8290
        %v8304 = vpop.f32.mrf.mxu0
        %v8305 = vadd.f32 0.0, %v8304
        %v8306 = vpop.f32.mrf.mxu0
        %v8307 = vadd.f32 0.0, %v8306
        %8308 = vdwg.mxu0
        %8309 = vrot.lane.b32.xlu0 %v6176, 32
        %v8310 = vpop.permute.xlu0 %8309
        %8311 = vrot.lane.b32.xlu0 %v6181, 32
        %v8312 = vpop.permute.xlu0 %8311
        %v8314 = vsel %vm884, %v8310, 0
        %v8317 = vsel %vm884, %v8312, 0
        %8319 = vmatpush.bf16.xpose.msra.mxu0 0
        %8320 = vmatpush.bf16.xpose.msra.mxu0 0
        %8321 = vmatpush.bf16.xpose.msra.mxu0 0
        %8322 = vmatpush.bf16.xpose.msra.mxu0 0
        %8323 = vmatpush.bf16.xpose.msra.mxu0 0
        %8324 = vmatpush.bf16.xpose.msra.mxu0 0
        %8325 = vmatpush.bf16.xpose.msra.mxu0 0
        %8326 = vmatpush.bf16.xpose.msra.mxu0 %v8317
        %8327 = vmatmul.bf16.gmra.mxu0 %v8314
        %v8328 = vpop.f32.mrf.mxu0
        %v8329 = vadd.f32 0.0, %v8328
        %v8330 = vpop.f32.mrf.mxu0
        %v8331 = vadd.f32 0.0, %v8330
        %8332 = vdwg.mxu0
        %8333 = vrot.lane.b32.xlu0 %v6206, 32
        %v8334 = vpop.permute.xlu0 %8333
        %8335 = vrot.lane.b32.xlu0 %v6211, 32
        %v8336 = vpop.permute.xlu0 %8335
        %v8338 = vsel %vm884, %v8334, 0
        %v8341 = vsel %vm884, %v8336, 0
        %8343 = vmatpush.bf16.xpose.msra.mxu0 0
        %8344 = vmatpush.bf16.xpose.msra.mxu0 0
        %8345 = vmatpush.bf16.xpose.msra.mxu0 0
        %8346 = vmatpush.bf16.xpose.msra.mxu0 0
        %8347 = vmatpush.bf16.xpose.msra.mxu0 0
        %8348 = vmatpush.bf16.xpose.msra.mxu0 0
        %8349 = vmatpush.bf16.xpose.msra.mxu0 0
        %8350 = vmatpush.bf16.xpose.msra.mxu0 %v8341
        %8351 = vmatmul.bf16.gmra.mxu0 %v8338
        %v8352 = vpop.f32.mrf.mxu0
        %v8353 = vadd.f32 0.0, %v8352
        %v8354 = vpop.f32.mrf.mxu0
        %v8355 = vadd.f32 0.0, %v8354
        %8356 = vdwg.mxu0
        %8357 = vrot.lane.b32.xlu0 %v6236, 32
        %v8358 = vpop.permute.xlu0 %8357
        %8359 = vrot.lane.b32.xlu0 %v6241, 32
        %v8360 = vpop.permute.xlu0 %8359
        %v8362 = vsel %vm884, %v8358, 0
        %v8365 = vsel %vm884, %v8360, 0
        %8367 = vmatpush.bf16.xpose.msra.mxu0 0
        %8368 = vmatpush.bf16.xpose.msra.mxu0 0
        %8369 = vmatpush.bf16.xpose.msra.mxu0 0
        %8370 = vmatpush.bf16.xpose.msra.mxu0 0
        %8371 = vmatpush.bf16.xpose.msra.mxu0 0
        %8372 = vmatpush.bf16.xpose.msra.mxu0 0
        %8373 = vmatpush.bf16.xpose.msra.mxu0 0
        %8374 = vmatpush.bf16.xpose.msra.mxu0 %v8365
        %8375 = vmatmul.bf16.gmra.mxu0 %v8362
        %v8376 = vpop.f32.mrf.mxu0
        %v8377 = vadd.f32 0.0, %v8376
        %v8378 = vpop.f32.mrf.mxu0
        %v8379 = vadd.f32 0.0, %v8378
        %8380 = vdwg.mxu0
        %v8381 = vmul.f32 %v8209, 0.17677669
        %v8382 = vmul.f32 %v8211, 0.17677669
        %v8383 = vmul.f32 %v8233, 0.17677669
        %v8384 = vmul.f32 %v8235, 0.17677669
        %v8385 = vmul.f32 %v8257, 0.17677669
        %v8386 = vmul.f32 %v8259, 0.17677669
        %v8387 = vmul.f32 %v8281, 0.17677669
        %v8388 = vmul.f32 %v8283, 0.17677669
        %v8389 = vmul.f32 %v8305, 0.17677669
        %v8390 = vmul.f32 %v8307, 0.17677669
        %v8391 = vmul.f32 %v8329, 0.17677669
        %v8392 = vmul.f32 %v8331, 0.17677669
        %v8393 = vmul.f32 %v8353, 0.17677669
        %v8394 = vmul.f32 %v8355, 0.17677669
        %v8395 = vmul.f32 %v8377, 0.17677669
        %v8396 = vmul.f32 %v8379, 0.17677669
        %v8397 = vsel %vm1758, %v8381, -inf
        %8398 = vmax.xlane.f32.xlu0 %v8397
        %v8399 = vpop.xlane.xlu0 %8398
        %v8400 = vsel %vm1758, %v8382, -inf
        %8401 = vmax.xlane.f32.xlu0 %v8400
        %v8402 = vpop.xlane.xlu0 %8401
        %v8403 = vsel %vm1758, %v8383, -inf
        %8404 = vmax.xlane.f32.xlu0 %v8403
        %v8405 = vpop.xlane.xlu0 %8404
        %v8406 = vsel %vm1758, %v8384, -inf
        %8407 = vmax.xlane.f32.xlu0 %v8406
        %v8408 = vpop.xlane.xlu0 %8407
        %v8409 = vsel %vm1758, %v8385, -inf
        %8410 = vmax.xlane.f32.xlu0 %v8409
        %v8411 = vpop.xlane.xlu0 %8410
        %v8412 = vsel %vm1758, %v8386, -inf
        %8413 = vmax.xlane.f32.xlu0 %v8412
        %v8414 = vpop.xlane.xlu0 %8413
        %v8415 = vsel %vm1758, %v8387, -inf
        %8416 = vmax.xlane.f32.xlu0 %v8415
        %v8417 = vpop.xlane.xlu0 %8416
        %v8418 = vsel %vm1758, %v8388, -inf
        %8419 = vmax.xlane.f32.xlu0 %v8418
        %v8420 = vpop.xlane.xlu0 %8419
        %v8421 = vsel %vm1758, %v8389, -inf
        %8422 = vmax.xlane.f32.xlu0 %v8421
        %v8423 = vpop.xlane.xlu0 %8422
        %v8424 = vsel %vm1758, %v8390, -inf
        %8425 = vmax.xlane.f32.xlu0 %v8424
        %v8426 = vpop.xlane.xlu0 %8425
        %v8427 = vsel %vm1758, %v8391, -inf
        %8428 = vmax.xlane.f32.xlu0 %v8427
        %v8429 = vpop.xlane.xlu0 %8428
        %v8430 = vsel %vm1758, %v8392, -inf
        %8431 = vmax.xlane.f32.xlu0 %v8430
        %v8432 = vpop.xlane.xlu0 %8431
        %v8433 = vsel %vm1758, %v8393, -inf
        %8434 = vmax.xlane.f32.xlu0 %v8433
        %v8435 = vpop.xlane.xlu0 %8434
        %v8436 = vsel %vm1758, %v8394, -inf
        %8437 = vmax.xlane.f32.xlu0 %v8436
        %v8438 = vpop.xlane.xlu0 %8437
        %v8439 = vsel %vm1758, %v8395, -inf
        %8440 = vmax.xlane.f32.xlu0 %v8439
        %v8441 = vpop.xlane.xlu0 %8440
        %v8442 = vsel %vm1758, %v8396, -inf
        %8443 = vmax.xlane.f32.xlu0 %v8442
        %v8444 = vpop.xlane.xlu0 %8443
        %v8445 = vsub.f32 %v8381, %v8399
        %v8446 = vsub.f32 %v8382, %v8402
        %v8447 = vsub.f32 %v8383, %v8405
        %v8448 = vsub.f32 %v8384, %v8408
        %v8449 = vsub.f32 %v8385, %v8411
        %v8450 = vsub.f32 %v8386, %v8414
        %v8451 = vsub.f32 %v8387, %v8417
        %v8452 = vsub.f32 %v8388, %v8420
        %v8453 = vsub.f32 %v8389, %v8423
        %v8454 = vsub.f32 %v8390, %v8426
        %v8455 = vsub.f32 %v8391, %v8429
        %v8456 = vsub.f32 %v8392, %v8432
        %v8457 = vsub.f32 %v8393, %v8435
        %v8458 = vsub.f32 %v8394, %v8438
        %v8459 = vsub.f32 %v8395, %v8441
        %v8460 = vsub.f32 %v8396, %v8444
        %v8461 = vmul.f32 %v8445, 1.442695
        %v8462 = vpow.pop %v8461
        %v8463 = vmul.f32 %v8446, 1.442695
        %v8464 = vpow.pop %v8463
        %v8465 = vmul.f32 %v8447, 1.442695
        %v8466 = vpow.pop %v8465
        %v8467 = vmul.f32 %v8448, 1.442695
        %v8468 = vpow.pop %v8467
        %v8469 = vmul.f32 %v8449, 1.442695
        %v8470 = vpow.pop %v8469
        %v8471 = vmul.f32 %v8450, 1.442695
        %v8472 = vpow.pop %v8471
        %v8473 = vmul.f32 %v8451, 1.442695
        %v8474 = vpow.pop %v8473
        %v8475 = vmul.f32 %v8452, 1.442695
        %v8476 = vpow.pop %v8475
        %v8477 = vmul.f32 %v8453, 1.442695
        %v8478 = vpow.pop %v8477
        %v8479 = vmul.f32 %v8454, 1.442695
        %v8480 = vpow.pop %v8479
        %v8481 = vmul.f32 %v8455, 1.442695
        %v8482 = vpow.pop %v8481
        %v8483 = vmul.f32 %v8456, 1.442695
        %v8484 = vpow.pop %v8483
        %v8485 = vmul.f32 %v8457, 1.442695
        %v8486 = vpow.pop %v8485
        %v8487 = vmul.f32 %v8458, 1.442695
        %v8488 = vpow.pop %v8487
        %v8489 = vmul.f32 %v8459, 1.442695
        %v8490 = vpow.pop %v8489
        %v8491 = vmul.f32 %v8460, 1.442695
        %v8492 = vpow.pop %v8491
        %v8493 = vsel %vm1758, %v8462, 0.0
        %8494 = vadd.xlane.f32.xlu0 %v8493
        %v8495 = vpop.xlane.xlu0 %8494
        %v8496 = vsel %vm1758, %v8464, 0.0
        %8497 = vadd.xlane.f32.xlu0 %v8496
        %v8498 = vpop.xlane.xlu0 %8497
        %v8499 = vsel %vm1758, %v8466, 0.0
        %8500 = vadd.xlane.f32.xlu0 %v8499
        %v8501 = vpop.xlane.xlu0 %8500
        %v8502 = vsel %vm1758, %v8468, 0.0
        %8503 = vadd.xlane.f32.xlu0 %v8502
        %v8504 = vpop.xlane.xlu0 %8503
        %v8505 = vsel %vm1758, %v8470, 0.0
        %8506 = vadd.xlane.f32.xlu0 %v8505
        %v8507 = vpop.xlane.xlu0 %8506
        %v8508 = vsel %vm1758, %v8472, 0.0
        %8509 = vadd.xlane.f32.xlu0 %v8508
        %v8510 = vpop.xlane.xlu0 %8509
        %v8511 = vsel %vm1758, %v8474, 0.0
        %8512 = vadd.xlane.f32.xlu0 %v8511
        %v8513 = vpop.xlane.xlu0 %8512
        %v8514 = vsel %vm1758, %v8476, 0.0
        %8515 = vadd.xlane.f32.xlu0 %v8514
        %v8516 = vpop.xlane.xlu0 %8515
        %v8517 = vsel %vm1758, %v8478, 0.0
        %8518 = vadd.xlane.f32.xlu0 %v8517
        %v8519 = vpop.xlane.xlu0 %8518
        %v8520 = vsel %vm1758, %v8480, 0.0
        %8521 = vadd.xlane.f32.xlu0 %v8520
        %v8522 = vpop.xlane.xlu0 %8521
        %v8523 = vsel %vm1758, %v8482, 0.0
        %8524 = vadd.xlane.f32.xlu0 %v8523
        %v8525 = vpop.xlane.xlu0 %8524
        %v8526 = vsel %vm1758, %v8484, 0.0
        %8527 = vadd.xlane.f32.xlu0 %v8526
        %v8528 = vpop.xlane.xlu0 %8527
        %v8529 = vsel %vm1758, %v8486, 0.0
        %8530 = vadd.xlane.f32.xlu0 %v8529
        %v8531 = vpop.xlane.xlu0 %8530
        %v8532 = vsel %vm1758, %v8488, 0.0
        %8533 = vadd.xlane.f32.xlu0 %v8532
        %v8534 = vpop.xlane.xlu0 %8533
        %v8535 = vsel %vm1758, %v8490, 0.0
        %8536 = vadd.xlane.f32.xlu0 %v8535
        %v8537 = vpop.xlane.xlu0 %8536
        %v8538 = vsel %vm1758, %v8492, 0.0
        %8539 = vadd.xlane.f32.xlu0 %v8538
        %v8540 = vpop.xlane.xlu0 %8539
        %v8541 = vrcp.pop %v8495
        %v8542 = vrcp.pop %v8498
        %v8543 = vrcp.pop %v8501
        %v8544 = vrcp.pop %v8504
        %v8545 = vrcp.pop %v8507
        %v8546 = vrcp.pop %v8510
        %v8547 = vrcp.pop %v8513
        %v8548 = vrcp.pop %v8516
        %v8549 = vrcp.pop %v8519
        %v8550 = vrcp.pop %v8522
        %v8551 = vrcp.pop %v8525
        %v8552 = vrcp.pop %v8528
        %v8553 = vrcp.pop %v8531
        %v8554 = vrcp.pop %v8534
        %v8555 = vrcp.pop %v8537
        %v8556 = vrcp.pop %v8540
        %v8557 = vmul.f32 %v8462, %v8541
        %v8558 = vmul.f32 %v8464, %v8542
        %v8559 = vmul.f32 %v8466, %v8543
        %v8560 = vmul.f32 %v8468, %v8544
        %v8561 = vmul.f32 %v8470, %v8545
        %v8562 = vmul.f32 %v8472, %v8546
        %v8563 = vmul.f32 %v8474, %v8547
        %v8564 = vmul.f32 %v8476, %v8548
        %v8565 = vmul.f32 %v8478, %v8549
        %v8566 = vmul.f32 %v8480, %v8550
        %v8567 = vmul.f32 %v8482, %v8551
        %v8568 = vmul.f32 %v8484, %v8552
        %v8569 = vmul.f32 %v8486, %v8553
        %v8570 = vmul.f32 %v8488, %v8554
        %v8571 = vmul.f32 %v8490, %v8555
        %v8572 = vmul.f32 %v8492, %v8556
        %v8573 = vpack.c.bf16 %v8557, %v8557
        %v8574 = vpack.c.bf16 %v8558, %v8558
        %v8575 = vpack.c.bf16 %v8559, %v8559
        %v8576 = vpack.c.bf16 %v8560, %v8560
        %v8577 = vpack.c.bf16 %v8561, %v8561
        %v8578 = vpack.c.bf16 %v8562, %v8562
        %v8579 = vpack.c.bf16 %v8563, %v8563
        %v8580 = vpack.c.bf16 %v8564, %v8564
        %v8581 = vpack.c.bf16 %v8565, %v8565
        %v8582 = vpack.c.bf16 %v8566, %v8566
        %v8583 = vpack.c.bf16 %v8567, %v8567
        %v8584 = vpack.c.bf16 %v8568, %v8568
        %v8585 = vpack.c.bf16 %v8569, %v8569
        %v8586 = vpack.c.bf16 %v8570, %v8570
        %v8587 = vpack.c.bf16 %v8571, %v8571
        %v8588 = vpack.c.bf16 %v8572, %v8572
        %v8591 = vunpack.c.l.b16 %v8573
        %v8592 = vunpack.c.l.b16 %v8574
        %v8593 = vpack.c.b16 %v8592, %v8591
        %8594 = vrot.lane.b32.xlu0 %v6479, 32
        %v8595 = vpop.permute.xlu0 %8594
        %v8598 = vsel %vm1758, %v8593, 0
        %8600 = vmatpush.bf16.msra.mxu0 0
        %8601 = vmatpush.bf16.msra.mxu0 0
        %8602 = vmatpush.bf16.msra.mxu0 0
        %8603 = vmatpush.bf16.msra.mxu0 0
        %8604 = vmatpush.bf16.msra.mxu0 0
        %8605 = vmatpush.bf16.msra.mxu0 0
        %8606 = vmatpush.bf16.msra.mxu0 0
        %8607 = vmatpush.bf16.msra.mxu0 %v8595
        %8608 = vmatmul.bf16.gmra.mxu0 %v8598
        %v8609 = vpop.f32.mrf.mxu0
        %v8610 = vadd.f32 0.0, %v8609
        %v8611 = vpop.f32.mrf.mxu0
        %v8612 = vadd.f32 0.0, %v8611
        %8613 = vdwg.mxu0
        %v8616 = vunpack.c.l.b16 %v8575
        %v8617 = vunpack.c.l.b16 %v8576
        %v8618 = vpack.c.b16 %v8617, %v8616
        %8619 = vrot.lane.b32.xlu0 %v6507, 32
        %v8620 = vpop.permute.xlu0 %8619
        %v8623 = vsel %vm1758, %v8618, 0
        %8625 = vmatpush.bf16.msra.mxu0 0
        %8626 = vmatpush.bf16.msra.mxu0 0
        %8627 = vmatpush.bf16.msra.mxu0 0
        %8628 = vmatpush.bf16.msra.mxu0 0
        %8629 = vmatpush.bf16.msra.mxu0 0
        %8630 = vmatpush.bf16.msra.mxu0 0
        %8631 = vmatpush.bf16.msra.mxu0 0
        %8632 = vmatpush.bf16.msra.mxu0 %v8620
        %8633 = vmatmul.bf16.gmra.mxu0 %v8623
        %v8634 = vpop.f32.mrf.mxu0
        %v8635 = vadd.f32 0.0, %v8634
        %v8636 = vpop.f32.mrf.mxu0
        %v8637 = vadd.f32 0.0, %v8636
        %8638 = vdwg.mxu0
        %v8641 = vunpack.c.l.b16 %v8577
        %v8642 = vunpack.c.l.b16 %v8578
        %v8643 = vpack.c.b16 %v8642, %v8641
        %8644 = vrot.lane.b32.xlu0 %v6535, 32
        %v8645 = vpop.permute.xlu0 %8644
        %v8648 = vsel %vm1758, %v8643, 0
        %8650 = vmatpush.bf16.msra.mxu0 0
        %8651 = vmatpush.bf16.msra.mxu0 0
        %8652 = vmatpush.bf16.msra.mxu0 0
        %8653 = vmatpush.bf16.msra.mxu0 0
        %8654 = vmatpush.bf16.msra.mxu0 0
        %8655 = vmatpush.bf16.msra.mxu0 0
        %8656 = vmatpush.bf16.msra.mxu0 0
        %8657 = vmatpush.bf16.msra.mxu0 %v8645
        %8658 = vmatmul.bf16.gmra.mxu0 %v8648
        %v8659 = vpop.f32.mrf.mxu0
        %v8660 = vadd.f32 0.0, %v8659
        %v8661 = vpop.f32.mrf.mxu0
        %v8662 = vadd.f32 0.0, %v8661
        %8663 = vdwg.mxu0
        %v8666 = vunpack.c.l.b16 %v8579
        %v8667 = vunpack.c.l.b16 %v8580
        %v8668 = vpack.c.b16 %v8667, %v8666
        %8669 = vrot.lane.b32.xlu0 %v6563, 32
        %v8670 = vpop.permute.xlu0 %8669
        %v8673 = vsel %vm1758, %v8668, 0
        %8675 = vmatpush.bf16.msra.mxu0 0
        %8676 = vmatpush.bf16.msra.mxu0 0
        %8677 = vmatpush.bf16.msra.mxu0 0
        %8678 = vmatpush.bf16.msra.mxu0 0
        %8679 = vmatpush.bf16.msra.mxu0 0
        %8680 = vmatpush.bf16.msra.mxu0 0
        %8681 = vmatpush.bf16.msra.mxu0 0
        %8682 = vmatpush.bf16.msra.mxu0 %v8670
        %8683 = vmatmul.bf16.gmra.mxu0 %v8673
        %v8684 = vpop.f32.mrf.mxu0
        %v8685 = vadd.f32 0.0, %v8684
        %v8686 = vpop.f32.mrf.mxu0
        %v8687 = vadd.f32 0.0, %v8686
        %8688 = vdwg.mxu0
        %v8691 = vunpack.c.l.b16 %v8581
        %v8692 = vunpack.c.l.b16 %v8582
        %v8693 = vpack.c.b16 %v8692, %v8691
        %8694 = vrot.lane.b32.xlu0 %v6591, 32
        %v8695 = vpop.permute.xlu0 %8694
        %v8698 = vsel %vm1758, %v8693, 0
        %8700 = vmatpush.bf16.msra.mxu0 0
        %8701 = vmatpush.bf16.msra.mxu0 0
        %8702 = vmatpush.bf16.msra.mxu0 0
        %8703 = vmatpush.bf16.msra.mxu0 0
        %8704 = vmatpush.bf16.msra.mxu0 0
        %8705 = vmatpush.bf16.msra.mxu0 0
        %8706 = vmatpush.bf16.msra.mxu0 0
        %8707 = vmatpush.bf16.msra.mxu0 %v8695
        %8708 = vmatmul.bf16.gmra.mxu0 %v8698
        %v8709 = vpop.f32.mrf.mxu0
        %v8710 = vadd.f32 0.0, %v8709
        %v8711 = vpop.f32.mrf.mxu0
        %v8712 = vadd.f32 0.0, %v8711
        %8713 = vdwg.mxu0
        %v8716 = vunpack.c.l.b16 %v8583
        %v8717 = vunpack.c.l.b16 %v8584
        %v8718 = vpack.c.b16 %v8717, %v8716
        %8719 = vrot.lane.b32.xlu0 %v6619, 32
        %v8720 = vpop.permute.xlu0 %8719
        %v8723 = vsel %vm1758, %v8718, 0
        %8725 = vmatpush.bf16.msra.mxu0 0
        %8726 = vmatpush.bf16.msra.mxu0 0
        %8727 = vmatpush.bf16.msra.mxu0 0
        %8728 = vmatpush.bf16.msra.mxu0 0
        %8729 = vmatpush.bf16.msra.mxu0 0
        %8730 = vmatpush.bf16.msra.mxu0 0
        %8731 = vmatpush.bf16.msra.mxu0 0
        %8732 = vmatpush.bf16.msra.mxu0 %v8720
        %8733 = vmatmul.bf16.gmra.mxu0 %v8723
        %v8734 = vpop.f32.mrf.mxu0
        %v8735 = vadd.f32 0.0, %v8734
        %v8736 = vpop.f32.mrf.mxu0
        %v8737 = vadd.f32 0.0, %v8736
        %8738 = vdwg.mxu0
        %v8741 = vunpack.c.l.b16 %v8585
        %v8742 = vunpack.c.l.b16 %v8586
        %v8743 = vpack.c.b16 %v8742, %v8741
        %8744 = vrot.lane.b32.xlu0 %v6647, 32
        %v8745 = vpop.permute.xlu0 %8744
        %v8748 = vsel %vm1758, %v8743, 0
        %8750 = vmatpush.bf16.msra.mxu0 0
        %8751 = vmatpush.bf16.msra.mxu0 0
        %8752 = vmatpush.bf16.msra.mxu0 0
        %8753 = vmatpush.bf16.msra.mxu0 0
        %8754 = vmatpush.bf16.msra.mxu0 0
        %8755 = vmatpush.bf16.msra.mxu0 0
        %8756 = vmatpush.bf16.msra.mxu0 0
        %8757 = vmatpush.bf16.msra.mxu0 %v8745
        %8758 = vmatmul.bf16.gmra.mxu0 %v8748
        %v8759 = vpop.f32.mrf.mxu0
        %v8760 = vadd.f32 0.0, %v8759
        %v8761 = vpop.f32.mrf.mxu0
        %v8762 = vadd.f32 0.0, %v8761
        %8763 = vdwg.mxu0
        %v8766 = vunpack.c.l.b16 %v8587
        %v8767 = vunpack.c.l.b16 %v8588
        %v8768 = vpack.c.b16 %v8767, %v8766
        %8769 = vrot.lane.b32.xlu0 %v6675, 32
        %v8770 = vpop.permute.xlu0 %8769
        %v8773 = vsel %vm1758, %v8768, 0
        %8775 = vmatpush.bf16.msra.mxu0 0
        %8776 = vmatpush.bf16.msra.mxu0 0
        %8777 = vmatpush.bf16.msra.mxu0 0
        %8778 = vmatpush.bf16.msra.mxu0 0
        %8779 = vmatpush.bf16.msra.mxu0 0
        %8780 = vmatpush.bf16.msra.mxu0 0
        %8781 = vmatpush.bf16.msra.mxu0 0
        %8782 = vmatpush.bf16.msra.mxu0 %v8770
        %8783 = vmatmul.bf16.gmra.mxu0 %v8773
        %v8784 = vpop.f32.mrf.mxu0
        %v8785 = vadd.f32 0.0, %v8784
        %v8786 = vpop.f32.mrf.mxu0
        %v8787 = vadd.f32 0.0, %v8786
        %8788 = vdwg.mxu0
        %v8789 = vpack.c.bf16 %v8612, %v8610
        %v8790 = vpack.c.bf16 %v8637, %v8635
        %v8791 = vpack.c.bf16 %v8662, %v8660
        %v8792 = vpack.c.bf16 %v8687, %v8685
        %v8793 = vpack.c.bf16 %v8712, %v8710
        %v8794 = vpack.c.bf16 %v8737, %v8735
        %v8795 = vpack.c.bf16 %v8762, %v8760
        %v8796 = vpack.c.bf16 %v8787, %v8785
        %v8801 = vunpack.c.l.b16 %v5678
        %v8802 = vunpack.c.l.b16 %v5679
        %v8803 = vunpack.c.l.b16 %v5680
        %v8804 = vunpack.c.l.b16 %v5681
        %v8805 = vpack.c.b16 %v8802, %v8801
        %v8806 = vpack.c.b16 %v8804, %v8803
        %v8810 = vsel %vm884, %v8789, 0
        %v8813 = vsel %vm884, %v8790, 0
        %v8816 = vsel %vm884, %v8791, 0
        %v8819 = vsel %vm884, %v8792, 0
        %v8822 = vsel %vm884, %v8793, 0
        %v8825 = vsel %vm884, %v8794, 0
        %v8828 = vsel %vm884, %v8795, 0
        %v8831 = vsel %vm884, %v8796, 0
        %8833 = vmatpush.bf16.msra.mxu0 0
        %8834 = vmatpush.bf16.msra.mxu0 0
        %8835 = vmatpush.bf16.msra.mxu0 0
        %8836 = vmatpush.bf16.msra.mxu0 0
        %8837 = vmatpush.bf16.msra.mxu0 0
        %8838 = vmatpush.bf16.msra.mxu0 0
        %8839 = vmatpush.bf16.msra.mxu0 %v8806
        %8840 = vmatpush.bf16.msra.mxu0 %v8805
        %8841 = vmatmul.bf16.gmra.mxu0 %v8810
        %v8842 = vpop.f32.mrf.mxu0
        %v8843 = vadd.f32 0.0, %v8842
        %v8844 = vpop.f32.mrf.mxu0
        %v8845 = vadd.f32 0.0, %v8844
        %8846 = vmatmul.bf16.gmra.mxu0 %v8813
        %v8847 = vpop.f32.mrf.mxu0
        %v8848 = vadd.f32 0.0, %v8847
        %v8849 = vpop.f32.mrf.mxu0
        %v8850 = vadd.f32 0.0, %v8849
        %8851 = vmatmul.bf16.gmra.mxu0 %v8816
        %v8852 = vpop.f32.mrf.mxu0
        %v8853 = vadd.f32 0.0, %v8852
        %v8854 = vpop.f32.mrf.mxu0
        %v8855 = vadd.f32 0.0, %v8854
        %8856 = vmatmul.bf16.gmra.mxu0 %v8819
        %v8857 = vpop.f32.mrf.mxu0
        %v8858 = vadd.f32 0.0, %v8857
        %v8859 = vpop.f32.mrf.mxu0
        %v8860 = vadd.f32 0.0, %v8859
        %8861 = vmatmul.bf16.gmra.mxu0 %v8822
        %v8862 = vpop.f32.mrf.mxu0
        %v8863 = vadd.f32 0.0, %v8862
        %v8864 = vpop.f32.mrf.mxu0
        %v8865 = vadd.f32 0.0, %v8864
        %8866 = vmatmul.bf16.gmra.mxu0 %v8825
        %v8867 = vpop.f32.mrf.mxu0
        %v8868 = vadd.f32 0.0, %v8867
        %v8869 = vpop.f32.mrf.mxu0
        %v8870 = vadd.f32 0.0, %v8869
        %8871 = vmatmul.bf16.gmra.mxu0 %v8828
        %v8872 = vpop.f32.mrf.mxu0
        %v8873 = vadd.f32 0.0, %v8872
        %v8874 = vpop.f32.mrf.mxu0
        %v8875 = vadd.f32 0.0, %v8874
        %8876 = vmatmul.bf16.gmra.mxu0 %v8831
        %v8877 = vpop.f32.mrf.mxu0
        %v8878 = vadd.f32 0.0, %v8877
        %v8879 = vpop.f32.mrf.mxu0
        %v8880 = vadd.f32 0.0, %v8879
        %8881 = vdwg.mxu0
        %v8882 = vadd.f32 %v8173, %v8843
        %v8883 = vadd.f32 %v8174, %v8845
        %v8884 = vadd.f32 %v8175, %v8848
        %v8885 = vadd.f32 %v8176, %v8850
        %v8886 = vadd.f32 %v8177, %v8853
        %v8887 = vadd.f32 %v8178, %v8855
        %v8888 = vadd.f32 %v8179, %v8858
        %v8889 = vadd.f32 %v8180, %v8860
        %v8890 = vadd.f32 %v8181, %v8863
        %v8891 = vadd.f32 %v8182, %v8865
        %v8892 = vadd.f32 %v8183, %v8868
        %v8893 = vadd.f32 %v8184, %v8870
        %v8894 = vadd.f32 %v8185, %v8873
        %v8895 = vadd.f32 %v8186, %v8875
        %v8896 = vadd.f32 %v8187, %v8878
        %v8897 = vadd.f32 %v8188, %v8880
        %v8898 = vld [vmem:[%s8 + $0x1] sm:$0x1]
        %v8899 = vperm.slane %v8898, 0
        %v8900 = vadd.f32 %v8882, %v8899
        %v8901 = vadd.f32 %v8883, %v8899
        %v8902 = vadd.f32 %v8884, %v8899
        %v8903 = vadd.f32 %v8885, %v8899
        %v8904 = vadd.f32 %v8886, %v8899
        %v8905 = vadd.f32 %v8887, %v8899
        %v8906 = vadd.f32 %v8888, %v8899
        %v8907 = vadd.f32 %v8889, %v8899
        %v8908 = vadd.f32 %v8890, %v8899
        %v8909 = vadd.f32 %v8891, %v8899
        %v8910 = vadd.f32 %v8892, %v8899
        %v8911 = vadd.f32 %v8893, %v8899
        %v8912 = vadd.f32 %v8894, %v8899
        %v8913 = vadd.f32 %v8895, %v8899
        %v8914 = vadd.f32 %v8896, %v8899
        %v8915 = vadd.f32 %v8897, %v8899
        %v8916 = vadd.f32 %v5616, %v8900
        %v8917 = vadd.f32 %v5617, %v8901
        %v8918 = vadd.f32 %v5618, %v8902
        %v8919 = vadd.f32 %v5619, %v8903
        %v8920 = vadd.f32 %v5620, %v8904
        %v8921 = vadd.f32 %v5621, %v8905
        %v8922 = vadd.f32 %v5622, %v8906
        %v8923 = vadd.f32 %v5623, %v8907
        %v8924 = vadd.f32 %v5624, %v8908
        %v8925 = vadd.f32 %v5625, %v8909
        %v8926 = vadd.f32 %v5626, %v8910
        %v8927 = vadd.f32 %v5627, %v8911
        %v8928 = vadd.f32 %v5628, %v8912
        %v8929 = vadd.f32 %v5629, %v8913
        %v8930 = vadd.f32 %v5630, %v8914
        %v8931 = vadd.f32 %v5631, %v8915
        %v8932 = vld [vmem:[%s9 + $0x1] sm:$0x1]
        %v8933 = vld [vmem:[#allocation16 + $0x1] sm:$0x1]
        %8934 = vadd.xlane.f32.xlu0 %v8916
        %v8935 = vpop.xlane.xlu0 %8934
        %8936 = vadd.xlane.f32.xlu0 %v8917
        %v8937 = vpop.xlane.xlu0 %8936
        %8938 = vadd.xlane.f32.xlu0 %v8918
        %v8939 = vpop.xlane.xlu0 %8938
        %8940 = vadd.xlane.f32.xlu0 %v8919
        %v8941 = vpop.xlane.xlu0 %8940
        %8942 = vadd.xlane.f32.xlu0 %v8920
        %v8943 = vpop.xlane.xlu0 %8942
        %8944 = vadd.xlane.f32.xlu0 %v8921
        %v8945 = vpop.xlane.xlu0 %8944
        %8946 = vadd.xlane.f32.xlu0 %v8922
        %v8947 = vpop.xlane.xlu0 %8946
        %8948 = vadd.xlane.f32.xlu0 %v8923
        %v8949 = vpop.xlane.xlu0 %8948
        %8950 = vadd.xlane.f32.xlu0 %v8924
        %v8951 = vpop.xlane.xlu0 %8950
        %8952 = vadd.xlane.f32.xlu0 %v8925
        %v8953 = vpop.xlane.xlu0 %8952
        %8954 = vadd.xlane.f32.xlu0 %v8926
        %v8955 = vpop.xlane.xlu0 %8954
        %8956 = vadd.xlane.f32.xlu0 %v8927
        %v8957 = vpop.xlane.xlu0 %8956
        %8958 = vadd.xlane.f32.xlu0 %v8928
        %v8959 = vpop.xlane.xlu0 %8958
        %8960 = vadd.xlane.f32.xlu0 %v8929
        %v8961 = vpop.xlane.xlu0 %8960
        %8962 = vadd.xlane.f32.xlu0 %v8930
        %v8963 = vpop.xlane.xlu0 %8962
        %8964 = vadd.xlane.f32.xlu0 %v8931
        %v8965 = vpop.xlane.xlu0 %8964
        %v8966 = vmul.f32 %v8935, %v4453
        %v8967 = vmul.f32 %v8937, %v4453
        %v8968 = vmul.f32 %v8939, %v4453
        %v8969 = vmul.f32 %v8941, %v4453
        %v8970 = vmul.f32 %v8943, %v4453
        %v8971 = vmul.f32 %v8945, %v4453
        %v8972 = vmul.f32 %v8947, %v4453
        %v8973 = vmul.f32 %v8949, %v4453
        %v8974 = vmul.f32 %v8951, %v4453
        %v8975 = vmul.f32 %v8953, %v4453
        %v8976 = vmul.f32 %v8955, %v4453
        %v8977 = vmul.f32 %v8957, %v4453
        %v8978 = vmul.f32 %v8959, %v4453
        %v8979 = vmul.f32 %v8961, %v4453
        %v8980 = vmul.f32 %v8963, %v4453
        %v8981 = vmul.f32 %v8965, %v4453
        %v8982 = vsub.f32 %v8916, %v8966
        %v8983 = vsub.f32 %v8917, %v8967
        %v8984 = vsub.f32 %v8918, %v8968
        %v8985 = vsub.f32 %v8919, %v8969
        %v8986 = vsub.f32 %v8920, %v8970
        %v8987 = vsub.f32 %v8921, %v8971
        %v8988 = vsub.f32 %v8922, %v8972
        %v8989 = vsub.f32 %v8923, %v8973
        %v8990 = vsub.f32 %v8924, %v8974
        %v8991 = vsub.f32 %v8925, %v8975
        %v8992 = vsub.f32 %v8926, %v8976
        %v8993 = vsub.f32 %v8927, %v8977
        %v8994 = vsub.f32 %v8928, %v8978
        %v8995 = vsub.f32 %v8929, %v8979
        %v8996 = vsub.f32 %v8930, %v8980
        %v8997 = vsub.f32 %v8931, %v8981
        %v8998 = vmul.f32 %v8982, %v8982
        %v8999 = vmul.f32 %v8983, %v8983
        %v9000 = vmul.f32 %v8984, %v8984
        %v9001 = vmul.f32 %v8985, %v8985
        %v9002 = vmul.f32 %v8986, %v8986
        %v9003 = vmul.f32 %v8987, %v8987
        %v9004 = vmul.f32 %v8988, %v8988
        %v9005 = vmul.f32 %v8989, %v8989
        %v9006 = vmul.f32 %v8990, %v8990
        %v9007 = vmul.f32 %v8991, %v8991
        %v9008 = vmul.f32 %v8992, %v8992
        %v9009 = vmul.f32 %v8993, %v8993
        %v9010 = vmul.f32 %v8994, %v8994
        %v9011 = vmul.f32 %v8995, %v8995
        %v9012 = vmul.f32 %v8996, %v8996
        %v9013 = vmul.f32 %v8997, %v8997
        %9014 = vadd.xlane.f32.xlu0 %v8998
        %v9015 = vpop.xlane.xlu0 %9014
        %9016 = vadd.xlane.f32.xlu0 %v8999
        %v9017 = vpop.xlane.xlu0 %9016
        %9018 = vadd.xlane.f32.xlu0 %v9000
        %v9019 = vpop.xlane.xlu0 %9018
        %9020 = vadd.xlane.f32.xlu0 %v9001
        %v9021 = vpop.xlane.xlu0 %9020
        %9022 = vadd.xlane.f32.xlu0 %v9002
        %v9023 = vpop.xlane.xlu0 %9022
        %9024 = vadd.xlane.f32.xlu0 %v9003
        %v9025 = vpop.xlane.xlu0 %9024
        %9026 = vadd.xlane.f32.xlu0 %v9004
        %v9027 = vpop.xlane.xlu0 %9026
        %9028 = vadd.xlane.f32.xlu0 %v9005
        %v9029 = vpop.xlane.xlu0 %9028
        %9030 = vadd.xlane.f32.xlu0 %v9006
        %v9031 = vpop.xlane.xlu0 %9030
        %9032 = vadd.xlane.f32.xlu0 %v9007
        %v9033 = vpop.xlane.xlu0 %9032
        %9034 = vadd.xlane.f32.xlu0 %v9008
        %v9035 = vpop.xlane.xlu0 %9034
        %9036 = vadd.xlane.f32.xlu0 %v9009
        %v9037 = vpop.xlane.xlu0 %9036
        %9038 = vadd.xlane.f32.xlu0 %v9010
        %v9039 = vpop.xlane.xlu0 %9038
        %9040 = vadd.xlane.f32.xlu0 %v9011
        %v9041 = vpop.xlane.xlu0 %9040
        %9042 = vadd.xlane.f32.xlu0 %v9012
        %v9043 = vpop.xlane.xlu0 %9042
        %9044 = vadd.xlane.f32.xlu0 %v9013
        %v9045 = vpop.xlane.xlu0 %9044
        %v9046 = vmul.f32 %v9015, %v4453
        %v9047 = vmul.f32 %v9017, %v4453
        %v9048 = vmul.f32 %v9019, %v4453
        %v9049 = vmul.f32 %v9021, %v4453
        %v9050 = vmul.f32 %v9023, %v4453
        %v9051 = vmul.f32 %v9025, %v4453
        %v9052 = vmul.f32 %v9027, %v4453
        %v9053 = vmul.f32 %v9029, %v4453
        %v9054 = vmul.f32 %v9031, %v4453
        %v9055 = vmul.f32 %v9033, %v4453
        %v9056 = vmul.f32 %v9035, %v4453
        %v9057 = vmul.f32 %v9037, %v4453
        %v9058 = vmul.f32 %v9039, %v4453
        %v9059 = vmul.f32 %v9041, %v4453
        %v9060 = vmul.f32 %v9043, %v4453
        %v9061 = vmul.f32 %v9045, %v4453
        %v9062 = vadd.f32 %v9046, 1e-05
        %v9063 = vadd.f32 %v9047, 1e-05
        %v9064 = vadd.f32 %v9048, 1e-05
        %v9065 = vadd.f32 %v9049, 1e-05
        %v9066 = vadd.f32 %v9050, 1e-05
        %v9067 = vadd.f32 %v9051, 1e-05
        %v9068 = vadd.f32 %v9052, 1e-05
        %v9069 = vadd.f32 %v9053, 1e-05
        %v9070 = vadd.f32 %v9054, 1e-05
        %v9071 = vadd.f32 %v9055, 1e-05
        %v9072 = vadd.f32 %v9056, 1e-05
        %v9073 = vadd.f32 %v9057, 1e-05
        %v9074 = vadd.f32 %v9058, 1e-05
        %v9075 = vadd.f32 %v9059, 1e-05
        %v9076 = vadd.f32 %v9060, 1e-05
        %v9077 = vadd.f32 %v9061, 1e-05
        %v9078 = vrsqrt.pop %v9062
        %v9079 = vmul.f32 %v9078, %v9062
        %v9080 = vmul.f32 %v9079, %v9078
        %v9081 = vmul.f32 0.5, %v9080
        %v9082 = vsub.f32 1.5, %v9081
        %v9083 = vmul.f32 %v9078, %v9082
        %vm9084 = vweird.f32 %v9062
        %vm9085 = vweird.f32 %v9078
        %vm9086 = vmor %vm9084, %vm9085
        %v9087 = vsel %vm9086, %v9078, %v9083
        %v9088 = vrsqrt.pop %v9063
        %v9089 = vmul.f32 %v9088, %v9063
        %v9090 = vmul.f32 %v9089, %v9088
        %v9091 = vmul.f32 0.5, %v9090
        %v9092 = vsub.f32 1.5, %v9091
        %v9093 = vmul.f32 %v9088, %v9092
        %vm9094 = vweird.f32 %v9063
        %vm9095 = vweird.f32 %v9088
        %vm9096 = vmor %vm9094, %vm9095
        %v9097 = vsel %vm9096, %v9088, %v9093
        %v9098 = vrsqrt.pop %v9064
        %v9099 = vmul.f32 %v9098, %v9064
        %v9100 = vmul.f32 %v9099, %v9098
        %v9101 = vmul.f32 0.5, %v9100
        %v9102 = vsub.f32 1.5, %v9101
        %v9103 = vmul.f32 %v9098, %v9102
        %vm9104 = vweird.f32 %v9064
        %vm9105 = vweird.f32 %v9098
        %vm9106 = vmor %vm9104, %vm9105
        %v9107 = vsel %vm9106, %v9098, %v9103
        %v9108 = vrsqrt.pop %v9065
        %v9109 = vmul.f32 %v9108, %v9065
        %v9110 = vmul.f32 %v9109, %v9108
        %v9111 = vmul.f32 0.5, %v9110
        %v9112 = vsub.f32 1.5, %v9111
        %v9113 = vmul.f32 %v9108, %v9112
        %vm9114 = vweird.f32 %v9065
        %vm9115 = vweird.f32 %v9108
        %vm9116 = vmor %vm9114, %vm9115
        %v9117 = vsel %vm9116, %v9108, %v9113
        %v9118 = vrsqrt.pop %v9066
        %v9119 = vmul.f32 %v9118, %v9066
        %v9120 = vmul.f32 %v9119, %v9118
        %v9121 = vmul.f32 0.5, %v9120
        %v9122 = vsub.f32 1.5, %v9121
        %v9123 = vmul.f32 %v9118, %v9122
        %vm9124 = vweird.f32 %v9066
        %vm9125 = vweird.f32 %v9118
        %vm9126 = vmor %vm9124, %vm9125
        %v9127 = vsel %vm9126, %v9118, %v9123
        %v9128 = vrsqrt.pop %v9067
        %v9129 = vmul.f32 %v9128, %v9067
        %v9130 = vmul.f32 %v9129, %v9128
        %v9131 = vmul.f32 0.5, %v9130
        %v9132 = vsub.f32 1.5, %v9131
        %v9133 = vmul.f32 %v9128, %v9132
        %vm9134 = vweird.f32 %v9067
        %vm9135 = vweird.f32 %v9128
        %vm9136 = vmor %vm9134, %vm9135
        %v9137 = vsel %vm9136, %v9128, %v9133
        %v9138 = vrsqrt.pop %v9068
        %v9139 = vmul.f32 %v9138, %v9068
        %v9140 = vmul.f32 %v9139, %v9138
        %v9141 = vmul.f32 0.5, %v9140
        %v9142 = vsub.f32 1.5, %v9141
        %v9143 = vmul.f32 %v9138, %v9142
        %vm9144 = vweird.f32 %v9068
        %vm9145 = vweird.f32 %v9138
        %vm9146 = vmor %vm9144, %vm9145
        %v9147 = vsel %vm9146, %v9138, %v9143
        %v9148 = vrsqrt.pop %v9069
        %v9149 = vmul.f32 %v9148, %v9069
        %v9150 = vmul.f32 %v9149, %v9148
        %v9151 = vmul.f32 0.5, %v9150
        %v9152 = vsub.f32 1.5, %v9151
        %v9153 = vmul.f32 %v9148, %v9152
        %vm9154 = vweird.f32 %v9069
        %vm9155 = vweird.f32 %v9148
        %vm9156 = vmor %vm9154, %vm9155
        %v9157 = vsel %vm9156, %v9148, %v9153
        %v9158 = vrsqrt.pop %v9070
        %v9159 = vmul.f32 %v9158, %v9070
        %v9160 = vmul.f32 %v9159, %v9158
        %v9161 = vmul.f32 0.5, %v9160
        %v9162 = vsub.f32 1.5, %v9161
        %v9163 = vmul.f32 %v9158, %v9162
        %vm9164 = vweird.f32 %v9070
        %vm9165 = vweird.f32 %v9158
        %vm9166 = vmor %vm9164, %vm9165
        %v9167 = vsel %vm9166, %v9158, %v9163
        %v9168 = vrsqrt.pop %v9071
        %v9169 = vmul.f32 %v9168, %v9071
        %v9170 = vmul.f32 %v9169, %v9168
        %v9171 = vmul.f32 0.5, %v9170
        %v9172 = vsub.f32 1.5, %v9171
        %v9173 = vmul.f32 %v9168, %v9172
        %vm9174 = vweird.f32 %v9071
        %vm9175 = vweird.f32 %v9168
        %vm9176 = vmor %vm9174, %vm9175
        %v9177 = vsel %vm9176, %v9168, %v9173
        %v9178 = vrsqrt.pop %v9072
        %v9179 = vmul.f32 %v9178, %v9072
        %v9180 = vmul.f32 %v9179, %v9178
        %v9181 = vmul.f32 0.5, %v9180
        %v9182 = vsub.f32 1.5, %v9181
        %v9183 = vmul.f32 %v9178, %v9182
        %vm9184 = vweird.f32 %v9072
        %vm9185 = vweird.f32 %v9178
        %vm9186 = vmor %vm9184, %vm9185
        %v9187 = vsel %vm9186, %v9178, %v9183
        %v9188 = vrsqrt.pop %v9073
        %v9189 = vmul.f32 %v9188, %v9073
        %v9190 = vmul.f32 %v9189, %v9188
        %v9191 = vmul.f32 0.5, %v9190
        %v9192 = vsub.f32 1.5, %v9191
        %v9193 = vmul.f32 %v9188, %v9192
        %vm9194 = vweird.f32 %v9073
        %vm9195 = vweird.f32 %v9188
        %vm9196 = vmor %vm9194, %vm9195
        %v9197 = vsel %vm9196, %v9188, %v9193
        %v9198 = vrsqrt.pop %v9074
        %v9199 = vmul.f32 %v9198, %v9074
        %v9200 = vmul.f32 %v9199, %v9198
        %v9201 = vmul.f32 0.5, %v9200
        %v9202 = vsub.f32 1.5, %v9201
        %v9203 = vmul.f32 %v9198, %v9202
        %vm9204 = vweird.f32 %v9074
        %vm9205 = vweird.f32 %v9198
        %vm9206 = vmor %vm9204, %vm9205
        %v9207 = vsel %vm9206, %v9198, %v9203
        %v9208 = vrsqrt.pop %v9075
        %v9209 = vmul.f32 %v9208, %v9075
        %v9210 = vmul.f32 %v9209, %v9208
        %v9211 = vmul.f32 0.5, %v9210
        %v9212 = vsub.f32 1.5, %v9211
        %v9213 = vmul.f32 %v9208, %v9212
        %vm9214 = vweird.f32 %v9075
        %vm9215 = vweird.f32 %v9208
        %vm9216 = vmor %vm9214, %vm9215
        %v9217 = vsel %vm9216, %v9208, %v9213
        %v9218 = vrsqrt.pop %v9076
        %v9219 = vmul.f32 %v9218, %v9076
        %v9220 = vmul.f32 %v9219, %v9218
        %v9221 = vmul.f32 0.5, %v9220
        %v9222 = vsub.f32 1.5, %v9221
        %v9223 = vmul.f32 %v9218, %v9222
        %vm9224 = vweird.f32 %v9076
        %vm9225 = vweird.f32 %v9218
        %vm9226 = vmor %vm9224, %vm9225
        %v9227 = vsel %vm9226, %v9218, %v9223
        %v9228 = vrsqrt.pop %v9077
        %v9229 = vmul.f32 %v9228, %v9077
        %v9230 = vmul.f32 %v9229, %v9228
        %v9231 = vmul.f32 0.5, %v9230
        %v9232 = vsub.f32 1.5, %v9231
        %v9233 = vmul.f32 %v9228, %v9232
        %vm9234 = vweird.f32 %v9077
        %vm9235 = vweird.f32 %v9228
        %vm9236 = vmor %vm9234, %vm9235
        %v9237 = vsel %vm9236, %v9228, %v9233
        %v9238 = vmul.f32 %v8982, %v9087
        %v9239 = vmul.f32 %v8983, %v9097
        %v9240 = vmul.f32 %v8984, %v9107
        %v9241 = vmul.f32 %v8985, %v9117
        %v9242 = vmul.f32 %v8986, %v9127
        %v9243 = vmul.f32 %v8987, %v9137
        %v9244 = vmul.f32 %v8988, %v9147
        %v9245 = vmul.f32 %v8989, %v9157
        %v9246 = vmul.f32 %v8990, %v9167
        %v9247 = vmul.f32 %v8991, %v9177
        %v9248 = vmul.f32 %v8992, %v9187
        %v9249 = vmul.f32 %v8993, %v9197
        %v9250 = vmul.f32 %v8994, %v9207
        %v9251 = vmul.f32 %v8995, %v9217
        %v9252 = vmul.f32 %v8996, %v9227
        %v9253 = vmul.f32 %v8997, %v9237
        %v9254 = vperm.slane %v8932, 0
        %v9255 = vmul.f32 %v9238, %v9254
        %v9256 = vmul.f32 %v9239, %v9254
        %v9257 = vmul.f32 %v9240, %v9254
        %v9258 = vmul.f32 %v9241, %v9254
        %v9259 = vmul.f32 %v9242, %v9254
        %v9260 = vmul.f32 %v9243, %v9254
        %v9261 = vmul.f32 %v9244, %v9254
        %v9262 = vmul.f32 %v9245, %v9254
        %v9263 = vmul.f32 %v9246, %v9254
        %v9264 = vmul.f32 %v9247, %v9254
        %v9265 = vmul.f32 %v9248, %v9254
        %v9266 = vmul.f32 %v9249, %v9254
        %v9267 = vmul.f32 %v9250, %v9254
        %v9268 = vmul.f32 %v9251, %v9254
        %v9269 = vmul.f32 %v9252, %v9254
        %v9270 = vmul.f32 %v9253, %v9254
        %v9271 = vperm.slane %v8933, 0
        %v9272 = vadd.f32 %v9255, %v9271
        %v9273 = vadd.f32 %v9256, %v9271
        %v9274 = vadd.f32 %v9257, %v9271
        %v9275 = vadd.f32 %v9258, %v9271
        %v9276 = vadd.f32 %v9259, %v9271
        %v9277 = vadd.f32 %v9260, %v9271
        %v9278 = vadd.f32 %v9261, %v9271
        %v9279 = vadd.f32 %v9262, %v9271
        %v9280 = vadd.f32 %v9263, %v9271
        %v9281 = vadd.f32 %v9264, %v9271
        %v9282 = vadd.f32 %v9265, %v9271
        %v9283 = vadd.f32 %v9266, %v9271
        %v9284 = vadd.f32 %v9267, %v9271
        %v9285 = vadd.f32 %v9268, %v9271
        %v9286 = vadd.f32 %v9269, %v9271
        %v9287 = vadd.f32 %v9270, %v9271
        %s9288 = scalar_lea.vmem [#allocation17], 128
        %v9289 = vld [vmem:[%s9288] sm:$0xff]
        %v9290 = vld [vmem:[%s9288 + $0x8] sm:$0xff]
        %v9291 = vld [vmem:[%s9288 + $0x10] sm:$0xff]
        %v9292 = vld [vmem:[%s9288 + $0x18] sm:$0xff]
        %v9293 = vld [vmem:[%s9288 + $0x20] sm:$0xff]
        %v9294 = vld [vmem:[%s9288 + $0x28] sm:$0xff]
        %v9295 = vld [vmem:[%s9288 + $0x30] sm:$0xff]
        %v9296 = vld [vmem:[%s9288 + $0x38] sm:$0xff]
        %v9297 = vld [vmem:[%s9288 + $0x40] sm:$0xff]
        %v9298 = vld [vmem:[%s9288 + $0x48] sm:$0xff]
        %v9299 = vld [vmem:[%s9288 + $0x50] sm:$0xff]
        %v9300 = vld [vmem:[%s9288 + $0x58] sm:$0xff]
        %v9301 = vld [vmem:[%s9288 + $0x60] sm:$0xff]
        %v9302 = vld [vmem:[%s9288 + $0x68] sm:$0xff]
        %v9303 = vld [vmem:[%s9288 + $0x70] sm:$0xff]
        %v9304 = vld [vmem:[%s9288 + $0x78] sm:$0xff]
        %v9305 = vpack.c.bf16 %v9273, %v9272
        %v9306 = vpack.c.bf16 %v9275, %v9274
        %v9307 = vpack.c.bf16 %v9277, %v9276
        %v9308 = vpack.c.bf16 %v9279, %v9278
        %v9309 = vpack.c.bf16 %v9281, %v9280
        %v9310 = vpack.c.bf16 %v9283, %v9282
        %v9311 = vpack.c.bf16 %v9285, %v9284
        %v9312 = vpack.c.bf16 %v9287, %v9286
        %s9313 = scalar_lea.vmem %s12, 1
        %v9314 = vld [vmem:[%s9313] ss:$2 sm:$0x3]
        %v9316 = vperm.slane %v9314, 0
        %v9317 = vperm.slane %v9314, 1
        %v9336 = vunpack.c.l.b16 %v9289
        %v9337 = vunpack.c.h.b16 %v9289
        %v9338 = vunpack.c.l.b16 %v9290
        %v9339 = vunpack.c.h.b16 %v9290
        %v9340 = vunpack.c.l.b16 %v9291
        %v9341 = vunpack.c.h.b16 %v9291
        %v9342 = vunpack.c.l.b16 %v9292
        %v9343 = vunpack.c.h.b16 %v9292
        %v9344 = vunpack.c.l.b16 %v9293
        %v9345 = vunpack.c.h.b16 %v9293
        %v9346 = vunpack.c.l.b16 %v9294
        %v9347 = vunpack.c.h.b16 %v9294
        %v9348 = vunpack.c.l.b16 %v9295
        %v9349 = vunpack.c.h.b16 %v9295
        %v9350 = vunpack.c.l.b16 %v9296
        %v9351 = vunpack.c.h.b16 %v9296
        %v9352 = vunpack.c.l.b16 %v9297
        %v9353 = vunpack.c.h.b16 %v9297
        %v9354 = vunpack.c.l.b16 %v9298
        %v9355 = vunpack.c.h.b16 %v9298
        %v9356 = vunpack.c.l.b16 %v9299
        %v9357 = vunpack.c.h.b16 %v9299
        %v9358 = vunpack.c.l.b16 %v9300
        %v9359 = vunpack.c.h.b16 %v9300
        %v9360 = vunpack.c.l.b16 %v9301
        %v9361 = vunpack.c.h.b16 %v9301
        %v9362 = vunpack.c.l.b16 %v9302
        %v9363 = vunpack.c.h.b16 %v9302
        %v9364 = vunpack.c.l.b16 %v9303
        %v9365 = vunpack.c.h.b16 %v9303
        %v9366 = vunpack.c.l.b16 %v9304
        %v9367 = vunpack.c.h.b16 %v9304
        %v9368 = vpack.c.b16 %v9338, %v9336
        %v9369 = vpack.c.b16 %v9339, %v9337
        %v9370 = vpack.c.b16 %v9342, %v9340
        %v9371 = vpack.c.b16 %v9343, %v9341
        %v9372 = vpack.c.b16 %v9346, %v9344
        %v9373 = vpack.c.b16 %v9347, %v9345
        %v9374 = vpack.c.b16 %v9350, %v9348
        %v9375 = vpack.c.b16 %v9351, %v9349
        %v9376 = vpack.c.b16 %v9354, %v9352
        %v9377 = vpack.c.b16 %v9355, %v9353
        %v9378 = vpack.c.b16 %v9358, %v9356
        %v9379 = vpack.c.b16 %v9359, %v9357
        %v9380 = vpack.c.b16 %v9362, %v9360
        %v9381 = vpack.c.b16 %v9363, %v9361
        %v9382 = vpack.c.b16 %v9366, %v9364
        %v9383 = vpack.c.b16 %v9367, %v9365
        %9400 = vmatpush.bf16.msra.mxu0 %v9382
        %9401 = vmatpush.bf16.msra.mxu0 %v9380
        %9402 = vmatpush.bf16.msra.mxu0 %v9378
        %9403 = vmatpush.bf16.msra.mxu0 %v9376
        %9404 = vmatpush.bf16.msra.mxu0 %v9374
        %9405 = vmatpush.bf16.msra.mxu0 %v9372
        %9406 = vmatpush.bf16.msra.mxu0 %v9370
        %9407 = vmatpush.bf16.msra.mxu0 %v9368
        %9408 = vmatmul.bf16.gmra.mxu0 %v9305
        %v9409 = vpop.f32.mrf.mxu0
        %v9410 = vadd.f32 %v9316, %v9409
        %v9411 = vpop.f32.mrf.mxu0
        %v9412 = vadd.f32 %v9316, %v9411
        %9413 = vmatmul.bf16.gmra.mxu0 %v9306
        %v9414 = vpop.f32.mrf.mxu0
        %v9415 = vadd.f32 %v9316, %v9414
        %v9416 = vpop.f32.mrf.mxu0
        %v9417 = vadd.f32 %v9316, %v9416
        %9418 = vmatmul.bf16.gmra.mxu0 %v9307
        %v9419 = vpop.f32.mrf.mxu0
        %v9420 = vadd.f32 %v9316, %v9419
        %v9421 = vpop.f32.mrf.mxu0
        %v9422 = vadd.f32 %v9316, %v9421
        %9423 = vmatmul.bf16.gmra.mxu0 %v9308
        %v9424 = vpop.f32.mrf.mxu0
        %v9425 = vadd.f32 %v9316, %v9424
        %v9426 = vpop.f32.mrf.mxu0
        %v9427 = vadd.f32 %v9316, %v9426
        %9428 = vmatmul.bf16.gmra.mxu0 %v9309
        %v9429 = vpop.f32.mrf.mxu0
        %v9430 = vadd.f32 %v9316, %v9429
        %v9431 = vpop.f32.mrf.mxu0
        %v9432 = vadd.f32 %v9316, %v9431
        %9433 = vmatmul.bf16.gmra.mxu0 %v9310
        %v9434 = vpop.f32.mrf.mxu0
        %v9435 = vadd.f32 %v9316, %v9434
        %v9436 = vpop.f32.mrf.mxu0
        %v9437 = vadd.f32 %v9316, %v9436
        %9438 = vmatmul.bf16.gmra.mxu0 %v9311
        %v9439 = vpop.f32.mrf.mxu0
        %v9440 = vadd.f32 %v9316, %v9439
        %v9441 = vpop.f32.mrf.mxu0
        %v9442 = vadd.f32 %v9316, %v9441
        %9443 = vmatmul.bf16.gmra.mxu0 %v9312
        %v9444 = vpop.f32.mrf.mxu0
        %v9445 = vadd.f32 %v9316, %v9444
        %v9446 = vpop.f32.mrf.mxu0
        %v9447 = vadd.f32 %v9316, %v9446
        %9448 = vdwg.mxu0
        %9449 = vmatpush.bf16.msra.mxu0 %v9383
        %9450 = vmatpush.bf16.msra.mxu0 %v9381
        %9451 = vmatpush.bf16.msra.mxu0 %v9379
        %9452 = vmatpush.bf16.msra.mxu0 %v9377
        %9453 = vmatpush.bf16.msra.mxu0 %v9375
        %9454 = vmatpush.bf16.msra.mxu0 %v9373
        %9455 = vmatpush.bf16.msra.mxu0 %v9371
        %9456 = vmatpush.bf16.msra.mxu0 %v9369
        %9457 = vmatmul.bf16.gmra.mxu0 %v9305
        %v9458 = vpop.f32.mrf.mxu0
        %v9459 = vadd.f32 %v9317, %v9458
        %v9460 = vpop.f32.mrf.mxu0
        %v9461 = vadd.f32 %v9317, %v9460
        %9462 = vmatmul.bf16.gmra.mxu0 %v9306
        %v9463 = vpop.f32.mrf.mxu0
        %v9464 = vadd.f32 %v9317, %v9463
        %v9465 = vpop.f32.mrf.mxu0
        %v9466 = vadd.f32 %v9317, %v9465
        %9467 = vmatmul.bf16.gmra.mxu0 %v9307
        %v9468 = vpop.f32.mrf.mxu0
        %v9469 = vadd.f32 %v9317, %v9468
        %v9470 = vpop.f32.mrf.mxu0
        %v9471 = vadd.f32 %v9317, %v9470
        %9472 = vmatmul.bf16.gmra.mxu0 %v9308
        %v9473 = vpop.f32.mrf.mxu0
        %v9474 = vadd.f32 %v9317, %v9473
        %v9475 = vpop.f32.mrf.mxu0
        %v9476 = vadd.f32 %v9317, %v9475
        %9477 = vmatmul.bf16.gmra.mxu0 %v9309
        %v9478 = vpop.f32.mrf.mxu0
        %v9479 = vadd.f32 %v9317, %v9478
        %v9480 = vpop.f32.mrf.mxu0
        %v9481 = vadd.f32 %v9317, %v9480
        %9482 = vmatmul.bf16.gmra.mxu0 %v9310
        %v9483 = vpop.f32.mrf.mxu0
        %v9484 = vadd.f32 %v9317, %v9483
        %v9485 = vpop.f32.mrf.mxu0
        %v9486 = vadd.f32 %v9317, %v9485
        %9487 = vmatmul.bf16.gmra.mxu0 %v9311
        %v9488 = vpop.f32.mrf.mxu0
        %v9489 = vadd.f32 %v9317, %v9488
        %v9490 = vpop.f32.mrf.mxu0
        %v9491 = vadd.f32 %v9317, %v9490
        %9492 = vmatmul.bf16.gmra.mxu0 %v9312
        %v9493 = vpop.f32.mrf.mxu0
        %v9494 = vadd.f32 %v9317, %v9493
        %v9495 = vpop.f32.mrf.mxu0
        %v9496 = vadd.f32 %v9317, %v9495
        %9497 = vdwg.mxu0
        %v9498 = vmax.f32 %v9410, 0.0
        %v9499 = vmax.f32 %v9459, 0.0
        %v9500 = vmax.f32 %v9412, 0.0
        %v9501 = vmax.f32 %v9461, 0.0
        %v9502 = vmax.f32 %v9415, 0.0
        %v9503 = vmax.f32 %v9464, 0.0
        %v9504 = vmax.f32 %v9417, 0.0
        %v9505 = vmax.f32 %v9466, 0.0
        %v9506 = vmax.f32 %v9420, 0.0
        %v9507 = vmax.f32 %v9469, 0.0
        %v9508 = vmax.f32 %v9422, 0.0
        %v9509 = vmax.f32 %v9471, 0.0
        %v9510 = vmax.f32 %v9425, 0.0
        %v9511 = vmax.f32 %v9474, 0.0
        %v9512 = vmax.f32 %v9427, 0.0
        %v9513 = vmax.f32 %v9476, 0.0
        %v9514 = vmax.f32 %v9430, 0.0
        %v9515 = vmax.f32 %v9479, 0.0
        %v9516 = vmax.f32 %v9432, 0.0
        %v9517 = vmax.f32 %v9481, 0.0
        %v9518 = vmax.f32 %v9435, 0.0
        %v9519 = vmax.f32 %v9484, 0.0
        %v9520 = vmax.f32 %v9437, 0.0
        %v9521 = vmax.f32 %v9486, 0.0
        %v9522 = vmax.f32 %v9440, 0.0
        %v9523 = vmax.f32 %v9489, 0.0
        %v9524 = vmax.f32 %v9442, 0.0
        %v9525 = vmax.f32 %v9491, 0.0
        %v9526 = vmax.f32 %v9445, 0.0
        %v9527 = vmax.f32 %v9494, 0.0
        %v9528 = vmax.f32 %v9447, 0.0
        %v9529 = vmax.f32 %v9496, 0.0
        %s9530 = scalar_lea.vmem [#allocation19], 128
        %v9531 = vld [vmem:[%s9530] sm:$0xf]
        %v9532 = vld [vmem:[%s9530 + $0x4] sm:$0xf]
        %v9533 = vld [vmem:[%s9530 + $0x8] sm:$0xf]
        %v9534 = vld [vmem:[%s9530 + $0xc] sm:$0xf]
        %v9535 = vld [vmem:[%s9530 + $0x10] sm:$0xf]
        %v9536 = vld [vmem:[%s9530 + $0x14] sm:$0xf]
        %v9537 = vld [vmem:[%s9530 + $0x18] sm:$0xf]
        %v9538 = vld [vmem:[%s9530 + $0x1c] sm:$0xf]
        %v9539 = vld [vmem:[%s9530 + $0x20] sm:$0xf]
        %v9540 = vld [vmem:[%s9530 + $0x24] sm:$0xf]
        %v9541 = vld [vmem:[%s9530 + $0x28] sm:$0xf]
        %v9542 = vld [vmem:[%s9530 + $0x2c] sm:$0xf]
        %v9543 = vld [vmem:[%s9530 + $0x30] sm:$0xf]
        %v9544 = vld [vmem:[%s9530 + $0x34] sm:$0xf]
        %v9545 = vld [vmem:[%s9530 + $0x38] sm:$0xf]
        %v9546 = vld [vmem:[%s9530 + $0x3c] sm:$0xf]
        %v9547 = vld [vmem:[%s9530 + $0x40] sm:$0xf]
        %v9548 = vld [vmem:[%s9530 + $0x44] sm:$0xf]
        %v9549 = vld [vmem:[%s9530 + $0x48] sm:$0xf]
        %v9550 = vld [vmem:[%s9530 + $0x4c] sm:$0xf]
        %v9551 = vld [vmem:[%s9530 + $0x50] sm:$0xf]
        %v9552 = vld [vmem:[%s9530 + $0x54] sm:$0xf]
        %v9553 = vld [vmem:[%s9530 + $0x58] sm:$0xf]
        %v9554 = vld [vmem:[%s9530 + $0x5c] sm:$0xf]
        %v9555 = vld [vmem:[%s9530 + $0x60] sm:$0xf]
        %v9556 = vld [vmem:[%s9530 + $0x64] sm:$0xf]
        %v9557 = vld [vmem:[%s9530 + $0x68] sm:$0xf]
        %v9558 = vld [vmem:[%s9530 + $0x6c] sm:$0xf]
        %v9559 = vld [vmem:[%s9530 + $0x70] sm:$0xf]
        %v9560 = vld [vmem:[%s9530 + $0x74] sm:$0xf]
        %v9561 = vld [vmem:[%s9530 + $0x78] sm:$0xf]
        %v9562 = vld [vmem:[%s9530 + $0x7c] sm:$0xf]
        %v9563 = vpack.c.bf16 %v9500, %v9498
        %v9564 = vpack.c.bf16 %v9501, %v9499
        %v9565 = vpack.c.bf16 %v9504, %v9502
        %v9566 = vpack.c.bf16 %v9505, %v9503
        %v9567 = vpack.c.bf16 %v9508, %v9506
        %v9568 = vpack.c.bf16 %v9509, %v9507
        %v9569 = vpack.c.bf16 %v9512, %v9510
        %v9570 = vpack.c.bf16 %v9513, %v9511
        %v9571 = vpack.c.bf16 %v9516, %v9514
        %v9572 = vpack.c.bf16 %v9517, %v9515
        %v9573 = vpack.c.bf16 %v9520, %v9518
        %v9574 = vpack.c.bf16 %v9521, %v9519
        %v9575 = vpack.c.bf16 %v9524, %v9522
        %v9576 = vpack.c.bf16 %v9525, %v9523
        %v9577 = vpack.c.bf16 %v9528, %v9526
        %v9578 = vpack.c.bf16 %v9529, %v9527
        %v9579 = vld [vmem:[%s14 + $0x1] sm:$0x1]
        %v9580 = vperm.slane %v9579, 0
        %v9613 = vunpack.c.l.b16 %v9531
        %v9614 = vunpack.c.l.b16 %v9532
        %v9615 = vunpack.c.l.b16 %v9533
        %v9616 = vunpack.c.l.b16 %v9534
        %v9617 = vunpack.c.l.b16 %v9535
        %v9618 = vunpack.c.l.b16 %v9536
        %v9619 = vunpack.c.l.b16 %v9537
        %v9620 = vunpack.c.l.b16 %v9538
        %v9621 = vunpack.c.l.b16 %v9539
        %v9622 = vunpack.c.l.b16 %v9540
        %v9623 = vunpack.c.l.b16 %v9541
        %v9624 = vunpack.c.l.b16 %v9542
        %v9625 = vunpack.c.l.b16 %v9543
        %v9626 = vunpack.c.l.b16 %v9544
        %v9627 = vunpack.c.l.b16 %v9545
        %v9628 = vunpack.c.l.b16 %v9546
        %v9629 = vunpack.c.l.b16 %v9547
        %v9630 = vunpack.c.l.b16 %v9548
        %v9631 = vunpack.c.l.b16 %v9549
        %v9632 = vunpack.c.l.b16 %v9550
        %v9633 = vunpack.c.l.b16 %v9551
        %v9634 = vunpack.c.l.b16 %v9552
        %v9635 = vunpack.c.l.b16 %v9553
        %v9636 = vunpack.c.l.b16 %v9554
        %v9637 = vunpack.c.l.b16 %v9555
        %v9638 = vunpack.c.l.b16 %v9556
        %v9639 = vunpack.c.l.b16 %v9557
        %v9640 = vunpack.c.l.b16 %v9558
        %v9641 = vunpack.c.l.b16 %v9559
        %v9642 = vunpack.c.l.b16 %v9560
        %v9643 = vunpack.c.l.b16 %v9561
        %v9644 = vunpack.c.l.b16 %v9562
        %v9645 = vpack.c.b16 %v9614, %v9613
        %v9646 = vpack.c.b16 %v9616, %v9615
        %v9647 = vpack.c.b16 %v9618, %v9617
        %v9648 = vpack.c.b16 %v9620, %v9619
        %v9649 = vpack.c.b16 %v9622, %v9621
        %v9650 = vpack.c.b16 %v9624, %v9623
        %v9651 = vpack.c.b16 %v9626, %v9625
        %v9652 = vpack.c.b16 %v9628, %v9627
        %v9653 = vpack.c.b16 %v9630, %v9629
        %v9654 = vpack.c.b16 %v9632, %v9631
        %v9655 = vpack.c.b16 %v9634, %v9633
        %v9656 = vpack.c.b16 %v9636, %v9635
        %v9657 = vpack.c.b16 %v9638, %v9637
        %v9658 = vpack.c.b16 %v9640, %v9639
        %v9659 = vpack.c.b16 %v9642, %v9641
        %v9660 = vpack.c.b16 %v9644, %v9643
        %9677 = vmatpush.bf16.msra.mxu0 %v9652
        %9678 = vmatpush.bf16.msra.mxu0 %v9651
        %9679 = vmatpush.bf16.msra.mxu0 %v9650
        %9680 = vmatpush.bf16.msra.mxu0 %v9649
        %9681 = vmatpush.bf16.msra.mxu0 %v9648
        %9682 = vmatpush.bf16.msra.mxu0 %v9647
        %9683 = vmatpush.bf16.msra.mxu0 %v9646
        %9684 = vmatpush.bf16.msra.mxu0 %v9645
        %9685 = vmatmul.bf16.gmra.mxu0 %v9563
        %v9686 = vpop.f32.mrf.mxu0
        %v9687 = vadd.f32 %v9580, %v9686
        %v9688 = vpop.f32.mrf.mxu0
        %v9689 = vadd.f32 %v9580, %v9688
        %9690 = vmatmul.bf16.gmra.mxu0 %v9565
        %v9691 = vpop.f32.mrf.mxu0
        %v9692 = vadd.f32 %v9580, %v9691
        %v9693 = vpop.f32.mrf.mxu0
        %v9694 = vadd.f32 %v9580, %v9693
        %9695 = vmatmul.bf16.gmra.mxu0 %v9567
        %v9696 = vpop.f32.mrf.mxu0
        %v9697 = vadd.f32 %v9580, %v9696
        %v9698 = vpop.f32.mrf.mxu0
        %v9699 = vadd.f32 %v9580, %v9698
        %9700 = vmatmul.bf16.gmra.mxu0 %v9569
        %v9701 = vpop.f32.mrf.mxu0
        %v9702 = vadd.f32 %v9580, %v9701
        %v9703 = vpop.f32.mrf.mxu0
        %v9704 = vadd.f32 %v9580, %v9703
        %9705 = vmatmul.bf16.gmra.mxu0 %v9571
        %v9706 = vpop.f32.mrf.mxu0
        %v9707 = vadd.f32 %v9580, %v9706
        %v9708 = vpop.f32.mrf.mxu0
        %v9709 = vadd.f32 %v9580, %v9708
        %9710 = vmatmul.bf16.gmra.mxu0 %v9573
        %v9711 = vpop.f32.mrf.mxu0
        %v9712 = vadd.f32 %v9580, %v9711
        %v9713 = vpop.f32.mrf.mxu0
        %v9714 = vadd.f32 %v9580, %v9713
        %9715 = vmatmul.bf16.gmra.mxu0 %v9575
        %v9716 = vpop.f32.mrf.mxu0
        %v9717 = vadd.f32 %v9580, %v9716
        %v9718 = vpop.f32.mrf.mxu0
        %v9719 = vadd.f32 %v9580, %v9718
        %9720 = vmatmul.bf16.gmra.mxu0 %v9577
        %v9721 = vpop.f32.mrf.mxu0
        %v9722 = vadd.f32 %v9580, %v9721
        %v9723 = vpop.f32.mrf.mxu0
        %v9724 = vadd.f32 %v9580, %v9723
        %9725 = vdwg.mxu0
        %9726 = vmatpush.bf16.msra.mxu0 %v9660
        %9727 = vmatpush.bf16.msra.mxu0 %v9659
        %9728 = vmatpush.bf16.msra.mxu0 %v9658
        %9729 = vmatpush.bf16.msra.mxu0 %v9657
        %9730 = vmatpush.bf16.msra.mxu0 %v9656
        %9731 = vmatpush.bf16.msra.mxu0 %v9655
        %9732 = vmatpush.bf16.msra.mxu0 %v9654
        %9733 = vmatpush.bf16.msra.mxu0 %v9653
        %9734 = vmatmul.bf16.gmra.mxu0 %v9564
        %v9735 = vpop.f32.mrf.mxu0
        %v9736 = vadd.f32 %v9687, %v9735
        %v9737 = vpop.f32.mrf.mxu0
        %v9738 = vadd.f32 %v9689, %v9737
        %9739 = vmatmul.bf16.gmra.mxu0 %v9566
        %v9740 = vpop.f32.mrf.mxu0
        %v9741 = vadd.f32 %v9692, %v9740
        %v9742 = vpop.f32.mrf.mxu0
        %v9743 = vadd.f32 %v9694, %v9742
        %9744 = vmatmul.bf16.gmra.mxu0 %v9568
        %v9745 = vpop.f32.mrf.mxu0
        %v9746 = vadd.f32 %v9697, %v9745
        %v9747 = vpop.f32.mrf.mxu0
        %v9748 = vadd.f32 %v9699, %v9747
        %9749 = vmatmul.bf16.gmra.mxu0 %v9570
        %v9750 = vpop.f32.mrf.mxu0
        %v9751 = vadd.f32 %v9702, %v9750
        %v9752 = vpop.f32.mrf.mxu0
        %v9753 = vadd.f32 %v9704, %v9752
        %9754 = vmatmul.bf16.gmra.mxu0 %v9572
        %v9755 = vpop.f32.mrf.mxu0
        %v9756 = vadd.f32 %v9707, %v9755
        %v9757 = vpop.f32.mrf.mxu0
        %v9758 = vadd.f32 %v9709, %v9757
        %9759 = vmatmul.bf16.gmra.mxu0 %v9574
        %v9760 = vpop.f32.mrf.mxu0
        %v9761 = vadd.f32 %v9712, %v9760
        %v9762 = vpop.f32.mrf.mxu0
        %v9763 = vadd.f32 %v9714, %v9762
        %9764 = vmatmul.bf16.gmra.mxu0 %v9576
        %v9765 = vpop.f32.mrf.mxu0
        %v9766 = vadd.f32 %v9717, %v9765
        %v9767 = vpop.f32.mrf.mxu0
        %v9768 = vadd.f32 %v9719, %v9767
        %9769 = vmatmul.bf16.gmra.mxu0 %v9578
        %v9770 = vpop.f32.mrf.mxu0
        %v9771 = vadd.f32 %v9722, %v9770
        %v9772 = vpop.f32.mrf.mxu0
        %v9773 = vadd.f32 %v9724, %v9772
        %9774 = vdwg.mxu0
        %v9775 = vadd.f32 %v9272, %v9736
        %v9776 = vadd.f32 %v9273, %v9738
        %v9777 = vadd.f32 %v9274, %v9741
        %v9778 = vadd.f32 %v9275, %v9743
        %v9779 = vadd.f32 %v9276, %v9746
        %v9780 = vadd.f32 %v9277, %v9748
        %v9781 = vadd.f32 %v9278, %v9751
        %v9782 = vadd.f32 %v9279, %v9753
        %v9783 = vadd.f32 %v9280, %v9756
        %v9784 = vadd.f32 %v9281, %v9758
        %v9785 = vadd.f32 %v9282, %v9761
        %v9786 = vadd.f32 %v9283, %v9763
        %v9787 = vadd.f32 %v9284, %v9766
        %v9788 = vadd.f32 %v9285, %v9768
        %v9789 = vadd.f32 %v9286, %v9771
        %v9790 = vadd.f32 %v9287, %v9773
        %v9791 = vld [vmem:[%s15 + $0x1] sm:$0x1]
        %v9792 = vld [vmem:[%s16 + $0x1] sm:$0x1]
        %9793 = vadd.xlane.f32.xlu0 %v9775
        %v9794 = vpop.xlane.xlu0 %9793
        %9795 = vadd.xlane.f32.xlu0 %v9776
        %v9796 = vpop.xlane.xlu0 %9795
        %9797 = vadd.xlane.f32.xlu0 %v9777
        %v9798 = vpop.xlane.xlu0 %9797
        %9799 = vadd.xlane.f32.xlu0 %v9778
        %v9800 = vpop.xlane.xlu0 %9799
        %9801 = vadd.xlane.f32.xlu0 %v9779
        %v9802 = vpop.xlane.xlu0 %9801
        %9803 = vadd.xlane.f32.xlu0 %v9780
        %v9804 = vpop.xlane.xlu0 %9803
        %9805 = vadd.xlane.f32.xlu0 %v9781
        %v9806 = vpop.xlane.xlu0 %9805
        %9807 = vadd.xlane.f32.xlu0 %v9782
        %v9808 = vpop.xlane.xlu0 %9807
        %9809 = vadd.xlane.f32.xlu0 %v9783
        %v9810 = vpop.xlane.xlu0 %9809
        %9811 = vadd.xlane.f32.xlu0 %v9784
        %v9812 = vpop.xlane.xlu0 %9811
        %9813 = vadd.xlane.f32.xlu0 %v9785
        %v9814 = vpop.xlane.xlu0 %9813
        %9815 = vadd.xlane.f32.xlu0 %v9786
        %v9816 = vpop.xlane.xlu0 %9815
        %9817 = vadd.xlane.f32.xlu0 %v9787
        %v9818 = vpop.xlane.xlu0 %9817
        %9819 = vadd.xlane.f32.xlu0 %v9788
        %v9820 = vpop.xlane.xlu0 %9819
        %9821 = vadd.xlane.f32.xlu0 %v9789
        %v9822 = vpop.xlane.xlu0 %9821
        %9823 = vadd.xlane.f32.xlu0 %v9790
        %v9824 = vpop.xlane.xlu0 %9823
        %v9825 = vmul.f32 %v9794, %v4453
        %v9826 = vmul.f32 %v9796, %v4453
        %v9827 = vmul.f32 %v9798, %v4453
        %v9828 = vmul.f32 %v9800, %v4453
        %v9829 = vmul.f32 %v9802, %v4453
        %v9830 = vmul.f32 %v9804, %v4453
        %v9831 = vmul.f32 %v9806, %v4453
        %v9832 = vmul.f32 %v9808, %v4453
        %v9833 = vmul.f32 %v9810, %v4453
        %v9834 = vmul.f32 %v9812, %v4453
        %v9835 = vmul.f32 %v9814, %v4453
        %v9836 = vmul.f32 %v9816, %v4453
        %v9837 = vmul.f32 %v9818, %v4453
        %v9838 = vmul.f32 %v9820, %v4453
        %v9839 = vmul.f32 %v9822, %v4453
        %v9840 = vmul.f32 %v9824, %v4453
        %v9841 = vsub.f32 %v9775, %v9825
        %v9842 = vsub.f32 %v9776, %v9826
        %v9843 = vsub.f32 %v9777, %v9827
        %v9844 = vsub.f32 %v9778, %v9828
        %v9845 = vsub.f32 %v9779, %v9829
        %v9846 = vsub.f32 %v9780, %v9830
        %v9847 = vsub.f32 %v9781, %v9831
        %v9848 = vsub.f32 %v9782, %v9832
        %v9849 = vsub.f32 %v9783, %v9833
        %v9850 = vsub.f32 %v9784, %v9834
        %v9851 = vsub.f32 %v9785, %v9835
        %v9852 = vsub.f32 %v9786, %v9836
        %v9853 = vsub.f32 %v9787, %v9837
        %v9854 = vsub.f32 %v9788, %v9838
        %v9855 = vsub.f32 %v9789, %v9839
        %v9856 = vsub.f32 %v9790, %v9840
        %v9857 = vmul.f32 %v9841, %v9841
        %v9858 = vmul.f32 %v9842, %v9842
        %v9859 = vmul.f32 %v9843, %v9843
        %v9860 = vmul.f32 %v9844, %v9844
        %v9861 = vmul.f32 %v9845, %v9845
        %v9862 = vmul.f32 %v9846, %v9846
        %v9863 = vmul.f32 %v9847, %v9847
        %v9864 = vmul.f32 %v9848, %v9848
        %v9865 = vmul.f32 %v9849, %v9849
        %v9866 = vmul.f32 %v9850, %v9850
        %v9867 = vmul.f32 %v9851, %v9851
        %v9868 = vmul.f32 %v9852, %v9852
        %v9869 = vmul.f32 %v9853, %v9853
        %v9870 = vmul.f32 %v9854, %v9854
        %v9871 = vmul.f32 %v9855, %v9855
        %v9872 = vmul.f32 %v9856, %v9856
        %9873 = vadd.xlane.f32.xlu0 %v9857
        %v9874 = vpop.xlane.xlu0 %9873
        %9875 = vadd.xlane.f32.xlu0 %v9858
        %v9876 = vpop.xlane.xlu0 %9875
        %9877 = vadd.xlane.f32.xlu0 %v9859
        %v9878 = vpop.xlane.xlu0 %9877
        %9879 = vadd.xlane.f32.xlu0 %v9860
        %v9880 = vpop.xlane.xlu0 %9879
        %9881 = vadd.xlane.f32.xlu0 %v9861
        %v9882 = vpop.xlane.xlu0 %9881
        %9883 = vadd.xlane.f32.xlu0 %v9862
        %v9884 = vpop.xlane.xlu0 %9883
        %9885 = vadd.xlane.f32.xlu0 %v9863
        %v9886 = vpop.xlane.xlu0 %9885
        %9887 = vadd.xlane.f32.xlu0 %v9864
        %v9888 = vpop.xlane.xlu0 %9887
        %9889 = vadd.xlane.f32.xlu0 %v9865
        %v9890 = vpop.xlane.xlu0 %9889
        %9891 = vadd.xlane.f32.xlu0 %v9866
        %v9892 = vpop.xlane.xlu0 %9891
        %9893 = vadd.xlane.f32.xlu0 %v9867
        %v9894 = vpop.xlane.xlu0 %9893
        %9895 = vadd.xlane.f32.xlu0 %v9868
        %v9896 = vpop.xlane.xlu0 %9895
        %9897 = vadd.xlane.f32.xlu0 %v9869
        %v9898 = vpop.xlane.xlu0 %9897
        %9899 = vadd.xlane.f32.xlu0 %v9870
        %v9900 = vpop.xlane.xlu0 %9899
        %9901 = vadd.xlane.f32.xlu0 %v9871
        %v9902 = vpop.xlane.xlu0 %9901
        %9903 = vadd.xlane.f32.xlu0 %v9872
        %v9904 = vpop.xlane.xlu0 %9903
        %v9905 = vmul.f32 %v9874, %v4453
        %v9906 = vmul.f32 %v9876, %v4453
        %v9907 = vmul.f32 %v9878, %v4453
        %v9908 = vmul.f32 %v9880, %v4453
        %v9909 = vmul.f32 %v9882, %v4453
        %v9910 = vmul.f32 %v9884, %v4453
        %v9911 = vmul.f32 %v9886, %v4453
        %v9912 = vmul.f32 %v9888, %v4453
        %v9913 = vmul.f32 %v9890, %v4453
        %v9914 = vmul.f32 %v9892, %v4453
        %v9915 = vmul.f32 %v9894, %v4453
        %v9916 = vmul.f32 %v9896, %v4453
        %v9917 = vmul.f32 %v9898, %v4453
        %v9918 = vmul.f32 %v9900, %v4453
        %v9919 = vmul.f32 %v9902, %v4453
        %v9920 = vmul.f32 %v9904, %v4453
        %v9921 = vadd.f32 %v9905, 1e-05
        %v9922 = vadd.f32 %v9906, 1e-05
        %v9923 = vadd.f32 %v9907, 1e-05
        %v9924 = vadd.f32 %v9908, 1e-05
        %v9925 = vadd.f32 %v9909, 1e-05
        %v9926 = vadd.f32 %v9910, 1e-05
        %v9927 = vadd.f32 %v9911, 1e-05
        %v9928 = vadd.f32 %v9912, 1e-05
        %v9929 = vadd.f32 %v9913, 1e-05
        %v9930 = vadd.f32 %v9914, 1e-05
        %v9931 = vadd.f32 %v9915, 1e-05
        %v9932 = vadd.f32 %v9916, 1e-05
        %v9933 = vadd.f32 %v9917, 1e-05
        %v9934 = vadd.f32 %v9918, 1e-05
        %v9935 = vadd.f32 %v9919, 1e-05
        %v9936 = vadd.f32 %v9920, 1e-05
        %v9937 = vrsqrt.pop %v9921
        %v9938 = vmul.f32 %v9937, %v9921
        %v9939 = vmul.f32 %v9938, %v9937
        %v9940 = vmul.f32 0.5, %v9939
        %v9941 = vsub.f32 1.5, %v9940
        %v9942 = vmul.f32 %v9937, %v9941
        %vm9943 = vweird.f32 %v9921
        %vm9944 = vweird.f32 %v9937
        %vm9945 = vmor %vm9943, %vm9944
        %v9946 = vsel %vm9945, %v9937, %v9942
        %v9947 = vrsqrt.pop %v9922
        %v9948 = vmul.f32 %v9947, %v9922
        %v9949 = vmul.f32 %v9948, %v9947
        %v9950 = vmul.f32 0.5, %v9949
        %v9951 = vsub.f32 1.5, %v9950
        %v9952 = vmul.f32 %v9947, %v9951
        %vm9953 = vweird.f32 %v9922
        %vm9954 = vweird.f32 %v9947
        %vm9955 = vmor %vm9953, %vm9954
        %v9956 = vsel %vm9955, %v9947, %v9952
        %v9957 = vrsqrt.pop %v9923
        %v9958 = vmul.f32 %v9957, %v9923
        %v9959 = vmul.f32 %v9958, %v9957
        %v9960 = vmul.f32 0.5, %v9959
        %v9961 = vsub.f32 1.5, %v9960
        %v9962 = vmul.f32 %v9957, %v9961
        %vm9963 = vweird.f32 %v9923
        %vm9964 = vweird.f32 %v9957
        %vm9965 = vmor %vm9963, %vm9964
        %v9966 = vsel %vm9965, %v9957, %v9962
        %v9967 = vrsqrt.pop %v9924
        %v9968 = vmul.f32 %v9967, %v9924
        %v9969 = vmul.f32 %v9968, %v9967
        %v9970 = vmul.f32 0.5, %v9969
        %v9971 = vsub.f32 1.5, %v9970
        %v9972 = vmul.f32 %v9967, %v9971
        %vm9973 = vweird.f32 %v9924
        %vm9974 = vweird.f32 %v9967
        %vm9975 = vmor %vm9973, %vm9974
        %v9976 = vsel %vm9975, %v9967, %v9972
        %v9977 = vrsqrt.pop %v9925
        %v9978 = vmul.f32 %v9977, %v9925
        %v9979 = vmul.f32 %v9978, %v9977
        %v9980 = vmul.f32 0.5, %v9979
        %v9981 = vsub.f32 1.5, %v9980
        %v9982 = vmul.f32 %v9977, %v9981
        %vm9983 = vweird.f32 %v9925
        %vm9984 = vweird.f32 %v9977
        %vm9985 = vmor %vm9983, %vm9984
        %v9986 = vsel %vm9985, %v9977, %v9982
        %v9987 = vrsqrt.pop %v9926
        %v9988 = vmul.f32 %v9987, %v9926
        %v9989 = vmul.f32 %v9988, %v9987
        %v9990 = vmul.f32 0.5, %v9989
        %v9991 = vsub.f32 1.5, %v9990
        %v9992 = vmul.f32 %v9987, %v9991
        %vm9993 = vweird.f32 %v9926
        %vm9994 = vweird.f32 %v9987
        %vm9995 = vmor %vm9993, %vm9994
        %v9996 = vsel %vm9995, %v9987, %v9992
        %v9997 = vrsqrt.pop %v9927
        %v9998 = vmul.f32 %v9997, %v9927
        %v9999 = vmul.f32 %v9998, %v9997
        %v10000 = vmul.f32 0.5, %v9999
        %v10001 = vsub.f32 1.5, %v10000
        %v10002 = vmul.f32 %v9997, %v10001
        %vm10003 = vweird.f32 %v9927
        %vm10004 = vweird.f32 %v9997
        %vm10005 = vmor %vm10003, %vm10004
        %v10006 = vsel %vm10005, %v9997, %v10002
        %v10007 = vrsqrt.pop %v9928
        %v10008 = vmul.f32 %v10007, %v9928
        %v10009 = vmul.f32 %v10008, %v10007
        %v10010 = vmul.f32 0.5, %v10009
        %v10011 = vsub.f32 1.5, %v10010
        %v10012 = vmul.f32 %v10007, %v10011
        %vm10013 = vweird.f32 %v9928
        %vm10014 = vweird.f32 %v10007
        %vm10015 = vmor %vm10013, %vm10014
        %v10016 = vsel %vm10015, %v10007, %v10012
        %v10017 = vrsqrt.pop %v9929
        %v10018 = vmul.f32 %v10017, %v9929
        %v10019 = vmul.f32 %v10018, %v10017
        %v10020 = vmul.f32 0.5, %v10019
        %v10021 = vsub.f32 1.5, %v10020
        %v10022 = vmul.f32 %v10017, %v10021
        %vm10023 = vweird.f32 %v9929
        %vm10024 = vweird.f32 %v10017
        %vm10025 = vmor %vm10023, %vm10024
        %v10026 = vsel %vm10025, %v10017, %v10022
        %v10027 = vrsqrt.pop %v9930
        %v10028 = vmul.f32 %v10027, %v9930
        %v10029 = vmul.f32 %v10028, %v10027
        %v10030 = vmul.f32 0.5, %v10029
        %v10031 = vsub.f32 1.5, %v10030
        %v10032 = vmul.f32 %v10027, %v10031
        %vm10033 = vweird.f32 %v9930
        %vm10034 = vweird.f32 %v10027
        %vm10035 = vmor %vm10033, %vm10034
        %v10036 = vsel %vm10035, %v10027, %v10032
        %v10037 = vrsqrt.pop %v9931
        %v10038 = vmul.f32 %v10037, %v9931
        %v10039 = vmul.f32 %v10038, %v10037
        %v10040 = vmul.f32 0.5, %v10039
        %v10041 = vsub.f32 1.5, %v10040
        %v10042 = vmul.f32 %v10037, %v10041
        %vm10043 = vweird.f32 %v9931
        %vm10044 = vweird.f32 %v10037
        %vm10045 = vmor %vm10043, %vm10044
        %v10046 = vsel %vm10045, %v10037, %v10042
        %v10047 = vrsqrt.pop %v9932
        %v10048 = vmul.f32 %v10047, %v9932
        %v10049 = vmul.f32 %v10048, %v10047
        %v10050 = vmul.f32 0.5, %v10049
        %v10051 = vsub.f32 1.5, %v10050
        %v10052 = vmul.f32 %v10047, %v10051
        %vm10053 = vweird.f32 %v9932
        %vm10054 = vweird.f32 %v10047
        %vm10055 = vmor %vm10053, %vm10054
        %v10056 = vsel %vm10055, %v10047, %v10052
        %v10057 = vrsqrt.pop %v9933
        %v10058 = vmul.f32 %v10057, %v9933
        %v10059 = vmul.f32 %v10058, %v10057
        %v10060 = vmul.f32 0.5, %v10059
        %v10061 = vsub.f32 1.5, %v10060
        %v10062 = vmul.f32 %v10057, %v10061
        %vm10063 = vweird.f32 %v9933
        %vm10064 = vweird.f32 %v10057
        %vm10065 = vmor %vm10063, %vm10064
        %v10066 = vsel %vm10065, %v10057, %v10062
        %v10067 = vrsqrt.pop %v9934
        %v10068 = vmul.f32 %v10067, %v9934
        %v10069 = vmul.f32 %v10068, %v10067
        %v10070 = vmul.f32 0.5, %v10069
        %v10071 = vsub.f32 1.5, %v10070
        %v10072 = vmul.f32 %v10067, %v10071
        %vm10073 = vweird.f32 %v9934
        %vm10074 = vweird.f32 %v10067
        %vm10075 = vmor %vm10073, %vm10074
        %v10076 = vsel %vm10075, %v10067, %v10072
        %v10077 = vrsqrt.pop %v9935
        %v10078 = vmul.f32 %v10077, %v9935
        %v10079 = vmul.f32 %v10078, %v10077
        %v10080 = vmul.f32 0.5, %v10079
        %v10081 = vsub.f32 1.5, %v10080
        %v10082 = vmul.f32 %v10077, %v10081
        %vm10083 = vweird.f32 %v9935
        %vm10084 = vweird.f32 %v10077
        %vm10085 = vmor %vm10083, %vm10084
        %v10086 = vsel %vm10085, %v10077, %v10082
        %v10087 = vrsqrt.pop %v9936
        %v10088 = vmul.f32 %v10087, %v9936
        %v10089 = vmul.f32 %v10088, %v10087
        %v10090 = vmul.f32 0.5, %v10089
        %v10091 = vsub.f32 1.5, %v10090
        %v10092 = vmul.f32 %v10087, %v10091
        %vm10093 = vweird.f32 %v9936
        %vm10094 = vweird.f32 %v10087
        %vm10095 = vmor %vm10093, %vm10094
        %v10096 = vsel %vm10095, %v10087, %v10092
        %v10097 = vmul.f32 %v9841, %v9946
        %v10098 = vmul.f32 %v9842, %v9956
        %v10099 = vmul.f32 %v9843, %v9966
        %v10100 = vmul.f32 %v9844, %v9976
        %v10101 = vmul.f32 %v9845, %v9986
        %v10102 = vmul.f32 %v9846, %v9996
        %v10103 = vmul.f32 %v9847, %v10006
        %v10104 = vmul.f32 %v9848, %v10016
        %v10105 = vmul.f32 %v9849, %v10026
        %v10106 = vmul.f32 %v9850, %v10036
        %v10107 = vmul.f32 %v9851, %v10046
        %v10108 = vmul.f32 %v9852, %v10056
        %v10109 = vmul.f32 %v9853, %v10066
        %v10110 = vmul.f32 %v9854, %v10076
        %v10111 = vmul.f32 %v9855, %v10086
        %v10112 = vmul.f32 %v9856, %v10096
        %v10113 = vperm.slane %v9791, 0
        %v10114 = vmul.f32 %v10097, %v10113
        %v10115 = vmul.f32 %v10098, %v10113
        %v10116 = vmul.f32 %v10099, %v10113
        %v10117 = vmul.f32 %v10100, %v10113
        %v10118 = vmul.f32 %v10101, %v10113
        %v10119 = vmul.f32 %v10102, %v10113
        %v10120 = vmul.f32 %v10103, %v10113
        %v10121 = vmul.f32 %v10104, %v10113
        %v10122 = vmul.f32 %v10105, %v10113
        %v10123 = vmul.f32 %v10106, %v10113
        %v10124 = vmul.f32 %v10107, %v10113
        %v10125 = vmul.f32 %v10108, %v10113
        %v10126 = vmul.f32 %v10109, %v10113
        %v10127 = vmul.f32 %v10110, %v10113
        %v10128 = vmul.f32 %v10111, %v10113
        %v10129 = vmul.f32 %v10112, %v10113
        %v10130 = vperm.slane %v9792, 0
        %v10131 = vadd.f32 %v10114, %v10130
        %v10132 = vadd.f32 %v10115, %v10130
        %v10133 = vadd.f32 %v10116, %v10130
        %v10134 = vadd.f32 %v10117, %v10130
        %v10135 = vadd.f32 %v10118, %v10130
        %v10136 = vadd.f32 %v10119, %v10130
        %v10137 = vadd.f32 %v10120, %v10130
        %v10138 = vadd.f32 %v10121, %v10130
        %v10139 = vadd.f32 %v10122, %v10130
        %v10140 = vadd.f32 %v10123, %v10130
        %v10141 = vadd.f32 %v10124, %v10130
        %v10142 = vadd.f32 %v10125, %v10130
        %v10143 = vadd.f32 %v10126, %v10130
        %v10144 = vadd.f32 %v10127, %v10130
        %v10145 = vadd.f32 %v10128, %v10130
        %v10146 = vadd.f32 %v10129, %v10130
        %10147 = vst [vmem:[%s828] sm:$0xff] %v10131
        %10148 = vst [vmem:[%s828 + $0x8] sm:$0xff] %v10132
        %10149 = vst [vmem:[%s828 + $0x10] sm:$0xff] %v10133
        %10150 = vst [vmem:[%s828 + $0x18] sm:$0xff] %v10134
        %10151 = vst [vmem:[%s828 + $0x20] sm:$0xff] %v10135
        %10152 = vst [vmem:[%s828 + $0x28] sm:$0xff] %v10136
        %10153 = vst [vmem:[%s828 + $0x30] sm:$0xff] %v10137
        %10154 = vst [vmem:[%s828 + $0x38] sm:$0xff] %v10138
        %10155 = vst [vmem:[%s828 + $0x40] sm:$0xff] %v10139
        %10156 = vst [vmem:[%s828 + $0x48] sm:$0xff] %v10140
        %10157 = vst [vmem:[%s828 + $0x50] sm:$0xff] %v10141
        %10158 = vst [vmem:[%s828 + $0x58] sm:$0xff] %v10142
        %10159 = vst [vmem:[%s828 + $0x60] sm:$0xff] %v10143
        %10160 = vst [vmem:[%s828 + $0x68] sm:$0xff] %v10144
        %10161 = vst [vmem:[%s828 + $0x70] sm:$0xff] %v10145
        %10162 = vst [vmem:[%s828 + $0x78] sm:$0xff] %v10146
        %v10163 = vld [vmem:[#allocation20] sm:$0xf]
        %v10164 = vld [vmem:[#allocation20 + $0x4] sm:$0xf]
        %v10165 = vld [vmem:[#allocation20 + $0x8] sm:$0xf]
        %v10166 = vld [vmem:[#allocation20 + $0xc] sm:$0xf]
        %v10167 = vld [vmem:[#allocation20 + $0x10] sm:$0xf]
        %v10168 = vld [vmem:[#allocation20 + $0x14] sm:$0xf]
        %v10169 = vld [vmem:[#allocation20 + $0x18] sm:$0xf]
        %v10170 = vld [vmem:[#allocation20 + $0x1c] sm:$0xf]
        %v10171 = vld [vmem:[#allocation20 + $0x20] sm:$0xf]
        %v10172 = vld [vmem:[#allocation20 + $0x24] sm:$0xf]
        %v10173 = vld [vmem:[#allocation20 + $0x28] sm:$0xf]
        %v10174 = vld [vmem:[#allocation20 + $0x2c] sm:$0xf]
        %v10175 = vld [vmem:[#allocation20 + $0x30] sm:$0xf]
        %v10176 = vld [vmem:[#allocation20 + $0x34] sm:$0xf]
        %v10177 = vld [vmem:[#allocation20 + $0x38] sm:$0xf]
        %v10178 = vld [vmem:[#allocation20 + $0x3c] sm:$0xf]
        %v10179 = vpack.c.bf16 %v10132, %v10131
        %v10180 = vpack.c.bf16 %v10134, %v10133
        %v10181 = vpack.c.bf16 %v10136, %v10135
        %v10182 = vpack.c.bf16 %v10138, %v10137
        %v10183 = vpack.c.bf16 %v10140, %v10139
        %v10184 = vpack.c.bf16 %v10142, %v10141
        %v10185 = vpack.c.bf16 %v10144, %v10143
        %v10186 = vpack.c.bf16 %v10146, %v10145
        %v10187 = vld [vmem:[%s18] sm:$0x1]
        %v10189 = vperm.slane %v10187, 0
        %v10207 = vunpack.c.l.b16 %v10163
        %v10208 = vunpack.c.l.b16 %v10164
        %v10209 = vunpack.c.l.b16 %v10165
        %v10210 = vunpack.c.l.b16 %v10166
        %v10211 = vunpack.c.l.b16 %v10167
        %v10212 = vunpack.c.l.b16 %v10168
        %v10213 = vunpack.c.l.b16 %v10169
        %v10214 = vunpack.c.l.b16 %v10170
        %v10215 = vunpack.c.l.b16 %v10171
        %v10216 = vunpack.c.l.b16 %v10172
        %v10217 = vunpack.c.l.b16 %v10173
        %v10218 = vunpack.c.l.b16 %v10174
        %v10219 = vunpack.c.l.b16 %v10175
        %v10220 = vunpack.c.l.b16 %v10176
        %v10221 = vunpack.c.l.b16 %v10177
        %v10222 = vunpack.c.l.b16 %v10178
        %v10223 = vpack.c.b16 %v10208, %v10207
        %v10224 = vpack.c.b16 %v10210, %v10209
        %v10225 = vpack.c.b16 %v10212, %v10211
        %v10226 = vpack.c.b16 %v10214, %v10213
        %v10227 = vpack.c.b16 %v10216, %v10215
        %v10228 = vpack.c.b16 %v10218, %v10217
        %v10229 = vpack.c.b16 %v10220, %v10219
        %v10230 = vpack.c.b16 %v10222, %v10221
        %10239 = vmatpush.bf16.msra.mxu0 %v10230
        %10240 = vmatpush.bf16.msra.mxu0 %v10229
        %10241 = vmatpush.bf16.msra.mxu0 %v10228
        %10242 = vmatpush.bf16.msra.mxu0 %v10227
        %10243 = vmatpush.bf16.msra.mxu0 %v10226
        %10244 = vmatpush.bf16.msra.mxu0 %v10225
        %10245 = vmatpush.bf16.msra.mxu0 %v10224
        %10246 = vmatpush.bf16.msra.mxu0 %v10223
        %10247 = vmatmul.bf16.gmra.mxu0 %v10179
        %v10248 = vpop.f32.mrf.mxu0
        %v10249 = vadd.f32 %v10189, %v10248
        %v10250 = vpop.f32.mrf.mxu0
        %v10251 = vadd.f32 %v10189, %v10250
        %10252 = vmatmul.bf16.gmra.mxu0 %v10180
        %v10253 = vpop.f32.mrf.mxu0
        %v10254 = vadd.f32 %v10189, %v10253
        %v10255 = vpop.f32.mrf.mxu0
        %v10256 = vadd.f32 %v10189, %v10255
        %10257 = vmatmul.bf16.gmra.mxu0 %v10181
        %v10258 = vpop.f32.mrf.mxu0
        %v10259 = vadd.f32 %v10189, %v10258
        %v10260 = vpop.f32.mrf.mxu0
        %v10261 = vadd.f32 %v10189, %v10260
        %10262 = vmatmul.bf16.gmra.mxu0 %v10182
        %v10263 = vpop.f32.mrf.mxu0
        %v10264 = vadd.f32 %v10189, %v10263
        %v10265 = vpop.f32.mrf.mxu0
        %v10266 = vadd.f32 %v10189, %v10265
        %10267 = vmatmul.bf16.gmra.mxu0 %v10183
        %v10268 = vpop.f32.mrf.mxu0
        %v10269 = vadd.f32 %v10189, %v10268
        %v10270 = vpop.f32.mrf.mxu0
        %v10271 = vadd.f32 %v10189, %v10270
        %10272 = vmatmul.bf16.gmra.mxu0 %v10184
        %v10273 = vpop.f32.mrf.mxu0
        %v10274 = vadd.f32 %v10189, %v10273
        %v10275 = vpop.f32.mrf.mxu0
        %v10276 = vadd.f32 %v10189, %v10275
        %10277 = vmatmul.bf16.gmra.mxu0 %v10185
        %v10278 = vpop.f32.mrf.mxu0
        %v10279 = vadd.f32 %v10189, %v10278
        %v10280 = vpop.f32.mrf.mxu0
        %v10281 = vadd.f32 %v10189, %v10280
        %10282 = vmatmul.bf16.gmra.mxu0 %v10186
        %v10283 = vpop.f32.mrf.mxu0
        %v10284 = vadd.f32 %v10189, %v10283
        %v10285 = vpop.f32.mrf.mxu0
        %v10286 = vadd.f32 %v10189, %v10285
        %10287 = vdwg.mxu0
        %10288 = vst [vmem:[%s835] sm:$0xff] %v10249
        %10289 = vst [vmem:[%s835 + $0x8] sm:$0xff] %v10251
        %10290 = vst [vmem:[%s835 + $0x10] sm:$0xff] %v10254
        %10291 = vst [vmem:[%s835 + $0x18] sm:$0xff] %v10256
        %10292 = vst [vmem:[%s835 + $0x20] sm:$0xff] %v10259
        %10293 = vst [vmem:[%s835 + $0x28] sm:$0xff] %v10261
        %10294 = vst [vmem:[%s835 + $0x30] sm:$0xff] %v10264
        %10295 = vst [vmem:[%s835 + $0x38] sm:$0xff] %v10266
        %10296 = vst [vmem:[%s835 + $0x40] sm:$0xff] %v10269
        %10297 = vst [vmem:[%s835 + $0x48] sm:$0xff] %v10271
        %10298 = vst [vmem:[%s835 + $0x50] sm:$0xff] %v10274
        %10299 = vst [vmem:[%s835 + $0x58] sm:$0xff] %v10276
        %10300 = vst [vmem:[%s835 + $0x60] sm:$0xff] %v10279
        %10301 = vst [vmem:[%s835 + $0x68] sm:$0xff] %v10281
        %10302 = vst [vmem:[%s835 + $0x70] sm:$0xff] %v10284
        %10303 = vst [vmem:[%s835 + $0x78] sm:$0xff] %v10286
        %s10304 = sand.u32 %s459, 1
        %s10305 = scalar_lea.sflag [#allocation4], %s10304
        %s10306 = sand.u32 %s459, 1
        %s10307 = smul.addr %s10306, 128
        %s10308 = scalar_lea.vmem [#allocation22], %s10307
        %s10309 = sand.u32 %s485, 1
        %s10310 = scalar_lea.sflag [#allocation24], %s10309
        %s10311 = sand.u32 %s485, 1
        %s10312 = smul.addr %s10311, 128
        %s10313 = scalar_lea.vmem [#allocation23], %s10312
        // Predicated region
        $region145: #{tpu_custom_call.1} parent=95 // pred_check
          %p10314 = pneg %p469
        $region146: #{tpu_custom_call.1} parent=95 // pred_check_branch
          %10316 = sbr.rel (%p10314) target = $region148
        $region147: #{tpu_custom_call.1} parent=95 // pred_region
          %s10317 = smul.u32 8, %s47
          %10319 = vsyncadd %s10305, 0
          %s10320 = smul.addr %s10317, 2
          %s10321 = smul.addr %s10320, 8
          %s10322 = scalar_lea.hbm %s19, %s10321
          %s10323 = sshll.u32 %s10308, 4
          %s10324 = int_to_ptr.vmem [resolvable:$true] %s10323
          %s10325 = sshll.u32 %s10322, 4
          %s10326 = int_to_ptr.hbm [resolvable:$true] %s10325
          %10331 = dma.vmem_to_hbm [thread:$0]  %s10324, 2048, %s10326, %s10305, 128, 128, 8
        $region148: #{tpu_custom_call.1} parent=95 // pred_fallthru
          _
        // Predicated region
        $region149: #{tpu_custom_call.1} parent=95 // pred_check
          %p10332 = pneg %p495
        $region150: #{tpu_custom_call.1} parent=95 // pred_check_branch
          %10334 = sbr.rel (%p10332) target = $region152
        $region151: #{tpu_custom_call.1} parent=95 // pred_region
          %s10335 = smul.u32 8, %s47
          %10337 = vsyncadd %s10310, 0
          %s10338 = smul.addr %s10335, 2
          %s10339 = smul.addr %s10338, 8
          %s10340 = scalar_lea.hbm %s20, %s10339
          %s10341 = sshll.u32 %s10313, 4
          %s10342 = int_to_ptr.vmem [resolvable:$true] %s10341
          %s10343 = sshll.u32 %s10340, 4
          %s10344 = int_to_ptr.hbm [resolvable:$true] %s10343
          %10349 = dma.vmem_to_hbm [thread:$0]  %s10342, 2048, %s10344, %s10310, 128, 128, 8
        $region152: #{tpu_custom_call.1} parent=95 // pred_fallthru
          _
      $region96: #{tpu_custom_call.1} parent=5 // pred_fallthru
        _
      %p10350 = scmp.le.s32.totalorder 2, %s42
      // Predicated region
      $region153: #{tpu_custom_call.1} parent=5 // pred_check
        %p10351 = pneg %p10350
      $region154: #{tpu_custom_call.1} parent=5 // pred_check_branch
        %10353 = sbr.rel (%p10351) target = $region156
      $region155: #{tpu_custom_call.1} parent=5 // pred_region
        %s10354 = ssub.s32 %s42, 2
        // Predicated region
        $region157: #{tpu_custom_call.1} parent=155 // pred_check
          %p10355 = pneg %p475
        $region158: #{tpu_custom_call.1} parent=155 // pred_check_branch
          %10357 = sbr.rel (%p10355) target = $region160
        $region159: #{tpu_custom_call.1} parent=155 // pred_region
          %s10358 = sand.u32 %s460, 1
          %s10359 = scalar_lea.sflag [#allocation4], %s10358
          %s10360 = sand.u32 %s460, 1
          %s10361 = smul.addr %s10360, 128
          %s10362 = scalar_lea.vmem [#allocation22], %s10361
          %10364 = dma.done %s10359, 2048
        $region160: #{tpu_custom_call.1} parent=155 // pred_fallthru
          _
        // Predicated region
        $region161: #{tpu_custom_call.1} parent=155 // pred_check
          %p10365 = pneg %p501
        $region162: #{tpu_custom_call.1} parent=155 // pred_check_branch
          %10367 = sbr.rel (%p10365) target = $region164
        $region163: #{tpu_custom_call.1} parent=155 // pred_region
          %s10368 = sand.u32 %s486, 1
          %s10369 = scalar_lea.sflag [#allocation24], %s10368
          %s10370 = sand.u32 %s486, 1
          %s10371 = smul.addr %s10370, 128
          %s10372 = scalar_lea.vmem [#allocation23], %s10371
          %10374 = dma.done %s10369, 2048
        $region164: #{tpu_custom_call.1} parent=155 // pred_fallthru
          _
      $region156: #{tpu_custom_call.1} parent=5 // pred_fallthru
        _
    $region6: #{tpu_custom_call.1} parent=1 // loop_footer
      %s46 = sadd.s32 1, %s42
    $region7: #{tpu_custom_call.1} parent=1 // loop_footer_branch
      %41 = sbr.rel target = $region3
    $region8: #{tpu_custom_call.1} parent=1 // loop_exit
      _
    %10375 = vsyncpa [#allocation3], 1
    %s10376 = scalar_lea.sflag [#allocation3], 1
    %10377 = vsyncpa %s10376, 1
    %10378 = vsyncpa [#allocation6], 1
    %10379 = vsyncpa [#allocation9], 1
    %10380 = vsyncpa [#allocation12], 1
    %10381 = vsyncpa [#allocation15], 1
    %10382 = vsyncpa [#allocation18], 1
    %10383 = vsyncpa [#allocation21], 1
    %10384 = vsyncpa [#allocation4], 1
    %s10385 = scalar_lea.sflag [#allocation4], 1
    %10386 = vsyncpa %s10385, 1
    %10387 = vsyncpa [#allocation24], 1
    %s10388 = scalar_lea.sflag [#allocation24], 1
    %10389 = vsyncpa %s10388, 1

</llo_original>
